<compile_context>
chip_gen: v5e
topology: v5e:2x2
jax: 0.10.0
libtpu: 0.0.40
codegen_flags: <defaults>
</compile_context>

<pallas_src>
import functools
import math

import jax
import jax.numpy as jnp
from jax import lax
from jax.experimental import pallas as pl
from jax.experimental.pallas import tpu as pltpu


VMEM_LIMIT = 32 * 1024 * 1024  # modest, safe on v5e/v6e/v7x


def _round_up(x, m):
    return ((x + m - 1) // m) * m


# ----------------------------------------------------------------------------
# Pallas matmul kernels with fused bias (+ optional ReLU)
# ----------------------------------------------------------------------------
def _mm_bias_single_k_kernel(a_ref, b_ref, bias_ref, o_ref, *, apply_relu):
    # Single K step: no accumulator scratch, no init/finalize conditionals.
    out = jnp.dot(a_ref[...], b_ref[...], preferred_element_type=jnp.float32)
    out = out + bias_ref[...]
    if apply_relu:
        out = jnp.maximum(out, 0.0)
    o_ref[...] = out.astype(o_ref.dtype)


def _mm_bias_multi_k_kernel(a_ref, b_ref, bias_ref, o_ref, acc_ref, *, apply_relu):
    k = pl.program_id(2)

    @pl.when(k == 0)
    def _():
        acc_ref[...] = jnp.zeros_like(acc_ref)

    acc_ref[...] += jnp.dot(a_ref[...], b_ref[...],
                            preferred_element_type=jnp.float32)

    @pl.when(k == pl.num_programs(2) - 1)
    def _():
        out = acc_ref[...] + bias_ref[...]
        if apply_relu:
            out = jnp.maximum(out, 0.0)
        o_ref[...] = out.astype(o_ref.dtype)


def matmul_bias(a, b_p, bias_p, *, tm, tn, tk, apply_relu, out_dtype):
    """relu?(a @ b_p + bias_p).

    a:      (M, K)   any float; cast to bf16, padded to (Mp, Kp) here (cheap).
    b_p:    (Kp, Np) bf16, pre-padded at init (Kp % tk == 0, Np % tn == 0).
    bias_p: (1, Np)  f32, pre-padded at init.
    Returns (M, Np) in out_dtype (caller slices N if needed).
    """
    M, K = a.shape
    Kp, Np = b_p.shape
    assert Kp % tk == 0 and Np % tn == 0 and Kp >= K
    Mp = _round_up(M, tm)

    a_p = a.astype(jnp.bfloat16)
    if (Mp, Kp) != (M, K):
        a_p = jnp.pad(a_p, ((0, Mp - M), (0, Kp - K)))

    k_steps = Kp // tk
    if k_steps == 1:
        out = pl.pallas_call(
            functools.partial(_mm_bias_single_k_kernel, apply_relu=apply_relu),
            out_shape=jax.ShapeDtypeStruct((Mp, Np), out_dtype),
            grid_spec=pltpu.PrefetchScalarGridSpec(
                num_scalar_prefetch=0,
                grid=(Mp // tm, Np // tn),
                in_specs=[
                    pl.BlockSpec((tm, tk), lambda i, j: (i, 0)),
                    pl.BlockSpec((tk, tn), lambda i, j: (0, j)),
                    pl.BlockSpec((1, tn), lambda i, j: (0, j)),
                ],
                out_specs=pl.BlockSpec((tm, tn), lambda i, j: (i, j)),
            ),
            compiler_params=pltpu.CompilerParams(
                dimension_semantics=("parallel", "parallel"),
                vmem_limit_bytes=VMEM_LIMIT),
        )(a_p, b_p, bias_p)
    else:
        out = pl.pallas_call(
            functools.partial(_mm_bias_multi_k_kernel, apply_relu=apply_relu),
            out_shape=jax.ShapeDtypeStruct((Mp, Np), out_dtype),
            grid_spec=pltpu.PrefetchScalarGridSpec(
                num_scalar_prefetch=0,
                grid=(Mp // tm, Np // tn, k_steps),
                in_specs=[
                    pl.BlockSpec((tm, tk), lambda i, j, k: (i, k)),
                    pl.BlockSpec((tk, tn), lambda i, j, k: (k, j)),
                    pl.BlockSpec((1, tn), lambda i, j, k: (0, j)),
                ],
                out_specs=pl.BlockSpec((tm, tn), lambda i, j, k: (i, j)),
                scratch_shapes=[pltpu.VMEM((tm, tn), jnp.float32)],
            ),
            compiler_params=pltpu.CompilerParams(
                dimension_semantics=("parallel", "parallel", "arbitrary"),
                vmem_limit_bytes=VMEM_LIMIT),
        )(a_p, b_p, bias_p)

    return out[:M, :]


# ----------------------------------------------------------------------------
# Fused Output-head tail: (16,1024) -> Linear+ReLU -> Linear(+bias) in one call
# ----------------------------------------------------------------------------
def _head_tail_kernel(h_ref, w2_ref, b2_ref, w3_ref, b3_ref, o_ref):
    h2 = jnp.dot(h_ref[...], w2_ref[...], preferred_element_type=jnp.float32)
    h2 = jnp.maximum(h2 + b2_ref[...], 0.0).astype(jnp.bfloat16)
    h3 = jnp.dot(h2, w3_ref[...], preferred_element_type=jnp.float32)
    o_ref[...] = h3 + b3_ref[...]


def head_tail(h, w2_p, b2_p, w3_p, b3_p):
    Mp, H1 = h.shape
    _, H2 = w2_p.shape
    _, Np = w3_p.shape
    return pl.pallas_call(
        _head_tail_kernel,
        out_shape=jax.ShapeDtypeStruct((Mp, Np), jnp.float32),
        grid_spec=pltpu.PrefetchScalarGridSpec(
            num_scalar_prefetch=0,
            grid=(1,),
            in_specs=[
                pl.BlockSpec((Mp, H1), lambda i: (0, 0)),
                pl.BlockSpec((H1, H2), lambda i: (0, 0)),
                pl.BlockSpec((1, H2), lambda i: (0, 0)),
                pl.BlockSpec((H2, Np), lambda i: (0, 0)),
                pl.BlockSpec((1, Np), lambda i: (0, 0)),
            ],
            out_specs=pl.BlockSpec((Mp, Np), lambda i: (0, 0)),
        ),
        compiler_params=pltpu.CompilerParams(
            dimension_semantics=("arbitrary",),
            vmem_limit_bytes=VMEM_LIMIT),
    )(h, w2_p, b2_p, w3_p, b3_p)


# ----------------------------------------------------------------------------
# Conv2d (valid, stride 1) via NHWC im2col + single-K Pallas matmul
# ----------------------------------------------------------------------------
def _im2col_nhwc(x, kh, kw):
    # x: (N, H, W, C) -> patches: (N*OH*OW, kh*kw*C), column order (kh, kw, C)
    N, H, W, C = x.shape
    OH, OW = H - kh + 1, W - kw + 1
    cols = []
    for i in range(kh):
        for j in range(kw):
            cols.append(x[:, i:i + OH, j:j + OW, :])      # (N, OH, OW, C)
    p = jnp.stack(cols, axis=3)                            # (N, OH, OW, kh*kw, C)
    return p.reshape(N * OH * OW, kh * kw * C), (N, OH, OW)


def conv2d_relu_nhwc(x_nhwc, wmat_p, bias_p, *, kh, kw, oc):
    # wmat_p: (round_up(kh*kw*ic,128), round_up(oc,128)) bf16, rows in (kh,kw,ic)
    patches, (N, OH, OW) = _im2col_nhwc(x_nhwc, kh, kw)
    M = patches.shape[0]
    tm = 256 if M >= 256 else _round_up(M, 16)
    out = matmul_bias(patches, wmat_p, bias_p,
                      tm=tm, tn=wmat_p.shape[1], tk=wmat_p.shape[0],
                      apply_relu=True, out_dtype=jnp.bfloat16)
    return out[:, :oc].reshape(N, OH, OW, oc)              # stays NHWC


# ----------------------------------------------------------------------------
# Output head: max_pool2d(2) -> flatten(NHWC) -> big GEMM -> fused tail -> log_softmax
# ----------------------------------------------------------------------------
def _maxpool2x2_nhwc(x):
    N, H, W, C = x.shape
    return x.reshape(N, H // 2, 2, W // 2, 2, C).max(axis=(2, 4))


def output_head(x_nhwc, head, num_classes=10):
    w1_p, b1_p, w2_p, b2_p, w3_p, b3_p = head
    B = x_nhwc.shape[0]
    xp = _maxpool2x2_nhwc(x_nhwc)
    x_flat = xp.reshape(B, -1).astype(jnp.bfloat16)        # NHWC flatten
    Mp = _round_up(B, 16)
    x_pad = jnp.pad(x_flat, ((0, Mp - B), (0, 0)))         # tiny per-call pad

    # D -> 1024: weight-stationary tiles, 2 parallel N tiles (v7x: one per TC).
    h1 = matmul_bias(x_pad, w1_p, b1_p, tm=Mp, tn=512, tk=1024,
                     apply_relu=True, out_dtype=jnp.bfloat16)   # (Mp, 1024)
    # 1024 -> 256 -> 10 fused in a single resident-VMEM kernel.
    logits_p = head_tail(h1, w2_p, b2_p, w3_p, b3_p)            # (Mp, 128) f32
    logits = logits_p[:B, :num_classes]
    return jax.nn.log_softmax(logits, axis=-1)                  # tiny epilogue


# ----------------------------------------------------------------------------
# Parameter init + one-time weight preprocessing (reshape / permute / pad / bf16)
# ----------------------------------------------------------------------------
def _uniform(key, shape, bound):
    return jax.random.uniform(key, shape, jnp.float32, -bound, bound)


def _prep_conv(key, oc, ic, kh, kw):
    k1, k2 = jax.random.split(key)
    fan_in = ic * kh * kw
    bound = 1.0 / math.sqrt(fan_in)
    w = _uniform(k1, (oc, ic, kh, kw), bound)               # PyTorch layout
    b = _uniform(k2, (oc,), bound)
    # Rows ordered (kh, kw, ic) to match the NHWC im2col column order.
    wmat = jnp.transpose(w, (2, 3, 1, 0)).reshape(fan_in, oc)
    Kp = _round_up(fan_in, 128)
    Np = _round_up(oc, 128)
    wmat_p = jnp.pad(wmat, ((0, Kp - fan_in), (0, Np - oc))).astype(jnp.bfloat16)
    bias_p = jnp.pad(b, (0, Np - oc)).reshape(1, Np)        # f32
    return wmat_p, bias_p


def _prep_linear(key, fan_in, fan_out, *, k_mult, n_mult, perm_chw=None):
    k1, k2 = jax.random.split(key)
    bound = 1.0 / math.sqrt(fan_in)
    w = _uniform(k1, (fan_in, fan_out), bound)              # rows: PyTorch NCHW flatten
    b = _uniform(k2, (fan_out,), bound)
    if perm_chw is not None:
        # Permute rows (C,H,W)-flatten -> (H,W,C)-flatten so NHWC activations
        # reproduce the PyTorch NCHW-flatten semantics exactly.
        C, H, W = perm_chw
        w = w.reshape(C, H, W, fan_out).transpose(1, 2, 0, 3).reshape(fan_in, fan_out)
    Kp = _round_up(fan_in, k_mult)
    Np = _round_up(fan_out, n_mult)
    w_p = jnp.pad(w, ((0, Kp - fan_in), (0, Np - fan_out))).astype(jnp.bfloat16)
    b_p = jnp.pad(b, (0, Np - fan_out)).reshape(1, Np)      # f32
    return w_p, b_p


def _prep_head(key, dims, pool_chw):
    k1, k2, k3 = jax.random.split(key, 3)
    # First layer's K padded to a multiple of tk=1024 (used by output_head).
    w1_p, b1_p = _prep_linear(k1, dims[0], dims[1], k_mult=1024, n_mult=128,
                              perm_chw=pool_chw)
    w2_p, b2_p = _prep_linear(k2, dims[1], dims[2], k_mult=128, n_mult=128)
    w3_p, b3_p = _prep_linear(k3, dims[2], dims[3], k_mult=128, n_mult=128)
    return (w1_p, b1_p, w2_p, b2_p, w3_p, b3_p)


def init_params(seed=42):
    keys = jax.random.split(jax.random.PRNGKey(seed), 6)
    return {
        "conv1": _prep_conv(keys[0], 32, 3, 3, 3),
        "conv2": _prep_conv(keys[1], 64, 32, 3, 3),
        "conv3": _prep_conv(keys[2], 128, 64, 3, 3),
        # Output([D, 1024, 256, 10]); pool_chw = (C, H/2, W/2) of the conv output.
        "fc1": _prep_head(keys[3], [7200, 1024, 256, 10], (32, 15, 15)),
        "fc2": _prep_head(keys[4], [12544, 1024, 256, 10], (64, 14, 14)),
        "fc3": _prep_head(keys[5], [21632, 1024, 256, 10], (128, 13, 13)),
    }


# ----------------------------------------------------------------------------
# ShortCircuitNet.forward
# ----------------------------------------------------------------------------
def short_circuit_net_forward(params, x, log_confidence_level):
    x = jnp.transpose(x, (0, 2, 3, 1)).astype(jnp.bfloat16)   # NCHW in -> NHWC internal

    # --- layer 1 ---
    h1 = conv2d_relu_nhwc(x, *params["conv1"], kh=3, kw=3, oc=32)
    y1 = output_head(h1, params["fc1"])
    sc1 = jnp.max(y1[0]) >= log_confidence_level
    # TODO(synk): write_file.write('L1\n' ...) host logging omitted.

    def after_l1(_):
        # --- layer 2 ---
        h2 = conv2d_relu_nhwc(h1, *params["conv2"], kh=3, kw=3, oc=64)
        y2 = output_head(h2, params["fc2"])
        sc2 = jnp.max(y2[0]) >= log_confidence_level
        # TODO(synk): write_file.write('L2\n' ...) host logging omitted.

        def after_l2(_):
            # --- layer 3 ---
            h3 = conv2d_relu_nhwc(h2, *params["conv3"], kh=3, kw=3, oc=128)
            y3 = output_head(h3, params["fc3"])
            # TODO(synk): write_file.write('L3\n' ...) host logging omitted.
            return y3

        return lax.cond(sc2, lambda _: y2, after_l2, None)

    return lax.cond(sc1, lambda _: y1, after_l1, None)


# ----------------------------------------------------------------------------
if __name__ == "__main__":
    confidence_level = 0.5
    log_conf = math.log(confidence_level)

    params = init_params(seed=42)

    # Input: CIFAR-like 3x32x32 (fixed by the Output head dims), small batch.
    x = jax.random.normal(jax.random.PRNGKey(0), (2, 3, 32, 32), dtype=jnp.float32)

    fwd = jax.jit(functools.partial(short_circuit_net_forward,
                                    log_confidence_level=log_conf))
    y = fwd(params, x)
    jax.block_until_ready(y)

    assert y.shape == (2, 10) and y.dtype == jnp.float32
    assert bool(jnp.all(jnp.isfinite(y)))
    print("KERNEL_OK")
</pallas_src>

<mosaic_0001>
module attributes {stable_mosaic.version = 11 : i64} {
  func.func @_mm_bias_single_k_kernel(%arg0: i32, %arg1: i32, %arg2: memref<256x128xbf16, #tpu.memory_space<vmem>>, %arg3: memref<128x128xbf16, #tpu.memory_space<vmem>>, %arg4: memref<1x128xf32, #tpu.memory_space<vmem>>, %arg5: memref<256x128xbf16, #tpu.memory_space<vmem>>) attributes {dimension_semantics = [#tpu.dimension_semantics<parallel>, #tpu.dimension_semantics<parallel>], iteration_bounds = array<i64: 8, 1>, scalar_prefetch = 0 : i64, scratch_operands = 0 : i64, tpu.core_type = #tpu.core_type<tc>, window_params = [{transform_indices = @transform_0, window_bounds = array<i64: 256, 128>}, {transform_indices = @transform_1, window_bounds = array<i64: 128, 128>}, {transform_indices = @transform_2, window_bounds = array<i64: 1, 128>}, {transform_indices = @transform_3, window_bounds = array<i64: 256, 128>}]} {
    %c0 = arith.constant 0 : index
    %c0_0 = arith.constant 0 : index
    %0 = vector.load %arg2[%c0, %c0_0] : memref<256x128xbf16, #tpu.memory_space<vmem>>, vector<256x128xbf16>
    %c0_1 = arith.constant 0 : index
    %c0_2 = arith.constant 0 : index
    %1 = vector.load %arg3[%c0_1, %c0_2] : memref<128x128xbf16, #tpu.memory_space<vmem>>, vector<128x128xbf16>
    %cst = arith.constant dense<0.000000e+00> : vector<256x128xf32>
    %2 = tpu.matmul %0, %1, %cst {dimension_numbers = #tpu.dot_dimension_numbers<[1], [0], [0], [1], [0, 0, 1, 1], [], []>} : vector<256x128xbf16>, vector<128x128xbf16>, vector<256x128xf32> -> vector<256x128xf32>
    %c0_3 = arith.constant 0 : index
    %c0_4 = arith.constant 0 : index
    %3 = vector.load %arg4[%c0_3, %c0_4] : memref<1x128xf32, #tpu.memory_space<vmem>>, vector<1x128xf32>
    %4 = vector.broadcast %3 : vector<1x128xf32> to vector<256x128xf32>
    %5 = arith.addf %2, %4 : vector<256x128xf32>
    %cst_5 = arith.constant 0.000000e+00 : f32
    %6 = vector.broadcast %cst_5 : f32 to vector<256x128xf32>
    %7 = arith.maximumf %5, %6 : vector<256x128xf32>
    %8 = arith.truncf %7 : vector<256x128xf32> to vector<256x128xbf16>
    %c0_6 = arith.constant 0 : index
    %c0_7 = arith.constant 0 : index
    %9 = vector.load %arg5[%c0_6, %c0_7] : memref<256x128xbf16, #tpu.memory_space<vmem>>, vector<256x128xbf16>
    tpu.vector_store %arg5[%c0_6, %c0_7], %8 {strides = array<i32>} : memref<256x128xbf16, #tpu.memory_space<vmem>>, vector<256x128xbf16>,
    return
  }
  func.func @transform_0(%arg0: i32, %arg1: i32) -> (i32, i32) {
    %c0_i32 = arith.constant 0 : i32
    %c0_i32_0 = arith.constant 0 : i32
    return %arg0, %c0_i32 : i32, i32
  }
  func.func @transform_1(%arg0: i32, %arg1: i32) -> (i32, i32) {
    %c0_i32 = arith.constant 0 : i32
    %c0_i32_0 = arith.constant 0 : i32
    return %c0_i32, %arg1 : i32, i32
  }
  func.func @transform_2(%arg0: i32, %arg1: i32) -> (i32, i32) {
    %c0_i32 = arith.constant 0 : i32
    %c0_i32_0 = arith.constant 0 : i32
    return %c0_i32, %arg1 : i32, i32
  }
  func.func @transform_3(%arg0: i32, %arg1: i32) -> (i32, i32) {
    %c0_i32 = arith.constant 0 : i32
    return %arg0, %arg1 : i32, i32
  }
}

module attributes {stable_mosaic.version = 11 : i64} {
  func.func @_mm_bias_multi_k_kernel(%arg0: i32, %arg1: i32, %arg2: i32, %arg3: memref<16x1024xbf16, #tpu.memory_space<vmem>>, %arg4: memref<1024x512xbf16, #tpu.memory_space<vmem>>, %arg5: memref<1x512xf32, #tpu.memory_space<vmem>>, %arg6: memref<16x512xbf16, #tpu.memory_space<vmem>>, %arg7: memref<16x512xf32, #tpu.memory_space<vmem>>) attributes {dimension_semantics = [#tpu.dimension_semantics<parallel>, #tpu.dimension_semantics<parallel>, #tpu.dimension_semantics<arbitrary>], iteration_bounds = array<i64: 1, 2, 8>, scalar_prefetch = 0 : i64, scratch_operands = 1 : i64, tpu.core_type = #tpu.core_type<tc>, window_params = [{transform_indices = @transform_0, window_bounds = array<i64: 16, 1024>}, {transform_indices = @transform_1, window_bounds = array<i64: 1024, 512>}, {transform_indices = @transform_2, window_bounds = array<i64: 1, 512>}, {transform_indices = @transform_3, window_bounds = array<i64: 16, 512>}]} {
    %c0_i32 = arith.constant 0 : i32
    %0 = arith.cmpi eq, %arg2, %c0_i32 : i32
    %1 = arith.extui %0 : i1 to i32
    %c0_i32_0 = arith.constant 0 : i32
    %2 = arith.cmpi ne, %1, %c0_i32_0 : i32
    scf.if %2 {
      %cst_9 = arith.constant 0.000000e+00 : f32
      %12 = vector.broadcast %cst_9 : f32 to vector<16x512xf32>
      %c0_10 = arith.constant 0 : index
      %c0_11 = arith.constant 0 : index
      %13 = vector.load %arg7[%c0_10, %c0_11] : memref<16x512xf32, #tpu.memory_space<vmem>>, vector<16x512xf32>
      tpu.vector_store %arg7[%c0_10, %c0_11], %12 {strides = array<i32>} : memref<16x512xf32, #tpu.memory_space<vmem>>, vector<16x512xf32>,
    } else {
    }
    %c0 = arith.constant 0 : index
    %c0_1 = arith.constant 0 : index
    %3 = vector.load %arg7[%c0, %c0_1] : memref<16x512xf32, #tpu.memory_space<vmem>>, vector<16x512xf32>
    %c0_2 = arith.constant 0 : index
    %c0_3 = arith.constant 0 : index
    %4 = vector.load %arg3[%c0_2, %c0_3] : memref<16x1024xbf16, #tpu.memory_space<vmem>>, vector<16x1024xbf16>
    %c0_4 = arith.constant 0 : index
    %c0_5 = arith.constant 0 : index
    %5 = vector.load %arg4[%c0_4, %c0_5] : memref<1024x512xbf16, #tpu.memory_space<vmem>>, vector<1024x512xbf16>
    %cst = arith.constant dense<0.000000e+00> : vector<16x512xf32>
    %6 = tpu.matmul %4, %5, %cst {dimension_numbers = #tpu.dot_dimension_numbers<[1], [0], [0], [1], [0, 0, 1, 1], [], []>} : vector<16x1024xbf16>, vector<1024x512xbf16>, vector<16x512xf32> -> vector<16x512xf32>
    %7 = arith.addf %3, %6 : vector<16x512xf32>
    %c0_6 = arith.constant 0 : index
    %c0_7 = arith.constant 0 : index
    %8 = vector.load %arg7[%c0_6, %c0_7] : memref<16x512xf32, #tpu.memory_space<vmem>>, vector<16x512xf32>
    tpu.vector_store %arg7[%c0_6, %c0_7], %7 {strides = array<i32>} : memref<16x512xf32, #tpu.memory_space<vmem>>, vector<16x512xf32>,
    %c7_i32 = arith.constant 7 : i32
    %9 = arith.cmpi eq, %arg2, %c7_i32 : i32
    %10 = arith.extui %9 : i1 to i32
    %c0_i32_8 = arith.constant 0 : i32
    %11 = arith.cmpi ne, %10, %c0_i32_8 : i32
    scf.if %11 {
      %c0_9 = arith.constant 0 : index
      %c0_10 = arith.constant 0 : index
      %12 = vector.load %arg7[%c0_9, %c0_10] : memref<16x512xf32, #tpu.memory_space<vmem>>, vector<16x512xf32>
      %c0_11 = arith.constant 0 : index
      %c0_12 = arith.constant 0 : index
      %13 = vector.load %arg5[%c0_11, %c0_12] : memref<1x512xf32, #tpu.memory_space<vmem>>, vector<1x512xf32>
      %14 = vector.broadcast %13 : vector<1x512xf32> to vector<16x512xf32>
      %15 = arith.addf %12, %14 : vector<16x512xf32>
      %cst_13 = arith.constant 0.000000e+00 : f32
      %16 = vector.broadcast %cst_13 : f32 to vector<16x512xf32>
      %17 = arith.maximumf %15, %16 : vector<16x512xf32>
      %18 = arith.truncf %17 : vector<16x512xf32> to vector<16x512xbf16>
      %c0_14 = arith.constant 0 : index
      %c0_15 = arith.constant 0 : index
      %19 = vector.load %arg6[%c0_14, %c0_15] : memref<16x512xbf16, #tpu.memory_space<vmem>>, vector<16x512xbf16>
      tpu.vector_store %arg6[%c0_14, %c0_15], %18 {strides = array<i32>} : memref<16x512xbf16, #tpu.memory_space<vmem>>, vector<16x512xbf16>,
    } else {
    }
    return
  }
  func.func @transform_0(%arg0: i32, %arg1: i32, %arg2: i32) -> (i32, i32) {
    %c0_i32 = arith.constant 0 : i32
    return %arg0, %arg2 : i32, i32
  }
  func.func @transform_1(%arg0: i32, %arg1: i32, %arg2: i32) -> (i32, i32) {
    %c0_i32 = arith.constant 0 : i32
    return %arg2, %arg1 : i32, i32
  }
  func.func @transform_2(%arg0: i32, %arg1: i32, %arg2: i32) -> (i32, i32) {
    %c0_i32 = arith.constant 0 : i32
    %c0_i32_0 = arith.constant 0 : i32
    return %c0_i32, %arg1 : i32, i32
  }
  func.func @transform_3(%arg0: i32, %arg1: i32, %arg2: i32) -> (i32, i32) {
    %c0_i32 = arith.constant 0 : i32
    return %arg0, %arg1 : i32, i32
  }
}

module attributes {stable_mosaic.version = 11 : i64} {
  func.func @_head_tail_kernel(%arg0: i32, %arg1: memref<16x1024xbf16, #tpu.memory_space<vmem>>, %arg2: memref<1024x256xbf16, #tpu.memory_space<vmem>>, %arg3: memref<1x256xf32, #tpu.memory_space<vmem>>, %arg4: memref<256x128xbf16, #tpu.memory_space<vmem>>, %arg5: memref<1x128xf32, #tpu.memory_space<vmem>>, %arg6: memref<16x128xf32, #tpu.memory_space<vmem>>) attributes {dimension_semantics = [#tpu.dimension_semantics<arbitrary>], iteration_bounds = array<i64: 1>, scalar_prefetch = 0 : i64, scratch_operands = 0 : i64, tpu.core_type = #tpu.core_type<tc>, window_params = [{pipeline_mode = #tpu.pipeline_mode<synchronous>, transform_indices = @transform_0, window_bounds = array<i64: 16, 1024>}, {pipeline_mode = #tpu.pipeline_mode<synchronous>, transform_indices = @transform_1, window_bounds = array<i64: 1024, 256>}, {pipeline_mode = #tpu.pipeline_mode<synchronous>, transform_indices = @transform_2, window_bounds = array<i64: 1, 256>}, {pipeline_mode = #tpu.pipeline_mode<synchronous>, transform_indices = @transform_3, window_bounds = array<i64: 256, 128>}, {pipeline_mode = #tpu.pipeline_mode<synchronous>, transform_indices = @transform_4, window_bounds = array<i64: 1, 128>}, {pipeline_mode = #tpu.pipeline_mode<synchronous>, transform_indices = @transform_5, window_bounds = array<i64: 16, 128>}]} {
    %c0 = arith.constant 0 : index
    %c0_0 = arith.constant 0 : index
    %0 = vector.load %arg1[%c0, %c0_0] : memref<16x1024xbf16, #tpu.memory_space<vmem>>, vector<16x1024xbf16>
    %c0_1 = arith.constant 0 : index
    %c0_2 = arith.constant 0 : index
    %1 = vector.load %arg2[%c0_1, %c0_2] : memref<1024x256xbf16, #tpu.memory_space<vmem>>, vector<1024x256xbf16>
    %cst = arith.constant dense<0.000000e+00> : vector<16x256xf32>
    %2 = tpu.matmul %0, %1, %cst {dimension_numbers = #tpu.dot_dimension_numbers<[1], [0], [0], [1], [0, 0, 1, 1], [], []>} : vector<16x1024xbf16>, vector<1024x256xbf16>, vector<16x256xf32> -> vector<16x256xf32>
    %c0_3 = arith.constant 0 : index
    %c0_4 = arith.constant 0 : index
    %3 = vector.load %arg3[%c0_3, %c0_4] : memref<1x256xf32, #tpu.memory_space<vmem>>, vector<1x256xf32>
    %4 = vector.broadcast %3 : vector<1x256xf32> to vector<16x256xf32>
    %5 = arith.addf %2, %4 : vector<16x256xf32>
    %cst_5 = arith.constant 0.000000e+00 : f32
    %6 = vector.broadcast %cst_5 : f32 to vector<16x256xf32>
    %7 = arith.maximumf %5, %6 : vector<16x256xf32>
    %8 = arith.truncf %7 : vector<16x256xf32> to vector<16x256xbf16>
    %c0_6 = arith.constant 0 : index
    %c0_7 = arith.constant 0 : index
    %9 = vector.load %arg4[%c0_6, %c0_7] : memref<256x128xbf16, #tpu.memory_space<vmem>>, vector<256x128xbf16>
    %cst_8 = arith.constant dense<0.000000e+00> : vector<16x128xf32>
    %10 = tpu.matmul %8, %9, %cst_8 {dimension_numbers = #tpu.dot_dimension_numbers<[1], [0], [0], [1], [0, 0, 1, 1], [], []>} : vector<16x256xbf16>, vector<256x128xbf16>, vector<16x128xf32> -> vector<16x128xf32>
    %c0_9 = arith.constant 0 : index
    %c0_10 = arith.constant 0 : index
    %11 = vector.load %arg5[%c0_9, %c0_10] : memref<1x128xf32, #tpu.memory_space<vmem>>, vector<1x128xf32>
    %12 = vector.broadcast %11 : vector<1x128xf32> to vector<16x128xf32>
    %13 = arith.addf %10, %12 : vector<16x128xf32>
    %c0_11 = arith.constant 0 : index
    %c0_12 = arith.constant 0 : index
    %14 = vector.load %arg6[%c0_11, %c0_12] : memref<16x128xf32, #tpu.memory_space<vmem>>, vector<16x128xf32>
    tpu.vector_store %arg6[%c0_11, %c0_12], %13 {strides = array<i32>} : memref<16x128xf32, #tpu.memory_space<vmem>>, vector<16x128xf32>,
    return
  }
  func.func @transform_0(%arg0: i32) -> (i32, i32) {
    %c0_i32 = arith.constant 0 : i32
    %c0_i32_0 = arith.constant 0 : i32
    %c0_i32_1 = arith.constant 0 : i32
    return %c0_i32, %c0_i32_0 : i32, i32
  }
  func.func @transform_1(%arg0: i32) -> (i32, i32) {
    %c0_i32 = arith.constant 0 : i32
    %c0_i32_0 = arith.constant 0 : i32
    %c0_i32_1 = arith.constant 0 : i32
    return %c0_i32, %c0_i32_0 : i32, i32
  }
  func.func @transform_2(%arg0: i32) -> (i32, i32) {
    %c0_i32 = arith.constant 0 : i32
    %c0_i32_0 = arith.constant 0 : i32
    %c0_i32_1 = arith.constant 0 : i32
    return %c0_i32, %c0_i32_0 : i32, i32
  }
  func.func @transform_3(%arg0: i32) -> (i32, i32) {
    %c0_i32 = arith.constant 0 : i32
    %c0_i32_0 = arith.constant 0 : i32
    %c0_i32_1 = arith.constant 0 : i32
    return %c0_i32, %c0_i32_0 : i32, i32
  }
  func.func @transform_4(%arg0: i32) -> (i32, i32) {
    %c0_i32 = arith.constant 0 : i32
    %c0_i32_0 = arith.constant 0 : i32
    %c0_i32_1 = arith.constant 0 : i32
    return %c0_i32, %c0_i32_0 : i32, i32
  }
  func.func @transform_5(%arg0: i32) -> (i32, i32) {
    %c0_i32 = arith.constant 0 : i32
    %c0_i32_0 = arith.constant 0 : i32
    %c0_i32_1 = arith.constant 0 : i32
    return %c0_i32, %c0_i32_0 : i32, i32
  }
}

module attributes {stable_mosaic.version = 11 : i64} {
  func.func @_mm_bias_single_k_kernel(%arg0: i32, %arg1: i32, %arg2: memref<256x384xbf16, #tpu.memory_space<vmem>>, %arg3: memref<384x128xbf16, #tpu.memory_space<vmem>>, %arg4: memref<1x128xf32, #tpu.memory_space<vmem>>, %arg5: memref<256x128xbf16, #tpu.memory_space<vmem>>) attributes {dimension_semantics = [#tpu.dimension_semantics<parallel>, #tpu.dimension_semantics<parallel>], iteration_bounds = array<i64: 7, 1>, scalar_prefetch = 0 : i64, scratch_operands = 0 : i64, tpu.core_type = #tpu.core_type<tc>, window_params = [{transform_indices = @transform_0, window_bounds = array<i64: 256, 384>}, {transform_indices = @transform_1, window_bounds = array<i64: 384, 128>}, {transform_indices = @transform_2, window_bounds = array<i64: 1, 128>}, {transform_indices = @transform_3, window_bounds = array<i64: 256, 128>}]} {
    %c0 = arith.constant 0 : index
    %c0_0 = arith.constant 0 : index
    %0 = vector.load %arg2[%c0, %c0_0] : memref<256x384xbf16, #tpu.memory_space<vmem>>, vector<256x384xbf16>
    %c0_1 = arith.constant 0 : index
    %c0_2 = arith.constant 0 : index
    %1 = vector.load %arg3[%c0_1, %c0_2] : memref<384x128xbf16, #tpu.memory_space<vmem>>, vector<384x128xbf16>
    %cst = arith.constant dense<0.000000e+00> : vector<256x128xf32>
    %2 = tpu.matmul %0, %1, %cst {dimension_numbers = #tpu.dot_dimension_numbers<[1], [0], [0], [1], [0, 0, 1, 1], [], []>} : vector<256x384xbf16>, vector<384x128xbf16>, vector<256x128xf32> -> vector<256x128xf32>
    %c0_3 = arith.constant 0 : index
    %c0_4 = arith.constant 0 : index
    %3 = vector.load %arg4[%c0_3, %c0_4] : memref<1x128xf32, #tpu.memory_space<vmem>>, vector<1x128xf32>
    %4 = vector.broadcast %3 : vector<1x128xf32> to vector<256x128xf32>
    %5 = arith.addf %2, %4 : vector<256x128xf32>
    %cst_5 = arith.constant 0.000000e+00 : f32
    %6 = vector.broadcast %cst_5 : f32 to vector<256x128xf32>
    %7 = arith.maximumf %5, %6 : vector<256x128xf32>
    %8 = arith.truncf %7 : vector<256x128xf32> to vector<256x128xbf16>
    %c0_6 = arith.constant 0 : index
    %c0_7 = arith.constant 0 : index
    %9 = vector.load %arg5[%c0_6, %c0_7] : memref<256x128xbf16, #tpu.memory_space<vmem>>, vector<256x128xbf16>
    tpu.vector_store %arg5[%c0_6, %c0_7], %8 {strides = array<i32>} : memref<256x128xbf16, #tpu.memory_space<vmem>>, vector<256x128xbf16>,
    return
  }
  func.func @transform_0(%arg0: i32, %arg1: i32) -> (i32, i32) {
    %c0_i32 = arith.constant 0 : i32
    %c0_i32_0 = arith.constant 0 : i32
    return %arg0, %c0_i32 : i32, i32
  }
  func.func @transform_1(%arg0: i32, %arg1: i32) -> (i32, i32) {
    %c0_i32 = arith.constant 0 : i32
    %c0_i32_0 = arith.constant 0 : i32
    return %c0_i32, %arg1 : i32, i32
  }
  func.func @transform_2(%arg0: i32, %arg1: i32) -> (i32, i32) {
    %c0_i32 = arith.constant 0 : i32
    %c0_i32_0 = arith.constant 0 : i32
    return %c0_i32, %arg1 : i32, i32
  }
  func.func @transform_3(%arg0: i32, %arg1: i32) -> (i32, i32) {
    %c0_i32 = arith.constant 0 : i32
    return %arg0, %arg1 : i32, i32
  }
}

module attributes {stable_mosaic.version = 11 : i64} {
  func.func @_mm_bias_multi_k_kernel(%arg0: i32, %arg1: i32, %arg2: i32, %arg3: memref<16x1024xbf16, #tpu.memory_space<vmem>>, %arg4: memref<1024x512xbf16, #tpu.memory_space<vmem>>, %arg5: memref<1x512xf32, #tpu.memory_space<vmem>>, %arg6: memref<16x512xbf16, #tpu.memory_space<vmem>>, %arg7: memref<16x512xf32, #tpu.memory_space<vmem>>) attributes {dimension_semantics = [#tpu.dimension_semantics<parallel>, #tpu.dimension_semantics<parallel>, #tpu.dimension_semantics<arbitrary>], iteration_bounds = array<i64: 1, 2, 13>, scalar_prefetch = 0 : i64, scratch_operands = 1 : i64, tpu.core_type = #tpu.core_type<tc>, window_params = [{transform_indices = @transform_0, window_bounds = array<i64: 16, 1024>}, {transform_indices = @transform_1, window_bounds = array<i64: 1024, 512>}, {transform_indices = @transform_2, window_bounds = array<i64: 1, 512>}, {transform_indices = @transform_3, window_bounds = array<i64: 16, 512>}]} {
    %c0_i32 = arith.constant 0 : i32
    %0 = arith.cmpi eq, %arg2, %c0_i32 : i32
    %1 = arith.extui %0 : i1 to i32
    %c0_i32_0 = arith.constant 0 : i32
    %2 = arith.cmpi ne, %1, %c0_i32_0 : i32
    scf.if %2 {
      %cst_9 = arith.constant 0.000000e+00 : f32
      %12 = vector.broadcast %cst_9 : f32 to vector<16x512xf32>
      %c0_10 = arith.constant 0 : index
      %c0_11 = arith.constant 0 : index
      %13 = vector.load %arg7[%c0_10, %c0_11] : memref<16x512xf32, #tpu.memory_space<vmem>>, vector<16x512xf32>
      tpu.vector_store %arg7[%c0_10, %c0_11], %12 {strides = array<i32>} : memref<16x512xf32, #tpu.memory_space<vmem>>, vector<16x512xf32>,
    } else {
    }
    %c0 = arith.constant 0 : index
    %c0_1 = arith.constant 0 : index
    %3 = vector.load %arg7[%c0, %c0_1] : memref<16x512xf32, #tpu.memory_space<vmem>>, vector<16x512xf32>
    %c0_2 = arith.constant 0 : index
    %c0_3 = arith.constant 0 : index
    %4 = vector.load %arg3[%c0_2, %c0_3] : memref<16x1024xbf16, #tpu.memory_space<vmem>>, vector<16x1024xbf16>
    %c0_4 = arith.constant 0 : index
    %c0_5 = arith.constant 0 : index
    %5 = vector.load %arg4[%c0_4, %c0_5] : memref<1024x512xbf16, #tpu.memory_space<vmem>>, vector<1024x512xbf16>
    %cst = arith.constant dense<0.000000e+00> : vector<16x512xf32>
    %6 = tpu.matmul %4, %5, %cst {dimension_numbers = #tpu.dot_dimension_numbers<[1], [0], [0], [1], [0, 0, 1, 1], [], []>} : vector<16x1024xbf16>, vector<1024x512xbf16>, vector<16x512xf32> -> vector<16x512xf32>
    %7 = arith.addf %3, %6 : vector<16x512xf32>
    %c0_6 = arith.constant 0 : index
    %c0_7 = arith.constant 0 : index
    %8 = vector.load %arg7[%c0_6, %c0_7] : memref<16x512xf32, #tpu.memory_space<vmem>>, vector<16x512xf32>
    tpu.vector_store %arg7[%c0_6, %c0_7], %7 {strides = array<i32>} : memref<16x512xf32, #tpu.memory_space<vmem>>, vector<16x512xf32>,
    %c12_i32 = arith.constant 12 : i32
    %9 = arith.cmpi eq, %arg2, %c12_i32 : i32
    %10 = arith.extui %9 : i1 to i32
    %c0_i32_8 = arith.constant 0 : i32
    %11 = arith.cmpi ne, %10, %c0_i32_8 : i32
    scf.if %11 {
      %c0_9 = arith.constant 0 : index
      %c0_10 = arith.constant 0 : index
      %12 = vector.load %arg7[%c0_9, %c0_10] : memref<16x512xf32, #tpu.memory_space<vmem>>, vector<16x512xf32>
      %c0_11 = arith.constant 0 : index
      %c0_12 = arith.constant 0 : index
      %13 = vector.load %arg5[%c0_11, %c0_12] : memref<1x512xf32, #tpu.memory_space<vmem>>, vector<1x512xf32>
      %14 = vector.broadcast %13 : vector<1x512xf32> to vector<16x512xf32>
      %15 = arith.addf %12, %14 : vector<16x512xf32>
      %cst_13 = arith.constant 0.000000e+00 : f32
      %16 = vector.broadcast %cst_13 : f32 to vector<16x512xf32>
      %17 = arith.maximumf %15, %16 : vector<16x512xf32>
      %18 = arith.truncf %17 : vector<16x512xf32> to vector<16x512xbf16>
      %c0_14 = arith.constant 0 : index
      %c0_15 = arith.constant 0 : index
      %19 = vector.load %arg6[%c0_14, %c0_15] : memref<16x512xbf16, #tpu.memory_space<vmem>>, vector<16x512xbf16>
      tpu.vector_store %arg6[%c0_14, %c0_15], %18 {strides = array<i32>} : memref<16x512xbf16, #tpu.memory_space<vmem>>, vector<16x512xbf16>,
    } else {
    }
    return
  }
  func.func @transform_0(%arg0: i32, %arg1: i32, %arg2: i32) -> (i32, i32) {
    %c0_i32 = arith.constant 0 : i32
    return %arg0, %arg2 : i32, i32
  }
  func.func @transform_1(%arg0: i32, %arg1: i32, %arg2: i32) -> (i32, i32) {
    %c0_i32 = arith.constant 0 : i32
    return %arg2, %arg1 : i32, i32
  }
  func.func @transform_2(%arg0: i32, %arg1: i32, %arg2: i32) -> (i32, i32) {
    %c0_i32 = arith.constant 0 : i32
    %c0_i32_0 = arith.constant 0 : i32
    return %c0_i32, %arg1 : i32, i32
  }
  func.func @transform_3(%arg0: i32, %arg1: i32, %arg2: i32) -> (i32, i32) {
    %c0_i32 = arith.constant 0 : i32
    return %arg0, %arg1 : i32, i32
  }
}

module attributes {stable_mosaic.version = 11 : i64} {
  func.func @_mm_bias_single_k_kernel(%arg0: i32, %arg1: i32, %arg2: memref<256x640xbf16, #tpu.memory_space<vmem>>, %arg3: memref<640x128xbf16, #tpu.memory_space<vmem>>, %arg4: memref<1x128xf32, #tpu.memory_space<vmem>>, %arg5: memref<256x128xbf16, #tpu.memory_space<vmem>>) attributes {dimension_semantics = [#tpu.dimension_semantics<parallel>, #tpu.dimension_semantics<parallel>], iteration_bounds = array<i64: 6, 1>, scalar_prefetch = 0 : i64, scratch_operands = 0 : i64, tpu.core_type = #tpu.core_type<tc>, window_params = [{transform_indices = @transform_0, window_bounds = array<i64: 256, 640>}, {transform_indices = @transform_1, window_bounds = array<i64: 640, 128>}, {transform_indices = @transform_2, window_bounds = array<i64: 1, 128>}, {transform_indices = @transform_3, window_bounds = array<i64: 256, 128>}]} {
    %c0 = arith.constant 0 : index
    %c0_0 = arith.constant 0 : index
    %0 = vector.load %arg2[%c0, %c0_0] : memref<256x640xbf16, #tpu.memory_space<vmem>>, vector<256x640xbf16>
    %c0_1 = arith.constant 0 : index
    %c0_2 = arith.constant 0 : index
    %1 = vector.load %arg3[%c0_1, %c0_2] : memref<640x128xbf16, #tpu.memory_space<vmem>>, vector<640x128xbf16>
    %cst = arith.constant dense<0.000000e+00> : vector<256x128xf32>
    %2 = tpu.matmul %0, %1, %cst {dimension_numbers = #tpu.dot_dimension_numbers<[1], [0], [0], [1], [0, 0, 1, 1], [], []>} : vector<256x640xbf16>, vector<640x128xbf16>, vector<256x128xf32> -> vector<256x128xf32>
    %c0_3 = arith.constant 0 : index
    %c0_4 = arith.constant 0 : index
    %3 = vector.load %arg4[%c0_3, %c0_4] : memref<1x128xf32, #tpu.memory_space<vmem>>, vector<1x128xf32>
    %4 = vector.broadcast %3 : vector<1x128xf32> to vector<256x128xf32>
    %5 = arith.addf %2, %4 : vector<256x128xf32>
    %cst_5 = arith.constant 0.000000e+00 : f32
    %6 = vector.broadcast %cst_5 : f32 to vector<256x128xf32>
    %7 = arith.maximumf %5, %6 : vector<256x128xf32>
    %8 = arith.truncf %7 : vector<256x128xf32> to vector<256x128xbf16>
    %c0_6 = arith.constant 0 : index
    %c0_7 = arith.constant 0 : index
    %9 = vector.load %arg5[%c0_6, %c0_7] : memref<256x128xbf16, #tpu.memory_space<vmem>>, vector<256x128xbf16>
    tpu.vector_store %arg5[%c0_6, %c0_7], %8 {strides = array<i32>} : memref<256x128xbf16, #tpu.memory_space<vmem>>, vector<256x128xbf16>,
    return
  }
  func.func @transform_0(%arg0: i32, %arg1: i32) -> (i32, i32) {
    %c0_i32 = arith.constant 0 : i32
    %c0_i32_0 = arith.constant 0 : i32
    return %arg0, %c0_i32 : i32, i32
  }
  func.func @transform_1(%arg0: i32, %arg1: i32) -> (i32, i32) {
    %c0_i32 = arith.constant 0 : i32
    %c0_i32_0 = arith.constant 0 : i32
    return %c0_i32, %arg1 : i32, i32
  }
  func.func @transform_2(%arg0: i32, %arg1: i32) -> (i32, i32) {
    %c0_i32 = arith.constant 0 : i32
    %c0_i32_0 = arith.constant 0 : i32
    return %c0_i32, %arg1 : i32, i32
  }
  func.func @transform_3(%arg0: i32, %arg1: i32) -> (i32, i32) {
    %c0_i32 = arith.constant 0 : i32
    return %arg0, %arg1 : i32, i32
  }
}

module attributes {stable_mosaic.version = 11 : i64} {
  func.func @_mm_bias_multi_k_kernel(%arg0: i32, %arg1: i32, %arg2: i32, %arg3: memref<16x1024xbf16, #tpu.memory_space<vmem>>, %arg4: memref<1024x512xbf16, #tpu.memory_space<vmem>>, %arg5: memref<1x512xf32, #tpu.memory_space<vmem>>, %arg6: memref<16x512xbf16, #tpu.memory_space<vmem>>, %arg7: memref<16x512xf32, #tpu.memory_space<vmem>>) attributes {dimension_semantics = [#tpu.dimension_semantics<parallel>, #tpu.dimension_semantics<parallel>, #tpu.dimension_semantics<arbitrary>], iteration_bounds = array<i64: 1, 2, 22>, scalar_prefetch = 0 : i64, scratch_operands = 1 : i64, tpu.core_type = #tpu.core_type<tc>, window_params = [{transform_indices = @transform_0, window_bounds = array<i64: 16, 1024>}, {transform_indices = @transform_1, window_bounds = array<i64: 1024, 512>}, {transform_indices = @transform_2, window_bounds = array<i64: 1, 512>}, {transform_indices = @transform_3, window_bounds = array<i64: 16, 512>}]} {
    %c0_i32 = arith.constant 0 : i32
    %0 = arith.cmpi eq, %arg2, %c0_i32 : i32
    %1 = arith.extui %0 : i1 to i32
    %c0_i32_0 = arith.constant 0 : i32
    %2 = arith.cmpi ne, %1, %c0_i32_0 : i32
    scf.if %2 {
      %cst_9 = arith.constant 0.000000e+00 : f32
      %12 = vector.broadcast %cst_9 : f32 to vector<16x512xf32>
      %c0_10 = arith.constant 0 : index
      %c0_11 = arith.constant 0 : index
      %13 = vector.load %arg7[%c0_10, %c0_11] : memref<16x512xf32, #tpu.memory_space<vmem>>, vector<16x512xf32>
      tpu.vector_store %arg7[%c0_10, %c0_11], %12 {strides = array<i32>} : memref<16x512xf32, #tpu.memory_space<vmem>>, vector<16x512xf32>,
    } else {
    }
    %c0 = arith.constant 0 : index
    %c0_1 = arith.constant 0 : index
    %3 = vector.load %arg7[%c0, %c0_1] : memref<16x512xf32, #tpu.memory_space<vmem>>, vector<16x512xf32>
    %c0_2 = arith.constant 0 : index
    %c0_3 = arith.constant 0 : index
    %4 = vector.load %arg3[%c0_2, %c0_3] : memref<16x1024xbf16, #tpu.memory_space<vmem>>, vector<16x1024xbf16>
    %c0_4 = arith.constant 0 : index
    %c0_5 = arith.constant 0 : index
    %5 = vector.load %arg4[%c0_4, %c0_5] : memref<1024x512xbf16, #tpu.memory_space<vmem>>, vector<1024x512xbf16>
    %cst = arith.constant dense<0.000000e+00> : vector<16x512xf32>
    %6 = tpu.matmul %4, %5, %cst {dimension_numbers = #tpu.dot_dimension_numbers<[1], [0], [0], [1], [0, 0, 1, 1], [], []>} : vector<16x1024xbf16>, vector<1024x512xbf16>, vector<16x512xf32> -> vector<16x512xf32>
    %7 = arith.addf %3, %6 : vector<16x512xf32>
    %c0_6 = arith.constant 0 : index
    %c0_7 = arith.constant 0 : index
    %8 = vector.load %arg7[%c0_6, %c0_7] : memref<16x512xf32, #tpu.memory_space<vmem>>, vector<16x512xf32>
    tpu.vector_store %arg7[%c0_6, %c0_7], %7 {strides = array<i32>} : memref<16x512xf32, #tpu.memory_space<vmem>>, vector<16x512xf32>,
    %c21_i32 = arith.constant 21 : i32
    %9 = arith.cmpi eq, %arg2, %c21_i32 : i32
    %10 = arith.extui %9 : i1 to i32
    %c0_i32_8 = arith.constant 0 : i32
    %11 = arith.cmpi ne, %10, %c0_i32_8 : i32
    scf.if %11 {
      %c0_9 = arith.constant 0 : index
      %c0_10 = arith.constant 0 : index
      %12 = vector.load %arg7[%c0_9, %c0_10] : memref<16x512xf32, #tpu.memory_space<vmem>>, vector<16x512xf32>
      %c0_11 = arith.constant 0 : index
      %c0_12 = arith.constant 0 : index
      %13 = vector.load %arg5[%c0_11, %c0_12] : memref<1x512xf32, #tpu.memory_space<vmem>>, vector<1x512xf32>
      %14 = vector.broadcast %13 : vector<1x512xf32> to vector<16x512xf32>
      %15 = arith.addf %12, %14 : vector<16x512xf32>
      %cst_13 = arith.constant 0.000000e+00 : f32
      %16 = vector.broadcast %cst_13 : f32 to vector<16x512xf32>
      %17 = arith.maximumf %15, %16 : vector<16x512xf32>
      %18 = arith.truncf %17 : vector<16x512xf32> to vector<16x512xbf16>
      %c0_14 = arith.constant 0 : index
      %c0_15 = arith.constant 0 : index
      %19 = vector.load %arg6[%c0_14, %c0_15] : memref<16x512xbf16, #tpu.memory_space<vmem>>, vector<16x512xbf16>
      tpu.vector_store %arg6[%c0_14, %c0_15], %18 {strides = array<i32>} : memref<16x512xbf16, #tpu.memory_space<vmem>>, vector<16x512xbf16>,
    } else {
    }
    return
  }
  func.func @transform_0(%arg0: i32, %arg1: i32, %arg2: i32) -> (i32, i32) {
    %c0_i32 = arith.constant 0 : i32
    return %arg0, %arg2 : i32, i32
  }
  func.func @transform_1(%arg0: i32, %arg1: i32, %arg2: i32) -> (i32, i32) {
    %c0_i32 = arith.constant 0 : i32
    return %arg2, %arg1 : i32, i32
  }
  func.func @transform_2(%arg0: i32, %arg1: i32, %arg2: i32) -> (i32, i32) {
    %c0_i32 = arith.constant 0 : i32
    %c0_i32_0 = arith.constant 0 : i32
    return %c0_i32, %arg1 : i32, i32
  }
  func.func @transform_3(%arg0: i32, %arg1: i32, %arg2: i32) -> (i32, i32) {
    %c0_i32 = arith.constant 0 : i32
    return %arg0, %arg1 : i32, i32
  }
}

</mosaic_0001>

<llo_original>
// kernel: short_circuit_net_forward.3
$region0: #{short_circuit_net_forward.3}
  #allocation0 [shape = 'u32[]', space=smem, size = 0x4, offset = 0x4, fixed_abs, tag = 'smem constant byte address 0x4 - core index']
  #allocation1 [shape = 'u32[72,128]{1,0:T(1,128)}', space=vmem, size = 0x9000, scoped, tag = 'internal scratch']
  %s0 = inlined_call_operand.vmem [shape: bf16[2048,128], index: 0, kind: input, shape index: {}]
  %s1 = inlined_call_operand.hbm [shape: bf16[128,128], index: 1, kind: input, shape index: {}]
  %s2 = inlined_call_operand.hbm [shape: f32[1,128], index: 2, kind: input, shape index: {}]
  %s3 = inlined_call_operand.vmem [shape: bf16[2048,128], index: 3, kind: output, shape index: {}]
  %s4 = sld [smem:[#allocation0]]
  $region53: #{short_circuit_net_forward.3} parent=0
    _
  %s6 = ssub.s32 1, %s4
  %s7 = scalar_select 0, %s6, %s4
  $region1: #{short_circuit_net_forward.3} parent=0
    #allocation2 [shape = 'u8[32768]{0}', space=vmem, size = 0x8000, scoped, tag = 'input window, operand 1, single buffered']
    #allocation3 [shape = 's32[2]{0}', space=sflag, size = 0x8, scoped, tag = 'scoped memory for short_circuit_net_forward.3']
    #allocation4 [shape = 'u8[512]{0}', space=vmem, size = 0x400, scoped, tag = 'input window, operand 2, single buffered']
    #allocation5 [shape = 's32[1]{0}', space=sflag, size = 0x4, scoped, tag = 'scoped memory for short_circuit_net_forward.3']
    %8 = vsyncpa [#allocation3], 0
    %9 = vsyncpa [#allocation5], 0
    loop: start=0, step=1, limit=10
    $region2: #{short_circuit_net_forward.3} parent=1 // loop_pre_header
      _
    $region3: #{short_circuit_net_forward.3} parent=1 // loop_header
      %s11 = sphi 0, %s15
      %p12 = scmp.ge.s32.totalorder %s11, 10
      %s18 = sphi 0, %s30
      %s19 = sphi 0, %s26
      %s20 = sphi 0, %s18
      %s21 = sphi 0, %s19
      %s22 = sphi 0, %s20
      %s23 = sphi 0, %s21
      %s33 = sphi 0, %s35
      %s36 = sphi 0, %s33
      %s37 = sphi 0, %s36
      %s53 = sphi 0, %s37
      %s59 = sphi 0, %s61
      %s62 = sphi 0, %s59
      %s63 = sphi 0, %s62
      %s79 = sphi 0, %s63
      %s85 = sphi 0, %s87
      %s88 = sphi 0, %s85
      %s89 = sphi 0, %s88
      %s105 = sphi 0, %s89
      %s113 = sphi 0, %s115
      %s116 = sphi 0, %s113
      %s117 = sphi 0, %s116
      %s133 = sphi 0, %s117
    $region4: #{short_circuit_net_forward.3} parent=1 // loop_header_branch
      %14 = sbr.rel (%p12) target = $region8
    $region5: #{short_circuit_net_forward.3} parent=1 // loop_body
      %s16 = ssub.s32 %s11, 1
      %s17 = ssub.s32 %s11, 2
      %s24 = sadd.s32 1, %s19
      %p25 = scmp.ge.s32.totalorder %s24, 1
      %s26 = scalar_select %p25, 0, %s24
      %s27 = sadd.s32 1, %s18
      %s28 = scalar_select %p25, %s27, %s18
      %p29 = scmp.ge.s32.totalorder %s28, 8
      %s30 = scalar_select %p29, 0, %s28
      %s31 = ssub.s32 %s18, %s30
      %p32 = scmp.eq.s32.totalorder %s31, 0
      %s34 = sadd.s32 %s33, 1
      %s35 = scalar_select %p32, %s33, %s34
      %p38 = pneg %p32
      %p39 = scmp.eq.s32.totalorder %s11, 7
      %p40 = por %p38, %p39
      %p41 = scmp.ne.s32.totalorder %s33, %s36
      %p42 = scmp.eq.s32.totalorder %s11, 0
      %p43 = por %p41, %p42
      %p44 = scmp.ne.s32.totalorder %s33, %s36
      %p45 = scmp.eq.s32.totalorder %s16, 7
      %p46 = por %p44, %p45
      %p47 = scmp.ne.s32.totalorder %s36, %s37
      %p48 = scmp.eq.s32.totalorder %s16, 0
      %p49 = por %p47, %p48
      %p50 = scmp.ne.s32.totalorder %s36, %s37
      %p51 = scmp.eq.s32.totalorder %s17, 7
      %p52 = por %p50, %p51
      %p54 = scmp.ne.s32.totalorder %s37, %s53
      %p55 = scmp.eq.s32.totalorder %s17, 0
      %p56 = por %p54, %p55
      %s57 = ssub.s32 %s19, %s26
      %p58 = scmp.eq.s32.totalorder %s57, 0
      %s60 = sadd.s32 %s59, 1
      %s61 = scalar_select %p58, %s59, %s60
      %p64 = pneg %p58
      %p65 = scmp.eq.s32.totalorder %s11, 7
      %p66 = por %p64, %p65
      %p67 = scmp.ne.s32.totalorder %s59, %s62
      %p68 = scmp.eq.s32.totalorder %s11, 0
      %p69 = por %p67, %p68
      %p70 = scmp.ne.s32.totalorder %s59, %s62
      %p71 = scmp.eq.s32.totalorder %s16, 7
      %p72 = por %p70, %p71
      %p73 = scmp.ne.s32.totalorder %s62, %s63
      %p74 = scmp.eq.s32.totalorder %s16, 0
      %p75 = por %p73, %p74
      %p76 = scmp.ne.s32.totalorder %s62, %s63
      %p77 = scmp.eq.s32.totalorder %s17, 7
      %p78 = por %p76, %p77
      %p80 = scmp.ne.s32.totalorder %s63, %s79
      %p81 = scmp.eq.s32.totalorder %s17, 0
      %p82 = por %p80, %p81
      %s83 = ssub.s32 %s19, %s26
      %p84 = scmp.eq.s32.totalorder %s83, 0
      %s86 = sadd.s32 %s85, 1
      %s87 = scalar_select %p84, %s85, %s86
      %p90 = pneg %p84
      %p91 = scmp.eq.s32.totalorder %s11, 7
      %p92 = por %p90, %p91
      %p93 = scmp.ne.s32.totalorder %s85, %s88
      %p94 = scmp.eq.s32.totalorder %s11, 0
      %p95 = por %p93, %p94
      %p96 = scmp.ne.s32.totalorder %s85, %s88
      %p97 = scmp.eq.s32.totalorder %s16, 7
      %p98 = por %p96, %p97
      %p99 = scmp.ne.s32.totalorder %s88, %s89
      %p100 = scmp.eq.s32.totalorder %s16, 0
      %p101 = por %p99, %p100
      %p102 = scmp.ne.s32.totalorder %s88, %s89
      %p103 = scmp.eq.s32.totalorder %s17, 7
      %p104 = por %p102, %p103
      %p106 = scmp.ne.s32.totalorder %s89, %s105
      %p107 = scmp.eq.s32.totalorder %s17, 0
      %p108 = por %p106, %p107
      %s109 = ssub.s32 %s18, %s30
      %s110 = ssub.s32 %s19, %s26
      %s111 = sor.u32 %s109, %s110
      %p112 = scmp.eq.s32.totalorder %s111, 0
      %s114 = sadd.s32 %s113, 1
      %s115 = scalar_select %p112, %s113, %s114
      %p118 = pneg %p112
      %p119 = scmp.eq.s32.totalorder %s11, 7
      %p120 = por %p118, %p119
      %p121 = scmp.ne.s32.totalorder %s113, %s116
      %p122 = scmp.eq.s32.totalorder %s11, 0
      %p123 = por %p121, %p122
      %p124 = scmp.ne.s32.totalorder %s113, %s116
      %p125 = scmp.eq.s32.totalorder %s16, 7
      %p126 = por %p124, %p125
      %p127 = scmp.ne.s32.totalorder %s116, %s117
      %p128 = scmp.eq.s32.totalorder %s16, 0
      %p129 = por %p127, %p128
      %p130 = scmp.ne.s32.totalorder %s116, %s117
      %p131 = scmp.eq.s32.totalorder %s17, 7
      %p132 = por %p130, %p131
      %p134 = scmp.ne.s32.totalorder %s117, %s133
      %p135 = scmp.eq.s32.totalorder %s17, 0
      %p136 = por %p134, %p135
      %p137 = scmp.le.s32.totalorder 1, %s11
      %p138 = scmp.lt.s32.totalorder %s11, 9
      %p139 = pnand %p137, %p138
      %p140 = pneg %p139
      // Predicated region
      $region9: #{short_circuit_net_forward.3} parent=5 // pred_check
        _
      $region10: #{short_circuit_net_forward.3} parent=5 // pred_check_branch
        %142 = sbr.rel (%p139) target = $region12
      $region11: #{short_circuit_net_forward.3} parent=5 // pred_region
        %s143 = ssub.s32 %s11, 1
        // Predicated region
        $region13: #{short_circuit_net_forward.3} parent=11 // pred_check
          %p144 = pneg %p75
        $region14: #{short_circuit_net_forward.3} parent=11 // pred_check_branch
          %146 = sbr.rel (%p144) target = $region16
        $region15: #{short_circuit_net_forward.3} parent=11 // pred_region
          %148 = vsyncadd [#allocation3], 0
          %s149 = smul.addr %s21, 4
          %s150 = scalar_lea.hbm %s1, %s149
          %s151 = sshll.u32 %s150, 4
          %s152 = int_to_ptr.hbm [resolvable:$true] %s151
          %s153 = sshll.u32 [#allocation2], 4
          %s154 = int_to_ptr.vmem [resolvable:$true] %s153
          %159 = dma.hbm_to_vmem [thread:$0]  %s152, 1024, %s154, [#allocation3], 64, 64, 4
        $region16: #{short_circuit_net_forward.3} parent=11 // pred_fallthru
          _
        // Predicated region
        $region17: #{short_circuit_net_forward.3} parent=11 // pred_check
          %p160 = pneg %p101
        $region18: #{short_circuit_net_forward.3} parent=11 // pred_check_branch
          %162 = sbr.rel (%p160) target = $region20
        $region19: #{short_circuit_net_forward.3} parent=11 // pred_region
          %164 = vsyncadd [#allocation5], 0
          %s165 = scalar_lea.hbm %s2, %s21
          %s167 = sshll.u32 %s165, 4
          %s168 = int_to_ptr.hbm [resolvable:$true] %s167
          %s169 = sshll.u32 [#allocation4], 4
          %s170 = int_to_ptr.vmem [resolvable:$true] %s169
          %172 = dma.hbm_to_vmem [thread:$0]  %s168, 16, %s170, [#allocation5]
        $region20: #{short_circuit_net_forward.3} parent=11 // pred_fallthru
          _
      $region12: #{short_circuit_net_forward.3} parent=5 // pred_fallthru
        _
      %p173 = scmp.lt.s32.totalorder %s11, 8
      // Predicated region
      $region21: #{short_circuit_net_forward.3} parent=5 // pred_check
        %p174 = pneg %p173
      $region22: #{short_circuit_net_forward.3} parent=5 // pred_check_branch
        %176 = sbr.rel (%p174) target = $region24
      $region23: #{short_circuit_net_forward.3} parent=5 // pred_region
        // Predicated region
        $region25: #{short_circuit_net_forward.3} parent=23 // pred_check
          %p177 = pneg %p43
        $region26: #{short_circuit_net_forward.3} parent=23 // pred_check_branch
          %179 = sbr.rel (%p177) target = $region28
        $region27: #{short_circuit_net_forward.3} parent=23 // pred_region
          %s180 = smul.u32 32, %s18
          %p181 = scmp.lt.s32.totalorder %s180, 255
          %s182 = scalar_select %p181, %s180, 255
          %s183 = smul.addr %s182, 4
          %s184 = scalar_lea.vmem %s0, %s183
          %s185 = smul.u32 32, %s18
        $region28: #{short_circuit_net_forward.3} parent=23 // pred_fallthru
          _
      $region24: #{short_circuit_net_forward.3} parent=5 // pred_fallthru
        _
      %p186 = scmp.le.s32.totalorder 1, %s11
      %p187 = scmp.lt.s32.totalorder %s11, 9
      %p188 = pnand %p186, %p187
      %p189 = pneg %p188
      // Predicated region
      $region29: #{short_circuit_net_forward.3} parent=5 // pred_check
        _
      $region30: #{short_circuit_net_forward.3} parent=5 // pred_check_branch
        %191 = sbr.rel (%p188) target = $region32
      $region31: #{short_circuit_net_forward.3} parent=5 // pred_region
        %s192 = ssub.s32 %s11, 1
        // Predicated region
        $region33: #{short_circuit_net_forward.3} parent=31 // pred_check
          %p193 = pneg %p75
        $region34: #{short_circuit_net_forward.3} parent=31 // pred_check_branch
          %195 = sbr.rel (%p193) target = $region36
        $region35: #{short_circuit_net_forward.3} parent=31 // pred_region
          %197 = dma.done [#allocation3], 1024
        $region36: #{short_circuit_net_forward.3} parent=31 // pred_fallthru
          _
        // Predicated region
        $region37: #{short_circuit_net_forward.3} parent=31 // pred_check
          %p198 = pneg %p101
        $region38: #{short_circuit_net_forward.3} parent=31 // pred_check_branch
          %200 = sbr.rel (%p198) target = $region40
        $region39: #{short_circuit_net_forward.3} parent=31 // pred_region
          %202 = dma.done [#allocation5], 16
        $region40: #{short_circuit_net_forward.3} parent=31 // pred_fallthru
          _
        %s203 = smul.u32 32, %s20
        %p204 = scmp.lt.s32.totalorder %s203, 255
        %s205 = scalar_select %p204, %s203, 255
        %s206 = smul.addr %s205, 4
        %s207 = scalar_lea.vmem %s0, %s206
        %p208 = pneg %p49
        %p209 = pneg %p46
        %p210 = pneg %p75
        %p211 = pneg %p72
        %p212 = pneg %p101
        %p213 = pneg %p98
        %p214 = pneg %p129
        %p215 = pneg %p126
        %s216 = smul.u32 32, %s20
        %p217 = scmp.lt.s32.totalorder %s216, 255
        %s218 = scalar_select %p217, %s216, 255
        %p219 = scmp.lt.s32.totalorder %s21, 0
        %s220 = scalar_select %p219, %s21, 0
        %s221 = sadd.s32 %s220, %s218
        %s222 = smul.addr %s221, 4
        %s223 = scalar_lea.vmem %s3, %s222
        %s224 = smul.u32 32, %s20
        %p225 = scmp.lt.s32.totalorder %s224, 255
        %s226 = scalar_select %p225, %s224, 255
        %s227 = smul.addr %s226, 4
        %s228 = scalar_lea.vmem %s0, %s227
        %s229 = smul.u32 32, %s20
        %s230 = smul.u32 32, %s20
        %p231 = scmp.lt.s32.totalorder %s230, 255
        %s232 = scalar_select %p231, %s230, 255
        %p233 = scmp.lt.s32.totalorder %s21, 0
        %s234 = scalar_select %p233, %s21, 0
        %s235 = sadd.s32 %s234, %s232
        %s236 = smul.addr %s235, 4
        %s237 = scalar_lea.vmem %s3, %s236
        %s238 = smul.u32 32, %s20
        %v239 = vld [vmem:[%s228] sm:$0xf]
        %v240 = vld [vmem:[%s228 + $0x4] sm:$0xf]
        %v241 = vld [vmem:[%s228 + $0x8] sm:$0xf]
        %v242 = vld [vmem:[%s228 + $0xc] sm:$0xf]
        %v243 = vld [vmem:[%s228 + $0x10] sm:$0xf]
        %v244 = vld [vmem:[%s228 + $0x14] sm:$0xf]
        %v245 = vld [vmem:[%s228 + $0x18] sm:$0xf]
        %v246 = vld [vmem:[%s228 + $0x1c] sm:$0xf]
        %v247 = vld [vmem:[%s228 + $0x20] sm:$0xf]
        %v248 = vld [vmem:[%s228 + $0x24] sm:$0xf]
        %v249 = vld [vmem:[%s228 + $0x28] sm:$0xf]
        %v250 = vld [vmem:[%s228 + $0x2c] sm:$0xf]
        %v251 = vld [vmem:[%s228 + $0x30] sm:$0xf]
        %v252 = vld [vmem:[%s228 + $0x34] sm:$0xf]
        %v253 = vld [vmem:[%s228 + $0x38] sm:$0xf]
        %v254 = vld [vmem:[%s228 + $0x3c] sm:$0xf]
        %v255 = vld [vmem:[%s228 + $0x40] sm:$0xf]
        %v256 = vld [vmem:[%s228 + $0x44] sm:$0xf]
        %v257 = vld [vmem:[%s228 + $0x48] sm:$0xf]
        %v258 = vld [vmem:[%s228 + $0x4c] sm:$0xf]
        %v259 = vld [vmem:[%s228 + $0x50] sm:$0xf]
        %v260 = vld [vmem:[%s228 + $0x54] sm:$0xf]
        %v261 = vld [vmem:[%s228 + $0x58] sm:$0xf]
        %v262 = vld [vmem:[%s228 + $0x5c] sm:$0xf]
        %v263 = vld [vmem:[%s228 + $0x60] sm:$0xf]
        %v264 = vld [vmem:[%s228 + $0x64] sm:$0xf]
        %v265 = vld [vmem:[%s228 + $0x68] sm:$0xf]
        %v266 = vld [vmem:[%s228 + $0x6c] sm:$0xf]
        %v267 = vld [vmem:[%s228 + $0x70] sm:$0xf]
        %v268 = vld [vmem:[%s228 + $0x74] sm:$0xf]
        %v269 = vld [vmem:[%s228 + $0x78] sm:$0xf]
        %v270 = vld [vmem:[%s228 + $0x7c] sm:$0xf]
        %v271 = vld [vmem:[#allocation2] sm:$0xf]
        %v272 = vld [vmem:[#allocation2 + $0x4] sm:$0xf]
        %v273 = vld [vmem:[#allocation2 + $0x8] sm:$0xf]
        %v274 = vld [vmem:[#allocation2 + $0xc] sm:$0xf]
        %v275 = vld [vmem:[#allocation2 + $0x10] sm:$0xf]
        %v276 = vld [vmem:[#allocation2 + $0x14] sm:$0xf]
        %v277 = vld [vmem:[#allocation2 + $0x18] sm:$0xf]
        %v278 = vld [vmem:[#allocation2 + $0x1c] sm:$0xf]
        %v279 = vld [vmem:[#allocation2 + $0x20] sm:$0xf]
        %v280 = vld [vmem:[#allocation2 + $0x24] sm:$0xf]
        %v281 = vld [vmem:[#allocation2 + $0x28] sm:$0xf]
        %v282 = vld [vmem:[#allocation2 + $0x2c] sm:$0xf]
        %v283 = vld [vmem:[#allocation2 + $0x30] sm:$0xf]
        %v284 = vld [vmem:[#allocation2 + $0x34] sm:$0xf]
        %v285 = vld [vmem:[#allocation2 + $0x38] sm:$0xf]
        %v286 = vld [vmem:[#allocation2 + $0x3c] sm:$0xf]
        %v287 = vld [vmem:[#allocation4] sm:$0x1]
        %v289 = vperm.slane %v287, 0
        %v323 = vunpack.c.l.b16 %v239
        %v324 = vunpack.c.l.b16 %v240
        %v325 = vunpack.c.l.b16 %v241
        %v326 = vunpack.c.l.b16 %v242
        %v327 = vunpack.c.l.b16 %v243
        %v328 = vunpack.c.l.b16 %v244
        %v329 = vunpack.c.l.b16 %v245
        %v330 = vunpack.c.l.b16 %v246
        %v331 = vunpack.c.l.b16 %v247
        %v332 = vunpack.c.l.b16 %v248
        %v333 = vunpack.c.l.b16 %v249
        %v334 = vunpack.c.l.b16 %v250
        %v335 = vunpack.c.l.b16 %v251
        %v336 = vunpack.c.l.b16 %v252
        %v337 = vunpack.c.l.b16 %v253
        %v338 = vunpack.c.l.b16 %v254
        %v339 = vunpack.c.l.b16 %v255
        %v340 = vunpack.c.l.b16 %v256
        %v341 = vunpack.c.l.b16 %v257
        %v342 = vunpack.c.l.b16 %v258
        %v343 = vunpack.c.l.b16 %v259
        %v344 = vunpack.c.l.b16 %v260
        %v345 = vunpack.c.l.b16 %v261
        %v346 = vunpack.c.l.b16 %v262
        %v347 = vunpack.c.l.b16 %v263
        %v348 = vunpack.c.l.b16 %v264
        %v349 = vunpack.c.l.b16 %v265
        %v350 = vunpack.c.l.b16 %v266
        %v351 = vunpack.c.l.b16 %v267
        %v352 = vunpack.c.l.b16 %v268
        %v353 = vunpack.c.l.b16 %v269
        %v354 = vunpack.c.l.b16 %v270
        %v355 = vpack.c.b16 %v324, %v323
        %v356 = vpack.c.b16 %v326, %v325
        %v357 = vpack.c.b16 %v328, %v327
        %v358 = vpack.c.b16 %v330, %v329
        %v359 = vpack.c.b16 %v332, %v331
        %v360 = vpack.c.b16 %v334, %v333
        %v361 = vpack.c.b16 %v336, %v335
        %v362 = vpack.c.b16 %v338, %v337
        %v363 = vpack.c.b16 %v340, %v339
        %v364 = vpack.c.b16 %v342, %v341
        %v365 = vpack.c.b16 %v344, %v343
        %v366 = vpack.c.b16 %v346, %v345
        %v367 = vpack.c.b16 %v348, %v347
        %v368 = vpack.c.b16 %v350, %v349
        %v369 = vpack.c.b16 %v352, %v351
        %v370 = vpack.c.b16 %v354, %v353
        %v403 = vunpack.c.l.b16 %v271
        %v404 = vunpack.c.l.b16 %v272
        %v405 = vunpack.c.l.b16 %v273
        %v406 = vunpack.c.l.b16 %v274
        %v407 = vunpack.c.l.b16 %v275
        %v408 = vunpack.c.l.b16 %v276
        %v409 = vunpack.c.l.b16 %v277
        %v410 = vunpack.c.l.b16 %v278
        %v411 = vunpack.c.l.b16 %v279
        %v412 = vunpack.c.l.b16 %v280
        %v413 = vunpack.c.l.b16 %v281
        %v414 = vunpack.c.l.b16 %v282
        %v415 = vunpack.c.l.b16 %v283
        %v416 = vunpack.c.l.b16 %v284
        %v417 = vunpack.c.l.b16 %v285
        %v418 = vunpack.c.l.b16 %v286
        %v419 = vpack.c.b16 %v404, %v403
        %v420 = vpack.c.b16 %v406, %v405
        %v421 = vpack.c.b16 %v408, %v407
        %v422 = vpack.c.b16 %v410, %v409
        %v423 = vpack.c.b16 %v412, %v411
        %v424 = vpack.c.b16 %v414, %v413
        %v425 = vpack.c.b16 %v416, %v415
        %v426 = vpack.c.b16 %v418, %v417
        %435 = vmatpush.bf16.msra.mxu0 %v426
        %436 = vmatpush.bf16.msra.mxu0 %v425
        %437 = vmatpush.bf16.msra.mxu0 %v424
        %438 = vmatpush.bf16.msra.mxu0 %v423
        %439 = vmatpush.bf16.msra.mxu0 %v422
        %440 = vmatpush.bf16.msra.mxu0 %v421
        %441 = vmatpush.bf16.msra.mxu0 %v420
        %442 = vmatpush.bf16.msra.mxu0 %v419
        %443 = vmatmul.bf16.gmra.mxu0 %v355
        %v444 = vpop.f32.mrf.mxu0
        %v445 = vadd.f32 %v289, %v444
        %v446 = vpop.f32.mrf.mxu0
        %v447 = vadd.f32 %v289, %v446
        %448 = vmatmul.bf16.gmra.mxu0 %v356
        %v449 = vpop.f32.mrf.mxu0
        %v450 = vadd.f32 %v289, %v449
        %v451 = vpop.f32.mrf.mxu0
        %v452 = vadd.f32 %v289, %v451
        %453 = vmatmul.bf16.gmra.mxu0 %v357
        %v454 = vpop.f32.mrf.mxu0
        %v455 = vadd.f32 %v289, %v454
        %v456 = vpop.f32.mrf.mxu0
        %v457 = vadd.f32 %v289, %v456
        %458 = vmatmul.bf16.gmra.mxu0 %v358
        %v459 = vpop.f32.mrf.mxu0
        %v460 = vadd.f32 %v289, %v459
        %v461 = vpop.f32.mrf.mxu0
        %v462 = vadd.f32 %v289, %v461
        %463 = vmatmul.bf16.gmra.mxu0 %v359
        %v464 = vpop.f32.mrf.mxu0
        %v465 = vadd.f32 %v289, %v464
        %v466 = vpop.f32.mrf.mxu0
        %v467 = vadd.f32 %v289, %v466
        %468 = vmatmul.bf16.gmra.mxu0 %v360
        %v469 = vpop.f32.mrf.mxu0
        %v470 = vadd.f32 %v289, %v469
        %v471 = vpop.f32.mrf.mxu0
        %v472 = vadd.f32 %v289, %v471
        %473 = vmatmul.bf16.gmra.mxu0 %v361
        %v474 = vpop.f32.mrf.mxu0
        %v475 = vadd.f32 %v289, %v474
        %v476 = vpop.f32.mrf.mxu0
        %v477 = vadd.f32 %v289, %v476
        %478 = vmatmul.bf16.gmra.mxu0 %v362
        %v479 = vpop.f32.mrf.mxu0
        %v480 = vadd.f32 %v289, %v479
        %v481 = vpop.f32.mrf.mxu0
        %v482 = vadd.f32 %v289, %v481
        %483 = vmatmul.bf16.gmra.mxu0 %v363
        %v484 = vpop.f32.mrf.mxu0
        %v485 = vadd.f32 %v289, %v484
        %v486 = vpop.f32.mrf.mxu0
        %v487 = vadd.f32 %v289, %v486
        %488 = vmatmul.bf16.gmra.mxu0 %v364
        %v489 = vpop.f32.mrf.mxu0
        %v490 = vadd.f32 %v289, %v489
        %v491 = vpop.f32.mrf.mxu0
        %v492 = vadd.f32 %v289, %v491
        %493 = vmatmul.bf16.gmra.mxu0 %v365
        %v494 = vpop.f32.mrf.mxu0
        %v495 = vadd.f32 %v289, %v494
        %v496 = vpop.f32.mrf.mxu0
        %v497 = vadd.f32 %v289, %v496
        %498 = vmatmul.bf16.gmra.mxu0 %v366
        %v499 = vpop.f32.mrf.mxu0
        %v500 = vadd.f32 %v289, %v499
        %v501 = vpop.f32.mrf.mxu0
        %v502 = vadd.f32 %v289, %v501
        %503 = vmatmul.bf16.gmra.mxu0 %v367
        %v504 = vpop.f32.mrf.mxu0
        %v505 = vadd.f32 %v289, %v504
        %v506 = vpop.f32.mrf.mxu0
        %v507 = vadd.f32 %v289, %v506
        %508 = vmatmul.bf16.gmra.mxu0 %v368
        %v509 = vpop.f32.mrf.mxu0
        %v510 = vadd.f32 %v289, %v509
        %v511 = vpop.f32.mrf.mxu0
        %v512 = vadd.f32 %v289, %v511
        %513 = vmatmul.bf16.gmra.mxu0 %v369
        %v514 = vpop.f32.mrf.mxu0
        %v515 = vadd.f32 %v289, %v514
        %v516 = vpop.f32.mrf.mxu0
        %v517 = vadd.f32 %v289, %v516
        %518 = vmatmul.bf16.gmra.mxu0 %v370
        %v519 = vpop.f32.mrf.mxu0
        %v520 = vadd.f32 %v289, %v519
        %v521 = vpop.f32.mrf.mxu0
        %v522 = vadd.f32 %v289, %v521
        %523 = vdwg.mxu0
        %v524 = vmax.f32 %v445, 0.0
        %v525 = vmax.f32 %v447, 0.0
        %v526 = vmax.f32 %v450, 0.0
        %v527 = vmax.f32 %v452, 0.0
        %v528 = vmax.f32 %v455, 0.0
        %v529 = vmax.f32 %v457, 0.0
        %v530 = vmax.f32 %v460, 0.0
        %v531 = vmax.f32 %v462, 0.0
        %v532 = vmax.f32 %v465, 0.0
        %v533 = vmax.f32 %v467, 0.0
        %v534 = vmax.f32 %v470, 0.0
        %v535 = vmax.f32 %v472, 0.0
        %v536 = vmax.f32 %v475, 0.0
        %v537 = vmax.f32 %v477, 0.0
        %v538 = vmax.f32 %v480, 0.0
        %v539 = vmax.f32 %v482, 0.0
        %v540 = vmax.f32 %v485, 0.0
        %v541 = vmax.f32 %v487, 0.0
        %v542 = vmax.f32 %v490, 0.0
        %v543 = vmax.f32 %v492, 0.0
        %v544 = vmax.f32 %v495, 0.0
        %v545 = vmax.f32 %v497, 0.0
        %v546 = vmax.f32 %v500, 0.0
        %v547 = vmax.f32 %v502, 0.0
        %v548 = vmax.f32 %v505, 0.0
        %v549 = vmax.f32 %v507, 0.0
        %v550 = vmax.f32 %v510, 0.0
        %v551 = vmax.f32 %v512, 0.0
        %v552 = vmax.f32 %v515, 0.0
        %v553 = vmax.f32 %v517, 0.0
        %v554 = vmax.f32 %v520, 0.0
        %v555 = vmax.f32 %v522, 0.0
        %v556 = vpack.c.bf16 %v524, %v524
        %v557 = vpack.c.bf16 %v525, %v525
        %v558 = vpack.c.bf16 %v526, %v526
        %v559 = vpack.c.bf16 %v527, %v527
        %v560 = vpack.c.bf16 %v528, %v528
        %v561 = vpack.c.bf16 %v529, %v529
        %v562 = vpack.c.bf16 %v530, %v530
        %v563 = vpack.c.bf16 %v531, %v531
        %v564 = vpack.c.bf16 %v532, %v532
        %v565 = vpack.c.bf16 %v533, %v533
        %v566 = vpack.c.bf16 %v534, %v534
        %v567 = vpack.c.bf16 %v535, %v535
        %v568 = vpack.c.bf16 %v536, %v536
        %v569 = vpack.c.bf16 %v537, %v537
        %v570 = vpack.c.bf16 %v538, %v538
        %v571 = vpack.c.bf16 %v539, %v539
        %v572 = vpack.c.bf16 %v540, %v540
        %v573 = vpack.c.bf16 %v541, %v541
        %v574 = vpack.c.bf16 %v542, %v542
        %v575 = vpack.c.bf16 %v543, %v543
        %v576 = vpack.c.bf16 %v544, %v544
        %v577 = vpack.c.bf16 %v545, %v545
        %v578 = vpack.c.bf16 %v546, %v546
        %v579 = vpack.c.bf16 %v547, %v547
        %v580 = vpack.c.bf16 %v548, %v548
        %v581 = vpack.c.bf16 %v549, %v549
        %v582 = vpack.c.bf16 %v550, %v550
        %v583 = vpack.c.bf16 %v551, %v551
        %v584 = vpack.c.bf16 %v552, %v552
        %v585 = vpack.c.bf16 %v553, %v553
        %v586 = vpack.c.bf16 %v554, %v554
        %v587 = vpack.c.bf16 %v555, %v555
        %588 = vst [vmem:[%s237] sm:$0xf] %v556
        %589 = vst [vmem:[%s237 + $0x4] sm:$0xf] %v557
        %590 = vst [vmem:[%s237 + $0x8] sm:$0xf] %v558
        %591 = vst [vmem:[%s237 + $0xc] sm:$0xf] %v559
        %592 = vst [vmem:[%s237 + $0x10] sm:$0xf] %v560
        %593 = vst [vmem:[%s237 + $0x14] sm:$0xf] %v561
        %594 = vst [vmem:[%s237 + $0x18] sm:$0xf] %v562
        %595 = vst [vmem:[%s237 + $0x1c] sm:$0xf] %v563
        %596 = vst [vmem:[%s237 + $0x20] sm:$0xf] %v564
        %597 = vst [vmem:[%s237 + $0x24] sm:$0xf] %v565
        %598 = vst [vmem:[%s237 + $0x28] sm:$0xf] %v566
        %599 = vst [vmem:[%s237 + $0x2c] sm:$0xf] %v567
        %600 = vst [vmem:[%s237 + $0x30] sm:$0xf] %v568
        %601 = vst [vmem:[%s237 + $0x34] sm:$0xf] %v569
        %602 = vst [vmem:[%s237 + $0x38] sm:$0xf] %v570
        %603 = vst [vmem:[%s237 + $0x3c] sm:$0xf] %v571
        %604 = vst [vmem:[%s237 + $0x40] sm:$0xf] %v572
        %605 = vst [vmem:[%s237 + $0x44] sm:$0xf] %v573
        %606 = vst [vmem:[%s237 + $0x48] sm:$0xf] %v574
        %607 = vst [vmem:[%s237 + $0x4c] sm:$0xf] %v575
        %608 = vst [vmem:[%s237 + $0x50] sm:$0xf] %v576
        %609 = vst [vmem:[%s237 + $0x54] sm:$0xf] %v577
        %610 = vst [vmem:[%s237 + $0x58] sm:$0xf] %v578
        %611 = vst [vmem:[%s237 + $0x5c] sm:$0xf] %v579
        %612 = vst [vmem:[%s237 + $0x60] sm:$0xf] %v580
        %613 = vst [vmem:[%s237 + $0x64] sm:$0xf] %v581
        %614 = vst [vmem:[%s237 + $0x68] sm:$0xf] %v582
        %615 = vst [vmem:[%s237 + $0x6c] sm:$0xf] %v583
        %616 = vst [vmem:[%s237 + $0x70] sm:$0xf] %v584
        %617 = vst [vmem:[%s237 + $0x74] sm:$0xf] %v585
        %618 = vst [vmem:[%s237 + $0x78] sm:$0xf] %v586
        %619 = vst [vmem:[%s237 + $0x7c] sm:$0xf] %v587
        %s620 = smul.u32 32, %s20
        %p621 = scmp.lt.s32.totalorder %s620, 255
        %s622 = scalar_select %p621, %s620, 255
        %p623 = scmp.lt.s32.totalorder %s21, 0
        %s624 = scalar_select %p623, %s21, 0
        %s625 = sadd.s32 %s624, %s622
        %s626 = smul.addr %s625, 4
        %s627 = scalar_lea.vmem %s3, %s626
        // Predicated region
        $region41: #{short_circuit_net_forward.3} parent=31 // pred_check
          %p628 = pneg %p126
        $region42: #{short_circuit_net_forward.3} parent=31 // pred_check_branch
          %630 = sbr.rel (%p628) target = $region44
        $region43: #{short_circuit_net_forward.3} parent=31 // pred_region
          %s631 = smul.u32 32, %s20
        $region44: #{short_circuit_net_forward.3} parent=31 // pred_fallthru
          _
      $region32: #{short_circuit_net_forward.3} parent=5 // pred_fallthru
        _
      %p632 = scmp.le.s32.totalorder 2, %s11
      // Predicated region
      $region45: #{short_circuit_net_forward.3} parent=5 // pred_check
        %p633 = pneg %p632
      $region46: #{short_circuit_net_forward.3} parent=5 // pred_check_branch
        %635 = sbr.rel (%p633) target = $region48
      $region47: #{short_circuit_net_forward.3} parent=5 // pred_region
        %s636 = ssub.s32 %s11, 2
        // Predicated region
        $region49: #{short_circuit_net_forward.3} parent=47 // pred_check
          %p637 = pneg %p132
        $region50: #{short_circuit_net_forward.3} parent=47 // pred_check_branch
          %639 = sbr.rel (%p637) target = $region52
        $region51: #{short_circuit_net_forward.3} parent=47 // pred_region
          %s640 = smul.u32 32, %s22
          %p641 = scmp.lt.s32.totalorder %s640, 255
          %s642 = scalar_select %p641, %s640, 255
          %p643 = scmp.lt.s32.totalorder %s23, 0
          %s644 = scalar_select %p643, %s23, 0
          %s645 = sadd.s32 %s644, %s642
          %s646 = smul.addr %s645, 4
          %s647 = scalar_lea.vmem %s3, %s646
        $region52: #{short_circuit_net_forward.3} parent=47 // pred_fallthru
          _
      $region48: #{short_circuit_net_forward.3} parent=5 // pred_fallthru
        _
    $region6: #{short_circuit_net_forward.3} parent=1 // loop_footer
      %s15 = sadd.s32 1, %s11
    $region7: #{short_circuit_net_forward.3} parent=1 // loop_footer_branch
      %10 = sbr.rel target = $region3
    $region8: #{short_circuit_net_forward.3} parent=1 // loop_exit
      _
    %648 = vsyncpa [#allocation3], 1
    %s649 = scalar_lea.sflag [#allocation3], 1
    %650 = vsyncpa %s649, 1
    %651 = vsyncpa [#allocation5], 1

// kernel: short_circuit_net_forward.4
$region0: #{short_circuit_net_forward.4}
  #allocation0 [shape = 'u32[]', space=smem, size = 0x4, offset = 0x4, fixed_abs, tag = 'smem constant byte address 0x4 - core index']
  #allocation1 [shape = 'u32[72,128]{1,0:T(1,128)}', space=vmem, size = 0x9000, scoped, tag = 'internal scratch']
  #allocation2 [shape = 'f32[16,512]{1,0:T(8,128)}', space=vmem, size = 0x8000, scoped, tag = 'scratch operand']
  %s0 = inlined_call_operand.vmem [shape: bf16[16,8192], index: 0, kind: input, shape index: {}]
  %s1 = inlined_call_operand.hbm [shape: bf16[8192,1024], index: 1, kind: input, shape index: {}]
  %s2 = inlined_call_operand.vmem [shape: f32[1,1024], index: 2, kind: input, shape index: {}]
  %s3 = inlined_call_operand.vmem [shape: bf16[16,1024], index: 3, kind: output, shape index: {}]
  %s4 = sld [smem:[#allocation0]]
  $region99: #{short_circuit_net_forward.4} parent=0
    _
  %s6 = ssub.s32 1, %s4
  %s7 = scalar_select 0, %s6, %s4
  $region1: #{short_circuit_net_forward.4} parent=0
    #allocation3 [shape = 'u8[65536]{0}', space=vmem, size = 0x10000, scoped, tag = 'input window, operand 0']
    #allocation4 [shape = 'u8[2097152]{0}', space=vmem, size = 0x200000, scoped, tag = 'input window, operand 1']
    #allocation5 [shape = 's32[2]{0}', space=sflag, size = 0x8, scoped, tag = 'scoped memory for short_circuit_net_forward.4']
    #allocation6 [shape = 'u8[32768]{0}', space=vmem, size = 0x8000, scoped, tag = 'output window, operand 0']
    %8 = vsyncpa [#allocation5], 0
    %s9 = scalar_lea.sflag [#allocation5], 1
    %10 = vsyncpa %s9, 0
    loop: start=0, step=1, limit=18
    $region2: #{short_circuit_net_forward.4} parent=1 // loop_pre_header
      _
    $region3: #{short_circuit_net_forward.4} parent=1 // loop_header
      %s12 = sphi 0, %s16
      %p13 = scmp.ge.s32.totalorder %s12, 18
      %s19 = sphi 0, %s38
      %s20 = sphi 0, %s34
      %s21 = sphi 0, %s30
      %s22 = sphi 0, %s19
      %s23 = sphi 0, %s20
      %s24 = sphi 0, %s21
      %s25 = sphi 0, %s22
      %s26 = sphi 0, %s23
      %s27 = sphi 0, %s24
      %s43 = sphi 0, %s45
      %s46 = sphi 0, %s43
      %s47 = sphi 0, %s46
      %s63 = sphi 0, %s47
      %s71 = sphi 0, %s73
      %s74 = sphi 0, %s71
      %s75 = sphi 0, %s74
      %s91 = sphi 0, %s75
      %s97 = sphi 0, %s99
      %s100 = sphi 0, %s97
      %s101 = sphi 0, %s100
      %s117 = sphi 0, %s101
      %s125 = sphi 0, %s127
      %s128 = sphi 0, %s125
      %s129 = sphi 0, %s128
      %s145 = sphi 0, %s129
    $region4: #{short_circuit_net_forward.4} parent=1 // loop_header_branch
      %15 = sbr.rel (%p13) target = $region8
    $region5: #{short_circuit_net_forward.4} parent=1 // loop_body
      %s17 = ssub.s32 %s12, 1
      %s18 = ssub.s32 %s12, 2
      %s28 = sadd.s32 1, %s21
      %p29 = scmp.ge.s32.totalorder %s28, 8
      %s30 = scalar_select %p29, 0, %s28
      %s31 = sadd.s32 1, %s20
      %s32 = scalar_select %p29, %s31, %s20
      %p33 = scmp.ge.s32.totalorder %s32, 2
      %s34 = scalar_select %p33, 0, %s32
      %s35 = sadd.s32 1, %s19
      %s36 = scalar_select %p33, %s35, %s19
      %p37 = scmp.ge.s32.totalorder %s36, 1
      %s38 = scalar_select %p37, 0, %s36
      %s39 = ssub.s32 %s19, %s38
      %s40 = ssub.s32 %s21, %s30
      %s41 = sor.u32 %s39, %s40
      %p42 = scmp.eq.s32.totalorder %s41, 0
      %s44 = sadd.s32 %s43, 1
      %s45 = scalar_select %p42, %s43, %s44
      %p48 = pneg %p42
      %p49 = scmp.eq.s32.totalorder %s12, 15
      %p50 = por %p48, %p49
      %p51 = scmp.ne.s32.totalorder %s43, %s46
      %p52 = scmp.eq.s32.totalorder %s12, 0
      %p53 = por %p51, %p52
      %p54 = scmp.ne.s32.totalorder %s43, %s46
      %p55 = scmp.eq.s32.totalorder %s17, 15
      %p56 = por %p54, %p55
      %p57 = scmp.ne.s32.totalorder %s46, %s47
      %p58 = scmp.eq.s32.totalorder %s17, 0
      %p59 = por %p57, %p58
      %p60 = scmp.ne.s32.totalorder %s46, %s47
      %p61 = scmp.eq.s32.totalorder %s18, 15
      %p62 = por %p60, %p61
      %p64 = scmp.ne.s32.totalorder %s47, %s63
      %p65 = scmp.eq.s32.totalorder %s18, 0
      %p66 = por %p64, %p65
      %s67 = ssub.s32 %s21, %s30
      %s68 = ssub.s32 %s20, %s34
      %s69 = sor.u32 %s67, %s68
      %p70 = scmp.eq.s32.totalorder %s69, 0
      %s72 = sadd.s32 %s71, 1
      %s73 = scalar_select %p70, %s71, %s72
      %p76 = pneg %p70
      %p77 = scmp.eq.s32.totalorder %s12, 15
      %p78 = por %p76, %p77
      %p79 = scmp.ne.s32.totalorder %s71, %s74
      %p80 = scmp.eq.s32.totalorder %s12, 0
      %p81 = por %p79, %p80
      %p82 = scmp.ne.s32.totalorder %s71, %s74
      %p83 = scmp.eq.s32.totalorder %s17, 15
      %p84 = por %p82, %p83
      %p85 = scmp.ne.s32.totalorder %s74, %s75
      %p86 = scmp.eq.s32.totalorder %s17, 0
      %p87 = por %p85, %p86
      %p88 = scmp.ne.s32.totalorder %s74, %s75
      %p89 = scmp.eq.s32.totalorder %s18, 15
      %p90 = por %p88, %p89
      %p92 = scmp.ne.s32.totalorder %s75, %s91
      %p93 = scmp.eq.s32.totalorder %s18, 0
      %p94 = por %p92, %p93
      %s95 = ssub.s32 %s20, %s34
      %p96 = scmp.eq.s32.totalorder %s95, 0
      %s98 = sadd.s32 %s97, 1
      %s99 = scalar_select %p96, %s97, %s98
      %p102 = pneg %p96
      %p103 = scmp.eq.s32.totalorder %s12, 15
      %p104 = por %p102, %p103
      %p105 = scmp.ne.s32.totalorder %s97, %s100
      %p106 = scmp.eq.s32.totalorder %s12, 0
      %p107 = por %p105, %p106
      %p108 = scmp.ne.s32.totalorder %s97, %s100
      %p109 = scmp.eq.s32.totalorder %s17, 15
      %p110 = por %p108, %p109
      %p111 = scmp.ne.s32.totalorder %s100, %s101
      %p112 = scmp.eq.s32.totalorder %s17, 0
      %p113 = por %p111, %p112
      %p114 = scmp.ne.s32.totalorder %s100, %s101
      %p115 = scmp.eq.s32.totalorder %s18, 15
      %p116 = por %p114, %p115
      %p118 = scmp.ne.s32.totalorder %s101, %s117
      %p119 = scmp.eq.s32.totalorder %s18, 0
      %p120 = por %p118, %p119
      %s121 = ssub.s32 %s19, %s38
      %s122 = ssub.s32 %s20, %s34
      %s123 = sor.u32 %s121, %s122
      %p124 = scmp.eq.s32.totalorder %s123, 0
      %s126 = sadd.s32 %s125, 1
      %s127 = scalar_select %p124, %s125, %s126
      %p130 = pneg %p124
      %p131 = scmp.eq.s32.totalorder %s12, 15
      %p132 = por %p130, %p131
      %p133 = scmp.ne.s32.totalorder %s125, %s128
      %p134 = scmp.eq.s32.totalorder %s12, 0
      %p135 = por %p133, %p134
      %p136 = scmp.ne.s32.totalorder %s125, %s128
      %p137 = scmp.eq.s32.totalorder %s17, 15
      %p138 = por %p136, %p137
      %p139 = scmp.ne.s32.totalorder %s128, %s129
      %p140 = scmp.eq.s32.totalorder %s17, 0
      %p141 = por %p139, %p140
      %p142 = scmp.ne.s32.totalorder %s128, %s129
      %p143 = scmp.eq.s32.totalorder %s18, 15
      %p144 = por %p142, %p143
      %p146 = scmp.ne.s32.totalorder %s129, %s145
      %p147 = scmp.eq.s32.totalorder %s18, 0
      %p148 = por %p146, %p147
      %p149 = scmp.le.s32.totalorder 1, %s12
      %p150 = scmp.lt.s32.totalorder %s12, 17
      %p151 = pnand %p149, %p150
      %p152 = pneg %p151
      // Predicated region
      $region9: #{short_circuit_net_forward.4} parent=5 // pred_check
        _
      $region10: #{short_circuit_net_forward.4} parent=5 // pred_check_branch
        %154 = sbr.rel (%p151) target = $region12
      $region11: #{short_circuit_net_forward.4} parent=5 // pred_region
        %s155 = ssub.s32 %s12, 1
      $region12: #{short_circuit_net_forward.4} parent=5 // pred_fallthru
        _
      %p156 = scmp.lt.s32.totalorder %s12, 16
      // Predicated region
      $region13: #{short_circuit_net_forward.4} parent=5 // pred_check
        %p157 = pneg %p156
      $region14: #{short_circuit_net_forward.4} parent=5 // pred_check_branch
        %159 = sbr.rel (%p157) target = $region16
      $region15: #{short_circuit_net_forward.4} parent=5 // pred_region
        // Predicated region
        $region17: #{short_circuit_net_forward.4} parent=15 // pred_check
          %p160 = pneg %p53
        $region18: #{short_circuit_net_forward.4} parent=15 // pred_check_branch
          %162 = sbr.rel (%p160) target = $region20
        $region19: #{short_circuit_net_forward.4} parent=15 // pred_region
          %s163 = sand.u32 %s43, 1
          %s164 = sand.u32 %s43, 1
          %s165 = smul.addr %s164, 64
          %s166 = scalar_lea.vmem [#allocation3], %s165
          %s167 = smul.u32 2, %s19
          %s168 = smul.u32 8, %s21
          %s169 = smul.addr %s167, 64
          %s170 = sadd.s32 %s168, %s169
          %s171 = smul.addr %s170, 4
          %s172 = scalar_lea.vmem %s0, %s171
          // Predicated region
          $region21: #{short_circuit_net_forward.4} parent=19 // pred_check
            _
          $region22: #{short_circuit_net_forward.4} parent=19 // pred_check_branch
            %174 = sbr.rel (0) target = $region24
          $region23: #{short_circuit_net_forward.4} parent=19 // pred_region
            // Predicated region
            $region25: #{short_circuit_net_forward.4} parent=23 // pred_check
              _
            $region26: #{short_circuit_net_forward.4} parent=23 // pred_check_branch
              %176 = sbr.rel (0) target = $region28
            $region27: #{short_circuit_net_forward.4} parent=23 // pred_region
              loop: start=0, step=1, limit=1
              $region29: #{short_circuit_net_forward.4} parent=27 // loop_pre_header
                _
              $region30: #{short_circuit_net_forward.4} parent=27 // loop_header
                %s178 = sphi 0, %s182
                %p179 = scmp.ge.s32.totalorder %s178, 1
                %s183 = sphi %s172, %s172
                %s184 = sphi %s166, %s166
              $region31: #{short_circuit_net_forward.4} parent=27 // loop_header_branch
                %181 = sbr.rel (%p179) target = $region35
              $region32: #{short_circuit_net_forward.4} parent=27 // loop_body
                %v185 = vld [vmem:[%s183] sm:$0xff]
                %186 = vst [vmem:[%s184] sm:$0xff] %v185
                %v187 = vld [vmem:[%s183 + $0x8] sm:$0xff]
                %188 = vst [vmem:[%s184 + $0x8] sm:$0xff] %v187
                %v189 = vld [vmem:[%s183 + $0x10] sm:$0xff]
                %190 = vst [vmem:[%s184 + $0x10] sm:$0xff] %v189
                %v191 = vld [vmem:[%s183 + $0x18] sm:$0xff]
                %192 = vst [vmem:[%s184 + $0x18] sm:$0xff] %v191
                %v193 = vld [vmem:[%s183 + $0x100] sm:$0xff]
                %194 = vst [vmem:[%s184 + $0x20] sm:$0xff] %v193
                %v195 = vld [vmem:[%s183 + $0x108] sm:$0xff]
                %196 = vst [vmem:[%s184 + $0x28] sm:$0xff] %v195
                %v197 = vld [vmem:[%s183 + $0x110] sm:$0xff]
                %198 = vst [vmem:[%s184 + $0x30] sm:$0xff] %v197
                %v199 = vld [vmem:[%s183 + $0x118] sm:$0xff]
                %200 = vst [vmem:[%s184 + $0x38] sm:$0xff] %v199
              $region33: #{short_circuit_net_forward.4} parent=27 // loop_footer
                %s182 = sadd.s32 1, %s178
              $region34: #{short_circuit_net_forward.4} parent=27 // loop_footer_branch
                %177 = sbr.rel target = $region30
              $region35: #{short_circuit_net_forward.4} parent=27 // loop_exit
                _
            $region28: #{short_circuit_net_forward.4} parent=23 // pred_fallthru
              _
            // Predicated region
            $region36: #{short_circuit_net_forward.4} parent=23 // pred_check
              _
            $region37: #{short_circuit_net_forward.4} parent=23 // pred_check_branch
              %202 = sbr.rel target = $region39
            $region38: #{short_circuit_net_forward.4} parent=23 // pred_region
              _
            $region39: #{short_circuit_net_forward.4} parent=23 // pred_fallthru
              _
          $region24: #{short_circuit_net_forward.4} parent=19 // pred_fallthru
            _
          %203 = vnop
        $region20: #{short_circuit_net_forward.4} parent=15 // pred_fallthru
          _
        // Predicated region
        $region40: #{short_circuit_net_forward.4} parent=15 // pred_check
          %p204 = pneg %p81
        $region41: #{short_circuit_net_forward.4} parent=15 // pred_check_branch
          %206 = sbr.rel (%p204) target = $region43
        $region42: #{short_circuit_net_forward.4} parent=15 // pred_region
          %s207 = sand.u32 %s71, 1
          %s208 = scalar_lea.sflag [#allocation5], %s207
          %s209 = sand.u32 %s71, 1
          %s210 = smul.addr %s209, 2048
          %s211 = scalar_lea.vmem [#allocation4], %s210
          %s212 = smul.u32 128, %s21
          %s213 = smul.u32 4, %s20
          %215 = vsyncadd %s208, 0
          %s216 = smul.addr %s212, 8
          %s217 = sadd.s32 %s213, %s216
          %s218 = smul.addr %s217, 4
          %s219 = scalar_lea.hbm %s1, %s218
          %s220 = sshll.u32 %s219, 4
          %s221 = int_to_ptr.hbm [resolvable:$true] %s220
          %s222 = sshll.u32 %s211, 4
          %s223 = int_to_ptr.vmem [resolvable:$true] %s222
          %228 = dma.hbm_to_vmem [thread:$0]  %s221, 32768, %s223, %s208, 512, 256, 16
        $region43: #{short_circuit_net_forward.4} parent=15 // pred_fallthru
          _
        // Predicated region
        $region44: #{short_circuit_net_forward.4} parent=15 // pred_check
          %p229 = pneg %p107
        $region45: #{short_circuit_net_forward.4} parent=15 // pred_check_branch
          %231 = sbr.rel (%p229) target = $region47
        $region46: #{short_circuit_net_forward.4} parent=15 // pred_region
          %s232 = smul.u32 4, %s20
          %p233 = scmp.lt.s32.totalorder %s232, 7
          %s234 = scalar_select %p233, %s232, 7
          %s235 = scalar_lea.vmem %s2, %s234
          %s236 = smul.u32 4, %s20
        $region47: #{short_circuit_net_forward.4} parent=15 // pred_fallthru
          _
      $region16: #{short_circuit_net_forward.4} parent=5 // pred_fallthru
        _
      %p237 = scmp.le.s32.totalorder 1, %s12
      %p238 = scmp.lt.s32.totalorder %s12, 17
      %p239 = pnand %p237, %p238
      %p240 = pneg %p239
      // Predicated region
      $region48: #{short_circuit_net_forward.4} parent=5 // pred_check
        _
      $region49: #{short_circuit_net_forward.4} parent=5 // pred_check_branch
        %242 = sbr.rel (%p239) target = $region51
      $region50: #{short_circuit_net_forward.4} parent=5 // pred_region
        %s243 = ssub.s32 %s12, 1
        %s244 = sand.u32 %s46, 1
        %s245 = sand.u32 %s46, 1
        %s246 = smul.addr %s245, 64
        %s247 = scalar_lea.vmem [#allocation3], %s246
        // Predicated region
        $region52: #{short_circuit_net_forward.4} parent=50 // pred_check
          %p248 = pneg %p59
        $region53: #{short_circuit_net_forward.4} parent=50 // pred_check_branch
          %250 = sbr.rel (%p248) target = $region55
        $region54: #{short_circuit_net_forward.4} parent=50 // pred_region
          _
        $region55: #{short_circuit_net_forward.4} parent=50 // pred_fallthru
          _
        %s251 = sand.u32 %s74, 1
        %s252 = scalar_lea.sflag [#allocation5], %s251
        %s253 = sand.u32 %s74, 1
        %s254 = smul.addr %s253, 2048
        %s255 = scalar_lea.vmem [#allocation4], %s254
        // Predicated region
        $region56: #{short_circuit_net_forward.4} parent=50 // pred_check
          %p256 = pneg %p87
        $region57: #{short_circuit_net_forward.4} parent=50 // pred_check_branch
          %258 = sbr.rel (%p256) target = $region59
        $region58: #{short_circuit_net_forward.4} parent=50 // pred_region
          %260 = dma.done %s252, 32768
        $region59: #{short_circuit_net_forward.4} parent=50 // pred_fallthru
          _
        %s261 = sand.u32 %s46, 1
        %s262 = sand.u32 %s46, 1
        %s263 = smul.addr %s262, 64
        %s264 = scalar_lea.vmem [#allocation3], %s263
        %p265 = pneg %p59
        %p266 = pneg %p56
        %s267 = sand.u32 %s74, 1
        %s268 = scalar_lea.sflag [#allocation5], %s267
        %s269 = sand.u32 %s74, 1
        %s270 = smul.addr %s269, 2048
        %s271 = scalar_lea.vmem [#allocation4], %s270
        %p272 = pneg %p87
        %p273 = pneg %p84
        %s274 = smul.u32 4, %s23
        %p275 = scmp.lt.s32.totalorder %s274, 7
        %s276 = scalar_select %p275, %s274, 7
        %s277 = scalar_lea.vmem %s2, %s276
        %p278 = pneg %p113
        %p279 = pneg %p110
        %p280 = pneg %p141
        %p281 = pneg %p138
        %s282 = sand.u32 %s128, 1
        %s283 = sand.u32 %s128, 1
        %s284 = smul.addr %s283, 32
        %s285 = scalar_lea.vmem [#allocation6], %s284
        %s286 = smul.u32 2, %s22
        %s287 = smul.u32 8, %s24
        %s288 = smul.u32 128, %s24
        %s289 = smul.u32 4, %s23
        %s290 = smul.u32 4, %s23
        %p291 = scmp.lt.s32.totalorder %s290, 7
        %s292 = scalar_select %p291, %s290, 7
        %s293 = scalar_lea.vmem %s2, %s292
        %s294 = smul.u32 4, %s23
        %s295 = smul.u32 2, %s22
        %s296 = smul.u32 4, %s23
        %p297 = scmp.eq.s32.totalorder %s24, 0
        // Predicated region
        $region60: #{short_circuit_net_forward.4} parent=50 // pred_check
          %p298 = pneg %p297
        $region61: #{short_circuit_net_forward.4} parent=50 // pred_check_branch
          %300 = sbr.rel (%p298) target = $region63
        $region62: #{short_circuit_net_forward.4} parent=50 // pred_region
          %301 = vst [vmem:[#allocation2] sm:$0xff] 0.0
          %302 = vst [vmem:[#allocation2 + $0x8] sm:$0xff] 0.0
          %303 = vst [vmem:[#allocation2 + $0x10] sm:$0xff] 0.0
          %304 = vst [vmem:[#allocation2 + $0x18] sm:$0xff] 0.0
          %305 = vst [vmem:[#allocation2 + $0x20] sm:$0xff] 0.0
          %306 = vst [vmem:[#allocation2 + $0x28] sm:$0xff] 0.0
          %307 = vst [vmem:[#allocation2 + $0x30] sm:$0xff] 0.0
          %308 = vst [vmem:[#allocation2 + $0x38] sm:$0xff] 0.0
        $region63: #{short_circuit_net_forward.4} parent=50 // pred_fallthru
          _
        %v309 = vld [vmem:[#allocation2] sm:$0xff]
        %v310 = vld [vmem:[#allocation2 + $0x8] sm:$0xff]
        %v311 = vld [vmem:[#allocation2 + $0x10] sm:$0xff]
        %v312 = vld [vmem:[#allocation2 + $0x18] sm:$0xff]
        %v313 = vld [vmem:[#allocation2 + $0x20] sm:$0xff]
        %v314 = vld [vmem:[#allocation2 + $0x28] sm:$0xff]
        %v315 = vld [vmem:[#allocation2 + $0x30] sm:$0xff]
        %v316 = vld [vmem:[#allocation2 + $0x38] sm:$0xff]
        %v317 = vld [vmem:[%s247] sm:$0xff]
        %v318 = vld [vmem:[%s247 + $0x8] sm:$0xff]
        %v319 = vld [vmem:[%s247 + $0x10] sm:$0xff]
        %v320 = vld [vmem:[%s247 + $0x18] sm:$0xff]
        %v321 = vld [vmem:[%s247 + $0x20] sm:$0xff]
        %v322 = vld [vmem:[%s247 + $0x28] sm:$0xff]
        %v323 = vld [vmem:[%s247 + $0x30] sm:$0xff]
        %v324 = vld [vmem:[%s247 + $0x38] sm:$0xff]
        %v325 = vld [vmem:[%s255] sm:$0xff]
        %v326 = vld [vmem:[%s255 + $0x8] sm:$0xff]
        %v327 = vld [vmem:[%s255 + $0x10] sm:$0xff]
        %v328 = vld [vmem:[%s255 + $0x18] sm:$0xff]
        %v329 = vld [vmem:[%s255 + $0x20] sm:$0xff]
        %v330 = vld [vmem:[%s255 + $0x28] sm:$0xff]
        %v331 = vld [vmem:[%s255 + $0x30] sm:$0xff]
        %v332 = vld [vmem:[%s255 + $0x38] sm:$0xff]
        %v333 = vld [vmem:[%s255 + $0x40] sm:$0xff]
        %v334 = vld [vmem:[%s255 + $0x48] sm:$0xff]
        %v335 = vld [vmem:[%s255 + $0x50] sm:$0xff]
        %v336 = vld [vmem:[%s255 + $0x58] sm:$0xff]
        %v337 = vld [vmem:[%s255 + $0x60] sm:$0xff]
        %v338 = vld [vmem:[%s255 + $0x68] sm:$0xff]
        %v339 = vld [vmem:[%s255 + $0x70] sm:$0xff]
        %v340 = vld [vmem:[%s255 + $0x78] sm:$0xff]
        %v341 = vld [vmem:[%s255 + $0x80] sm:$0xff]
        %v342 = vld [vmem:[%s255 + $0x88] sm:$0xff]
        %v343 = vld [vmem:[%s255 + $0x90] sm:$0xff]
        %v344 = vld [vmem:[%s255 + $0x98] sm:$0xff]
        %v345 = vld [vmem:[%s255 + $0xa0] sm:$0xff]
        %v346 = vld [vmem:[%s255 + $0xa8] sm:$0xff]
        %v347 = vld [vmem:[%s255 + $0xb0] sm:$0xff]
        %v348 = vld [vmem:[%s255 + $0xb8] sm:$0xff]
        %v349 = vld [vmem:[%s255 + $0xc0] sm:$0xff]
        %v350 = vld [vmem:[%s255 + $0xc8] sm:$0xff]
        %v351 = vld [vmem:[%s255 + $0xd0] sm:$0xff]
        %v352 = vld [vmem:[%s255 + $0xd8] sm:$0xff]
        %v353 = vld [vmem:[%s255 + $0xe0] sm:$0xff]
        %v354 = vld [vmem:[%s255 + $0xe8] sm:$0xff]
        %v355 = vld [vmem:[%s255 + $0xf0] sm:$0xff]
        %v356 = vld [vmem:[%s255 + $0xf8] sm:$0xff]
        %v357 = vld [vmem:[%s255 + $0x100] sm:$0xff]
        %v358 = vld [vmem:[%s255 + $0x108] sm:$0xff]
        %v359 = vld [vmem:[%s255 + $0x110] sm:$0xff]
        %v360 = vld [vmem:[%s255 + $0x118] sm:$0xff]
        %v361 = vld [vmem:[%s255 + $0x120] sm:$0xff]
        %v362 = vld [vmem:[%s255 + $0x128] sm:$0xff]
        %v363 = vld [vmem:[%s255 + $0x130] sm:$0xff]
        %v364 = vld [vmem:[%s255 + $0x138] sm:$0xff]
        %v365 = vld [vmem:[%s255 + $0x140] sm:$0xff]
        %v366 = vld [vmem:[%s255 + $0x148] sm:$0xff]
        %v367 = vld [vmem:[%s255 + $0x150] sm:$0xff]
        %v368 = vld [vmem:[%s255 + $0x158] sm:$0xff]
        %v369 = vld [vmem:[%s255 + $0x160] sm:$0xff]
        %v370 = vld [vmem:[%s255 + $0x168] sm:$0xff]
        %v371 = vld [vmem:[%s255 + $0x170] sm:$0xff]
        %v372 = vld [vmem:[%s255 + $0x178] sm:$0xff]
        %v373 = vld [vmem:[%s255 + $0x180] sm:$0xff]
        %v374 = vld [vmem:[%s255 + $0x188] sm:$0xff]
        %v375 = vld [vmem:[%s255 + $0x190] sm:$0xff]
        %v376 = vld [vmem:[%s255 + $0x198] sm:$0xff]
        %v377 = vld [vmem:[%s255 + $0x1a0] sm:$0xff]
        %v378 = vld [vmem:[%s255 + $0x1a8] sm:$0xff]
        %v379 = vld [vmem:[%s255 + $0x1b0] sm:$0xff]
        %v380 = vld [vmem:[%s255 + $0x1b8] sm:$0xff]
        %v381 = vld [vmem:[%s255 + $0x1c0] sm:$0xff]
        %v382 = vld [vmem:[%s255 + $0x1c8] sm:$0xff]
        %v383 = vld [vmem:[%s255 + $0x1d0] sm:$0xff]
        %v384 = vld [vmem:[%s255 + $0x1d8] sm:$0xff]
        %v385 = vld [vmem:[%s255 + $0x1e0] sm:$0xff]
        %v386 = vld [vmem:[%s255 + $0x1e8] sm:$0xff]
        %v387 = vld [vmem:[%s255 + $0x1f0] sm:$0xff]
        %v388 = vld [vmem:[%s255 + $0x1f8] sm:$0xff]
        %v389 = vld [vmem:[%s255 + $0x200] sm:$0xff]
        %v390 = vld [vmem:[%s255 + $0x208] sm:$0xff]
        %v391 = vld [vmem:[%s255 + $0x210] sm:$0xff]
        %v392 = vld [vmem:[%s255 + $0x218] sm:$0xff]
        %v393 = vld [vmem:[%s255 + $0x220] sm:$0xff]
        %v394 = vld [vmem:[%s255 + $0x228] sm:$0xff]
        %v395 = vld [vmem:[%s255 + $0x230] sm:$0xff]
        %v396 = vld [vmem:[%s255 + $0x238] sm:$0xff]
        %v397 = vld [vmem:[%s255 + $0x240] sm:$0xff]
        %v398 = vld [vmem:[%s255 + $0x248] sm:$0xff]
        %v399 = vld [vmem:[%s255 + $0x250] sm:$0xff]
        %v400 = vld [vmem:[%s255 + $0x258] sm:$0xff]
        %v401 = vld [vmem:[%s255 + $0x260] sm:$0xff]
        %v402 = vld [vmem:[%s255 + $0x268] sm:$0xff]
        %v403 = vld [vmem:[%s255 + $0x270] sm:$0xff]
        %v404 = vld [vmem:[%s255 + $0x278] sm:$0xff]
        %v405 = vld [vmem:[%s255 + $0x280] sm:$0xff]
        %v406 = vld [vmem:[%s255 + $0x288] sm:$0xff]
        %v407 = vld [vmem:[%s255 + $0x290] sm:$0xff]
        %v408 = vld [vmem:[%s255 + $0x298] sm:$0xff]
        %v409 = vld [vmem:[%s255 + $0x2a0] sm:$0xff]
        %v410 = vld [vmem:[%s255 + $0x2a8] sm:$0xff]
        %v411 = vld [vmem:[%s255 + $0x2b0] sm:$0xff]
        %v412 = vld [vmem:[%s255 + $0x2b8] sm:$0xff]
        %v413 = vld [vmem:[%s255 + $0x2c0] sm:$0xff]
        %v414 = vld [vmem:[%s255 + $0x2c8] sm:$0xff]
        %v415 = vld [vmem:[%s255 + $0x2d0] sm:$0xff]
        %v416 = vld [vmem:[%s255 + $0x2d8] sm:$0xff]
        %v417 = vld [vmem:[%s255 + $0x2e0] sm:$0xff]
        %v418 = vld [vmem:[%s255 + $0x2e8] sm:$0xff]
        %v419 = vld [vmem:[%s255 + $0x2f0] sm:$0xff]
        %v420 = vld [vmem:[%s255 + $0x2f8] sm:$0xff]
        %v421 = vld [vmem:[%s255 + $0x300] sm:$0xff]
        %v422 = vld [vmem:[%s255 + $0x308] sm:$0xff]
        %v423 = vld [vmem:[%s255 + $0x310] sm:$0xff]
        %v424 = vld [vmem:[%s255 + $0x318] sm:$0xff]
        %v425 = vld [vmem:[%s255 + $0x320] sm:$0xff]
        %v426 = vld [vmem:[%s255 + $0x328] sm:$0xff]
        %v427 = vld [vmem:[%s255 + $0x330] sm:$0xff]
        %v428 = vld [vmem:[%s255 + $0x338] sm:$0xff]
        %v429 = vld [vmem:[%s255 + $0x340] sm:$0xff]
        %v430 = vld [vmem:[%s255 + $0x348] sm:$0xff]
        %v431 = vld [vmem:[%s255 + $0x350] sm:$0xff]
        %v432 = vld [vmem:[%s255 + $0x358] sm:$0xff]
        %v433 = vld [vmem:[%s255 + $0x360] sm:$0xff]
        %v434 = vld [vmem:[%s255 + $0x368] sm:$0xff]
        %v435 = vld [vmem:[%s255 + $0x370] sm:$0xff]
        %v436 = vld [vmem:[%s255 + $0x378] sm:$0xff]
        %v437 = vld [vmem:[%s255 + $0x380] sm:$0xff]
        %v438 = vld [vmem:[%s255 + $0x388] sm:$0xff]
        %v439 = vld [vmem:[%s255 + $0x390] sm:$0xff]
        %v440 = vld [vmem:[%s255 + $0x398] sm:$0xff]
        %v441 = vld [vmem:[%s255 + $0x3a0] sm:$0xff]
        %v442 = vld [vmem:[%s255 + $0x3a8] sm:$0xff]
        %v443 = vld [vmem:[%s255 + $0x3b0] sm:$0xff]
        %v444 = vld [vmem:[%s255 + $0x3b8] sm:$0xff]
        %v445 = vld [vmem:[%s255 + $0x3c0] sm:$0xff]
        %v446 = vld [vmem:[%s255 + $0x3c8] sm:$0xff]
        %v447 = vld [vmem:[%s255 + $0x3d0] sm:$0xff]
        %v448 = vld [vmem:[%s255 + $0x3d8] sm:$0xff]
        %v449 = vld [vmem:[%s255 + $0x3e0] sm:$0xff]
        %v450 = vld [vmem:[%s255 + $0x3e8] sm:$0xff]
        %v451 = vld [vmem:[%s255 + $0x3f0] sm:$0xff]
        %v452 = vld [vmem:[%s255 + $0x3f8] sm:$0xff]
        %v453 = vld [vmem:[%s255 + $0x400] sm:$0xff]
        %v454 = vld [vmem:[%s255 + $0x408] sm:$0xff]
        %v455 = vld [vmem:[%s255 + $0x410] sm:$0xff]
        %v456 = vld [vmem:[%s255 + $0x418] sm:$0xff]
        %v457 = vld [vmem:[%s255 + $0x420] sm:$0xff]
        %v458 = vld [vmem:[%s255 + $0x428] sm:$0xff]
        %v459 = vld [vmem:[%s255 + $0x430] sm:$0xff]
        %v460 = vld [vmem:[%s255 + $0x438] sm:$0xff]
        %v461 = vld [vmem:[%s255 + $0x440] sm:$0xff]
        %v462 = vld [vmem:[%s255 + $0x448] sm:$0xff]
        %v463 = vld [vmem:[%s255 + $0x450] sm:$0xff]
        %v464 = vld [vmem:[%s255 + $0x458] sm:$0xff]
        %v465 = vld [vmem:[%s255 + $0x460] sm:$0xff]
        %v466 = vld [vmem:[%s255 + $0x468] sm:$0xff]
        %v467 = vld [vmem:[%s255 + $0x470] sm:$0xff]
        %v468 = vld [vmem:[%s255 + $0x478] sm:$0xff]
        %v469 = vld [vmem:[%s255 + $0x480] sm:$0xff]
        %v470 = vld [vmem:[%s255 + $0x488] sm:$0xff]
        %v471 = vld [vmem:[%s255 + $0x490] sm:$0xff]
        %v472 = vld [vmem:[%s255 + $0x498] sm:$0xff]
        %v473 = vld [vmem:[%s255 + $0x4a0] sm:$0xff]
        %v474 = vld [vmem:[%s255 + $0x4a8] sm:$0xff]
        %v475 = vld [vmem:[%s255 + $0x4b0] sm:$0xff]
        %v476 = vld [vmem:[%s255 + $0x4b8] sm:$0xff]
        %v477 = vld [vmem:[%s255 + $0x4c0] sm:$0xff]
        %v478 = vld [vmem:[%s255 + $0x4c8] sm:$0xff]
        %v479 = vld [vmem:[%s255 + $0x4d0] sm:$0xff]
        %v480 = vld [vmem:[%s255 + $0x4d8] sm:$0xff]
        %v481 = vld [vmem:[%s255 + $0x4e0] sm:$0xff]
        %v482 = vld [vmem:[%s255 + $0x4e8] sm:$0xff]
        %v483 = vld [vmem:[%s255 + $0x4f0] sm:$0xff]
        %v484 = vld [vmem:[%s255 + $0x4f8] sm:$0xff]
        %v485 = vld [vmem:[%s255 + $0x500] sm:$0xff]
        %v486 = vld [vmem:[%s255 + $0x508] sm:$0xff]
        %v487 = vld [vmem:[%s255 + $0x510] sm:$0xff]
        %v488 = vld [vmem:[%s255 + $0x518] sm:$0xff]
        %v489 = vld [vmem:[%s255 + $0x520] sm:$0xff]
        %v490 = vld [vmem:[%s255 + $0x528] sm:$0xff]
        %v491 = vld [vmem:[%s255 + $0x530] sm:$0xff]
        %v492 = vld [vmem:[%s255 + $0x538] sm:$0xff]
        %v493 = vld [vmem:[%s255 + $0x540] sm:$0xff]
        %v494 = vld [vmem:[%s255 + $0x548] sm:$0xff]
        %v495 = vld [vmem:[%s255 + $0x550] sm:$0xff]
        %v496 = vld [vmem:[%s255 + $0x558] sm:$0xff]
        %v497 = vld [vmem:[%s255 + $0x560] sm:$0xff]
        %v498 = vld [vmem:[%s255 + $0x568] sm:$0xff]
        %v499 = vld [vmem:[%s255 + $0x570] sm:$0xff]
        %v500 = vld [vmem:[%s255 + $0x578] sm:$0xff]
        %v501 = vld [vmem:[%s255 + $0x580] sm:$0xff]
        %v502 = vld [vmem:[%s255 + $0x588] sm:$0xff]
        %v503 = vld [vmem:[%s255 + $0x590] sm:$0xff]
        %v504 = vld [vmem:[%s255 + $0x598] sm:$0xff]
        %v505 = vld [vmem:[%s255 + $0x5a0] sm:$0xff]
        %v506 = vld [vmem:[%s255 + $0x5a8] sm:$0xff]
        %v507 = vld [vmem:[%s255 + $0x5b0] sm:$0xff]
        %v508 = vld [vmem:[%s255 + $0x5b8] sm:$0xff]
        %v509 = vld [vmem:[%s255 + $0x5c0] sm:$0xff]
        %v510 = vld [vmem:[%s255 + $0x5c8] sm:$0xff]
        %v511 = vld [vmem:[%s255 + $0x5d0] sm:$0xff]
        %v512 = vld [vmem:[%s255 + $0x5d8] sm:$0xff]
        %v513 = vld [vmem:[%s255 + $0x5e0] sm:$0xff]
        %v514 = vld [vmem:[%s255 + $0x5e8] sm:$0xff]
        %v515 = vld [vmem:[%s255 + $0x5f0] sm:$0xff]
        %v516 = vld [vmem:[%s255 + $0x5f8] sm:$0xff]
        %v517 = vld [vmem:[%s255 + $0x600] sm:$0xff]
        %v518 = vld [vmem:[%s255 + $0x608] sm:$0xff]
        %v519 = vld [vmem:[%s255 + $0x610] sm:$0xff]
        %v520 = vld [vmem:[%s255 + $0x618] sm:$0xff]
        %v521 = vld [vmem:[%s255 + $0x620] sm:$0xff]
        %v522 = vld [vmem:[%s255 + $0x628] sm:$0xff]
        %v523 = vld [vmem:[%s255 + $0x630] sm:$0xff]
        %v524 = vld [vmem:[%s255 + $0x638] sm:$0xff]
        %v525 = vld [vmem:[%s255 + $0x640] sm:$0xff]
        %v526 = vld [vmem:[%s255 + $0x648] sm:$0xff]
        %v527 = vld [vmem:[%s255 + $0x650] sm:$0xff]
        %v528 = vld [vmem:[%s255 + $0x658] sm:$0xff]
        %v529 = vld [vmem:[%s255 + $0x660] sm:$0xff]
        %v530 = vld [vmem:[%s255 + $0x668] sm:$0xff]
        %v531 = vld [vmem:[%s255 + $0x670] sm:$0xff]
        %v532 = vld [vmem:[%s255 + $0x678] sm:$0xff]
        %v533 = vld [vmem:[%s255 + $0x680] sm:$0xff]
        %v534 = vld [vmem:[%s255 + $0x688] sm:$0xff]
        %v535 = vld [vmem:[%s255 + $0x690] sm:$0xff]
        %v536 = vld [vmem:[%s255 + $0x698] sm:$0xff]
        %v537 = vld [vmem:[%s255 + $0x6a0] sm:$0xff]
        %v538 = vld [vmem:[%s255 + $0x6a8] sm:$0xff]
        %v539 = vld [vmem:[%s255 + $0x6b0] sm:$0xff]
        %v540 = vld [vmem:[%s255 + $0x6b8] sm:$0xff]
        %v541 = vld [vmem:[%s255 + $0x6c0] sm:$0xff]
        %v542 = vld [vmem:[%s255 + $0x6c8] sm:$0xff]
        %v543 = vld [vmem:[%s255 + $0x6d0] sm:$0xff]
        %v544 = vld [vmem:[%s255 + $0x6d8] sm:$0xff]
        %v545 = vld [vmem:[%s255 + $0x6e0] sm:$0xff]
        %v546 = vld [vmem:[%s255 + $0x6e8] sm:$0xff]
        %v547 = vld [vmem:[%s255 + $0x6f0] sm:$0xff]
        %v548 = vld [vmem:[%s255 + $0x6f8] sm:$0xff]
        %v549 = vld [vmem:[%s255 + $0x700] sm:$0xff]
        %v550 = vld [vmem:[%s255 + $0x708] sm:$0xff]
        %v551 = vld [vmem:[%s255 + $0x710] sm:$0xff]
        %v552 = vld [vmem:[%s255 + $0x718] sm:$0xff]
        %v553 = vld [vmem:[%s255 + $0x720] sm:$0xff]
        %v554 = vld [vmem:[%s255 + $0x728] sm:$0xff]
        %v555 = vld [vmem:[%s255 + $0x730] sm:$0xff]
        %v556 = vld [vmem:[%s255 + $0x738] sm:$0xff]
        %v557 = vld [vmem:[%s255 + $0x740] sm:$0xff]
        %v558 = vld [vmem:[%s255 + $0x748] sm:$0xff]
        %v559 = vld [vmem:[%s255 + $0x750] sm:$0xff]
        %v560 = vld [vmem:[%s255 + $0x758] sm:$0xff]
        %v561 = vld [vmem:[%s255 + $0x760] sm:$0xff]
        %v562 = vld [vmem:[%s255 + $0x768] sm:$0xff]
        %v563 = vld [vmem:[%s255 + $0x770] sm:$0xff]
        %v564 = vld [vmem:[%s255 + $0x778] sm:$0xff]
        %v565 = vld [vmem:[%s255 + $0x780] sm:$0xff]
        %v566 = vld [vmem:[%s255 + $0x788] sm:$0xff]
        %v567 = vld [vmem:[%s255 + $0x790] sm:$0xff]
        %v568 = vld [vmem:[%s255 + $0x798] sm:$0xff]
        %v569 = vld [vmem:[%s255 + $0x7a0] sm:$0xff]
        %v570 = vld [vmem:[%s255 + $0x7a8] sm:$0xff]
        %v571 = vld [vmem:[%s255 + $0x7b0] sm:$0xff]
        %v572 = vld [vmem:[%s255 + $0x7b8] sm:$0xff]
        %v573 = vld [vmem:[%s255 + $0x7c0] sm:$0xff]
        %v574 = vld [vmem:[%s255 + $0x7c8] sm:$0xff]
        %v575 = vld [vmem:[%s255 + $0x7d0] sm:$0xff]
        %v576 = vld [vmem:[%s255 + $0x7d8] sm:$0xff]
        %v577 = vld [vmem:[%s255 + $0x7e0] sm:$0xff]
        %v578 = vld [vmem:[%s255 + $0x7e8] sm:$0xff]
        %v579 = vld [vmem:[%s255 + $0x7f0] sm:$0xff]
        %v580 = vld [vmem:[%s255 + $0x7f8] sm:$0xff]
        %v589 = vunpack.c.l.b16 %v317
        %v590 = vunpack.c.h.b16 %v317
        %v591 = vunpack.c.l.b16 %v318
        %v592 = vunpack.c.h.b16 %v318
        %v593 = vunpack.c.l.b16 %v319
        %v594 = vunpack.c.h.b16 %v319
        %v595 = vunpack.c.l.b16 %v320
        %v596 = vunpack.c.h.b16 %v320
        %v597 = vunpack.c.l.b16 %v321
        %v598 = vunpack.c.h.b16 %v321
        %v599 = vunpack.c.l.b16 %v322
        %v600 = vunpack.c.h.b16 %v322
        %v601 = vunpack.c.l.b16 %v323
        %v602 = vunpack.c.h.b16 %v323
        %v603 = vunpack.c.l.b16 %v324
        %v604 = vunpack.c.h.b16 %v324
        %v605 = vpack.c.b16 %v597, %v589
        %v606 = vpack.c.b16 %v598, %v590
        %v607 = vpack.c.b16 %v599, %v591
        %v608 = vpack.c.b16 %v600, %v592
        %v609 = vpack.c.b16 %v601, %v593
        %v610 = vpack.c.b16 %v602, %v594
        %v611 = vpack.c.b16 %v603, %v595
        %v612 = vpack.c.b16 %v604, %v596
        %v877 = vunpack.c.l.b16 %v325
        %v878 = vunpack.c.h.b16 %v325
        %v879 = vunpack.c.l.b16 %v326
        %v880 = vunpack.c.h.b16 %v326
        %v881 = vunpack.c.l.b16 %v327
        %v882 = vunpack.c.h.b16 %v327
        %v883 = vunpack.c.l.b16 %v328
        %v884 = vunpack.c.h.b16 %v328
        %v885 = vunpack.c.l.b16 %v329
        %v886 = vunpack.c.h.b16 %v329
        %v887 = vunpack.c.l.b16 %v330
        %v888 = vunpack.c.h.b16 %v330
        %v889 = vunpack.c.l.b16 %v331
        %v890 = vunpack.c.h.b16 %v331
        %v891 = vunpack.c.l.b16 %v332
        %v892 = vunpack.c.h.b16 %v332
        %v893 = vunpack.c.l.b16 %v333
        %v894 = vunpack.c.h.b16 %v333
        %v895 = vunpack.c.l.b16 %v334
        %v896 = vunpack.c.h.b16 %v334
        %v897 = vunpack.c.l.b16 %v335
        %v898 = vunpack.c.h.b16 %v335
        %v899 = vunpack.c.l.b16 %v336
        %v900 = vunpack.c.h.b16 %v336
        %v901 = vunpack.c.l.b16 %v337
        %v902 = vunpack.c.h.b16 %v337
        %v903 = vunpack.c.l.b16 %v338
        %v904 = vunpack.c.h.b16 %v338
        %v905 = vunpack.c.l.b16 %v339
        %v906 = vunpack.c.h.b16 %v339
        %v907 = vunpack.c.l.b16 %v340
        %v908 = vunpack.c.h.b16 %v340
        %v909 = vunpack.c.l.b16 %v341
        %v910 = vunpack.c.h.b16 %v341
        %v911 = vunpack.c.l.b16 %v342
        %v912 = vunpack.c.h.b16 %v342
        %v913 = vunpack.c.l.b16 %v343
        %v914 = vunpack.c.h.b16 %v343
        %v915 = vunpack.c.l.b16 %v344
        %v916 = vunpack.c.h.b16 %v344
        %v917 = vunpack.c.l.b16 %v345
        %v918 = vunpack.c.h.b16 %v345
        %v919 = vunpack.c.l.b16 %v346
        %v920 = vunpack.c.h.b16 %v346
        %v921 = vunpack.c.l.b16 %v347
        %v922 = vunpack.c.h.b16 %v347
        %v923 = vunpack.c.l.b16 %v348
        %v924 = vunpack.c.h.b16 %v348
        %v925 = vunpack.c.l.b16 %v349
        %v926 = vunpack.c.h.b16 %v349
        %v927 = vunpack.c.l.b16 %v350
        %v928 = vunpack.c.h.b16 %v350
        %v929 = vunpack.c.l.b16 %v351
        %v930 = vunpack.c.h.b16 %v351
        %v931 = vunpack.c.l.b16 %v352
        %v932 = vunpack.c.h.b16 %v352
        %v933 = vunpack.c.l.b16 %v353
        %v934 = vunpack.c.h.b16 %v353
        %v935 = vunpack.c.l.b16 %v354
        %v936 = vunpack.c.h.b16 %v354
        %v937 = vunpack.c.l.b16 %v355
        %v938 = vunpack.c.h.b16 %v355
        %v939 = vunpack.c.l.b16 %v356
        %v940 = vunpack.c.h.b16 %v356
        %v941 = vunpack.c.l.b16 %v357
        %v942 = vunpack.c.h.b16 %v357
        %v943 = vunpack.c.l.b16 %v358
        %v944 = vunpack.c.h.b16 %v358
        %v945 = vunpack.c.l.b16 %v359
        %v946 = vunpack.c.h.b16 %v359
        %v947 = vunpack.c.l.b16 %v360
        %v948 = vunpack.c.h.b16 %v360
        %v949 = vunpack.c.l.b16 %v361
        %v950 = vunpack.c.h.b16 %v361
        %v951 = vunpack.c.l.b16 %v362
        %v952 = vunpack.c.h.b16 %v362
        %v953 = vunpack.c.l.b16 %v363
        %v954 = vunpack.c.h.b16 %v363
        %v955 = vunpack.c.l.b16 %v364
        %v956 = vunpack.c.h.b16 %v364
        %v957 = vunpack.c.l.b16 %v365
        %v958 = vunpack.c.h.b16 %v365
        %v959 = vunpack.c.l.b16 %v366
        %v960 = vunpack.c.h.b16 %v366
        %v961 = vunpack.c.l.b16 %v367
        %v962 = vunpack.c.h.b16 %v367
        %v963 = vunpack.c.l.b16 %v368
        %v964 = vunpack.c.h.b16 %v368
        %v965 = vunpack.c.l.b16 %v369
        %v966 = vunpack.c.h.b16 %v369
        %v967 = vunpack.c.l.b16 %v370
        %v968 = vunpack.c.h.b16 %v370
        %v969 = vunpack.c.l.b16 %v371
        %v970 = vunpack.c.h.b16 %v371
        %v971 = vunpack.c.l.b16 %v372
        %v972 = vunpack.c.h.b16 %v372
        %v973 = vunpack.c.l.b16 %v373
        %v974 = vunpack.c.h.b16 %v373
        %v975 = vunpack.c.l.b16 %v374
        %v976 = vunpack.c.h.b16 %v374
        %v977 = vunpack.c.l.b16 %v375
        %v978 = vunpack.c.h.b16 %v375
        %v979 = vunpack.c.l.b16 %v376
        %v980 = vunpack.c.h.b16 %v376
        %v981 = vunpack.c.l.b16 %v377
        %v982 = vunpack.c.h.b16 %v377
        %v983 = vunpack.c.l.b16 %v378
        %v984 = vunpack.c.h.b16 %v378
        %v985 = vunpack.c.l.b16 %v379
        %v986 = vunpack.c.h.b16 %v379
        %v987 = vunpack.c.l.b16 %v380
        %v988 = vunpack.c.h.b16 %v380
        %v989 = vunpack.c.l.b16 %v381
        %v990 = vunpack.c.h.b16 %v381
        %v991 = vunpack.c.l.b16 %v382
        %v992 = vunpack.c.h.b16 %v382
        %v993 = vunpack.c.l.b16 %v383
        %v994 = vunpack.c.h.b16 %v383
        %v995 = vunpack.c.l.b16 %v384
        %v996 = vunpack.c.h.b16 %v384
        %v997 = vunpack.c.l.b16 %v385
        %v998 = vunpack.c.h.b16 %v385
        %v999 = vunpack.c.l.b16 %v386
        %v1000 = vunpack.c.h.b16 %v386
        %v1001 = vunpack.c.l.b16 %v387
        %v1002 = vunpack.c.h.b16 %v387
        %v1003 = vunpack.c.l.b16 %v388
        %v1004 = vunpack.c.h.b16 %v388
        %v1005 = vunpack.c.l.b16 %v389
        %v1006 = vunpack.c.h.b16 %v389
        %v1007 = vunpack.c.l.b16 %v390
        %v1008 = vunpack.c.h.b16 %v390
        %v1009 = vunpack.c.l.b16 %v391
        %v1010 = vunpack.c.h.b16 %v391
        %v1011 = vunpack.c.l.b16 %v392
        %v1012 = vunpack.c.h.b16 %v392
        %v1013 = vunpack.c.l.b16 %v393
        %v1014 = vunpack.c.h.b16 %v393
        %v1015 = vunpack.c.l.b16 %v394
        %v1016 = vunpack.c.h.b16 %v394
        %v1017 = vunpack.c.l.b16 %v395
        %v1018 = vunpack.c.h.b16 %v395
        %v1019 = vunpack.c.l.b16 %v396
        %v1020 = vunpack.c.h.b16 %v396
        %v1021 = vunpack.c.l.b16 %v397
        %v1022 = vunpack.c.h.b16 %v397
        %v1023 = vunpack.c.l.b16 %v398
        %v1024 = vunpack.c.h.b16 %v398
        %v1025 = vunpack.c.l.b16 %v399
        %v1026 = vunpack.c.h.b16 %v399
        %v1027 = vunpack.c.l.b16 %v400
        %v1028 = vunpack.c.h.b16 %v400
        %v1029 = vunpack.c.l.b16 %v401
        %v1030 = vunpack.c.h.b16 %v401
        %v1031 = vunpack.c.l.b16 %v402
        %v1032 = vunpack.c.h.b16 %v402
        %v1033 = vunpack.c.l.b16 %v403
        %v1034 = vunpack.c.h.b16 %v403
        %v1035 = vunpack.c.l.b16 %v404
        %v1036 = vunpack.c.h.b16 %v404
        %v1037 = vunpack.c.l.b16 %v405
        %v1038 = vunpack.c.h.b16 %v405
        %v1039 = vunpack.c.l.b16 %v406
        %v1040 = vunpack.c.h.b16 %v406
        %v1041 = vunpack.c.l.b16 %v407
        %v1042 = vunpack.c.h.b16 %v407
        %v1043 = vunpack.c.l.b16 %v408
        %v1044 = vunpack.c.h.b16 %v408
        %v1045 = vunpack.c.l.b16 %v409
        %v1046 = vunpack.c.h.b16 %v409
        %v1047 = vunpack.c.l.b16 %v410
        %v1048 = vunpack.c.h.b16 %v410
        %v1049 = vunpack.c.l.b16 %v411
        %v1050 = vunpack.c.h.b16 %v411
        %v1051 = vunpack.c.l.b16 %v412
        %v1052 = vunpack.c.h.b16 %v412
        %v1053 = vunpack.c.l.b16 %v413
        %v1054 = vunpack.c.h.b16 %v413
        %v1055 = vunpack.c.l.b16 %v414
        %v1056 = vunpack.c.h.b16 %v414
        %v1057 = vunpack.c.l.b16 %v415
        %v1058 = vunpack.c.h.b16 %v415
        %v1059 = vunpack.c.l.b16 %v416
        %v1060 = vunpack.c.h.b16 %v416
        %v1061 = vunpack.c.l.b16 %v417
        %v1062 = vunpack.c.h.b16 %v417
        %v1063 = vunpack.c.l.b16 %v418
        %v1064 = vunpack.c.h.b16 %v418
        %v1065 = vunpack.c.l.b16 %v419
        %v1066 = vunpack.c.h.b16 %v419
        %v1067 = vunpack.c.l.b16 %v420
        %v1068 = vunpack.c.h.b16 %v420
        %v1069 = vunpack.c.l.b16 %v421
        %v1070 = vunpack.c.h.b16 %v421
        %v1071 = vunpack.c.l.b16 %v422
        %v1072 = vunpack.c.h.b16 %v422
        %v1073 = vunpack.c.l.b16 %v423
        %v1074 = vunpack.c.h.b16 %v423
        %v1075 = vunpack.c.l.b16 %v424
        %v1076 = vunpack.c.h.b16 %v424
        %v1077 = vunpack.c.l.b16 %v425
        %v1078 = vunpack.c.h.b16 %v425
        %v1079 = vunpack.c.l.b16 %v426
        %v1080 = vunpack.c.h.b16 %v426
        %v1081 = vunpack.c.l.b16 %v427
        %v1082 = vunpack.c.h.b16 %v427
        %v1083 = vunpack.c.l.b16 %v428
        %v1084 = vunpack.c.h.b16 %v428
        %v1085 = vunpack.c.l.b16 %v429
        %v1086 = vunpack.c.h.b16 %v429
        %v1087 = vunpack.c.l.b16 %v430
        %v1088 = vunpack.c.h.b16 %v430
        %v1089 = vunpack.c.l.b16 %v431
        %v1090 = vunpack.c.h.b16 %v431
        %v1091 = vunpack.c.l.b16 %v432
        %v1092 = vunpack.c.h.b16 %v432
        %v1093 = vunpack.c.l.b16 %v433
        %v1094 = vunpack.c.h.b16 %v433
        %v1095 = vunpack.c.l.b16 %v434
        %v1096 = vunpack.c.h.b16 %v434
        %v1097 = vunpack.c.l.b16 %v435
        %v1098 = vunpack.c.h.b16 %v435
        %v1099 = vunpack.c.l.b16 %v436
        %v1100 = vunpack.c.h.b16 %v436
        %v1101 = vunpack.c.l.b16 %v437
        %v1102 = vunpack.c.h.b16 %v437
        %v1103 = vunpack.c.l.b16 %v438
        %v1104 = vunpack.c.h.b16 %v438
        %v1105 = vunpack.c.l.b16 %v439
        %v1106 = vunpack.c.h.b16 %v439
        %v1107 = vunpack.c.l.b16 %v440
        %v1108 = vunpack.c.h.b16 %v440
        %v1109 = vunpack.c.l.b16 %v441
        %v1110 = vunpack.c.h.b16 %v441
        %v1111 = vunpack.c.l.b16 %v442
        %v1112 = vunpack.c.h.b16 %v442
        %v1113 = vunpack.c.l.b16 %v443
        %v1114 = vunpack.c.h.b16 %v443
        %v1115 = vunpack.c.l.b16 %v444
        %v1116 = vunpack.c.h.b16 %v444
        %v1117 = vunpack.c.l.b16 %v445
        %v1118 = vunpack.c.h.b16 %v445
        %v1119 = vunpack.c.l.b16 %v446
        %v1120 = vunpack.c.h.b16 %v446
        %v1121 = vunpack.c.l.b16 %v447
        %v1122 = vunpack.c.h.b16 %v447
        %v1123 = vunpack.c.l.b16 %v448
        %v1124 = vunpack.c.h.b16 %v448
        %v1125 = vunpack.c.l.b16 %v449
        %v1126 = vunpack.c.h.b16 %v449
        %v1127 = vunpack.c.l.b16 %v450
        %v1128 = vunpack.c.h.b16 %v450
        %v1129 = vunpack.c.l.b16 %v451
        %v1130 = vunpack.c.h.b16 %v451
        %v1131 = vunpack.c.l.b16 %v452
        %v1132 = vunpack.c.h.b16 %v452
        %v1133 = vunpack.c.l.b16 %v453
        %v1134 = vunpack.c.h.b16 %v453
        %v1135 = vunpack.c.l.b16 %v454
        %v1136 = vunpack.c.h.b16 %v454
        %v1137 = vunpack.c.l.b16 %v455
        %v1138 = vunpack.c.h.b16 %v455
        %v1139 = vunpack.c.l.b16 %v456
        %v1140 = vunpack.c.h.b16 %v456
        %v1141 = vunpack.c.l.b16 %v457
        %v1142 = vunpack.c.h.b16 %v457
        %v1143 = vunpack.c.l.b16 %v458
        %v1144 = vunpack.c.h.b16 %v458
        %v1145 = vunpack.c.l.b16 %v459
        %v1146 = vunpack.c.h.b16 %v459
        %v1147 = vunpack.c.l.b16 %v460
        %v1148 = vunpack.c.h.b16 %v460
        %v1149 = vunpack.c.l.b16 %v461
        %v1150 = vunpack.c.h.b16 %v461
        %v1151 = vunpack.c.l.b16 %v462
        %v1152 = vunpack.c.h.b16 %v462
        %v1153 = vunpack.c.l.b16 %v463
        %v1154 = vunpack.c.h.b16 %v463
        %v1155 = vunpack.c.l.b16 %v464
        %v1156 = vunpack.c.h.b16 %v464
        %v1157 = vunpack.c.l.b16 %v465
        %v1158 = vunpack.c.h.b16 %v465
        %v1159 = vunpack.c.l.b16 %v466
        %v1160 = vunpack.c.h.b16 %v466
        %v1161 = vunpack.c.l.b16 %v467
        %v1162 = vunpack.c.h.b16 %v467
        %v1163 = vunpack.c.l.b16 %v468
        %v1164 = vunpack.c.h.b16 %v468
        %v1165 = vunpack.c.l.b16 %v469
        %v1166 = vunpack.c.h.b16 %v469
        %v1167 = vunpack.c.l.b16 %v470
        %v1168 = vunpack.c.h.b16 %v470
        %v1169 = vunpack.c.l.b16 %v471
        %v1170 = vunpack.c.h.b16 %v471
        %v1171 = vunpack.c.l.b16 %v472
        %v1172 = vunpack.c.h.b16 %v472
        %v1173 = vunpack.c.l.b16 %v473
        %v1174 = vunpack.c.h.b16 %v473
        %v1175 = vunpack.c.l.b16 %v474
        %v1176 = vunpack.c.h.b16 %v474
        %v1177 = vunpack.c.l.b16 %v475
        %v1178 = vunpack.c.h.b16 %v475
        %v1179 = vunpack.c.l.b16 %v476
        %v1180 = vunpack.c.h.b16 %v476
        %v1181 = vunpack.c.l.b16 %v477
        %v1182 = vunpack.c.h.b16 %v477
        %v1183 = vunpack.c.l.b16 %v478
        %v1184 = vunpack.c.h.b16 %v478
        %v1185 = vunpack.c.l.b16 %v479
        %v1186 = vunpack.c.h.b16 %v479
        %v1187 = vunpack.c.l.b16 %v480
        %v1188 = vunpack.c.h.b16 %v480
        %v1189 = vunpack.c.l.b16 %v481
        %v1190 = vunpack.c.h.b16 %v481
        %v1191 = vunpack.c.l.b16 %v482
        %v1192 = vunpack.c.h.b16 %v482
        %v1193 = vunpack.c.l.b16 %v483
        %v1194 = vunpack.c.h.b16 %v483
        %v1195 = vunpack.c.l.b16 %v484
        %v1196 = vunpack.c.h.b16 %v484
        %v1197 = vunpack.c.l.b16 %v485
        %v1198 = vunpack.c.h.b16 %v485
        %v1199 = vunpack.c.l.b16 %v486
        %v1200 = vunpack.c.h.b16 %v486
        %v1201 = vunpack.c.l.b16 %v487
        %v1202 = vunpack.c.h.b16 %v487
        %v1203 = vunpack.c.l.b16 %v488
        %v1204 = vunpack.c.h.b16 %v488
        %v1205 = vunpack.c.l.b16 %v489
        %v1206 = vunpack.c.h.b16 %v489
        %v1207 = vunpack.c.l.b16 %v490
        %v1208 = vunpack.c.h.b16 %v490
        %v1209 = vunpack.c.l.b16 %v491
        %v1210 = vunpack.c.h.b16 %v491
        %v1211 = vunpack.c.l.b16 %v492
        %v1212 = vunpack.c.h.b16 %v492
        %v1213 = vunpack.c.l.b16 %v493
        %v1214 = vunpack.c.h.b16 %v493
        %v1215 = vunpack.c.l.b16 %v494
        %v1216 = vunpack.c.h.b16 %v494
        %v1217 = vunpack.c.l.b16 %v495
        %v1218 = vunpack.c.h.b16 %v495
        %v1219 = vunpack.c.l.b16 %v496
        %v1220 = vunpack.c.h.b16 %v496
        %v1221 = vunpack.c.l.b16 %v497
        %v1222 = vunpack.c.h.b16 %v497
        %v1223 = vunpack.c.l.b16 %v498
        %v1224 = vunpack.c.h.b16 %v498
        %v1225 = vunpack.c.l.b16 %v499
        %v1226 = vunpack.c.h.b16 %v499
        %v1227 = vunpack.c.l.b16 %v500
        %v1228 = vunpack.c.h.b16 %v500
        %v1229 = vunpack.c.l.b16 %v501
        %v1230 = vunpack.c.h.b16 %v501
        %v1231 = vunpack.c.l.b16 %v502
        %v1232 = vunpack.c.h.b16 %v502
        %v1233 = vunpack.c.l.b16 %v503
        %v1234 = vunpack.c.h.b16 %v503
        %v1235 = vunpack.c.l.b16 %v504
        %v1236 = vunpack.c.h.b16 %v504
        %v1237 = vunpack.c.l.b16 %v505
        %v1238 = vunpack.c.h.b16 %v505
        %v1239 = vunpack.c.l.b16 %v506
        %v1240 = vunpack.c.h.b16 %v506
        %v1241 = vunpack.c.l.b16 %v507
        %v1242 = vunpack.c.h.b16 %v507
        %v1243 = vunpack.c.l.b16 %v508
        %v1244 = vunpack.c.h.b16 %v508
        %v1245 = vunpack.c.l.b16 %v509
        %v1246 = vunpack.c.h.b16 %v509
        %v1247 = vunpack.c.l.b16 %v510
        %v1248 = vunpack.c.h.b16 %v510
        %v1249 = vunpack.c.l.b16 %v511
        %v1250 = vunpack.c.h.b16 %v511
        %v1251 = vunpack.c.l.b16 %v512
        %v1252 = vunpack.c.h.b16 %v512
        %v1253 = vunpack.c.l.b16 %v513
        %v1254 = vunpack.c.h.b16 %v513
        %v1255 = vunpack.c.l.b16 %v514
        %v1256 = vunpack.c.h.b16 %v514
        %v1257 = vunpack.c.l.b16 %v515
        %v1258 = vunpack.c.h.b16 %v515
        %v1259 = vunpack.c.l.b16 %v516
        %v1260 = vunpack.c.h.b16 %v516
        %v1261 = vunpack.c.l.b16 %v517
        %v1262 = vunpack.c.h.b16 %v517
        %v1263 = vunpack.c.l.b16 %v518
        %v1264 = vunpack.c.h.b16 %v518
        %v1265 = vunpack.c.l.b16 %v519
        %v1266 = vunpack.c.h.b16 %v519
        %v1267 = vunpack.c.l.b16 %v520
        %v1268 = vunpack.c.h.b16 %v520
        %v1269 = vunpack.c.l.b16 %v521
        %v1270 = vunpack.c.h.b16 %v521
        %v1271 = vunpack.c.l.b16 %v522
        %v1272 = vunpack.c.h.b16 %v522
        %v1273 = vunpack.c.l.b16 %v523
        %v1274 = vunpack.c.h.b16 %v523
        %v1275 = vunpack.c.l.b16 %v524
        %v1276 = vunpack.c.h.b16 %v524
        %v1277 = vunpack.c.l.b16 %v525
        %v1278 = vunpack.c.h.b16 %v525
        %v1279 = vunpack.c.l.b16 %v526
        %v1280 = vunpack.c.h.b16 %v526
        %v1281 = vunpack.c.l.b16 %v527
        %v1282 = vunpack.c.h.b16 %v527
        %v1283 = vunpack.c.l.b16 %v528
        %v1284 = vunpack.c.h.b16 %v528
        %v1285 = vunpack.c.l.b16 %v529
        %v1286 = vunpack.c.h.b16 %v529
        %v1287 = vunpack.c.l.b16 %v530
        %v1288 = vunpack.c.h.b16 %v530
        %v1289 = vunpack.c.l.b16 %v531
        %v1290 = vunpack.c.h.b16 %v531
        %v1291 = vunpack.c.l.b16 %v532
        %v1292 = vunpack.c.h.b16 %v532
        %v1293 = vunpack.c.l.b16 %v533
        %v1294 = vunpack.c.h.b16 %v533
        %v1295 = vunpack.c.l.b16 %v534
        %v1296 = vunpack.c.h.b16 %v534
        %v1297 = vunpack.c.l.b16 %v535
        %v1298 = vunpack.c.h.b16 %v535
        %v1299 = vunpack.c.l.b16 %v536
        %v1300 = vunpack.c.h.b16 %v536
        %v1301 = vunpack.c.l.b16 %v537
        %v1302 = vunpack.c.h.b16 %v537
        %v1303 = vunpack.c.l.b16 %v538
        %v1304 = vunpack.c.h.b16 %v538
        %v1305 = vunpack.c.l.b16 %v539
        %v1306 = vunpack.c.h.b16 %v539
        %v1307 = vunpack.c.l.b16 %v540
        %v1308 = vunpack.c.h.b16 %v540
        %v1309 = vunpack.c.l.b16 %v541
        %v1310 = vunpack.c.h.b16 %v541
        %v1311 = vunpack.c.l.b16 %v542
        %v1312 = vunpack.c.h.b16 %v542
        %v1313 = vunpack.c.l.b16 %v543
        %v1314 = vunpack.c.h.b16 %v543
        %v1315 = vunpack.c.l.b16 %v544
        %v1316 = vunpack.c.h.b16 %v544
        %v1317 = vunpack.c.l.b16 %v545
        %v1318 = vunpack.c.h.b16 %v545
        %v1319 = vunpack.c.l.b16 %v546
        %v1320 = vunpack.c.h.b16 %v546
        %v1321 = vunpack.c.l.b16 %v547
        %v1322 = vunpack.c.h.b16 %v547
        %v1323 = vunpack.c.l.b16 %v548
        %v1324 = vunpack.c.h.b16 %v548
        %v1325 = vunpack.c.l.b16 %v549
        %v1326 = vunpack.c.h.b16 %v549
        %v1327 = vunpack.c.l.b16 %v550
        %v1328 = vunpack.c.h.b16 %v550
        %v1329 = vunpack.c.l.b16 %v551
        %v1330 = vunpack.c.h.b16 %v551
        %v1331 = vunpack.c.l.b16 %v552
        %v1332 = vunpack.c.h.b16 %v552
        %v1333 = vunpack.c.l.b16 %v553
        %v1334 = vunpack.c.h.b16 %v553
        %v1335 = vunpack.c.l.b16 %v554
        %v1336 = vunpack.c.h.b16 %v554
        %v1337 = vunpack.c.l.b16 %v555
        %v1338 = vunpack.c.h.b16 %v555
        %v1339 = vunpack.c.l.b16 %v556
        %v1340 = vunpack.c.h.b16 %v556
        %v1341 = vunpack.c.l.b16 %v557
        %v1342 = vunpack.c.h.b16 %v557
        %v1343 = vunpack.c.l.b16 %v558
        %v1344 = vunpack.c.h.b16 %v558
        %v1345 = vunpack.c.l.b16 %v559
        %v1346 = vunpack.c.h.b16 %v559
        %v1347 = vunpack.c.l.b16 %v560
        %v1348 = vunpack.c.h.b16 %v560
        %v1349 = vunpack.c.l.b16 %v561
        %v1350 = vunpack.c.h.b16 %v561
        %v1351 = vunpack.c.l.b16 %v562
        %v1352 = vunpack.c.h.b16 %v562
        %v1353 = vunpack.c.l.b16 %v563
        %v1354 = vunpack.c.h.b16 %v563
        %v1355 = vunpack.c.l.b16 %v564
        %v1356 = vunpack.c.h.b16 %v564
        %v1357 = vunpack.c.l.b16 %v565
        %v1358 = vunpack.c.h.b16 %v565
        %v1359 = vunpack.c.l.b16 %v566
        %v1360 = vunpack.c.h.b16 %v566
        %v1361 = vunpack.c.l.b16 %v567
        %v1362 = vunpack.c.h.b16 %v567
        %v1363 = vunpack.c.l.b16 %v568
        %v1364 = vunpack.c.h.b16 %v568
        %v1365 = vunpack.c.l.b16 %v569
        %v1366 = vunpack.c.h.b16 %v569
        %v1367 = vunpack.c.l.b16 %v570
        %v1368 = vunpack.c.h.b16 %v570
        %v1369 = vunpack.c.l.b16 %v571
        %v1370 = vunpack.c.h.b16 %v571
        %v1371 = vunpack.c.l.b16 %v572
        %v1372 = vunpack.c.h.b16 %v572
        %v1373 = vunpack.c.l.b16 %v573
        %v1374 = vunpack.c.h.b16 %v573
        %v1375 = vunpack.c.l.b16 %v574
        %v1376 = vunpack.c.h.b16 %v574
        %v1377 = vunpack.c.l.b16 %v575
        %v1378 = vunpack.c.h.b16 %v575
        %v1379 = vunpack.c.l.b16 %v576
        %v1380 = vunpack.c.h.b16 %v576
        %v1381 = vunpack.c.l.b16 %v577
        %v1382 = vunpack.c.h.b16 %v577
        %v1383 = vunpack.c.l.b16 %v578
        %v1384 = vunpack.c.h.b16 %v578
        %v1385 = vunpack.c.l.b16 %v579
        %v1386 = vunpack.c.h.b16 %v579
        %v1387 = vunpack.c.l.b16 %v580
        %v1388 = vunpack.c.h.b16 %v580
        %v1389 = vpack.c.b16 %v881, %v877
        %v1390 = vpack.c.b16 %v882, %v878
        %v1391 = vpack.c.b16 %v883, %v879
        %v1392 = vpack.c.b16 %v884, %v880
        %v1393 = vpack.c.b16 %v889, %v885
        %v1394 = vpack.c.b16 %v890, %v886
        %v1395 = vpack.c.b16 %v891, %v887
        %v1396 = vpack.c.b16 %v892, %v888
        %v1397 = vpack.c.b16 %v897, %v893
        %v1398 = vpack.c.b16 %v898, %v894
        %v1399 = vpack.c.b16 %v899, %v895
        %v1400 = vpack.c.b16 %v900, %v896
        %v1401 = vpack.c.b16 %v905, %v901
        %v1402 = vpack.c.b16 %v906, %v902
        %v1403 = vpack.c.b16 %v907, %v903
        %v1404 = vpack.c.b16 %v908, %v904
        %v1405 = vpack.c.b16 %v913, %v909
        %v1406 = vpack.c.b16 %v914, %v910
        %v1407 = vpack.c.b16 %v915, %v911
        %v1408 = vpack.c.b16 %v916, %v912
        %v1409 = vpack.c.b16 %v921, %v917
        %v1410 = vpack.c.b16 %v922, %v918
        %v1411 = vpack.c.b16 %v923, %v919
        %v1412 = vpack.c.b16 %v924, %v920
        %v1413 = vpack.c.b16 %v929, %v925
        %v1414 = vpack.c.b16 %v930, %v926
        %v1415 = vpack.c.b16 %v931, %v927
        %v1416 = vpack.c.b16 %v932, %v928
        %v1417 = vpack.c.b16 %v937, %v933
        %v1418 = vpack.c.b16 %v938, %v934
        %v1419 = vpack.c.b16 %v939, %v935
        %v1420 = vpack.c.b16 %v940, %v936
        %v1421 = vpack.c.b16 %v945, %v941
        %v1422 = vpack.c.b16 %v946, %v942
        %v1423 = vpack.c.b16 %v947, %v943
        %v1424 = vpack.c.b16 %v948, %v944
        %v1425 = vpack.c.b16 %v953, %v949
        %v1426 = vpack.c.b16 %v954, %v950
        %v1427 = vpack.c.b16 %v955, %v951
        %v1428 = vpack.c.b16 %v956, %v952
        %v1429 = vpack.c.b16 %v961, %v957
        %v1430 = vpack.c.b16 %v962, %v958
        %v1431 = vpack.c.b16 %v963, %v959
        %v1432 = vpack.c.b16 %v964, %v960
        %v1433 = vpack.c.b16 %v969, %v965
        %v1434 = vpack.c.b16 %v970, %v966
        %v1435 = vpack.c.b16 %v971, %v967
        %v1436 = vpack.c.b16 %v972, %v968
        %v1437 = vpack.c.b16 %v977, %v973
        %v1438 = vpack.c.b16 %v978, %v974
        %v1439 = vpack.c.b16 %v979, %v975
        %v1440 = vpack.c.b16 %v980, %v976
        %v1441 = vpack.c.b16 %v985, %v981
        %v1442 = vpack.c.b16 %v986, %v982
        %v1443 = vpack.c.b16 %v987, %v983
        %v1444 = vpack.c.b16 %v988, %v984
        %v1445 = vpack.c.b16 %v993, %v989
        %v1446 = vpack.c.b16 %v994, %v990
        %v1447 = vpack.c.b16 %v995, %v991
        %v1448 = vpack.c.b16 %v996, %v992
        %v1449 = vpack.c.b16 %v1001, %v997
        %v1450 = vpack.c.b16 %v1002, %v998
        %v1451 = vpack.c.b16 %v1003, %v999
        %v1452 = vpack.c.b16 %v1004, %v1000
        %v1453 = vpack.c.b16 %v1009, %v1005
        %v1454 = vpack.c.b16 %v1010, %v1006
        %v1455 = vpack.c.b16 %v1011, %v1007
        %v1456 = vpack.c.b16 %v1012, %v1008
        %v1457 = vpack.c.b16 %v1017, %v1013
        %v1458 = vpack.c.b16 %v1018, %v1014
        %v1459 = vpack.c.b16 %v1019, %v1015
        %v1460 = vpack.c.b16 %v1020, %v1016
        %v1461 = vpack.c.b16 %v1025, %v1021
        %v1462 = vpack.c.b16 %v1026, %v1022
        %v1463 = vpack.c.b16 %v1027, %v1023
        %v1464 = vpack.c.b16 %v1028, %v1024
        %v1465 = vpack.c.b16 %v1033, %v1029
        %v1466 = vpack.c.b16 %v1034, %v1030
        %v1467 = vpack.c.b16 %v1035, %v1031
        %v1468 = vpack.c.b16 %v1036, %v1032
        %v1469 = vpack.c.b16 %v1041, %v1037
        %v1470 = vpack.c.b16 %v1042, %v1038
        %v1471 = vpack.c.b16 %v1043, %v1039
        %v1472 = vpack.c.b16 %v1044, %v1040
        %v1473 = vpack.c.b16 %v1049, %v1045
        %v1474 = vpack.c.b16 %v1050, %v1046
        %v1475 = vpack.c.b16 %v1051, %v1047
        %v1476 = vpack.c.b16 %v1052, %v1048
        %v1477 = vpack.c.b16 %v1057, %v1053
        %v1478 = vpack.c.b16 %v1058, %v1054
        %v1479 = vpack.c.b16 %v1059, %v1055
        %v1480 = vpack.c.b16 %v1060, %v1056
        %v1481 = vpack.c.b16 %v1065, %v1061
        %v1482 = vpack.c.b16 %v1066, %v1062
        %v1483 = vpack.c.b16 %v1067, %v1063
        %v1484 = vpack.c.b16 %v1068, %v1064
        %v1485 = vpack.c.b16 %v1073, %v1069
        %v1486 = vpack.c.b16 %v1074, %v1070
        %v1487 = vpack.c.b16 %v1075, %v1071
        %v1488 = vpack.c.b16 %v1076, %v1072
        %v1489 = vpack.c.b16 %v1081, %v1077
        %v1490 = vpack.c.b16 %v1082, %v1078
        %v1491 = vpack.c.b16 %v1083, %v1079
        %v1492 = vpack.c.b16 %v1084, %v1080
        %v1493 = vpack.c.b16 %v1089, %v1085
        %v1494 = vpack.c.b16 %v1090, %v1086
        %v1495 = vpack.c.b16 %v1091, %v1087
        %v1496 = vpack.c.b16 %v1092, %v1088
        %v1497 = vpack.c.b16 %v1097, %v1093
        %v1498 = vpack.c.b16 %v1098, %v1094
        %v1499 = vpack.c.b16 %v1099, %v1095
        %v1500 = vpack.c.b16 %v1100, %v1096
        %v1501 = vpack.c.b16 %v1105, %v1101
        %v1502 = vpack.c.b16 %v1106, %v1102
        %v1503 = vpack.c.b16 %v1107, %v1103
        %v1504 = vpack.c.b16 %v1108, %v1104
        %v1505 = vpack.c.b16 %v1113, %v1109
        %v1506 = vpack.c.b16 %v1114, %v1110
        %v1507 = vpack.c.b16 %v1115, %v1111
        %v1508 = vpack.c.b16 %v1116, %v1112
        %v1509 = vpack.c.b16 %v1121, %v1117
        %v1510 = vpack.c.b16 %v1122, %v1118
        %v1511 = vpack.c.b16 %v1123, %v1119
        %v1512 = vpack.c.b16 %v1124, %v1120
        %v1513 = vpack.c.b16 %v1129, %v1125
        %v1514 = vpack.c.b16 %v1130, %v1126
        %v1515 = vpack.c.b16 %v1131, %v1127
        %v1516 = vpack.c.b16 %v1132, %v1128
        %v1517 = vpack.c.b16 %v1137, %v1133
        %v1518 = vpack.c.b16 %v1138, %v1134
        %v1519 = vpack.c.b16 %v1139, %v1135
        %v1520 = vpack.c.b16 %v1140, %v1136
        %v1521 = vpack.c.b16 %v1145, %v1141
        %v1522 = vpack.c.b16 %v1146, %v1142
        %v1523 = vpack.c.b16 %v1147, %v1143
        %v1524 = vpack.c.b16 %v1148, %v1144
        %v1525 = vpack.c.b16 %v1153, %v1149
        %v1526 = vpack.c.b16 %v1154, %v1150
        %v1527 = vpack.c.b16 %v1155, %v1151
        %v1528 = vpack.c.b16 %v1156, %v1152
        %v1529 = vpack.c.b16 %v1161, %v1157
        %v1530 = vpack.c.b16 %v1162, %v1158
        %v1531 = vpack.c.b16 %v1163, %v1159
        %v1532 = vpack.c.b16 %v1164, %v1160
        %v1533 = vpack.c.b16 %v1169, %v1165
        %v1534 = vpack.c.b16 %v1170, %v1166
        %v1535 = vpack.c.b16 %v1171, %v1167
        %v1536 = vpack.c.b16 %v1172, %v1168
        %v1537 = vpack.c.b16 %v1177, %v1173
        %v1538 = vpack.c.b16 %v1178, %v1174
        %v1539 = vpack.c.b16 %v1179, %v1175
        %v1540 = vpack.c.b16 %v1180, %v1176
        %v1541 = vpack.c.b16 %v1185, %v1181
        %v1542 = vpack.c.b16 %v1186, %v1182
        %v1543 = vpack.c.b16 %v1187, %v1183
        %v1544 = vpack.c.b16 %v1188, %v1184
        %v1545 = vpack.c.b16 %v1193, %v1189
        %v1546 = vpack.c.b16 %v1194, %v1190
        %v1547 = vpack.c.b16 %v1195, %v1191
        %v1548 = vpack.c.b16 %v1196, %v1192
        %v1549 = vpack.c.b16 %v1201, %v1197
        %v1550 = vpack.c.b16 %v1202, %v1198
        %v1551 = vpack.c.b16 %v1203, %v1199
        %v1552 = vpack.c.b16 %v1204, %v1200
        %v1553 = vpack.c.b16 %v1209, %v1205
        %v1554 = vpack.c.b16 %v1210, %v1206
        %v1555 = vpack.c.b16 %v1211, %v1207
        %v1556 = vpack.c.b16 %v1212, %v1208
        %v1557 = vpack.c.b16 %v1217, %v1213
        %v1558 = vpack.c.b16 %v1218, %v1214
        %v1559 = vpack.c.b16 %v1219, %v1215
        %v1560 = vpack.c.b16 %v1220, %v1216
        %v1561 = vpack.c.b16 %v1225, %v1221
        %v1562 = vpack.c.b16 %v1226, %v1222
        %v1563 = vpack.c.b16 %v1227, %v1223
        %v1564 = vpack.c.b16 %v1228, %v1224
        %v1565 = vpack.c.b16 %v1233, %v1229
        %v1566 = vpack.c.b16 %v1234, %v1230
        %v1567 = vpack.c.b16 %v1235, %v1231
        %v1568 = vpack.c.b16 %v1236, %v1232
        %v1569 = vpack.c.b16 %v1241, %v1237
        %v1570 = vpack.c.b16 %v1242, %v1238
        %v1571 = vpack.c.b16 %v1243, %v1239
        %v1572 = vpack.c.b16 %v1244, %v1240
        %v1573 = vpack.c.b16 %v1249, %v1245
        %v1574 = vpack.c.b16 %v1250, %v1246
        %v1575 = vpack.c.b16 %v1251, %v1247
        %v1576 = vpack.c.b16 %v1252, %v1248
        %v1577 = vpack.c.b16 %v1257, %v1253
        %v1578 = vpack.c.b16 %v1258, %v1254
        %v1579 = vpack.c.b16 %v1259, %v1255
        %v1580 = vpack.c.b16 %v1260, %v1256
        %v1581 = vpack.c.b16 %v1265, %v1261
        %v1582 = vpack.c.b16 %v1266, %v1262
        %v1583 = vpack.c.b16 %v1267, %v1263
        %v1584 = vpack.c.b16 %v1268, %v1264
        %v1585 = vpack.c.b16 %v1273, %v1269
        %v1586 = vpack.c.b16 %v1274, %v1270
        %v1587 = vpack.c.b16 %v1275, %v1271
        %v1588 = vpack.c.b16 %v1276, %v1272
        %v1589 = vpack.c.b16 %v1281, %v1277
        %v1590 = vpack.c.b16 %v1282, %v1278
        %v1591 = vpack.c.b16 %v1283, %v1279
        %v1592 = vpack.c.b16 %v1284, %v1280
        %v1593 = vpack.c.b16 %v1289, %v1285
        %v1594 = vpack.c.b16 %v1290, %v1286
        %v1595 = vpack.c.b16 %v1291, %v1287
        %v1596 = vpack.c.b16 %v1292, %v1288
        %v1597 = vpack.c.b16 %v1297, %v1293
        %v1598 = vpack.c.b16 %v1298, %v1294
        %v1599 = vpack.c.b16 %v1299, %v1295
        %v1600 = vpack.c.b16 %v1300, %v1296
        %v1601 = vpack.c.b16 %v1305, %v1301
        %v1602 = vpack.c.b16 %v1306, %v1302
        %v1603 = vpack.c.b16 %v1307, %v1303
        %v1604 = vpack.c.b16 %v1308, %v1304
        %v1605 = vpack.c.b16 %v1313, %v1309
        %v1606 = vpack.c.b16 %v1314, %v1310
        %v1607 = vpack.c.b16 %v1315, %v1311
        %v1608 = vpack.c.b16 %v1316, %v1312
        %v1609 = vpack.c.b16 %v1321, %v1317
        %v1610 = vpack.c.b16 %v1322, %v1318
        %v1611 = vpack.c.b16 %v1323, %v1319
        %v1612 = vpack.c.b16 %v1324, %v1320
        %v1613 = vpack.c.b16 %v1329, %v1325
        %v1614 = vpack.c.b16 %v1330, %v1326
        %v1615 = vpack.c.b16 %v1331, %v1327
        %v1616 = vpack.c.b16 %v1332, %v1328
        %v1617 = vpack.c.b16 %v1337, %v1333
        %v1618 = vpack.c.b16 %v1338, %v1334
        %v1619 = vpack.c.b16 %v1339, %v1335
        %v1620 = vpack.c.b16 %v1340, %v1336
        %v1621 = vpack.c.b16 %v1345, %v1341
        %v1622 = vpack.c.b16 %v1346, %v1342
        %v1623 = vpack.c.b16 %v1347, %v1343
        %v1624 = vpack.c.b16 %v1348, %v1344
        %v1625 = vpack.c.b16 %v1353, %v1349
        %v1626 = vpack.c.b16 %v1354, %v1350
        %v1627 = vpack.c.b16 %v1355, %v1351
        %v1628 = vpack.c.b16 %v1356, %v1352
        %v1629 = vpack.c.b16 %v1361, %v1357
        %v1630 = vpack.c.b16 %v1362, %v1358
        %v1631 = vpack.c.b16 %v1363, %v1359
        %v1632 = vpack.c.b16 %v1364, %v1360
        %v1633 = vpack.c.b16 %v1369, %v1365
        %v1634 = vpack.c.b16 %v1370, %v1366
        %v1635 = vpack.c.b16 %v1371, %v1367
        %v1636 = vpack.c.b16 %v1372, %v1368
        %v1637 = vpack.c.b16 %v1377, %v1373
        %v1638 = vpack.c.b16 %v1378, %v1374
        %v1639 = vpack.c.b16 %v1379, %v1375
        %v1640 = vpack.c.b16 %v1380, %v1376
        %v1641 = vpack.c.b16 %v1385, %v1381
        %v1642 = vpack.c.b16 %v1386, %v1382
        %v1643 = vpack.c.b16 %v1387, %v1383
        %v1644 = vpack.c.b16 %v1388, %v1384
        %1901 = vmatpush.bf16.msra.mxu0 %v1417
        %1902 = vmatpush.bf16.msra.mxu0 %v1413
        %1903 = vmatpush.bf16.msra.mxu0 %v1409
        %1904 = vmatpush.bf16.msra.mxu0 %v1405
        %1905 = vmatpush.bf16.msra.mxu0 %v1401
        %1906 = vmatpush.bf16.msra.mxu0 %v1397
        %1907 = vmatpush.bf16.msra.mxu0 %v1393
        %1908 = vmatpush.bf16.msra.mxu0 %v1389
        %1909 = vmatmul.bf16.gmra.mxu0 %v605
        %v1910 = vpop.f32.mrf.mxu0
        %v1911 = vadd.f32 0.0, %v1910
        %v1912 = vpop.f32.mrf.mxu0
        %v1913 = vadd.f32 0.0, %v1912
        %1914 = vdwg.mxu0
        %1915 = vmatpush.bf16.msra.mxu0 %v1449
        %1916 = vmatpush.bf16.msra.mxu0 %v1445
        %1917 = vmatpush.bf16.msra.mxu0 %v1441
        %1918 = vmatpush.bf16.msra.mxu0 %v1437
        %1919 = vmatpush.bf16.msra.mxu0 %v1433
        %1920 = vmatpush.bf16.msra.mxu0 %v1429
        %1921 = vmatpush.bf16.msra.mxu0 %v1425
        %1922 = vmatpush.bf16.msra.mxu0 %v1421
        %1923 = vmatmul.bf16.gmra.mxu0 %v606
        %v1924 = vpop.f32.mrf.mxu0
        %v1925 = vadd.f32 %v1911, %v1924
        %v1926 = vpop.f32.mrf.mxu0
        %v1927 = vadd.f32 %v1913, %v1926
        %1928 = vdwg.mxu0
        %1929 = vmatpush.bf16.msra.mxu0 %v1481
        %1930 = vmatpush.bf16.msra.mxu0 %v1477
        %1931 = vmatpush.bf16.msra.mxu0 %v1473
        %1932 = vmatpush.bf16.msra.mxu0 %v1469
        %1933 = vmatpush.bf16.msra.mxu0 %v1465
        %1934 = vmatpush.bf16.msra.mxu0 %v1461
        %1935 = vmatpush.bf16.msra.mxu0 %v1457
        %1936 = vmatpush.bf16.msra.mxu0 %v1453
        %1937 = vmatmul.bf16.gmra.mxu0 %v607
        %v1938 = vpop.f32.mrf.mxu0
        %v1939 = vadd.f32 %v1925, %v1938
        %v1940 = vpop.f32.mrf.mxu0
        %v1941 = vadd.f32 %v1927, %v1940
        %1942 = vdwg.mxu0
        %1943 = vmatpush.bf16.msra.mxu0 %v1513
        %1944 = vmatpush.bf16.msra.mxu0 %v1509
        %1945 = vmatpush.bf16.msra.mxu0 %v1505
        %1946 = vmatpush.bf16.msra.mxu0 %v1501
        %1947 = vmatpush.bf16.msra.mxu0 %v1497
        %1948 = vmatpush.bf16.msra.mxu0 %v1493
        %1949 = vmatpush.bf16.msra.mxu0 %v1489
        %1950 = vmatpush.bf16.msra.mxu0 %v1485
        %1951 = vmatmul.bf16.gmra.mxu0 %v608
        %v1952 = vpop.f32.mrf.mxu0
        %v1953 = vadd.f32 %v1939, %v1952
        %v1954 = vpop.f32.mrf.mxu0
        %v1955 = vadd.f32 %v1941, %v1954
        %1956 = vdwg.mxu0
        %1957 = vmatpush.bf16.msra.mxu0 %v1545
        %1958 = vmatpush.bf16.msra.mxu0 %v1541
        %1959 = vmatpush.bf16.msra.mxu0 %v1537
        %1960 = vmatpush.bf16.msra.mxu0 %v1533
        %1961 = vmatpush.bf16.msra.mxu0 %v1529
        %1962 = vmatpush.bf16.msra.mxu0 %v1525
        %1963 = vmatpush.bf16.msra.mxu0 %v1521
        %1964 = vmatpush.bf16.msra.mxu0 %v1517
        %1965 = vmatmul.bf16.gmra.mxu0 %v609
        %v1966 = vpop.f32.mrf.mxu0
        %v1967 = vadd.f32 %v1953, %v1966
        %v1968 = vpop.f32.mrf.mxu0
        %v1969 = vadd.f32 %v1955, %v1968
        %1970 = vdwg.mxu0
        %1971 = vmatpush.bf16.msra.mxu0 %v1577
        %1972 = vmatpush.bf16.msra.mxu0 %v1573
        %1973 = vmatpush.bf16.msra.mxu0 %v1569
        %1974 = vmatpush.bf16.msra.mxu0 %v1565
        %1975 = vmatpush.bf16.msra.mxu0 %v1561
        %1976 = vmatpush.bf16.msra.mxu0 %v1557
        %1977 = vmatpush.bf16.msra.mxu0 %v1553
        %1978 = vmatpush.bf16.msra.mxu0 %v1549
        %1979 = vmatmul.bf16.gmra.mxu0 %v610
        %v1980 = vpop.f32.mrf.mxu0
        %v1981 = vadd.f32 %v1967, %v1980
        %v1982 = vpop.f32.mrf.mxu0
        %v1983 = vadd.f32 %v1969, %v1982
        %1984 = vdwg.mxu0
        %1985 = vmatpush.bf16.msra.mxu0 %v1609
        %1986 = vmatpush.bf16.msra.mxu0 %v1605
        %1987 = vmatpush.bf16.msra.mxu0 %v1601
        %1988 = vmatpush.bf16.msra.mxu0 %v1597
        %1989 = vmatpush.bf16.msra.mxu0 %v1593
        %1990 = vmatpush.bf16.msra.mxu0 %v1589
        %1991 = vmatpush.bf16.msra.mxu0 %v1585
        %1992 = vmatpush.bf16.msra.mxu0 %v1581
        %1993 = vmatmul.bf16.gmra.mxu0 %v611
        %v1994 = vpop.f32.mrf.mxu0
        %v1995 = vadd.f32 %v1981, %v1994
        %v1996 = vpop.f32.mrf.mxu0
        %v1997 = vadd.f32 %v1983, %v1996
        %1998 = vdwg.mxu0
        %1999 = vmatpush.bf16.msra.mxu0 %v1641
        %2000 = vmatpush.bf16.msra.mxu0 %v1637
        %2001 = vmatpush.bf16.msra.mxu0 %v1633
        %2002 = vmatpush.bf16.msra.mxu0 %v1629
        %2003 = vmatpush.bf16.msra.mxu0 %v1625
        %2004 = vmatpush.bf16.msra.mxu0 %v1621
        %2005 = vmatpush.bf16.msra.mxu0 %v1617
        %2006 = vmatpush.bf16.msra.mxu0 %v1613
        %2007 = vmatmul.bf16.gmra.mxu0 %v612
        %v2008 = vpop.f32.mrf.mxu0
        %v2009 = vadd.f32 %v1995, %v2008
        %v2010 = vpop.f32.mrf.mxu0
        %v2011 = vadd.f32 %v1997, %v2010
        %2012 = vdwg.mxu0
        %2013 = vmatpush.bf16.msra.mxu0 %v1418
        %2014 = vmatpush.bf16.msra.mxu0 %v1414
        %2015 = vmatpush.bf16.msra.mxu0 %v1410
        %2016 = vmatpush.bf16.msra.mxu0 %v1406
        %2017 = vmatpush.bf16.msra.mxu0 %v1402
        %2018 = vmatpush.bf16.msra.mxu0 %v1398
        %2019 = vmatpush.bf16.msra.mxu0 %v1394
        %2020 = vmatpush.bf16.msra.mxu0 %v1390
        %2021 = vmatmul.bf16.gmra.mxu0 %v605
        %v2022 = vpop.f32.mrf.mxu0
        %v2023 = vadd.f32 0.0, %v2022
        %v2024 = vpop.f32.mrf.mxu0
        %v2025 = vadd.f32 0.0, %v2024
        %2026 = vdwg.mxu0
        %2027 = vmatpush.bf16.msra.mxu0 %v1450
        %2028 = vmatpush.bf16.msra.mxu0 %v1446
        %2029 = vmatpush.bf16.msra.mxu0 %v1442
        %2030 = vmatpush.bf16.msra.mxu0 %v1438
        %2031 = vmatpush.bf16.msra.mxu0 %v1434
        %2032 = vmatpush.bf16.msra.mxu0 %v1430
        %2033 = vmatpush.bf16.msra.mxu0 %v1426
        %2034 = vmatpush.bf16.msra.mxu0 %v1422
        %2035 = vmatmul.bf16.gmra.mxu0 %v606
        %v2036 = vpop.f32.mrf.mxu0
        %v2037 = vadd.f32 %v2023, %v2036
        %v2038 = vpop.f32.mrf.mxu0
        %v2039 = vadd.f32 %v2025, %v2038
        %2040 = vdwg.mxu0
        %2041 = vmatpush.bf16.msra.mxu0 %v1482
        %2042 = vmatpush.bf16.msra.mxu0 %v1478
        %2043 = vmatpush.bf16.msra.mxu0 %v1474
        %2044 = vmatpush.bf16.msra.mxu0 %v1470
        %2045 = vmatpush.bf16.msra.mxu0 %v1466
        %2046 = vmatpush.bf16.msra.mxu0 %v1462
        %2047 = vmatpush.bf16.msra.mxu0 %v1458
        %2048 = vmatpush.bf16.msra.mxu0 %v1454
        %2049 = vmatmul.bf16.gmra.mxu0 %v607
        %v2050 = vpop.f32.mrf.mxu0
        %v2051 = vadd.f32 %v2037, %v2050
        %v2052 = vpop.f32.mrf.mxu0
        %v2053 = vadd.f32 %v2039, %v2052
        %2054 = vdwg.mxu0
        %2055 = vmatpush.bf16.msra.mxu0 %v1514
        %2056 = vmatpush.bf16.msra.mxu0 %v1510
        %2057 = vmatpush.bf16.msra.mxu0 %v1506
        %2058 = vmatpush.bf16.msra.mxu0 %v1502
        %2059 = vmatpush.bf16.msra.mxu0 %v1498
        %2060 = vmatpush.bf16.msra.mxu0 %v1494
        %2061 = vmatpush.bf16.msra.mxu0 %v1490
        %2062 = vmatpush.bf16.msra.mxu0 %v1486
        %2063 = vmatmul.bf16.gmra.mxu0 %v608
        %v2064 = vpop.f32.mrf.mxu0
        %v2065 = vadd.f32 %v2051, %v2064
        %v2066 = vpop.f32.mrf.mxu0
        %v2067 = vadd.f32 %v2053, %v2066
        %2068 = vdwg.mxu0
        %2069 = vmatpush.bf16.msra.mxu0 %v1546
        %2070 = vmatpush.bf16.msra.mxu0 %v1542
        %2071 = vmatpush.bf16.msra.mxu0 %v1538
        %2072 = vmatpush.bf16.msra.mxu0 %v1534
        %2073 = vmatpush.bf16.msra.mxu0 %v1530
        %2074 = vmatpush.bf16.msra.mxu0 %v1526
        %2075 = vmatpush.bf16.msra.mxu0 %v1522
        %2076 = vmatpush.bf16.msra.mxu0 %v1518
        %2077 = vmatmul.bf16.gmra.mxu0 %v609
        %v2078 = vpop.f32.mrf.mxu0
        %v2079 = vadd.f32 %v2065, %v2078
        %v2080 = vpop.f32.mrf.mxu0
        %v2081 = vadd.f32 %v2067, %v2080
        %2082 = vdwg.mxu0
        %2083 = vmatpush.bf16.msra.mxu0 %v1578
        %2084 = vmatpush.bf16.msra.mxu0 %v1574
        %2085 = vmatpush.bf16.msra.mxu0 %v1570
        %2086 = vmatpush.bf16.msra.mxu0 %v1566
        %2087 = vmatpush.bf16.msra.mxu0 %v1562
        %2088 = vmatpush.bf16.msra.mxu0 %v1558
        %2089 = vmatpush.bf16.msra.mxu0 %v1554
        %2090 = vmatpush.bf16.msra.mxu0 %v1550
        %2091 = vmatmul.bf16.gmra.mxu0 %v610
        %v2092 = vpop.f32.mrf.mxu0
        %v2093 = vadd.f32 %v2079, %v2092
        %v2094 = vpop.f32.mrf.mxu0
        %v2095 = vadd.f32 %v2081, %v2094
        %2096 = vdwg.mxu0
        %2097 = vmatpush.bf16.msra.mxu0 %v1610
        %2098 = vmatpush.bf16.msra.mxu0 %v1606
        %2099 = vmatpush.bf16.msra.mxu0 %v1602
        %2100 = vmatpush.bf16.msra.mxu0 %v1598
        %2101 = vmatpush.bf16.msra.mxu0 %v1594
        %2102 = vmatpush.bf16.msra.mxu0 %v1590
        %2103 = vmatpush.bf16.msra.mxu0 %v1586
        %2104 = vmatpush.bf16.msra.mxu0 %v1582
        %2105 = vmatmul.bf16.gmra.mxu0 %v611
        %v2106 = vpop.f32.mrf.mxu0
        %v2107 = vadd.f32 %v2093, %v2106
        %v2108 = vpop.f32.mrf.mxu0
        %v2109 = vadd.f32 %v2095, %v2108
        %2110 = vdwg.mxu0
        %2111 = vmatpush.bf16.msra.mxu0 %v1642
        %2112 = vmatpush.bf16.msra.mxu0 %v1638
        %2113 = vmatpush.bf16.msra.mxu0 %v1634
        %2114 = vmatpush.bf16.msra.mxu0 %v1630
        %2115 = vmatpush.bf16.msra.mxu0 %v1626
        %2116 = vmatpush.bf16.msra.mxu0 %v1622
        %2117 = vmatpush.bf16.msra.mxu0 %v1618
        %2118 = vmatpush.bf16.msra.mxu0 %v1614
        %2119 = vmatmul.bf16.gmra.mxu0 %v612
        %v2120 = vpop.f32.mrf.mxu0
        %v2121 = vadd.f32 %v2107, %v2120
        %v2122 = vpop.f32.mrf.mxu0
        %v2123 = vadd.f32 %v2109, %v2122
        %2124 = vdwg.mxu0
        %2125 = vmatpush.bf16.msra.mxu0 %v1419
        %2126 = vmatpush.bf16.msra.mxu0 %v1415
        %2127 = vmatpush.bf16.msra.mxu0 %v1411
        %2128 = vmatpush.bf16.msra.mxu0 %v1407
        %2129 = vmatpush.bf16.msra.mxu0 %v1403
        %2130 = vmatpush.bf16.msra.mxu0 %v1399
        %2131 = vmatpush.bf16.msra.mxu0 %v1395
        %2132 = vmatpush.bf16.msra.mxu0 %v1391
        %2133 = vmatmul.bf16.gmra.mxu0 %v605
        %v2134 = vpop.f32.mrf.mxu0
        %v2135 = vadd.f32 0.0, %v2134
        %v2136 = vpop.f32.mrf.mxu0
        %v2137 = vadd.f32 0.0, %v2136
        %2138 = vdwg.mxu0
        %2139 = vmatpush.bf16.msra.mxu0 %v1451
        %2140 = vmatpush.bf16.msra.mxu0 %v1447
        %2141 = vmatpush.bf16.msra.mxu0 %v1443
        %2142 = vmatpush.bf16.msra.mxu0 %v1439
        %2143 = vmatpush.bf16.msra.mxu0 %v1435
        %2144 = vmatpush.bf16.msra.mxu0 %v1431
        %2145 = vmatpush.bf16.msra.mxu0 %v1427
        %2146 = vmatpush.bf16.msra.mxu0 %v1423
        %2147 = vmatmul.bf16.gmra.mxu0 %v606
        %v2148 = vpop.f32.mrf.mxu0
        %v2149 = vadd.f32 %v2135, %v2148
        %v2150 = vpop.f32.mrf.mxu0
        %v2151 = vadd.f32 %v2137, %v2150
        %2152 = vdwg.mxu0
        %2153 = vmatpush.bf16.msra.mxu0 %v1483
        %2154 = vmatpush.bf16.msra.mxu0 %v1479
        %2155 = vmatpush.bf16.msra.mxu0 %v1475
        %2156 = vmatpush.bf16.msra.mxu0 %v1471
        %2157 = vmatpush.bf16.msra.mxu0 %v1467
        %2158 = vmatpush.bf16.msra.mxu0 %v1463
        %2159 = vmatpush.bf16.msra.mxu0 %v1459
        %2160 = vmatpush.bf16.msra.mxu0 %v1455
        %2161 = vmatmul.bf16.gmra.mxu0 %v607
        %v2162 = vpop.f32.mrf.mxu0
        %v2163 = vadd.f32 %v2149, %v2162
        %v2164 = vpop.f32.mrf.mxu0
        %v2165 = vadd.f32 %v2151, %v2164
        %2166 = vdwg.mxu0
        %2167 = vmatpush.bf16.msra.mxu0 %v1515
        %2168 = vmatpush.bf16.msra.mxu0 %v1511
        %2169 = vmatpush.bf16.msra.mxu0 %v1507
        %2170 = vmatpush.bf16.msra.mxu0 %v1503
        %2171 = vmatpush.bf16.msra.mxu0 %v1499
        %2172 = vmatpush.bf16.msra.mxu0 %v1495
        %2173 = vmatpush.bf16.msra.mxu0 %v1491
        %2174 = vmatpush.bf16.msra.mxu0 %v1487
        %2175 = vmatmul.bf16.gmra.mxu0 %v608
        %v2176 = vpop.f32.mrf.mxu0
        %v2177 = vadd.f32 %v2163, %v2176
        %v2178 = vpop.f32.mrf.mxu0
        %v2179 = vadd.f32 %v2165, %v2178
        %2180 = vdwg.mxu0
        %2181 = vmatpush.bf16.msra.mxu0 %v1547
        %2182 = vmatpush.bf16.msra.mxu0 %v1543
        %2183 = vmatpush.bf16.msra.mxu0 %v1539
        %2184 = vmatpush.bf16.msra.mxu0 %v1535
        %2185 = vmatpush.bf16.msra.mxu0 %v1531
        %2186 = vmatpush.bf16.msra.mxu0 %v1527
        %2187 = vmatpush.bf16.msra.mxu0 %v1523
        %2188 = vmatpush.bf16.msra.mxu0 %v1519
        %2189 = vmatmul.bf16.gmra.mxu0 %v609
        %v2190 = vpop.f32.mrf.mxu0
        %v2191 = vadd.f32 %v2177, %v2190
        %v2192 = vpop.f32.mrf.mxu0
        %v2193 = vadd.f32 %v2179, %v2192
        %2194 = vdwg.mxu0
        %2195 = vmatpush.bf16.msra.mxu0 %v1579
        %2196 = vmatpush.bf16.msra.mxu0 %v1575
        %2197 = vmatpush.bf16.msra.mxu0 %v1571
        %2198 = vmatpush.bf16.msra.mxu0 %v1567
        %2199 = vmatpush.bf16.msra.mxu0 %v1563
        %2200 = vmatpush.bf16.msra.mxu0 %v1559
        %2201 = vmatpush.bf16.msra.mxu0 %v1555
        %2202 = vmatpush.bf16.msra.mxu0 %v1551
        %2203 = vmatmul.bf16.gmra.mxu0 %v610
        %v2204 = vpop.f32.mrf.mxu0
        %v2205 = vadd.f32 %v2191, %v2204
        %v2206 = vpop.f32.mrf.mxu0
        %v2207 = vadd.f32 %v2193, %v2206
        %2208 = vdwg.mxu0
        %2209 = vmatpush.bf16.msra.mxu0 %v1611
        %2210 = vmatpush.bf16.msra.mxu0 %v1607
        %2211 = vmatpush.bf16.msra.mxu0 %v1603
        %2212 = vmatpush.bf16.msra.mxu0 %v1599
        %2213 = vmatpush.bf16.msra.mxu0 %v1595
        %2214 = vmatpush.bf16.msra.mxu0 %v1591
        %2215 = vmatpush.bf16.msra.mxu0 %v1587
        %2216 = vmatpush.bf16.msra.mxu0 %v1583
        %2217 = vmatmul.bf16.gmra.mxu0 %v611
        %v2218 = vpop.f32.mrf.mxu0
        %v2219 = vadd.f32 %v2205, %v2218
        %v2220 = vpop.f32.mrf.mxu0
        %v2221 = vadd.f32 %v2207, %v2220
        %2222 = vdwg.mxu0
        %2223 = vmatpush.bf16.msra.mxu0 %v1643
        %2224 = vmatpush.bf16.msra.mxu0 %v1639
        %2225 = vmatpush.bf16.msra.mxu0 %v1635
        %2226 = vmatpush.bf16.msra.mxu0 %v1631
        %2227 = vmatpush.bf16.msra.mxu0 %v1627
        %2228 = vmatpush.bf16.msra.mxu0 %v1623
        %2229 = vmatpush.bf16.msra.mxu0 %v1619
        %2230 = vmatpush.bf16.msra.mxu0 %v1615
        %2231 = vmatmul.bf16.gmra.mxu0 %v612
        %v2232 = vpop.f32.mrf.mxu0
        %v2233 = vadd.f32 %v2219, %v2232
        %v2234 = vpop.f32.mrf.mxu0
        %v2235 = vadd.f32 %v2221, %v2234
        %2236 = vdwg.mxu0
        %2237 = vmatpush.bf16.msra.mxu0 %v1420
        %2238 = vmatpush.bf16.msra.mxu0 %v1416
        %2239 = vmatpush.bf16.msra.mxu0 %v1412
        %2240 = vmatpush.bf16.msra.mxu0 %v1408
        %2241 = vmatpush.bf16.msra.mxu0 %v1404
        %2242 = vmatpush.bf16.msra.mxu0 %v1400
        %2243 = vmatpush.bf16.msra.mxu0 %v1396
        %2244 = vmatpush.bf16.msra.mxu0 %v1392
        %2245 = vmatmul.bf16.gmra.mxu0 %v605
        %v2246 = vpop.f32.mrf.mxu0
        %v2247 = vadd.f32 0.0, %v2246
        %v2248 = vpop.f32.mrf.mxu0
        %v2249 = vadd.f32 0.0, %v2248
        %2250 = vdwg.mxu0
        %2251 = vmatpush.bf16.msra.mxu0 %v1452
        %2252 = vmatpush.bf16.msra.mxu0 %v1448
        %2253 = vmatpush.bf16.msra.mxu0 %v1444
        %2254 = vmatpush.bf16.msra.mxu0 %v1440
        %2255 = vmatpush.bf16.msra.mxu0 %v1436
        %2256 = vmatpush.bf16.msra.mxu0 %v1432
        %2257 = vmatpush.bf16.msra.mxu0 %v1428
        %2258 = vmatpush.bf16.msra.mxu0 %v1424
        %2259 = vmatmul.bf16.gmra.mxu0 %v606
        %v2260 = vpop.f32.mrf.mxu0
        %v2261 = vadd.f32 %v2247, %v2260
        %v2262 = vpop.f32.mrf.mxu0
        %v2263 = vadd.f32 %v2249, %v2262
        %2264 = vdwg.mxu0
        %2265 = vmatpush.bf16.msra.mxu0 %v1484
        %2266 = vmatpush.bf16.msra.mxu0 %v1480
        %2267 = vmatpush.bf16.msra.mxu0 %v1476
        %2268 = vmatpush.bf16.msra.mxu0 %v1472
        %2269 = vmatpush.bf16.msra.mxu0 %v1468
        %2270 = vmatpush.bf16.msra.mxu0 %v1464
        %2271 = vmatpush.bf16.msra.mxu0 %v1460
        %2272 = vmatpush.bf16.msra.mxu0 %v1456
        %2273 = vmatmul.bf16.gmra.mxu0 %v607
        %v2274 = vpop.f32.mrf.mxu0
        %v2275 = vadd.f32 %v2261, %v2274
        %v2276 = vpop.f32.mrf.mxu0
        %v2277 = vadd.f32 %v2263, %v2276
        %2278 = vdwg.mxu0
        %2279 = vmatpush.bf16.msra.mxu0 %v1516
        %2280 = vmatpush.bf16.msra.mxu0 %v1512
        %2281 = vmatpush.bf16.msra.mxu0 %v1508
        %2282 = vmatpush.bf16.msra.mxu0 %v1504
        %2283 = vmatpush.bf16.msra.mxu0 %v1500
        %2284 = vmatpush.bf16.msra.mxu0 %v1496
        %2285 = vmatpush.bf16.msra.mxu0 %v1492
        %2286 = vmatpush.bf16.msra.mxu0 %v1488
        %2287 = vmatmul.bf16.gmra.mxu0 %v608
        %v2288 = vpop.f32.mrf.mxu0
        %v2289 = vadd.f32 %v2275, %v2288
        %v2290 = vpop.f32.mrf.mxu0
        %v2291 = vadd.f32 %v2277, %v2290
        %2292 = vdwg.mxu0
        %2293 = vmatpush.bf16.msra.mxu0 %v1548
        %2294 = vmatpush.bf16.msra.mxu0 %v1544
        %2295 = vmatpush.bf16.msra.mxu0 %v1540
        %2296 = vmatpush.bf16.msra.mxu0 %v1536
        %2297 = vmatpush.bf16.msra.mxu0 %v1532
        %2298 = vmatpush.bf16.msra.mxu0 %v1528
        %2299 = vmatpush.bf16.msra.mxu0 %v1524
        %2300 = vmatpush.bf16.msra.mxu0 %v1520
        %2301 = vmatmul.bf16.gmra.mxu0 %v609
        %v2302 = vpop.f32.mrf.mxu0
        %v2303 = vadd.f32 %v2289, %v2302
        %v2304 = vpop.f32.mrf.mxu0
        %v2305 = vadd.f32 %v2291, %v2304
        %2306 = vdwg.mxu0
        %2307 = vmatpush.bf16.msra.mxu0 %v1580
        %2308 = vmatpush.bf16.msra.mxu0 %v1576
        %2309 = vmatpush.bf16.msra.mxu0 %v1572
        %2310 = vmatpush.bf16.msra.mxu0 %v1568
        %2311 = vmatpush.bf16.msra.mxu0 %v1564
        %2312 = vmatpush.bf16.msra.mxu0 %v1560
        %2313 = vmatpush.bf16.msra.mxu0 %v1556
        %2314 = vmatpush.bf16.msra.mxu0 %v1552
        %2315 = vmatmul.bf16.gmra.mxu0 %v610
        %v2316 = vpop.f32.mrf.mxu0
        %v2317 = vadd.f32 %v2303, %v2316
        %v2318 = vpop.f32.mrf.mxu0
        %v2319 = vadd.f32 %v2305, %v2318
        %2320 = vdwg.mxu0
        %2321 = vmatpush.bf16.msra.mxu0 %v1612
        %2322 = vmatpush.bf16.msra.mxu0 %v1608
        %2323 = vmatpush.bf16.msra.mxu0 %v1604
        %2324 = vmatpush.bf16.msra.mxu0 %v1600
        %2325 = vmatpush.bf16.msra.mxu0 %v1596
        %2326 = vmatpush.bf16.msra.mxu0 %v1592
        %2327 = vmatpush.bf16.msra.mxu0 %v1588
        %2328 = vmatpush.bf16.msra.mxu0 %v1584
        %2329 = vmatmul.bf16.gmra.mxu0 %v611
        %v2330 = vpop.f32.mrf.mxu0
        %v2331 = vadd.f32 %v2317, %v2330
        %v2332 = vpop.f32.mrf.mxu0
        %v2333 = vadd.f32 %v2319, %v2332
        %2334 = vdwg.mxu0
        %2335 = vmatpush.bf16.msra.mxu0 %v1644
        %2336 = vmatpush.bf16.msra.mxu0 %v1640
        %2337 = vmatpush.bf16.msra.mxu0 %v1636
        %2338 = vmatpush.bf16.msra.mxu0 %v1632
        %2339 = vmatpush.bf16.msra.mxu0 %v1628
        %2340 = vmatpush.bf16.msra.mxu0 %v1624
        %2341 = vmatpush.bf16.msra.mxu0 %v1620
        %2342 = vmatpush.bf16.msra.mxu0 %v1616
        %2343 = vmatmul.bf16.gmra.mxu0 %v612
        %v2344 = vpop.f32.mrf.mxu0
        %v2345 = vadd.f32 %v2331, %v2344
        %v2346 = vpop.f32.mrf.mxu0
        %v2347 = vadd.f32 %v2333, %v2346
        %2348 = vdwg.mxu0
        %v2349 = vadd.f32 %v309, %v2009
        %v2350 = vadd.f32 %v310, %v2121
        %v2351 = vadd.f32 %v311, %v2233
        %v2352 = vadd.f32 %v312, %v2345
        %v2353 = vadd.f32 %v313, %v2011
        %v2354 = vadd.f32 %v314, %v2123
        %v2355 = vadd.f32 %v315, %v2235
        %v2356 = vadd.f32 %v316, %v2347
        %2357 = vst [vmem:[#allocation2] sm:$0xff] %v2349
        %2358 = vst [vmem:[#allocation2 + $0x8] sm:$0xff] %v2350
        %2359 = vst [vmem:[#allocation2 + $0x10] sm:$0xff] %v2351
        %2360 = vst [vmem:[#allocation2 + $0x18] sm:$0xff] %v2352
        %2361 = vst [vmem:[#allocation2 + $0x20] sm:$0xff] %v2353
        %2362 = vst [vmem:[#allocation2 + $0x28] sm:$0xff] %v2354
        %2363 = vst [vmem:[#allocation2 + $0x30] sm:$0xff] %v2355
        %2364 = vst [vmem:[#allocation2 + $0x38] sm:$0xff] %v2356
        %p2365 = scmp.eq.s32.totalorder %s24, 7
        // Predicated region
        $region64: #{short_circuit_net_forward.4} parent=50 // pred_check
          %p2366 = pneg %p2365
        $region65: #{short_circuit_net_forward.4} parent=50 // pred_check_branch
          %2368 = sbr.rel (%p2366) target = $region67
        $region66: #{short_circuit_net_forward.4} parent=50 // pred_region
          %v2369 = vld [vmem:[#allocation2] sm:$0xff]
          %v2370 = vld [vmem:[#allocation2 + $0x8] sm:$0xff]
          %v2371 = vld [vmem:[#allocation2 + $0x10] sm:$0xff]
          %v2372 = vld [vmem:[#allocation2 + $0x18] sm:$0xff]
          %v2373 = vld [vmem:[#allocation2 + $0x20] sm:$0xff]
          %v2374 = vld [vmem:[#allocation2 + $0x28] sm:$0xff]
          %v2375 = vld [vmem:[#allocation2 + $0x30] sm:$0xff]
          %v2376 = vld [vmem:[#allocation2 + $0x38] sm:$0xff]
          %v2377 = vld [vmem:[%s293] sm:$0xf]
          %v2379 = vperm.slane %v2377, 0
          %v2380 = vperm.slane %v2377, 1
          %v2381 = vperm.slane %v2377, 2
          %v2382 = vperm.slane %v2377, 3
          %v2387 = vadd.f32 %v2369, %v2379
          %v2388 = vadd.f32 %v2370, %v2380
          %v2389 = vadd.f32 %v2371, %v2381
          %v2390 = vadd.f32 %v2372, %v2382
          %v2391 = vadd.f32 %v2373, %v2379
          %v2392 = vadd.f32 %v2374, %v2380
          %v2393 = vadd.f32 %v2375, %v2381
          %v2394 = vadd.f32 %v2376, %v2382
          %v2395 = vmax.f32 %v2387, 0.0
          %v2396 = vmax.f32 %v2388, 0.0
          %v2397 = vmax.f32 %v2389, 0.0
          %v2398 = vmax.f32 %v2390, 0.0
          %v2399 = vmax.f32 %v2391, 0.0
          %v2400 = vmax.f32 %v2392, 0.0
          %v2401 = vmax.f32 %v2393, 0.0
          %v2402 = vmax.f32 %v2394, 0.0
          %v2403 = vpack.c.bf16 %v2396, %v2395
          %v2404 = vpack.c.bf16 %v2398, %v2397
          %v2405 = vpack.c.bf16 %v2400, %v2399
          %v2406 = vpack.c.bf16 %v2402, %v2401
          %2407 = vst [vmem:[%s285] sm:$0xff] %v2403
          %2408 = vst [vmem:[%s285 + $0x8] sm:$0xff] %v2404
          %2409 = vst [vmem:[%s285 + $0x10] sm:$0xff] %v2405
          %2410 = vst [vmem:[%s285 + $0x18] sm:$0xff] %v2406
        $region67: #{short_circuit_net_forward.4} parent=50 // pred_fallthru
          _
        %s2411 = sand.u32 %s128, 1
        %s2412 = sand.u32 %s128, 1
        %s2413 = smul.addr %s2412, 32
        %s2414 = scalar_lea.vmem [#allocation6], %s2413
        // Predicated region
        $region68: #{short_circuit_net_forward.4} parent=50 // pred_check
          %p2415 = pneg %p138
        $region69: #{short_circuit_net_forward.4} parent=50 // pred_check_branch
          %2417 = sbr.rel (%p2415) target = $region71
        $region70: #{short_circuit_net_forward.4} parent=50 // pred_region
          %s2418 = smul.u32 2, %s22
          %s2419 = smul.u32 4, %s23
          %s2420 = smul.addr %s2418, 8
          %s2421 = sadd.s32 %s2419, %s2420
          %s2422 = smul.addr %s2421, 4
          %s2423 = scalar_lea.vmem %s3, %s2422
          // Predicated region
          $region72: #{short_circuit_net_forward.4} parent=70 // pred_check
            _
          $region73: #{short_circuit_net_forward.4} parent=70 // pred_check_branch
            %2425 = sbr.rel (0) target = $region75
          $region74: #{short_circuit_net_forward.4} parent=70 // pred_region
            // Predicated region
            $region76: #{short_circuit_net_forward.4} parent=74 // pred_check
              _
            $region77: #{short_circuit_net_forward.4} parent=74 // pred_check_branch
              %2427 = sbr.rel (0) target = $region79
            $region78: #{short_circuit_net_forward.4} parent=74 // pred_region
              loop: start=0, step=1, limit=1
              $region80: #{short_circuit_net_forward.4} parent=78 // loop_pre_header
                _
              $region81: #{short_circuit_net_forward.4} parent=78 // loop_header
                %s2429 = sphi 0, %s2433
                %p2430 = scmp.ge.s32.totalorder %s2429, 1
                %s2434 = sphi %s2414, %s2414
                %s2435 = sphi %s2423, %s2423
              $region82: #{short_circuit_net_forward.4} parent=78 // loop_header_branch
                %2432 = sbr.rel (%p2430) target = $region86
              $region83: #{short_circuit_net_forward.4} parent=78 // loop_body
                %v2436 = vld [vmem:[%s2434] sm:$0xff]
                %2437 = vst [vmem:[%s2435] sm:$0xff] %v2436
                %v2438 = vld [vmem:[%s2434 + $0x8] sm:$0xff]
                %2439 = vst [vmem:[%s2435 + $0x8] sm:$0xff] %v2438
                %v2440 = vld [vmem:[%s2434 + $0x10] sm:$0xff]
                %2441 = vst [vmem:[%s2435 + $0x20] sm:$0xff] %v2440
                %v2442 = vld [vmem:[%s2434 + $0x18] sm:$0xff]
                %2443 = vst [vmem:[%s2435 + $0x28] sm:$0xff] %v2442
              $region84: #{short_circuit_net_forward.4} parent=78 // loop_footer
                %s2433 = sadd.s32 1, %s2429
              $region85: #{short_circuit_net_forward.4} parent=78 // loop_footer_branch
                %2428 = sbr.rel target = $region81
              $region86: #{short_circuit_net_forward.4} parent=78 // loop_exit
                _
            $region79: #{short_circuit_net_forward.4} parent=74 // pred_fallthru
              _
            // Predicated region
            $region87: #{short_circuit_net_forward.4} parent=74 // pred_check
              _
            $region88: #{short_circuit_net_forward.4} parent=74 // pred_check_branch
              %2445 = sbr.rel target = $region90
            $region89: #{short_circuit_net_forward.4} parent=74 // pred_region
              _
            $region90: #{short_circuit_net_forward.4} parent=74 // pred_fallthru
              _
          $region75: #{short_circuit_net_forward.4} parent=70 // pred_fallthru
            _
          %2446 = vnop
        $region71: #{short_circuit_net_forward.4} parent=50 // pred_fallthru
          _
      $region51: #{short_circuit_net_forward.4} parent=5 // pred_fallthru
        _
      %p2447 = scmp.le.s32.totalorder 2, %s12
      // Predicated region
      $region91: #{short_circuit_net_forward.4} parent=5 // pred_check
        %p2448 = pneg %p2447
      $region92: #{short_circuit_net_forward.4} parent=5 // pred_check_branch
        %2450 = sbr.rel (%p2448) target = $region94
      $region93: #{short_circuit_net_forward.4} parent=5 // pred_region
        %s2451 = ssub.s32 %s12, 2
        // Predicated region
        $region95: #{short_circuit_net_forward.4} parent=93 // pred_check
          %p2452 = pneg %p144
        $region96: #{short_circuit_net_forward.4} parent=93 // pred_check_branch
          %2454 = sbr.rel (%p2452) target = $region98
        $region97: #{short_circuit_net_forward.4} parent=93 // pred_region
          %s2455 = sand.u32 %s129, 1
          %s2456 = sand.u32 %s129, 1
          %s2457 = smul.addr %s2456, 32
          %s2458 = scalar_lea.vmem [#allocation6], %s2457
        $region98: #{short_circuit_net_forward.4} parent=93 // pred_fallthru
          _
      $region94: #{short_circuit_net_forward.4} parent=5 // pred_fallthru
        _
    $region6: #{short_circuit_net_forward.4} parent=1 // loop_footer
      %s16 = sadd.s32 1, %s12
    $region7: #{short_circuit_net_forward.4} parent=1 // loop_footer_branch
      %11 = sbr.rel target = $region3
    $region8: #{short_circuit_net_forward.4} parent=1 // loop_exit
      _
    %2459 = vsyncpa [#allocation5], 1
    %s2460 = scalar_lea.sflag [#allocation5], 1
    %2461 = vsyncpa %s2460, 1

// kernel: short_circuit_net_forward.5
$region0: #{short_circuit_net_forward.5}
  #allocation0 [shape = 'u32[]', space=smem, size = 0x4, offset = 0x4, fixed_abs, tag = 'smem constant byte address 0x4 - core index']
  #allocation1 [shape = 'u32[72,128]{1,0:T(1,128)}', space=vmem, size = 0x9000, scoped, tag = 'internal scratch']
  %s0 = inlined_call_operand.vmem [shape: bf16[16,1024], index: 0, kind: input, shape index: {}]
  %s1 = inlined_call_operand.vmem [shape: bf16[1024,256], index: 1, kind: input, shape index: {}]
  %s2 = inlined_call_operand.vmem [shape: f32[1,256], index: 2, kind: input, shape index: {}]
  %s3 = inlined_call_operand.vmem [shape: bf16[256,128], index: 3, kind: input, shape index: {}]
  %s4 = inlined_call_operand.vmem [shape: f32[1,128], index: 4, kind: input, shape index: {}]
  %s5 = inlined_call_operand.vmem [shape: f32[16,128], index: 5, kind: output, shape index: {}]
  %s6 = sld [smem:[#allocation0]]
  $region30: #{short_circuit_net_forward.5} parent=0
    _
  %s8 = ssub.s32 1, %s6
  %s9 = scalar_select 0, %s8, %s6
  // Predicated region
  $region2: #{short_circuit_net_forward.5} parent=0 // pred_check
    _
  $region3: #{short_circuit_net_forward.5} parent=0 // pred_check_branch
    %11 = sbr.rel (0) target = $region5
  $region4: #{short_circuit_net_forward.5} parent=0 // pred_region
    _
  $region5: #{short_circuit_net_forward.5} parent=0 // pred_fallthru
    _
  // Predicated region
  $region6: #{short_circuit_net_forward.5} parent=0 // pred_check
    _
  $region7: #{short_circuit_net_forward.5} parent=0 // pred_check_branch
    %13 = sbr.rel (0) target = $region9
  $region8: #{short_circuit_net_forward.5} parent=0 // pred_region
    _
  $region9: #{short_circuit_net_forward.5} parent=0 // pred_fallthru
    _
  // Predicated region
  $region10: #{short_circuit_net_forward.5} parent=0 // pred_check
    _
  $region11: #{short_circuit_net_forward.5} parent=0 // pred_check_branch
    %15 = sbr.rel (0) target = $region13
  $region12: #{short_circuit_net_forward.5} parent=0 // pred_region
    _
  $region13: #{short_circuit_net_forward.5} parent=0 // pred_fallthru
    _
  // Predicated region
  $region14: #{short_circuit_net_forward.5} parent=0 // pred_check
    _
  $region15: #{short_circuit_net_forward.5} parent=0 // pred_check_branch
    %17 = sbr.rel (0) target = $region17
  $region16: #{short_circuit_net_forward.5} parent=0 // pred_region
    _
  $region17: #{short_circuit_net_forward.5} parent=0 // pred_fallthru
    _
  // Predicated region
  $region18: #{short_circuit_net_forward.5} parent=0 // pred_check
    _
  $region19: #{short_circuit_net_forward.5} parent=0 // pred_check_branch
    %19 = sbr.rel (0) target = $region21
  $region20: #{short_circuit_net_forward.5} parent=0 // pred_region
    _
  $region21: #{short_circuit_net_forward.5} parent=0 // pred_fallthru
    _
  %v20 = vld [vmem:[%s0] sm:$0xff]
  %v21 = vld [vmem:[%s0 + $0x8] sm:$0xff]
  %v22 = vld [vmem:[%s0 + $0x10] sm:$0xff]
  %v23 = vld [vmem:[%s0 + $0x18] sm:$0xff]
  %v24 = vld [vmem:[%s0 + $0x20] sm:$0xff]
  %v25 = vld [vmem:[%s0 + $0x28] sm:$0xff]
  %v26 = vld [vmem:[%s0 + $0x30] sm:$0xff]
  %v27 = vld [vmem:[%s0 + $0x38] sm:$0xff]
  %v28 = vld [vmem:[%s1] sm:$0xff]
  %v29 = vld [vmem:[%s1 + $0x8] sm:$0xff]
  %v30 = vld [vmem:[%s1 + $0x10] sm:$0xff]
  %v31 = vld [vmem:[%s1 + $0x18] sm:$0xff]
  %v32 = vld [vmem:[%s1 + $0x20] sm:$0xff]
  %v33 = vld [vmem:[%s1 + $0x28] sm:$0xff]
  %v34 = vld [vmem:[%s1 + $0x30] sm:$0xff]
  %v35 = vld [vmem:[%s1 + $0x38] sm:$0xff]
  %v36 = vld [vmem:[%s1 + $0x40] sm:$0xff]
  %v37 = vld [vmem:[%s1 + $0x48] sm:$0xff]
  %v38 = vld [vmem:[%s1 + $0x50] sm:$0xff]
  %v39 = vld [vmem:[%s1 + $0x58] sm:$0xff]
  %v40 = vld [vmem:[%s1 + $0x60] sm:$0xff]
  %v41 = vld [vmem:[%s1 + $0x68] sm:$0xff]
  %v42 = vld [vmem:[%s1 + $0x70] sm:$0xff]
  %v43 = vld [vmem:[%s1 + $0x78] sm:$0xff]
  %v44 = vld [vmem:[%s1 + $0x80] sm:$0xff]
  %v45 = vld [vmem:[%s1 + $0x88] sm:$0xff]
  %v46 = vld [vmem:[%s1 + $0x90] sm:$0xff]
  %v47 = vld [vmem:[%s1 + $0x98] sm:$0xff]
  %v48 = vld [vmem:[%s1 + $0xa0] sm:$0xff]
  %v49 = vld [vmem:[%s1 + $0xa8] sm:$0xff]
  %v50 = vld [vmem:[%s1 + $0xb0] sm:$0xff]
  %v51 = vld [vmem:[%s1 + $0xb8] sm:$0xff]
  %v52 = vld [vmem:[%s1 + $0xc0] sm:$0xff]
  %v53 = vld [vmem:[%s1 + $0xc8] sm:$0xff]
  %v54 = vld [vmem:[%s1 + $0xd0] sm:$0xff]
  %v55 = vld [vmem:[%s1 + $0xd8] sm:$0xff]
  %v56 = vld [vmem:[%s1 + $0xe0] sm:$0xff]
  %v57 = vld [vmem:[%s1 + $0xe8] sm:$0xff]
  %v58 = vld [vmem:[%s1 + $0xf0] sm:$0xff]
  %v59 = vld [vmem:[%s1 + $0xf8] sm:$0xff]
  %v60 = vld [vmem:[%s1 + $0x100] sm:$0xff]
  %v61 = vld [vmem:[%s1 + $0x108] sm:$0xff]
  %v62 = vld [vmem:[%s1 + $0x110] sm:$0xff]
  %v63 = vld [vmem:[%s1 + $0x118] sm:$0xff]
  %v64 = vld [vmem:[%s1 + $0x120] sm:$0xff]
  %v65 = vld [vmem:[%s1 + $0x128] sm:$0xff]
  %v66 = vld [vmem:[%s1 + $0x130] sm:$0xff]
  %v67 = vld [vmem:[%s1 + $0x138] sm:$0xff]
  %v68 = vld [vmem:[%s1 + $0x140] sm:$0xff]
  %v69 = vld [vmem:[%s1 + $0x148] sm:$0xff]
  %v70 = vld [vmem:[%s1 + $0x150] sm:$0xff]
  %v71 = vld [vmem:[%s1 + $0x158] sm:$0xff]
  %v72 = vld [vmem:[%s1 + $0x160] sm:$0xff]
  %v73 = vld [vmem:[%s1 + $0x168] sm:$0xff]
  %v74 = vld [vmem:[%s1 + $0x170] sm:$0xff]
  %v75 = vld [vmem:[%s1 + $0x178] sm:$0xff]
  %v76 = vld [vmem:[%s1 + $0x180] sm:$0xff]
  %v77 = vld [vmem:[%s1 + $0x188] sm:$0xff]
  %v78 = vld [vmem:[%s1 + $0x190] sm:$0xff]
  %v79 = vld [vmem:[%s1 + $0x198] sm:$0xff]
  %v80 = vld [vmem:[%s1 + $0x1a0] sm:$0xff]
  %v81 = vld [vmem:[%s1 + $0x1a8] sm:$0xff]
  %v82 = vld [vmem:[%s1 + $0x1b0] sm:$0xff]
  %v83 = vld [vmem:[%s1 + $0x1b8] sm:$0xff]
  %v84 = vld [vmem:[%s1 + $0x1c0] sm:$0xff]
  %v85 = vld [vmem:[%s1 + $0x1c8] sm:$0xff]
  %v86 = vld [vmem:[%s1 + $0x1d0] sm:$0xff]
  %v87 = vld [vmem:[%s1 + $0x1d8] sm:$0xff]
  %v88 = vld [vmem:[%s1 + $0x1e0] sm:$0xff]
  %v89 = vld [vmem:[%s1 + $0x1e8] sm:$0xff]
  %v90 = vld [vmem:[%s1 + $0x1f0] sm:$0xff]
  %v91 = vld [vmem:[%s1 + $0x1f8] sm:$0xff]
  %v92 = vld [vmem:[%s1 + $0x200] sm:$0xff]
  %v93 = vld [vmem:[%s1 + $0x208] sm:$0xff]
  %v94 = vld [vmem:[%s1 + $0x210] sm:$0xff]
  %v95 = vld [vmem:[%s1 + $0x218] sm:$0xff]
  %v96 = vld [vmem:[%s1 + $0x220] sm:$0xff]
  %v97 = vld [vmem:[%s1 + $0x228] sm:$0xff]
  %v98 = vld [vmem:[%s1 + $0x230] sm:$0xff]
  %v99 = vld [vmem:[%s1 + $0x238] sm:$0xff]
  %v100 = vld [vmem:[%s1 + $0x240] sm:$0xff]
  %v101 = vld [vmem:[%s1 + $0x248] sm:$0xff]
  %v102 = vld [vmem:[%s1 + $0x250] sm:$0xff]
  %v103 = vld [vmem:[%s1 + $0x258] sm:$0xff]
  %v104 = vld [vmem:[%s1 + $0x260] sm:$0xff]
  %v105 = vld [vmem:[%s1 + $0x268] sm:$0xff]
  %v106 = vld [vmem:[%s1 + $0x270] sm:$0xff]
  %v107 = vld [vmem:[%s1 + $0x278] sm:$0xff]
  %v108 = vld [vmem:[%s1 + $0x280] sm:$0xff]
  %v109 = vld [vmem:[%s1 + $0x288] sm:$0xff]
  %v110 = vld [vmem:[%s1 + $0x290] sm:$0xff]
  %v111 = vld [vmem:[%s1 + $0x298] sm:$0xff]
  %v112 = vld [vmem:[%s1 + $0x2a0] sm:$0xff]
  %v113 = vld [vmem:[%s1 + $0x2a8] sm:$0xff]
  %v114 = vld [vmem:[%s1 + $0x2b0] sm:$0xff]
  %v115 = vld [vmem:[%s1 + $0x2b8] sm:$0xff]
  %v116 = vld [vmem:[%s1 + $0x2c0] sm:$0xff]
  %v117 = vld [vmem:[%s1 + $0x2c8] sm:$0xff]
  %v118 = vld [vmem:[%s1 + $0x2d0] sm:$0xff]
  %v119 = vld [vmem:[%s1 + $0x2d8] sm:$0xff]
  %v120 = vld [vmem:[%s1 + $0x2e0] sm:$0xff]
  %v121 = vld [vmem:[%s1 + $0x2e8] sm:$0xff]
  %v122 = vld [vmem:[%s1 + $0x2f0] sm:$0xff]
  %v123 = vld [vmem:[%s1 + $0x2f8] sm:$0xff]
  %v124 = vld [vmem:[%s1 + $0x300] sm:$0xff]
  %v125 = vld [vmem:[%s1 + $0x308] sm:$0xff]
  %v126 = vld [vmem:[%s1 + $0x310] sm:$0xff]
  %v127 = vld [vmem:[%s1 + $0x318] sm:$0xff]
  %v128 = vld [vmem:[%s1 + $0x320] sm:$0xff]
  %v129 = vld [vmem:[%s1 + $0x328] sm:$0xff]
  %v130 = vld [vmem:[%s1 + $0x330] sm:$0xff]
  %v131 = vld [vmem:[%s1 + $0x338] sm:$0xff]
  %v132 = vld [vmem:[%s1 + $0x340] sm:$0xff]
  %v133 = vld [vmem:[%s1 + $0x348] sm:$0xff]
  %v134 = vld [vmem:[%s1 + $0x350] sm:$0xff]
  %v135 = vld [vmem:[%s1 + $0x358] sm:$0xff]
  %v136 = vld [vmem:[%s1 + $0x360] sm:$0xff]
  %v137 = vld [vmem:[%s1 + $0x368] sm:$0xff]
  %v138 = vld [vmem:[%s1 + $0x370] sm:$0xff]
  %v139 = vld [vmem:[%s1 + $0x378] sm:$0xff]
  %v140 = vld [vmem:[%s1 + $0x380] sm:$0xff]
  %v141 = vld [vmem:[%s1 + $0x388] sm:$0xff]
  %v142 = vld [vmem:[%s1 + $0x390] sm:$0xff]
  %v143 = vld [vmem:[%s1 + $0x398] sm:$0xff]
  %v144 = vld [vmem:[%s1 + $0x3a0] sm:$0xff]
  %v145 = vld [vmem:[%s1 + $0x3a8] sm:$0xff]
  %v146 = vld [vmem:[%s1 + $0x3b0] sm:$0xff]
  %v147 = vld [vmem:[%s1 + $0x3b8] sm:$0xff]
  %v148 = vld [vmem:[%s1 + $0x3c0] sm:$0xff]
  %v149 = vld [vmem:[%s1 + $0x3c8] sm:$0xff]
  %v150 = vld [vmem:[%s1 + $0x3d0] sm:$0xff]
  %v151 = vld [vmem:[%s1 + $0x3d8] sm:$0xff]
  %v152 = vld [vmem:[%s1 + $0x3e0] sm:$0xff]
  %v153 = vld [vmem:[%s1 + $0x3e8] sm:$0xff]
  %v154 = vld [vmem:[%s1 + $0x3f0] sm:$0xff]
  %v155 = vld [vmem:[%s1 + $0x3f8] sm:$0xff]
  %v156 = vld [vmem:[%s2] sm:$0x3]
  %v158 = vperm.slane %v156, 0
  %v159 = vperm.slane %v156, 1
  %v170 = vunpack.c.l.b16 %v20
  %v171 = vunpack.c.h.b16 %v20
  %v172 = vunpack.c.l.b16 %v21
  %v173 = vunpack.c.h.b16 %v21
  %v174 = vunpack.c.l.b16 %v22
  %v175 = vunpack.c.h.b16 %v22
  %v176 = vunpack.c.l.b16 %v23
  %v177 = vunpack.c.h.b16 %v23
  %v178 = vunpack.c.l.b16 %v24
  %v179 = vunpack.c.h.b16 %v24
  %v180 = vunpack.c.l.b16 %v25
  %v181 = vunpack.c.h.b16 %v25
  %v182 = vunpack.c.l.b16 %v26
  %v183 = vunpack.c.h.b16 %v26
  %v184 = vunpack.c.l.b16 %v27
  %v185 = vunpack.c.h.b16 %v27
  %v186 = vpack.c.b16 %v178, %v170
  %v187 = vpack.c.b16 %v179, %v171
  %v188 = vpack.c.b16 %v180, %v172
  %v189 = vpack.c.b16 %v181, %v173
  %v190 = vpack.c.b16 %v182, %v174
  %v191 = vpack.c.b16 %v183, %v175
  %v192 = vpack.c.b16 %v184, %v176
  %v193 = vpack.c.b16 %v185, %v177
  %v330 = vunpack.c.l.b16 %v28
  %v331 = vunpack.c.h.b16 %v28
  %v332 = vunpack.c.l.b16 %v29
  %v333 = vunpack.c.h.b16 %v29
  %v334 = vunpack.c.l.b16 %v30
  %v335 = vunpack.c.h.b16 %v30
  %v336 = vunpack.c.l.b16 %v31
  %v337 = vunpack.c.h.b16 %v31
  %v338 = vunpack.c.l.b16 %v32
  %v339 = vunpack.c.h.b16 %v32
  %v340 = vunpack.c.l.b16 %v33
  %v341 = vunpack.c.h.b16 %v33
  %v342 = vunpack.c.l.b16 %v34
  %v343 = vunpack.c.h.b16 %v34
  %v344 = vunpack.c.l.b16 %v35
  %v345 = vunpack.c.h.b16 %v35
  %v346 = vunpack.c.l.b16 %v36
  %v347 = vunpack.c.h.b16 %v36
  %v348 = vunpack.c.l.b16 %v37
  %v349 = vunpack.c.h.b16 %v37
  %v350 = vunpack.c.l.b16 %v38
  %v351 = vunpack.c.h.b16 %v38
  %v352 = vunpack.c.l.b16 %v39
  %v353 = vunpack.c.h.b16 %v39
  %v354 = vunpack.c.l.b16 %v40
  %v355 = vunpack.c.h.b16 %v40
  %v356 = vunpack.c.l.b16 %v41
  %v357 = vunpack.c.h.b16 %v41
  %v358 = vunpack.c.l.b16 %v42
  %v359 = vunpack.c.h.b16 %v42
  %v360 = vunpack.c.l.b16 %v43
  %v361 = vunpack.c.h.b16 %v43
  %v362 = vunpack.c.l.b16 %v44
  %v363 = vunpack.c.h.b16 %v44
  %v364 = vunpack.c.l.b16 %v45
  %v365 = vunpack.c.h.b16 %v45
  %v366 = vunpack.c.l.b16 %v46
  %v367 = vunpack.c.h.b16 %v46
  %v368 = vunpack.c.l.b16 %v47
  %v369 = vunpack.c.h.b16 %v47
  %v370 = vunpack.c.l.b16 %v48
  %v371 = vunpack.c.h.b16 %v48
  %v372 = vunpack.c.l.b16 %v49
  %v373 = vunpack.c.h.b16 %v49
  %v374 = vunpack.c.l.b16 %v50
  %v375 = vunpack.c.h.b16 %v50
  %v376 = vunpack.c.l.b16 %v51
  %v377 = vunpack.c.h.b16 %v51
  %v378 = vunpack.c.l.b16 %v52
  %v379 = vunpack.c.h.b16 %v52
  %v380 = vunpack.c.l.b16 %v53
  %v381 = vunpack.c.h.b16 %v53
  %v382 = vunpack.c.l.b16 %v54
  %v383 = vunpack.c.h.b16 %v54
  %v384 = vunpack.c.l.b16 %v55
  %v385 = vunpack.c.h.b16 %v55
  %v386 = vunpack.c.l.b16 %v56
  %v387 = vunpack.c.h.b16 %v56
  %v388 = vunpack.c.l.b16 %v57
  %v389 = vunpack.c.h.b16 %v57
  %v390 = vunpack.c.l.b16 %v58
  %v391 = vunpack.c.h.b16 %v58
  %v392 = vunpack.c.l.b16 %v59
  %v393 = vunpack.c.h.b16 %v59
  %v394 = vunpack.c.l.b16 %v60
  %v395 = vunpack.c.h.b16 %v60
  %v396 = vunpack.c.l.b16 %v61
  %v397 = vunpack.c.h.b16 %v61
  %v398 = vunpack.c.l.b16 %v62
  %v399 = vunpack.c.h.b16 %v62
  %v400 = vunpack.c.l.b16 %v63
  %v401 = vunpack.c.h.b16 %v63
  %v402 = vunpack.c.l.b16 %v64
  %v403 = vunpack.c.h.b16 %v64
  %v404 = vunpack.c.l.b16 %v65
  %v405 = vunpack.c.h.b16 %v65
  %v406 = vunpack.c.l.b16 %v66
  %v407 = vunpack.c.h.b16 %v66
  %v408 = vunpack.c.l.b16 %v67
  %v409 = vunpack.c.h.b16 %v67
  %v410 = vunpack.c.l.b16 %v68
  %v411 = vunpack.c.h.b16 %v68
  %v412 = vunpack.c.l.b16 %v69
  %v413 = vunpack.c.h.b16 %v69
  %v414 = vunpack.c.l.b16 %v70
  %v415 = vunpack.c.h.b16 %v70
  %v416 = vunpack.c.l.b16 %v71
  %v417 = vunpack.c.h.b16 %v71
  %v418 = vunpack.c.l.b16 %v72
  %v419 = vunpack.c.h.b16 %v72
  %v420 = vunpack.c.l.b16 %v73
  %v421 = vunpack.c.h.b16 %v73
  %v422 = vunpack.c.l.b16 %v74
  %v423 = vunpack.c.h.b16 %v74
  %v424 = vunpack.c.l.b16 %v75
  %v425 = vunpack.c.h.b16 %v75
  %v426 = vunpack.c.l.b16 %v76
  %v427 = vunpack.c.h.b16 %v76
  %v428 = vunpack.c.l.b16 %v77
  %v429 = vunpack.c.h.b16 %v77
  %v430 = vunpack.c.l.b16 %v78
  %v431 = vunpack.c.h.b16 %v78
  %v432 = vunpack.c.l.b16 %v79
  %v433 = vunpack.c.h.b16 %v79
  %v434 = vunpack.c.l.b16 %v80
  %v435 = vunpack.c.h.b16 %v80
  %v436 = vunpack.c.l.b16 %v81
  %v437 = vunpack.c.h.b16 %v81
  %v438 = vunpack.c.l.b16 %v82
  %v439 = vunpack.c.h.b16 %v82
  %v440 = vunpack.c.l.b16 %v83
  %v441 = vunpack.c.h.b16 %v83
  %v442 = vunpack.c.l.b16 %v84
  %v443 = vunpack.c.h.b16 %v84
  %v444 = vunpack.c.l.b16 %v85
  %v445 = vunpack.c.h.b16 %v85
  %v446 = vunpack.c.l.b16 %v86
  %v447 = vunpack.c.h.b16 %v86
  %v448 = vunpack.c.l.b16 %v87
  %v449 = vunpack.c.h.b16 %v87
  %v450 = vunpack.c.l.b16 %v88
  %v451 = vunpack.c.h.b16 %v88
  %v452 = vunpack.c.l.b16 %v89
  %v453 = vunpack.c.h.b16 %v89
  %v454 = vunpack.c.l.b16 %v90
  %v455 = vunpack.c.h.b16 %v90
  %v456 = vunpack.c.l.b16 %v91
  %v457 = vunpack.c.h.b16 %v91
  %v458 = vunpack.c.l.b16 %v92
  %v459 = vunpack.c.h.b16 %v92
  %v460 = vunpack.c.l.b16 %v93
  %v461 = vunpack.c.h.b16 %v93
  %v462 = vunpack.c.l.b16 %v94
  %v463 = vunpack.c.h.b16 %v94
  %v464 = vunpack.c.l.b16 %v95
  %v465 = vunpack.c.h.b16 %v95
  %v466 = vunpack.c.l.b16 %v96
  %v467 = vunpack.c.h.b16 %v96
  %v468 = vunpack.c.l.b16 %v97
  %v469 = vunpack.c.h.b16 %v97
  %v470 = vunpack.c.l.b16 %v98
  %v471 = vunpack.c.h.b16 %v98
  %v472 = vunpack.c.l.b16 %v99
  %v473 = vunpack.c.h.b16 %v99
  %v474 = vunpack.c.l.b16 %v100
  %v475 = vunpack.c.h.b16 %v100
  %v476 = vunpack.c.l.b16 %v101
  %v477 = vunpack.c.h.b16 %v101
  %v478 = vunpack.c.l.b16 %v102
  %v479 = vunpack.c.h.b16 %v102
  %v480 = vunpack.c.l.b16 %v103
  %v481 = vunpack.c.h.b16 %v103
  %v482 = vunpack.c.l.b16 %v104
  %v483 = vunpack.c.h.b16 %v104
  %v484 = vunpack.c.l.b16 %v105
  %v485 = vunpack.c.h.b16 %v105
  %v486 = vunpack.c.l.b16 %v106
  %v487 = vunpack.c.h.b16 %v106
  %v488 = vunpack.c.l.b16 %v107
  %v489 = vunpack.c.h.b16 %v107
  %v490 = vunpack.c.l.b16 %v108
  %v491 = vunpack.c.h.b16 %v108
  %v492 = vunpack.c.l.b16 %v109
  %v493 = vunpack.c.h.b16 %v109
  %v494 = vunpack.c.l.b16 %v110
  %v495 = vunpack.c.h.b16 %v110
  %v496 = vunpack.c.l.b16 %v111
  %v497 = vunpack.c.h.b16 %v111
  %v498 = vunpack.c.l.b16 %v112
  %v499 = vunpack.c.h.b16 %v112
  %v500 = vunpack.c.l.b16 %v113
  %v501 = vunpack.c.h.b16 %v113
  %v502 = vunpack.c.l.b16 %v114
  %v503 = vunpack.c.h.b16 %v114
  %v504 = vunpack.c.l.b16 %v115
  %v505 = vunpack.c.h.b16 %v115
  %v506 = vunpack.c.l.b16 %v116
  %v507 = vunpack.c.h.b16 %v116
  %v508 = vunpack.c.l.b16 %v117
  %v509 = vunpack.c.h.b16 %v117
  %v510 = vunpack.c.l.b16 %v118
  %v511 = vunpack.c.h.b16 %v118
  %v512 = vunpack.c.l.b16 %v119
  %v513 = vunpack.c.h.b16 %v119
  %v514 = vunpack.c.l.b16 %v120
  %v515 = vunpack.c.h.b16 %v120
  %v516 = vunpack.c.l.b16 %v121
  %v517 = vunpack.c.h.b16 %v121
  %v518 = vunpack.c.l.b16 %v122
  %v519 = vunpack.c.h.b16 %v122
  %v520 = vunpack.c.l.b16 %v123
  %v521 = vunpack.c.h.b16 %v123
  %v522 = vunpack.c.l.b16 %v124
  %v523 = vunpack.c.h.b16 %v124
  %v524 = vunpack.c.l.b16 %v125
  %v525 = vunpack.c.h.b16 %v125
  %v526 = vunpack.c.l.b16 %v126
  %v527 = vunpack.c.h.b16 %v126
  %v528 = vunpack.c.l.b16 %v127
  %v529 = vunpack.c.h.b16 %v127
  %v530 = vunpack.c.l.b16 %v128
  %v531 = vunpack.c.h.b16 %v128
  %v532 = vunpack.c.l.b16 %v129
  %v533 = vunpack.c.h.b16 %v129
  %v534 = vunpack.c.l.b16 %v130
  %v535 = vunpack.c.h.b16 %v130
  %v536 = vunpack.c.l.b16 %v131
  %v537 = vunpack.c.h.b16 %v131
  %v538 = vunpack.c.l.b16 %v132
  %v539 = vunpack.c.h.b16 %v132
  %v540 = vunpack.c.l.b16 %v133
  %v541 = vunpack.c.h.b16 %v133
  %v542 = vunpack.c.l.b16 %v134
  %v543 = vunpack.c.h.b16 %v134
  %v544 = vunpack.c.l.b16 %v135
  %v545 = vunpack.c.h.b16 %v135
  %v546 = vunpack.c.l.b16 %v136
  %v547 = vunpack.c.h.b16 %v136
  %v548 = vunpack.c.l.b16 %v137
  %v549 = vunpack.c.h.b16 %v137
  %v550 = vunpack.c.l.b16 %v138
  %v551 = vunpack.c.h.b16 %v138
  %v552 = vunpack.c.l.b16 %v139
  %v553 = vunpack.c.h.b16 %v139
  %v554 = vunpack.c.l.b16 %v140
  %v555 = vunpack.c.h.b16 %v140
  %v556 = vunpack.c.l.b16 %v141
  %v557 = vunpack.c.h.b16 %v141
  %v558 = vunpack.c.l.b16 %v142
  %v559 = vunpack.c.h.b16 %v142
  %v560 = vunpack.c.l.b16 %v143
  %v561 = vunpack.c.h.b16 %v143
  %v562 = vunpack.c.l.b16 %v144
  %v563 = vunpack.c.h.b16 %v144
  %v564 = vunpack.c.l.b16 %v145
  %v565 = vunpack.c.h.b16 %v145
  %v566 = vunpack.c.l.b16 %v146
  %v567 = vunpack.c.h.b16 %v146
  %v568 = vunpack.c.l.b16 %v147
  %v569 = vunpack.c.h.b16 %v147
  %v570 = vunpack.c.l.b16 %v148
  %v571 = vunpack.c.h.b16 %v148
  %v572 = vunpack.c.l.b16 %v149
  %v573 = vunpack.c.h.b16 %v149
  %v574 = vunpack.c.l.b16 %v150
  %v575 = vunpack.c.h.b16 %v150
  %v576 = vunpack.c.l.b16 %v151
  %v577 = vunpack.c.h.b16 %v151
  %v578 = vunpack.c.l.b16 %v152
  %v579 = vunpack.c.h.b16 %v152
  %v580 = vunpack.c.l.b16 %v153
  %v581 = vunpack.c.h.b16 %v153
  %v582 = vunpack.c.l.b16 %v154
  %v583 = vunpack.c.h.b16 %v154
  %v584 = vunpack.c.l.b16 %v155
  %v585 = vunpack.c.h.b16 %v155
  %v586 = vpack.c.b16 %v332, %v330
  %v587 = vpack.c.b16 %v333, %v331
  %v588 = vpack.c.b16 %v336, %v334
  %v589 = vpack.c.b16 %v337, %v335
  %v590 = vpack.c.b16 %v340, %v338
  %v591 = vpack.c.b16 %v341, %v339
  %v592 = vpack.c.b16 %v344, %v342
  %v593 = vpack.c.b16 %v345, %v343
  %v594 = vpack.c.b16 %v348, %v346
  %v595 = vpack.c.b16 %v349, %v347
  %v596 = vpack.c.b16 %v352, %v350
  %v597 = vpack.c.b16 %v353, %v351
  %v598 = vpack.c.b16 %v356, %v354
  %v599 = vpack.c.b16 %v357, %v355
  %v600 = vpack.c.b16 %v360, %v358
  %v601 = vpack.c.b16 %v361, %v359
  %v602 = vpack.c.b16 %v364, %v362
  %v603 = vpack.c.b16 %v365, %v363
  %v604 = vpack.c.b16 %v368, %v366
  %v605 = vpack.c.b16 %v369, %v367
  %v606 = vpack.c.b16 %v372, %v370
  %v607 = vpack.c.b16 %v373, %v371
  %v608 = vpack.c.b16 %v376, %v374
  %v609 = vpack.c.b16 %v377, %v375
  %v610 = vpack.c.b16 %v380, %v378
  %v611 = vpack.c.b16 %v381, %v379
  %v612 = vpack.c.b16 %v384, %v382
  %v613 = vpack.c.b16 %v385, %v383
  %v614 = vpack.c.b16 %v388, %v386
  %v615 = vpack.c.b16 %v389, %v387
  %v616 = vpack.c.b16 %v392, %v390
  %v617 = vpack.c.b16 %v393, %v391
  %v618 = vpack.c.b16 %v396, %v394
  %v619 = vpack.c.b16 %v397, %v395
  %v620 = vpack.c.b16 %v400, %v398
  %v621 = vpack.c.b16 %v401, %v399
  %v622 = vpack.c.b16 %v404, %v402
  %v623 = vpack.c.b16 %v405, %v403
  %v624 = vpack.c.b16 %v408, %v406
  %v625 = vpack.c.b16 %v409, %v407
  %v626 = vpack.c.b16 %v412, %v410
  %v627 = vpack.c.b16 %v413, %v411
  %v628 = vpack.c.b16 %v416, %v414
  %v629 = vpack.c.b16 %v417, %v415
  %v630 = vpack.c.b16 %v420, %v418
  %v631 = vpack.c.b16 %v421, %v419
  %v632 = vpack.c.b16 %v424, %v422
  %v633 = vpack.c.b16 %v425, %v423
  %v634 = vpack.c.b16 %v428, %v426
  %v635 = vpack.c.b16 %v429, %v427
  %v636 = vpack.c.b16 %v432, %v430
  %v637 = vpack.c.b16 %v433, %v431
  %v638 = vpack.c.b16 %v436, %v434
  %v639 = vpack.c.b16 %v437, %v435
  %v640 = vpack.c.b16 %v440, %v438
  %v641 = vpack.c.b16 %v441, %v439
  %v642 = vpack.c.b16 %v444, %v442
  %v643 = vpack.c.b16 %v445, %v443
  %v644 = vpack.c.b16 %v448, %v446
  %v645 = vpack.c.b16 %v449, %v447
  %v646 = vpack.c.b16 %v452, %v450
  %v647 = vpack.c.b16 %v453, %v451
  %v648 = vpack.c.b16 %v456, %v454
  %v649 = vpack.c.b16 %v457, %v455
  %v650 = vpack.c.b16 %v460, %v458
  %v651 = vpack.c.b16 %v461, %v459
  %v652 = vpack.c.b16 %v464, %v462
  %v653 = vpack.c.b16 %v465, %v463
  %v654 = vpack.c.b16 %v468, %v466
  %v655 = vpack.c.b16 %v469, %v467
  %v656 = vpack.c.b16 %v472, %v470
  %v657 = vpack.c.b16 %v473, %v471
  %v658 = vpack.c.b16 %v476, %v474
  %v659 = vpack.c.b16 %v477, %v475
  %v660 = vpack.c.b16 %v480, %v478
  %v661 = vpack.c.b16 %v481, %v479
  %v662 = vpack.c.b16 %v484, %v482
  %v663 = vpack.c.b16 %v485, %v483
  %v664 = vpack.c.b16 %v488, %v486
  %v665 = vpack.c.b16 %v489, %v487
  %v666 = vpack.c.b16 %v492, %v490
  %v667 = vpack.c.b16 %v493, %v491
  %v668 = vpack.c.b16 %v496, %v494
  %v669 = vpack.c.b16 %v497, %v495
  %v670 = vpack.c.b16 %v500, %v498
  %v671 = vpack.c.b16 %v501, %v499
  %v672 = vpack.c.b16 %v504, %v502
  %v673 = vpack.c.b16 %v505, %v503
  %v674 = vpack.c.b16 %v508, %v506
  %v675 = vpack.c.b16 %v509, %v507
  %v676 = vpack.c.b16 %v512, %v510
  %v677 = vpack.c.b16 %v513, %v511
  %v678 = vpack.c.b16 %v516, %v514
  %v679 = vpack.c.b16 %v517, %v515
  %v680 = vpack.c.b16 %v520, %v518
  %v681 = vpack.c.b16 %v521, %v519
  %v682 = vpack.c.b16 %v524, %v522
  %v683 = vpack.c.b16 %v525, %v523
  %v684 = vpack.c.b16 %v528, %v526
  %v685 = vpack.c.b16 %v529, %v527
  %v686 = vpack.c.b16 %v532, %v530
  %v687 = vpack.c.b16 %v533, %v531
  %v688 = vpack.c.b16 %v536, %v534
  %v689 = vpack.c.b16 %v537, %v535
  %v690 = vpack.c.b16 %v540, %v538
  %v691 = vpack.c.b16 %v541, %v539
  %v692 = vpack.c.b16 %v544, %v542
  %v693 = vpack.c.b16 %v545, %v543
  %v694 = vpack.c.b16 %v548, %v546
  %v695 = vpack.c.b16 %v549, %v547
  %v696 = vpack.c.b16 %v552, %v550
  %v697 = vpack.c.b16 %v553, %v551
  %v698 = vpack.c.b16 %v556, %v554
  %v699 = vpack.c.b16 %v557, %v555
  %v700 = vpack.c.b16 %v560, %v558
  %v701 = vpack.c.b16 %v561, %v559
  %v702 = vpack.c.b16 %v564, %v562
  %v703 = vpack.c.b16 %v565, %v563
  %v704 = vpack.c.b16 %v568, %v566
  %v705 = vpack.c.b16 %v569, %v567
  %v706 = vpack.c.b16 %v572, %v570
  %v707 = vpack.c.b16 %v573, %v571
  %v708 = vpack.c.b16 %v576, %v574
  %v709 = vpack.c.b16 %v577, %v575
  %v710 = vpack.c.b16 %v580, %v578
  %v711 = vpack.c.b16 %v581, %v579
  %v712 = vpack.c.b16 %v584, %v582
  %v713 = vpack.c.b16 %v585, %v583
  %842 = vmatpush.bf16.msra.mxu0 %v600
  %843 = vmatpush.bf16.msra.mxu0 %v598
  %844 = vmatpush.bf16.msra.mxu0 %v596
  %845 = vmatpush.bf16.msra.mxu0 %v594
  %846 = vmatpush.bf16.msra.mxu0 %v592
  %847 = vmatpush.bf16.msra.mxu0 %v590
  %848 = vmatpush.bf16.msra.mxu0 %v588
  %849 = vmatpush.bf16.msra.mxu0 %v586
  %850 = vmatmul.bf16.gmra.mxu0 %v186
  %v851 = vpop.f32.mrf.mxu0
  %v852 = vadd.f32 %v158, %v851
  %v853 = vpop.f32.mrf.mxu0
  %v854 = vadd.f32 %v158, %v853
  %855 = vdwg.mxu0
  %856 = vmatpush.bf16.msra.mxu0 %v616
  %857 = vmatpush.bf16.msra.mxu0 %v614
  %858 = vmatpush.bf16.msra.mxu0 %v612
  %859 = vmatpush.bf16.msra.mxu0 %v610
  %860 = vmatpush.bf16.msra.mxu0 %v608
  %861 = vmatpush.bf16.msra.mxu0 %v606
  %862 = vmatpush.bf16.msra.mxu0 %v604
  %863 = vmatpush.bf16.msra.mxu0 %v602
  %864 = vmatmul.bf16.gmra.mxu0 %v187
  %v865 = vpop.f32.mrf.mxu0
  %v866 = vadd.f32 %v852, %v865
  %v867 = vpop.f32.mrf.mxu0
  %v868 = vadd.f32 %v854, %v867
  %869 = vdwg.mxu0
  %870 = vmatpush.bf16.msra.mxu0 %v632
  %871 = vmatpush.bf16.msra.mxu0 %v630
  %872 = vmatpush.bf16.msra.mxu0 %v628
  %873 = vmatpush.bf16.msra.mxu0 %v626
  %874 = vmatpush.bf16.msra.mxu0 %v624
  %875 = vmatpush.bf16.msra.mxu0 %v622
  %876 = vmatpush.bf16.msra.mxu0 %v620
  %877 = vmatpush.bf16.msra.mxu0 %v618
  %878 = vmatmul.bf16.gmra.mxu0 %v188
  %v879 = vpop.f32.mrf.mxu0
  %v880 = vadd.f32 %v866, %v879
  %v881 = vpop.f32.mrf.mxu0
  %v882 = vadd.f32 %v868, %v881
  %883 = vdwg.mxu0
  %884 = vmatpush.bf16.msra.mxu0 %v648
  %885 = vmatpush.bf16.msra.mxu0 %v646
  %886 = vmatpush.bf16.msra.mxu0 %v644
  %887 = vmatpush.bf16.msra.mxu0 %v642
  %888 = vmatpush.bf16.msra.mxu0 %v640
  %889 = vmatpush.bf16.msra.mxu0 %v638
  %890 = vmatpush.bf16.msra.mxu0 %v636
  %891 = vmatpush.bf16.msra.mxu0 %v634
  %892 = vmatmul.bf16.gmra.mxu0 %v189
  %v893 = vpop.f32.mrf.mxu0
  %v894 = vadd.f32 %v880, %v893
  %v895 = vpop.f32.mrf.mxu0
  %v896 = vadd.f32 %v882, %v895
  %897 = vdwg.mxu0
  %898 = vmatpush.bf16.msra.mxu0 %v664
  %899 = vmatpush.bf16.msra.mxu0 %v662
  %900 = vmatpush.bf16.msra.mxu0 %v660
  %901 = vmatpush.bf16.msra.mxu0 %v658
  %902 = vmatpush.bf16.msra.mxu0 %v656
  %903 = vmatpush.bf16.msra.mxu0 %v654
  %904 = vmatpush.bf16.msra.mxu0 %v652
  %905 = vmatpush.bf16.msra.mxu0 %v650
  %906 = vmatmul.bf16.gmra.mxu0 %v190
  %v907 = vpop.f32.mrf.mxu0
  %v908 = vadd.f32 %v894, %v907
  %v909 = vpop.f32.mrf.mxu0
  %v910 = vadd.f32 %v896, %v909
  %911 = vdwg.mxu0
  %912 = vmatpush.bf16.msra.mxu0 %v680
  %913 = vmatpush.bf16.msra.mxu0 %v678
  %914 = vmatpush.bf16.msra.mxu0 %v676
  %915 = vmatpush.bf16.msra.mxu0 %v674
  %916 = vmatpush.bf16.msra.mxu0 %v672
  %917 = vmatpush.bf16.msra.mxu0 %v670
  %918 = vmatpush.bf16.msra.mxu0 %v668
  %919 = vmatpush.bf16.msra.mxu0 %v666
  %920 = vmatmul.bf16.gmra.mxu0 %v191
  %v921 = vpop.f32.mrf.mxu0
  %v922 = vadd.f32 %v908, %v921
  %v923 = vpop.f32.mrf.mxu0
  %v924 = vadd.f32 %v910, %v923
  %925 = vdwg.mxu0
  %926 = vmatpush.bf16.msra.mxu0 %v696
  %927 = vmatpush.bf16.msra.mxu0 %v694
  %928 = vmatpush.bf16.msra.mxu0 %v692
  %929 = vmatpush.bf16.msra.mxu0 %v690
  %930 = vmatpush.bf16.msra.mxu0 %v688
  %931 = vmatpush.bf16.msra.mxu0 %v686
  %932 = vmatpush.bf16.msra.mxu0 %v684
  %933 = vmatpush.bf16.msra.mxu0 %v682
  %934 = vmatmul.bf16.gmra.mxu0 %v192
  %v935 = vpop.f32.mrf.mxu0
  %v936 = vadd.f32 %v922, %v935
  %v937 = vpop.f32.mrf.mxu0
  %v938 = vadd.f32 %v924, %v937
  %939 = vdwg.mxu0
  %940 = vmatpush.bf16.msra.mxu0 %v712
  %941 = vmatpush.bf16.msra.mxu0 %v710
  %942 = vmatpush.bf16.msra.mxu0 %v708
  %943 = vmatpush.bf16.msra.mxu0 %v706
  %944 = vmatpush.bf16.msra.mxu0 %v704
  %945 = vmatpush.bf16.msra.mxu0 %v702
  %946 = vmatpush.bf16.msra.mxu0 %v700
  %947 = vmatpush.bf16.msra.mxu0 %v698
  %948 = vmatmul.bf16.gmra.mxu0 %v193
  %v949 = vpop.f32.mrf.mxu0
  %v950 = vadd.f32 %v936, %v949
  %v951 = vpop.f32.mrf.mxu0
  %v952 = vadd.f32 %v938, %v951
  %953 = vdwg.mxu0
  %954 = vmatpush.bf16.msra.mxu0 %v601
  %955 = vmatpush.bf16.msra.mxu0 %v599
  %956 = vmatpush.bf16.msra.mxu0 %v597
  %957 = vmatpush.bf16.msra.mxu0 %v595
  %958 = vmatpush.bf16.msra.mxu0 %v593
  %959 = vmatpush.bf16.msra.mxu0 %v591
  %960 = vmatpush.bf16.msra.mxu0 %v589
  %961 = vmatpush.bf16.msra.mxu0 %v587
  %962 = vmatmul.bf16.gmra.mxu0 %v186
  %v963 = vpop.f32.mrf.mxu0
  %v964 = vadd.f32 %v159, %v963
  %v965 = vpop.f32.mrf.mxu0
  %v966 = vadd.f32 %v159, %v965
  %967 = vdwg.mxu0
  %968 = vmatpush.bf16.msra.mxu0 %v617
  %969 = vmatpush.bf16.msra.mxu0 %v615
  %970 = vmatpush.bf16.msra.mxu0 %v613
  %971 = vmatpush.bf16.msra.mxu0 %v611
  %972 = vmatpush.bf16.msra.mxu0 %v609
  %973 = vmatpush.bf16.msra.mxu0 %v607
  %974 = vmatpush.bf16.msra.mxu0 %v605
  %975 = vmatpush.bf16.msra.mxu0 %v603
  %976 = vmatmul.bf16.gmra.mxu0 %v187
  %v977 = vpop.f32.mrf.mxu0
  %v978 = vadd.f32 %v964, %v977
  %v979 = vpop.f32.mrf.mxu0
  %v980 = vadd.f32 %v966, %v979
  %981 = vdwg.mxu0
  %982 = vmatpush.bf16.msra.mxu0 %v633
  %983 = vmatpush.bf16.msra.mxu0 %v631
  %984 = vmatpush.bf16.msra.mxu0 %v629
  %985 = vmatpush.bf16.msra.mxu0 %v627
  %986 = vmatpush.bf16.msra.mxu0 %v625
  %987 = vmatpush.bf16.msra.mxu0 %v623
  %988 = vmatpush.bf16.msra.mxu0 %v621
  %989 = vmatpush.bf16.msra.mxu0 %v619
  %990 = vmatmul.bf16.gmra.mxu0 %v188
  %v991 = vpop.f32.mrf.mxu0
  %v992 = vadd.f32 %v978, %v991
  %v993 = vpop.f32.mrf.mxu0
  %v994 = vadd.f32 %v980, %v993
  %995 = vdwg.mxu0
  %996 = vmatpush.bf16.msra.mxu0 %v649
  %997 = vmatpush.bf16.msra.mxu0 %v647
  %998 = vmatpush.bf16.msra.mxu0 %v645
  %999 = vmatpush.bf16.msra.mxu0 %v643
  %1000 = vmatpush.bf16.msra.mxu0 %v641
  %1001 = vmatpush.bf16.msra.mxu0 %v639
  %1002 = vmatpush.bf16.msra.mxu0 %v637
  %1003 = vmatpush.bf16.msra.mxu0 %v635
  %1004 = vmatmul.bf16.gmra.mxu0 %v189
  %v1005 = vpop.f32.mrf.mxu0
  %v1006 = vadd.f32 %v992, %v1005
  %v1007 = vpop.f32.mrf.mxu0
  %v1008 = vadd.f32 %v994, %v1007
  %1009 = vdwg.mxu0
  %1010 = vmatpush.bf16.msra.mxu0 %v665
  %1011 = vmatpush.bf16.msra.mxu0 %v663
  %1012 = vmatpush.bf16.msra.mxu0 %v661
  %1013 = vmatpush.bf16.msra.mxu0 %v659
  %1014 = vmatpush.bf16.msra.mxu0 %v657
  %1015 = vmatpush.bf16.msra.mxu0 %v655
  %1016 = vmatpush.bf16.msra.mxu0 %v653
  %1017 = vmatpush.bf16.msra.mxu0 %v651
  %1018 = vmatmul.bf16.gmra.mxu0 %v190
  %v1019 = vpop.f32.mrf.mxu0
  %v1020 = vadd.f32 %v1006, %v1019
  %v1021 = vpop.f32.mrf.mxu0
  %v1022 = vadd.f32 %v1008, %v1021
  %1023 = vdwg.mxu0
  %1024 = vmatpush.bf16.msra.mxu0 %v681
  %1025 = vmatpush.bf16.msra.mxu0 %v679
  %1026 = vmatpush.bf16.msra.mxu0 %v677
  %1027 = vmatpush.bf16.msra.mxu0 %v675
  %1028 = vmatpush.bf16.msra.mxu0 %v673
  %1029 = vmatpush.bf16.msra.mxu0 %v671
  %1030 = vmatpush.bf16.msra.mxu0 %v669
  %1031 = vmatpush.bf16.msra.mxu0 %v667
  %1032 = vmatmul.bf16.gmra.mxu0 %v191
  %v1033 = vpop.f32.mrf.mxu0
  %v1034 = vadd.f32 %v1020, %v1033
  %v1035 = vpop.f32.mrf.mxu0
  %v1036 = vadd.f32 %v1022, %v1035
  %1037 = vdwg.mxu0
  %1038 = vmatpush.bf16.msra.mxu0 %v697
  %1039 = vmatpush.bf16.msra.mxu0 %v695
  %1040 = vmatpush.bf16.msra.mxu0 %v693
  %1041 = vmatpush.bf16.msra.mxu0 %v691
  %1042 = vmatpush.bf16.msra.mxu0 %v689
  %1043 = vmatpush.bf16.msra.mxu0 %v687
  %1044 = vmatpush.bf16.msra.mxu0 %v685
  %1045 = vmatpush.bf16.msra.mxu0 %v683
  %1046 = vmatmul.bf16.gmra.mxu0 %v192
  %v1047 = vpop.f32.mrf.mxu0
  %v1048 = vadd.f32 %v1034, %v1047
  %v1049 = vpop.f32.mrf.mxu0
  %v1050 = vadd.f32 %v1036, %v1049
  %1051 = vdwg.mxu0
  %1052 = vmatpush.bf16.msra.mxu0 %v713
  %1053 = vmatpush.bf16.msra.mxu0 %v711
  %1054 = vmatpush.bf16.msra.mxu0 %v709
  %1055 = vmatpush.bf16.msra.mxu0 %v707
  %1056 = vmatpush.bf16.msra.mxu0 %v705
  %1057 = vmatpush.bf16.msra.mxu0 %v703
  %1058 = vmatpush.bf16.msra.mxu0 %v701
  %1059 = vmatpush.bf16.msra.mxu0 %v699
  %1060 = vmatmul.bf16.gmra.mxu0 %v193
  %v1061 = vpop.f32.mrf.mxu0
  %v1062 = vadd.f32 %v1048, %v1061
  %v1063 = vpop.f32.mrf.mxu0
  %v1064 = vadd.f32 %v1050, %v1063
  %1065 = vdwg.mxu0
  %v1066 = vmax.f32 %v950, 0.0
  %v1067 = vmax.f32 %v1062, 0.0
  %v1068 = vmax.f32 %v952, 0.0
  %v1069 = vmax.f32 %v1064, 0.0
  %v1070 = vpack.c.bf16 %v1068, %v1066
  %v1071 = vpack.c.bf16 %v1069, %v1067
  %v1072 = vld [vmem:[%s3] sm:$0xf]
  %v1073 = vld [vmem:[%s3 + $0x4] sm:$0xf]
  %v1074 = vld [vmem:[%s3 + $0x8] sm:$0xf]
  %v1075 = vld [vmem:[%s3 + $0xc] sm:$0xf]
  %v1076 = vld [vmem:[%s3 + $0x10] sm:$0xf]
  %v1077 = vld [vmem:[%s3 + $0x14] sm:$0xf]
  %v1078 = vld [vmem:[%s3 + $0x18] sm:$0xf]
  %v1079 = vld [vmem:[%s3 + $0x1c] sm:$0xf]
  %v1080 = vld [vmem:[%s3 + $0x20] sm:$0xf]
  %v1081 = vld [vmem:[%s3 + $0x24] sm:$0xf]
  %v1082 = vld [vmem:[%s3 + $0x28] sm:$0xf]
  %v1083 = vld [vmem:[%s3 + $0x2c] sm:$0xf]
  %v1084 = vld [vmem:[%s3 + $0x30] sm:$0xf]
  %v1085 = vld [vmem:[%s3 + $0x34] sm:$0xf]
  %v1086 = vld [vmem:[%s3 + $0x38] sm:$0xf]
  %v1087 = vld [vmem:[%s3 + $0x3c] sm:$0xf]
  %v1088 = vld [vmem:[%s3 + $0x40] sm:$0xf]
  %v1089 = vld [vmem:[%s3 + $0x44] sm:$0xf]
  %v1090 = vld [vmem:[%s3 + $0x48] sm:$0xf]
  %v1091 = vld [vmem:[%s3 + $0x4c] sm:$0xf]
  %v1092 = vld [vmem:[%s3 + $0x50] sm:$0xf]
  %v1093 = vld [vmem:[%s3 + $0x54] sm:$0xf]
  %v1094 = vld [vmem:[%s3 + $0x58] sm:$0xf]
  %v1095 = vld [vmem:[%s3 + $0x5c] sm:$0xf]
  %v1096 = vld [vmem:[%s3 + $0x60] sm:$0xf]
  %v1097 = vld [vmem:[%s3 + $0x64] sm:$0xf]
  %v1098 = vld [vmem:[%s3 + $0x68] sm:$0xf]
  %v1099 = vld [vmem:[%s3 + $0x6c] sm:$0xf]
  %v1100 = vld [vmem:[%s3 + $0x70] sm:$0xf]
  %v1101 = vld [vmem:[%s3 + $0x74] sm:$0xf]
  %v1102 = vld [vmem:[%s3 + $0x78] sm:$0xf]
  %v1103 = vld [vmem:[%s3 + $0x7c] sm:$0xf]
  %v1104 = vld [vmem:[%s4] sm:$0x1]
  %v1106 = vperm.slane %v1104, 0
  %v1140 = vunpack.c.l.b16 %v1072
  %v1141 = vunpack.c.l.b16 %v1073
  %v1142 = vunpack.c.l.b16 %v1074
  %v1143 = vunpack.c.l.b16 %v1075
  %v1144 = vunpack.c.l.b16 %v1076
  %v1145 = vunpack.c.l.b16 %v1077
  %v1146 = vunpack.c.l.b16 %v1078
  %v1147 = vunpack.c.l.b16 %v1079
  %v1148 = vunpack.c.l.b16 %v1080
  %v1149 = vunpack.c.l.b16 %v1081
  %v1150 = vunpack.c.l.b16 %v1082
  %v1151 = vunpack.c.l.b16 %v1083
  %v1152 = vunpack.c.l.b16 %v1084
  %v1153 = vunpack.c.l.b16 %v1085
  %v1154 = vunpack.c.l.b16 %v1086
  %v1155 = vunpack.c.l.b16 %v1087
  %v1156 = vunpack.c.l.b16 %v1088
  %v1157 = vunpack.c.l.b16 %v1089
  %v1158 = vunpack.c.l.b16 %v1090
  %v1159 = vunpack.c.l.b16 %v1091
  %v1160 = vunpack.c.l.b16 %v1092
  %v1161 = vunpack.c.l.b16 %v1093
  %v1162 = vunpack.c.l.b16 %v1094
  %v1163 = vunpack.c.l.b16 %v1095
  %v1164 = vunpack.c.l.b16 %v1096
  %v1165 = vunpack.c.l.b16 %v1097
  %v1166 = vunpack.c.l.b16 %v1098
  %v1167 = vunpack.c.l.b16 %v1099
  %v1168 = vunpack.c.l.b16 %v1100
  %v1169 = vunpack.c.l.b16 %v1101
  %v1170 = vunpack.c.l.b16 %v1102
  %v1171 = vunpack.c.l.b16 %v1103
  %v1172 = vpack.c.b16 %v1141, %v1140
  %v1173 = vpack.c.b16 %v1143, %v1142
  %v1174 = vpack.c.b16 %v1145, %v1144
  %v1175 = vpack.c.b16 %v1147, %v1146
  %v1176 = vpack.c.b16 %v1149, %v1148
  %v1177 = vpack.c.b16 %v1151, %v1150
  %v1178 = vpack.c.b16 %v1153, %v1152
  %v1179 = vpack.c.b16 %v1155, %v1154
  %v1180 = vpack.c.b16 %v1157, %v1156
  %v1181 = vpack.c.b16 %v1159, %v1158
  %v1182 = vpack.c.b16 %v1161, %v1160
  %v1183 = vpack.c.b16 %v1163, %v1162
  %v1184 = vpack.c.b16 %v1165, %v1164
  %v1185 = vpack.c.b16 %v1167, %v1166
  %v1186 = vpack.c.b16 %v1169, %v1168
  %v1187 = vpack.c.b16 %v1171, %v1170
  %1204 = vmatpush.bf16.msra.mxu0 %v1179
  %1205 = vmatpush.bf16.msra.mxu0 %v1178
  %1206 = vmatpush.bf16.msra.mxu0 %v1177
  %1207 = vmatpush.bf16.msra.mxu0 %v1176
  %1208 = vmatpush.bf16.msra.mxu0 %v1175
  %1209 = vmatpush.bf16.msra.mxu0 %v1174
  %1210 = vmatpush.bf16.msra.mxu0 %v1173
  %1211 = vmatpush.bf16.msra.mxu0 %v1172
  %1212 = vmatmul.bf16.gmra.mxu0 %v1070
  %v1213 = vpop.f32.mrf.mxu0
  %v1214 = vadd.f32 %v1106, %v1213
  %v1215 = vpop.f32.mrf.mxu0
  %v1216 = vadd.f32 %v1106, %v1215
  %1217 = vdwg.mxu0
  %1218 = vmatpush.bf16.msra.mxu0 %v1187
  %1219 = vmatpush.bf16.msra.mxu0 %v1186
  %1220 = vmatpush.bf16.msra.mxu0 %v1185
  %1221 = vmatpush.bf16.msra.mxu0 %v1184
  %1222 = vmatpush.bf16.msra.mxu0 %v1183
  %1223 = vmatpush.bf16.msra.mxu0 %v1182
  %1224 = vmatpush.bf16.msra.mxu0 %v1181
  %1225 = vmatpush.bf16.msra.mxu0 %v1180
  %1226 = vmatmul.bf16.gmra.mxu0 %v1071
  %v1227 = vpop.f32.mrf.mxu0
  %v1228 = vadd.f32 %v1214, %v1227
  %v1229 = vpop.f32.mrf.mxu0
  %v1230 = vadd.f32 %v1216, %v1229
  %1231 = vdwg.mxu0
  %1232 = vst [vmem:[%s5] sm:$0xff] %v1228
  %1233 = vst [vmem:[%s5 + $0x8] sm:$0xff] %v1230
  // Predicated region
  $region22: #{short_circuit_net_forward.5} parent=0 // pred_check
    _
  $region23: #{short_circuit_net_forward.5} parent=0 // pred_check_branch
    %1235 = sbr.rel (0) target = $region25
  $region24: #{short_circuit_net_forward.5} parent=0 // pred_region
    _
  $region25: #{short_circuit_net_forward.5} parent=0 // pred_fallthru
    _
  // Predicated region
  $region26: #{short_circuit_net_forward.5} parent=0 // pred_check
    _
  $region27: #{short_circuit_net_forward.5} parent=0 // pred_check_branch
    %1237 = sbr.rel (0) target = $region29
  $region28: #{short_circuit_net_forward.5} parent=0 // pred_region
    _
  $region29: #{short_circuit_net_forward.5} parent=0 // pred_fallthru
    _

// kernel: branch_0_fun.9
$region0: #{branch_0_fun.9}
  #allocation0 [shape = 'u32[]', space=smem, size = 0x4, offset = 0x4, fixed_abs, tag = 'smem constant byte address 0x4 - core index']
  #allocation1 [shape = 'u32[72,128]{1,0:T(1,128)}', space=vmem, size = 0x9000, scoped, tag = 'internal scratch']
  %s0 = inlined_call_operand.vmem [shape: bf16[1792,384], index: 0, kind: input, shape index: {}]
  %s1 = inlined_call_operand.vmem [shape: bf16[384,128], index: 1, kind: input, shape index: {}]
  %s2 = inlined_call_operand.vmem [shape: f32[1,128], index: 2, kind: input, shape index: {}]
  %s3 = inlined_call_operand.vmem [shape: bf16[1792,128], index: 3, kind: output, shape index: {}]
  %s4 = sld [smem:[#allocation0]]
  $region45: #{branch_0_fun.9} parent=0
    _
  %s6 = ssub.s32 1, %s4
  %s7 = scalar_select 0, %s6, %s4
  loop: start=0, step=1, limit=9
  $region2: #{branch_0_fun.9} parent=0 // loop_pre_header
    _
  $region3: #{branch_0_fun.9} parent=0 // loop_header
    %s9 = sphi 0, %s13
    %p10 = scmp.ge.s32.totalorder %s9, 9
    %s16 = sphi 0, %s28
    %s17 = sphi 0, %s24
    %s18 = sphi 0, %s16
    %s19 = sphi 0, %s17
    %s20 = sphi 0, %s18
    %s21 = sphi 0, %s19
    %s31 = sphi 0, %s33
    %s34 = sphi 0, %s31
    %s35 = sphi 0, %s34
    %s51 = sphi 0, %s35
    %s57 = sphi 0, %s59
    %s60 = sphi 0, %s57
    %s61 = sphi 0, %s60
    %s77 = sphi 0, %s61
    %s83 = sphi 0, %s85
    %s86 = sphi 0, %s83
    %s87 = sphi 0, %s86
    %s103 = sphi 0, %s87
    %s111 = sphi 0, %s113
    %s114 = sphi 0, %s111
    %s115 = sphi 0, %s114
    %s131 = sphi 0, %s115
  $region4: #{branch_0_fun.9} parent=0 // loop_header_branch
    %12 = sbr.rel (%p10) target = $region8
  $region5: #{branch_0_fun.9} parent=0 // loop_body
    %s14 = ssub.s32 %s9, 1
    %s15 = ssub.s32 %s9, 2
    %s22 = sadd.s32 1, %s17
    %p23 = scmp.ge.s32.totalorder %s22, 1
    %s24 = scalar_select %p23, 0, %s22
    %s25 = sadd.s32 1, %s16
    %s26 = scalar_select %p23, %s25, %s16
    %p27 = scmp.ge.s32.totalorder %s26, 7
    %s28 = scalar_select %p27, 0, %s26
    %s29 = ssub.s32 %s16, %s28
    %p30 = scmp.eq.s32.totalorder %s29, 0
    %s32 = sadd.s32 %s31, 1
    %s33 = scalar_select %p30, %s31, %s32
    %p36 = pneg %p30
    %p37 = scmp.eq.s32.totalorder %s9, 6
    %p38 = por %p36, %p37
    %p39 = scmp.ne.s32.totalorder %s31, %s34
    %p40 = scmp.eq.s32.totalorder %s9, 0
    %p41 = por %p39, %p40
    %p42 = scmp.ne.s32.totalorder %s31, %s34
    %p43 = scmp.eq.s32.totalorder %s14, 6
    %p44 = por %p42, %p43
    %p45 = scmp.ne.s32.totalorder %s34, %s35
    %p46 = scmp.eq.s32.totalorder %s14, 0
    %p47 = por %p45, %p46
    %p48 = scmp.ne.s32.totalorder %s34, %s35
    %p49 = scmp.eq.s32.totalorder %s15, 6
    %p50 = por %p48, %p49
    %p52 = scmp.ne.s32.totalorder %s35, %s51
    %p53 = scmp.eq.s32.totalorder %s15, 0
    %p54 = por %p52, %p53
    %s55 = ssub.s32 %s17, %s24
    %p56 = scmp.eq.s32.totalorder %s55, 0
    %s58 = sadd.s32 %s57, 1
    %s59 = scalar_select %p56, %s57, %s58
    %p62 = pneg %p56
    %p63 = scmp.eq.s32.totalorder %s9, 6
    %p64 = por %p62, %p63
    %p65 = scmp.ne.s32.totalorder %s57, %s60
    %p66 = scmp.eq.s32.totalorder %s9, 0
    %p67 = por %p65, %p66
    %p68 = scmp.ne.s32.totalorder %s57, %s60
    %p69 = scmp.eq.s32.totalorder %s14, 6
    %p70 = por %p68, %p69
    %p71 = scmp.ne.s32.totalorder %s60, %s61
    %p72 = scmp.eq.s32.totalorder %s14, 0
    %p73 = por %p71, %p72
    %p74 = scmp.ne.s32.totalorder %s60, %s61
    %p75 = scmp.eq.s32.totalorder %s15, 6
    %p76 = por %p74, %p75
    %p78 = scmp.ne.s32.totalorder %s61, %s77
    %p79 = scmp.eq.s32.totalorder %s15, 0
    %p80 = por %p78, %p79
    %s81 = ssub.s32 %s17, %s24
    %p82 = scmp.eq.s32.totalorder %s81, 0
    %s84 = sadd.s32 %s83, 1
    %s85 = scalar_select %p82, %s83, %s84
    %p88 = pneg %p82
    %p89 = scmp.eq.s32.totalorder %s9, 6
    %p90 = por %p88, %p89
    %p91 = scmp.ne.s32.totalorder %s83, %s86
    %p92 = scmp.eq.s32.totalorder %s9, 0
    %p93 = por %p91, %p92
    %p94 = scmp.ne.s32.totalorder %s83, %s86
    %p95 = scmp.eq.s32.totalorder %s14, 6
    %p96 = por %p94, %p95
    %p97 = scmp.ne.s32.totalorder %s86, %s87
    %p98 = scmp.eq.s32.totalorder %s14, 0
    %p99 = por %p97, %p98
    %p100 = scmp.ne.s32.totalorder %s86, %s87
    %p101 = scmp.eq.s32.totalorder %s15, 6
    %p102 = por %p100, %p101
    %p104 = scmp.ne.s32.totalorder %s87, %s103
    %p105 = scmp.eq.s32.totalorder %s15, 0
    %p106 = por %p104, %p105
    %s107 = ssub.s32 %s16, %s28
    %s108 = ssub.s32 %s17, %s24
    %s109 = sor.u32 %s107, %s108
    %p110 = scmp.eq.s32.totalorder %s109, 0
    %s112 = sadd.s32 %s111, 1
    %s113 = scalar_select %p110, %s111, %s112
    %p116 = pneg %p110
    %p117 = scmp.eq.s32.totalorder %s9, 6
    %p118 = por %p116, %p117
    %p119 = scmp.ne.s32.totalorder %s111, %s114
    %p120 = scmp.eq.s32.totalorder %s9, 0
    %p121 = por %p119, %p120
    %p122 = scmp.ne.s32.totalorder %s111, %s114
    %p123 = scmp.eq.s32.totalorder %s14, 6
    %p124 = por %p122, %p123
    %p125 = scmp.ne.s32.totalorder %s114, %s115
    %p126 = scmp.eq.s32.totalorder %s14, 0
    %p127 = por %p125, %p126
    %p128 = scmp.ne.s32.totalorder %s114, %s115
    %p129 = scmp.eq.s32.totalorder %s15, 6
    %p130 = por %p128, %p129
    %p132 = scmp.ne.s32.totalorder %s115, %s131
    %p133 = scmp.eq.s32.totalorder %s15, 0
    %p134 = por %p132, %p133
    %p135 = scmp.le.s32.totalorder 1, %s9
    %p136 = scmp.lt.s32.totalorder %s9, 8
    %p137 = pnand %p135, %p136
    %p138 = pneg %p137
    // Predicated region
    $region9: #{branch_0_fun.9} parent=5 // pred_check
      _
    $region10: #{branch_0_fun.9} parent=5 // pred_check_branch
      %140 = sbr.rel (%p137) target = $region12
    $region11: #{branch_0_fun.9} parent=5 // pred_region
      %s141 = ssub.s32 %s9, 1
      // Predicated region
      $region13: #{branch_0_fun.9} parent=11 // pred_check
        %p142 = pneg %p73
      $region14: #{branch_0_fun.9} parent=11 // pred_check_branch
        %144 = sbr.rel (%p142) target = $region16
      $region15: #{branch_0_fun.9} parent=11 // pred_region
        %p145 = scmp.lt.s32.totalorder %s19, 0
        %s146 = scalar_select %p145, %s19, 0
        %s147 = smul.addr %s146, 4
        %s148 = scalar_lea.vmem %s1, %s147
      $region16: #{branch_0_fun.9} parent=11 // pred_fallthru
        _
      // Predicated region
      $region17: #{branch_0_fun.9} parent=11 // pred_check
        %p149 = pneg %p99
      $region18: #{branch_0_fun.9} parent=11 // pred_check_branch
        %151 = sbr.rel (%p149) target = $region20
      $region19: #{branch_0_fun.9} parent=11 // pred_region
        %p152 = scmp.lt.s32.totalorder %s19, 0
        %s153 = scalar_select %p152, %s19, 0
        %s154 = scalar_lea.vmem %s2, %s153
      $region20: #{branch_0_fun.9} parent=11 // pred_fallthru
        _
    $region12: #{branch_0_fun.9} parent=5 // pred_fallthru
      _
    %p155 = scmp.lt.s32.totalorder %s9, 7
    // Predicated region
    $region21: #{branch_0_fun.9} parent=5 // pred_check
      %p156 = pneg %p155
    $region22: #{branch_0_fun.9} parent=5 // pred_check_branch
      %158 = sbr.rel (%p156) target = $region24
    $region23: #{branch_0_fun.9} parent=5 // pred_region
      // Predicated region
      $region25: #{branch_0_fun.9} parent=23 // pred_check
        %p159 = pneg %p41
      $region26: #{branch_0_fun.9} parent=23 // pred_check_branch
        %161 = sbr.rel (%p159) target = $region28
      $region27: #{branch_0_fun.9} parent=23 // pred_region
        %s162 = smul.u32 32, %s16
        %p163 = scmp.lt.s32.totalorder %s162, 223
        %s164 = scalar_select %p163, %s162, 223
        %s165 = smul.addr %s164, 3
        %s166 = smul.addr %s165, 4
        %s167 = scalar_lea.vmem %s0, %s166
        %s168 = smul.u32 32, %s16
      $region28: #{branch_0_fun.9} parent=23 // pred_fallthru
        _
    $region24: #{branch_0_fun.9} parent=5 // pred_fallthru
      _
    %p169 = scmp.le.s32.totalorder 1, %s9
    %p170 = scmp.lt.s32.totalorder %s9, 8
    %p171 = pnand %p169, %p170
    %p172 = pneg %p171
    // Predicated region
    $region29: #{branch_0_fun.9} parent=5 // pred_check
      _
    $region30: #{branch_0_fun.9} parent=5 // pred_check_branch
      %174 = sbr.rel (%p171) target = $region32
    $region31: #{branch_0_fun.9} parent=5 // pred_region
      %s175 = ssub.s32 %s9, 1
      %s176 = smul.u32 32, %s18
      %p177 = scmp.lt.s32.totalorder %s176, 223
      %s178 = scalar_select %p177, %s176, 223
      %s179 = smul.addr %s178, 3
      %s180 = smul.addr %s179, 4
      %s181 = scalar_lea.vmem %s0, %s180
      %p182 = pneg %p47
      %p183 = pneg %p44
      %p184 = scmp.lt.s32.totalorder %s19, 0
      %s185 = scalar_select %p184, %s19, 0
      %s186 = smul.addr %s185, 4
      %s187 = scalar_lea.vmem %s1, %s186
      %p188 = pneg %p73
      %p189 = pneg %p70
      %p190 = scmp.lt.s32.totalorder %s19, 0
      %s191 = scalar_select %p190, %s19, 0
      %s192 = scalar_lea.vmem %s2, %s191
      %p193 = pneg %p99
      %p194 = pneg %p96
      %p195 = pneg %p127
      %p196 = pneg %p124
      %s197 = smul.u32 32, %s18
      %p198 = scmp.lt.s32.totalorder %s197, 223
      %s199 = scalar_select %p198, %s197, 223
      %p200 = scmp.lt.s32.totalorder %s19, 0
      %s201 = scalar_select %p200, %s19, 0
      %s202 = sadd.s32 %s201, %s199
      %s203 = smul.addr %s202, 4
      %s204 = scalar_lea.vmem %s3, %s203
      %s205 = smul.u32 32, %s18
      %p206 = scmp.lt.s32.totalorder %s205, 223
      %s207 = scalar_select %p206, %s205, 223
      %s208 = smul.addr %s207, 3
      %s209 = smul.addr %s208, 4
      %s210 = scalar_lea.vmem %s0, %s209
      %s211 = smul.u32 32, %s18
      %p212 = scmp.lt.s32.totalorder %s19, 0
      %s213 = scalar_select %p212, %s19, 0
      %s214 = smul.addr %s213, 4
      %s215 = scalar_lea.vmem %s1, %s214
      %p216 = scmp.lt.s32.totalorder %s19, 0
      %s217 = scalar_select %p216, %s19, 0
      %s218 = scalar_lea.vmem %s2, %s217
      %s219 = smul.u32 32, %s18
      %p220 = scmp.lt.s32.totalorder %s219, 223
      %s221 = scalar_select %p220, %s219, 223
      %p222 = scmp.lt.s32.totalorder %s19, 0
      %s223 = scalar_select %p222, %s19, 0
      %s224 = sadd.s32 %s223, %s221
      %s225 = smul.addr %s224, 4
      %s226 = scalar_lea.vmem %s3, %s225
      %s227 = smul.u32 32, %s18
      %v228 = vld [vmem:[%s210] sm:$0xff]
      %v229 = vld [vmem:[%s210 + $0x8] sm:$0xf]
      %v230 = vld [vmem:[%s210 + $0xc] sm:$0xff]
      %v231 = vld [vmem:[%s210 + $0x14] sm:$0xf]
      %v232 = vld [vmem:[%s210 + $0x18] sm:$0xff]
      %v233 = vld [vmem:[%s210 + $0x20] sm:$0xf]
      %v234 = vld [vmem:[%s210 + $0x24] sm:$0xff]
      %v235 = vld [vmem:[%s210 + $0x2c] sm:$0xf]
      %v236 = vld [vmem:[%s210 + $0x30] sm:$0xff]
      %v237 = vld [vmem:[%s210 + $0x38] sm:$0xf]
      %v238 = vld [vmem:[%s210 + $0x3c] sm:$0xff]
      %v239 = vld [vmem:[%s210 + $0x44] sm:$0xf]
      %v240 = vld [vmem:[%s210 + $0x48] sm:$0xff]
      %v241 = vld [vmem:[%s210 + $0x50] sm:$0xf]
      %v242 = vld [vmem:[%s210 + $0x54] sm:$0xff]
      %v243 = vld [vmem:[%s210 + $0x5c] sm:$0xf]
      %v244 = vld [vmem:[%s210 + $0x60] sm:$0xff]
      %v245 = vld [vmem:[%s210 + $0x68] sm:$0xf]
      %v246 = vld [vmem:[%s210 + $0x6c] sm:$0xff]
      %v247 = vld [vmem:[%s210 + $0x74] sm:$0xf]
      %v248 = vld [vmem:[%s210 + $0x78] sm:$0xff]
      %v249 = vld [vmem:[%s210 + $0x80] sm:$0xf]
      %v250 = vld [vmem:[%s210 + $0x84] sm:$0xff]
      %v251 = vld [vmem:[%s210 + $0x8c] sm:$0xf]
      %v252 = vld [vmem:[%s210 + $0x90] sm:$0xff]
      %v253 = vld [vmem:[%s210 + $0x98] sm:$0xf]
      %v254 = vld [vmem:[%s210 + $0x9c] sm:$0xff]
      %v255 = vld [vmem:[%s210 + $0xa4] sm:$0xf]
      %v256 = vld [vmem:[%s210 + $0xa8] sm:$0xff]
      %v257 = vld [vmem:[%s210 + $0xb0] sm:$0xf]
      %v258 = vld [vmem:[%s210 + $0xb4] sm:$0xff]
      %v259 = vld [vmem:[%s210 + $0xbc] sm:$0xf]
      %v260 = vld [vmem:[%s210 + $0xc0] sm:$0xff]
      %v261 = vld [vmem:[%s210 + $0xc8] sm:$0xf]
      %v262 = vld [vmem:[%s210 + $0xcc] sm:$0xff]
      %v263 = vld [vmem:[%s210 + $0xd4] sm:$0xf]
      %v264 = vld [vmem:[%s210 + $0xd8] sm:$0xff]
      %v265 = vld [vmem:[%s210 + $0xe0] sm:$0xf]
      %v266 = vld [vmem:[%s210 + $0xe4] sm:$0xff]
      %v267 = vld [vmem:[%s210 + $0xec] sm:$0xf]
      %v268 = vld [vmem:[%s210 + $0xf0] sm:$0xff]
      %v269 = vld [vmem:[%s210 + $0xf8] sm:$0xf]
      %v270 = vld [vmem:[%s210 + $0xfc] sm:$0xff]
      %v271 = vld [vmem:[%s210 + $0x104] sm:$0xf]
      %v272 = vld [vmem:[%s210 + $0x108] sm:$0xff]
      %v273 = vld [vmem:[%s210 + $0x110] sm:$0xf]
      %v274 = vld [vmem:[%s210 + $0x114] sm:$0xff]
      %v275 = vld [vmem:[%s210 + $0x11c] sm:$0xf]
      %v276 = vld [vmem:[%s210 + $0x120] sm:$0xff]
      %v277 = vld [vmem:[%s210 + $0x128] sm:$0xf]
      %v278 = vld [vmem:[%s210 + $0x12c] sm:$0xff]
      %v279 = vld [vmem:[%s210 + $0x134] sm:$0xf]
      %v280 = vld [vmem:[%s210 + $0x138] sm:$0xff]
      %v281 = vld [vmem:[%s210 + $0x140] sm:$0xf]
      %v282 = vld [vmem:[%s210 + $0x144] sm:$0xff]
      %v283 = vld [vmem:[%s210 + $0x14c] sm:$0xf]
      %v284 = vld [vmem:[%s210 + $0x150] sm:$0xff]
      %v285 = vld [vmem:[%s210 + $0x158] sm:$0xf]
      %v286 = vld [vmem:[%s210 + $0x15c] sm:$0xff]
      %v287 = vld [vmem:[%s210 + $0x164] sm:$0xf]
      %v288 = vld [vmem:[%s210 + $0x168] sm:$0xff]
      %v289 = vld [vmem:[%s210 + $0x170] sm:$0xf]
      %v290 = vld [vmem:[%s210 + $0x174] sm:$0xff]
      %v291 = vld [vmem:[%s210 + $0x17c] sm:$0xf]
      %v292 = vld [vmem:[%s215] sm:$0xf]
      %v293 = vld [vmem:[%s215 + $0x4] sm:$0xf]
      %v294 = vld [vmem:[%s215 + $0x8] sm:$0xf]
      %v295 = vld [vmem:[%s215 + $0xc] sm:$0xf]
      %v296 = vld [vmem:[%s215 + $0x10] sm:$0xf]
      %v297 = vld [vmem:[%s215 + $0x14] sm:$0xf]
      %v298 = vld [vmem:[%s215 + $0x18] sm:$0xf]
      %v299 = vld [vmem:[%s215 + $0x1c] sm:$0xf]
      %v300 = vld [vmem:[%s215 + $0x20] sm:$0xf]
      %v301 = vld [vmem:[%s215 + $0x24] sm:$0xf]
      %v302 = vld [vmem:[%s215 + $0x28] sm:$0xf]
      %v303 = vld [vmem:[%s215 + $0x2c] sm:$0xf]
      %v304 = vld [vmem:[%s215 + $0x30] sm:$0xf]
      %v305 = vld [vmem:[%s215 + $0x34] sm:$0xf]
      %v306 = vld [vmem:[%s215 + $0x38] sm:$0xf]
      %v307 = vld [vmem:[%s215 + $0x3c] sm:$0xf]
      %v308 = vld [vmem:[%s215 + $0x40] sm:$0xf]
      %v309 = vld [vmem:[%s215 + $0x44] sm:$0xf]
      %v310 = vld [vmem:[%s215 + $0x48] sm:$0xf]
      %v311 = vld [vmem:[%s215 + $0x4c] sm:$0xf]
      %v312 = vld [vmem:[%s215 + $0x50] sm:$0xf]
      %v313 = vld [vmem:[%s215 + $0x54] sm:$0xf]
      %v314 = vld [vmem:[%s215 + $0x58] sm:$0xf]
      %v315 = vld [vmem:[%s215 + $0x5c] sm:$0xf]
      %v316 = vld [vmem:[%s215 + $0x60] sm:$0xf]
      %v317 = vld [vmem:[%s215 + $0x64] sm:$0xf]
      %v318 = vld [vmem:[%s215 + $0x68] sm:$0xf]
      %v319 = vld [vmem:[%s215 + $0x6c] sm:$0xf]
      %v320 = vld [vmem:[%s215 + $0x70] sm:$0xf]
      %v321 = vld [vmem:[%s215 + $0x74] sm:$0xf]
      %v322 = vld [vmem:[%s215 + $0x78] sm:$0xf]
      %v323 = vld [vmem:[%s215 + $0x7c] sm:$0xf]
      %v324 = vld [vmem:[%s215 + $0x80] sm:$0xf]
      %v325 = vld [vmem:[%s215 + $0x84] sm:$0xf]
      %v326 = vld [vmem:[%s215 + $0x88] sm:$0xf]
      %v327 = vld [vmem:[%s215 + $0x8c] sm:$0xf]
      %v328 = vld [vmem:[%s215 + $0x90] sm:$0xf]
      %v329 = vld [vmem:[%s215 + $0x94] sm:$0xf]
      %v330 = vld [vmem:[%s215 + $0x98] sm:$0xf]
      %v331 = vld [vmem:[%s215 + $0x9c] sm:$0xf]
      %v332 = vld [vmem:[%s215 + $0xa0] sm:$0xf]
      %v333 = vld [vmem:[%s215 + $0xa4] sm:$0xf]
      %v334 = vld [vmem:[%s215 + $0xa8] sm:$0xf]
      %v335 = vld [vmem:[%s215 + $0xac] sm:$0xf]
      %v336 = vld [vmem:[%s215 + $0xb0] sm:$0xf]
      %v337 = vld [vmem:[%s215 + $0xb4] sm:$0xf]
      %v338 = vld [vmem:[%s215 + $0xb8] sm:$0xf]
      %v339 = vld [vmem:[%s215 + $0xbc] sm:$0xf]
      %v340 = vld [vmem:[%s218] sm:$0x1]
      %v342 = vperm.slane %v340, 0
      %v408 = vunpack.c.l.b16 %v228
      %v409 = vunpack.c.h.b16 %v228
      %v410 = vunpack.c.l.b16 %v229
      %v411 = vunpack.c.l.b16 %v230
      %v412 = vunpack.c.h.b16 %v230
      %v413 = vunpack.c.l.b16 %v231
      %v414 = vunpack.c.l.b16 %v232
      %v415 = vunpack.c.h.b16 %v232
      %v416 = vunpack.c.l.b16 %v233
      %v417 = vunpack.c.l.b16 %v234
      %v418 = vunpack.c.h.b16 %v234
      %v419 = vunpack.c.l.b16 %v235
      %v420 = vunpack.c.l.b16 %v236
      %v421 = vunpack.c.h.b16 %v236
      %v422 = vunpack.c.l.b16 %v237
      %v423 = vunpack.c.l.b16 %v238
      %v424 = vunpack.c.h.b16 %v238
      %v425 = vunpack.c.l.b16 %v239
      %v426 = vunpack.c.l.b16 %v240
      %v427 = vunpack.c.h.b16 %v240
      %v428 = vunpack.c.l.b16 %v241
      %v429 = vunpack.c.l.b16 %v242
      %v430 = vunpack.c.h.b16 %v242
      %v431 = vunpack.c.l.b16 %v243
      %v432 = vunpack.c.l.b16 %v244
      %v433 = vunpack.c.h.b16 %v244
      %v434 = vunpack.c.l.b16 %v245
      %v435 = vunpack.c.l.b16 %v246
      %v436 = vunpack.c.h.b16 %v246
      %v437 = vunpack.c.l.b16 %v247
      %v438 = vunpack.c.l.b16 %v248
      %v439 = vunpack.c.h.b16 %v248
      %v440 = vunpack.c.l.b16 %v249
      %v441 = vunpack.c.l.b16 %v250
      %v442 = vunpack.c.h.b16 %v250
      %v443 = vunpack.c.l.b16 %v251
      %v444 = vunpack.c.l.b16 %v252
      %v445 = vunpack.c.h.b16 %v252
      %v446 = vunpack.c.l.b16 %v253
      %v447 = vunpack.c.l.b16 %v254
      %v448 = vunpack.c.h.b16 %v254
      %v449 = vunpack.c.l.b16 %v255
      %v450 = vunpack.c.l.b16 %v256
      %v451 = vunpack.c.h.b16 %v256
      %v452 = vunpack.c.l.b16 %v257
      %v453 = vunpack.c.l.b16 %v258
      %v454 = vunpack.c.h.b16 %v258
      %v455 = vunpack.c.l.b16 %v259
      %v456 = vunpack.c.l.b16 %v260
      %v457 = vunpack.c.h.b16 %v260
      %v458 = vunpack.c.l.b16 %v261
      %v459 = vunpack.c.l.b16 %v262
      %v460 = vunpack.c.h.b16 %v262
      %v461 = vunpack.c.l.b16 %v263
      %v462 = vunpack.c.l.b16 %v264
      %v463 = vunpack.c.h.b16 %v264
      %v464 = vunpack.c.l.b16 %v265
      %v465 = vunpack.c.l.b16 %v266
      %v466 = vunpack.c.h.b16 %v266
      %v467 = vunpack.c.l.b16 %v267
      %v468 = vunpack.c.l.b16 %v268
      %v469 = vunpack.c.h.b16 %v268
      %v470 = vunpack.c.l.b16 %v269
      %v471 = vunpack.c.l.b16 %v270
      %v472 = vunpack.c.h.b16 %v270
      %v473 = vunpack.c.l.b16 %v271
      %v474 = vunpack.c.l.b16 %v272
      %v475 = vunpack.c.h.b16 %v272
      %v476 = vunpack.c.l.b16 %v273
      %v477 = vunpack.c.l.b16 %v274
      %v478 = vunpack.c.h.b16 %v274
      %v479 = vunpack.c.l.b16 %v275
      %v480 = vunpack.c.l.b16 %v276
      %v481 = vunpack.c.h.b16 %v276
      %v482 = vunpack.c.l.b16 %v277
      %v483 = vunpack.c.l.b16 %v278
      %v484 = vunpack.c.h.b16 %v278
      %v485 = vunpack.c.l.b16 %v279
      %v486 = vunpack.c.l.b16 %v280
      %v487 = vunpack.c.h.b16 %v280
      %v488 = vunpack.c.l.b16 %v281
      %v489 = vunpack.c.l.b16 %v282
      %v490 = vunpack.c.h.b16 %v282
      %v491 = vunpack.c.l.b16 %v283
      %v492 = vunpack.c.l.b16 %v284
      %v493 = vunpack.c.h.b16 %v284
      %v494 = vunpack.c.l.b16 %v285
      %v495 = vunpack.c.l.b16 %v286
      %v496 = vunpack.c.h.b16 %v286
      %v497 = vunpack.c.l.b16 %v287
      %v498 = vunpack.c.l.b16 %v288
      %v499 = vunpack.c.h.b16 %v288
      %v500 = vunpack.c.l.b16 %v289
      %v501 = vunpack.c.l.b16 %v290
      %v502 = vunpack.c.h.b16 %v290
      %v503 = vunpack.c.l.b16 %v291
      %v504 = vpack.c.b16 %v411, %v408
      %v505 = vpack.c.b16 %v412, %v409
      %v506 = vpack.c.b16 %v413, %v410
      %v507 = vpack.c.b16 %v417, %v414
      %v508 = vpack.c.b16 %v418, %v415
      %v509 = vpack.c.b16 %v419, %v416
      %v510 = vpack.c.b16 %v423, %v420
      %v511 = vpack.c.b16 %v424, %v421
      %v512 = vpack.c.b16 %v425, %v422
      %v513 = vpack.c.b16 %v429, %v426
      %v514 = vpack.c.b16 %v430, %v427
      %v515 = vpack.c.b16 %v431, %v428
      %v516 = vpack.c.b16 %v435, %v432
      %v517 = vpack.c.b16 %v436, %v433
      %v518 = vpack.c.b16 %v437, %v434
      %v519 = vpack.c.b16 %v441, %v438
      %v520 = vpack.c.b16 %v442, %v439
      %v521 = vpack.c.b16 %v443, %v440
      %v522 = vpack.c.b16 %v447, %v444
      %v523 = vpack.c.b16 %v448, %v445
      %v524 = vpack.c.b16 %v449, %v446
      %v525 = vpack.c.b16 %v453, %v450
      %v526 = vpack.c.b16 %v454, %v451
      %v527 = vpack.c.b16 %v455, %v452
      %v528 = vpack.c.b16 %v459, %v456
      %v529 = vpack.c.b16 %v460, %v457
      %v530 = vpack.c.b16 %v461, %v458
      %v531 = vpack.c.b16 %v465, %v462
      %v532 = vpack.c.b16 %v466, %v463
      %v533 = vpack.c.b16 %v467, %v464
      %v534 = vpack.c.b16 %v471, %v468
      %v535 = vpack.c.b16 %v472, %v469
      %v536 = vpack.c.b16 %v473, %v470
      %v537 = vpack.c.b16 %v477, %v474
      %v538 = vpack.c.b16 %v478, %v475
      %v539 = vpack.c.b16 %v479, %v476
      %v540 = vpack.c.b16 %v483, %v480
      %v541 = vpack.c.b16 %v484, %v481
      %v542 = vpack.c.b16 %v485, %v482
      %v543 = vpack.c.b16 %v489, %v486
      %v544 = vpack.c.b16 %v490, %v487
      %v545 = vpack.c.b16 %v491, %v488
      %v546 = vpack.c.b16 %v495, %v492
      %v547 = vpack.c.b16 %v496, %v493
      %v548 = vpack.c.b16 %v497, %v494
      %v549 = vpack.c.b16 %v501, %v498
      %v550 = vpack.c.b16 %v502, %v499
      %v551 = vpack.c.b16 %v503, %v500
      %v648 = vunpack.c.l.b16 %v292
      %v649 = vunpack.c.l.b16 %v293
      %v650 = vunpack.c.l.b16 %v294
      %v651 = vunpack.c.l.b16 %v295
      %v652 = vunpack.c.l.b16 %v296
      %v653 = vunpack.c.l.b16 %v297
      %v654 = vunpack.c.l.b16 %v298
      %v655 = vunpack.c.l.b16 %v299
      %v656 = vunpack.c.l.b16 %v300
      %v657 = vunpack.c.l.b16 %v301
      %v658 = vunpack.c.l.b16 %v302
      %v659 = vunpack.c.l.b16 %v303
      %v660 = vunpack.c.l.b16 %v304
      %v661 = vunpack.c.l.b16 %v305
      %v662 = vunpack.c.l.b16 %v306
      %v663 = vunpack.c.l.b16 %v307
      %v664 = vunpack.c.l.b16 %v308
      %v665 = vunpack.c.l.b16 %v309
      %v666 = vunpack.c.l.b16 %v310
      %v667 = vunpack.c.l.b16 %v311
      %v668 = vunpack.c.l.b16 %v312
      %v669 = vunpack.c.l.b16 %v313
      %v670 = vunpack.c.l.b16 %v314
      %v671 = vunpack.c.l.b16 %v315
      %v672 = vunpack.c.l.b16 %v316
      %v673 = vunpack.c.l.b16 %v317
      %v674 = vunpack.c.l.b16 %v318
      %v675 = vunpack.c.l.b16 %v319
      %v676 = vunpack.c.l.b16 %v320
      %v677 = vunpack.c.l.b16 %v321
      %v678 = vunpack.c.l.b16 %v322
      %v679 = vunpack.c.l.b16 %v323
      %v680 = vunpack.c.l.b16 %v324
      %v681 = vunpack.c.l.b16 %v325
      %v682 = vunpack.c.l.b16 %v326
      %v683 = vunpack.c.l.b16 %v327
      %v684 = vunpack.c.l.b16 %v328
      %v685 = vunpack.c.l.b16 %v329
      %v686 = vunpack.c.l.b16 %v330
      %v687 = vunpack.c.l.b16 %v331
      %v688 = vunpack.c.l.b16 %v332
      %v689 = vunpack.c.l.b16 %v333
      %v690 = vunpack.c.l.b16 %v334
      %v691 = vunpack.c.l.b16 %v335
      %v692 = vunpack.c.l.b16 %v336
      %v693 = vunpack.c.l.b16 %v337
      %v694 = vunpack.c.l.b16 %v338
      %v695 = vunpack.c.l.b16 %v339
      %v696 = vpack.c.b16 %v649, %v648
      %v697 = vpack.c.b16 %v651, %v650
      %v698 = vpack.c.b16 %v653, %v652
      %v699 = vpack.c.b16 %v655, %v654
      %v700 = vpack.c.b16 %v657, %v656
      %v701 = vpack.c.b16 %v659, %v658
      %v702 = vpack.c.b16 %v661, %v660
      %v703 = vpack.c.b16 %v663, %v662
      %v704 = vpack.c.b16 %v665, %v664
      %v705 = vpack.c.b16 %v667, %v666
      %v706 = vpack.c.b16 %v669, %v668
      %v707 = vpack.c.b16 %v671, %v670
      %v708 = vpack.c.b16 %v673, %v672
      %v709 = vpack.c.b16 %v675, %v674
      %v710 = vpack.c.b16 %v677, %v676
      %v711 = vpack.c.b16 %v679, %v678
      %v712 = vpack.c.b16 %v681, %v680
      %v713 = vpack.c.b16 %v683, %v682
      %v714 = vpack.c.b16 %v685, %v684
      %v715 = vpack.c.b16 %v687, %v686
      %v716 = vpack.c.b16 %v689, %v688
      %v717 = vpack.c.b16 %v691, %v690
      %v718 = vpack.c.b16 %v693, %v692
      %v719 = vpack.c.b16 %v695, %v694
      %744 = vmatpush.bf16.msra.mxu0 %v703
      %745 = vmatpush.bf16.msra.mxu0 %v702
      %746 = vmatpush.bf16.msra.mxu0 %v701
      %747 = vmatpush.bf16.msra.mxu0 %v700
      %748 = vmatpush.bf16.msra.mxu0 %v699
      %749 = vmatpush.bf16.msra.mxu0 %v698
      %750 = vmatpush.bf16.msra.mxu0 %v697
      %751 = vmatpush.bf16.msra.mxu0 %v696
      %752 = vmatmul.bf16.gmra.mxu0 %v504
      %v753 = vpop.f32.mrf.mxu0
      %v754 = vadd.f32 %v342, %v753
      %v755 = vpop.f32.mrf.mxu0
      %v756 = vadd.f32 %v342, %v755
      %757 = vmatmul.bf16.gmra.mxu0 %v507
      %v758 = vpop.f32.mrf.mxu0
      %v759 = vadd.f32 %v342, %v758
      %v760 = vpop.f32.mrf.mxu0
      %v761 = vadd.f32 %v342, %v760
      %762 = vmatmul.bf16.gmra.mxu0 %v510
      %v763 = vpop.f32.mrf.mxu0
      %v764 = vadd.f32 %v342, %v763
      %v765 = vpop.f32.mrf.mxu0
      %v766 = vadd.f32 %v342, %v765
      %767 = vmatmul.bf16.gmra.mxu0 %v513
      %v768 = vpop.f32.mrf.mxu0
      %v769 = vadd.f32 %v342, %v768
      %v770 = vpop.f32.mrf.mxu0
      %v771 = vadd.f32 %v342, %v770
      %772 = vmatmul.bf16.gmra.mxu0 %v516
      %v773 = vpop.f32.mrf.mxu0
      %v774 = vadd.f32 %v342, %v773
      %v775 = vpop.f32.mrf.mxu0
      %v776 = vadd.f32 %v342, %v775
      %777 = vmatmul.bf16.gmra.mxu0 %v519
      %v778 = vpop.f32.mrf.mxu0
      %v779 = vadd.f32 %v342, %v778
      %v780 = vpop.f32.mrf.mxu0
      %v781 = vadd.f32 %v342, %v780
      %782 = vmatmul.bf16.gmra.mxu0 %v522
      %v783 = vpop.f32.mrf.mxu0
      %v784 = vadd.f32 %v342, %v783
      %v785 = vpop.f32.mrf.mxu0
      %v786 = vadd.f32 %v342, %v785
      %787 = vmatmul.bf16.gmra.mxu0 %v525
      %v788 = vpop.f32.mrf.mxu0
      %v789 = vadd.f32 %v342, %v788
      %v790 = vpop.f32.mrf.mxu0
      %v791 = vadd.f32 %v342, %v790
      %792 = vmatmul.bf16.gmra.mxu0 %v528
      %v793 = vpop.f32.mrf.mxu0
      %v794 = vadd.f32 %v342, %v793
      %v795 = vpop.f32.mrf.mxu0
      %v796 = vadd.f32 %v342, %v795
      %797 = vmatmul.bf16.gmra.mxu0 %v531
      %v798 = vpop.f32.mrf.mxu0
      %v799 = vadd.f32 %v342, %v798
      %v800 = vpop.f32.mrf.mxu0
      %v801 = vadd.f32 %v342, %v800
      %802 = vmatmul.bf16.gmra.mxu0 %v534
      %v803 = vpop.f32.mrf.mxu0
      %v804 = vadd.f32 %v342, %v803
      %v805 = vpop.f32.mrf.mxu0
      %v806 = vadd.f32 %v342, %v805
      %807 = vmatmul.bf16.gmra.mxu0 %v537
      %v808 = vpop.f32.mrf.mxu0
      %v809 = vadd.f32 %v342, %v808
      %v810 = vpop.f32.mrf.mxu0
      %v811 = vadd.f32 %v342, %v810
      %812 = vmatmul.bf16.gmra.mxu0 %v540
      %v813 = vpop.f32.mrf.mxu0
      %v814 = vadd.f32 %v342, %v813
      %v815 = vpop.f32.mrf.mxu0
      %v816 = vadd.f32 %v342, %v815
      %817 = vmatmul.bf16.gmra.mxu0 %v543
      %v818 = vpop.f32.mrf.mxu0
      %v819 = vadd.f32 %v342, %v818
      %v820 = vpop.f32.mrf.mxu0
      %v821 = vadd.f32 %v342, %v820
      %822 = vmatmul.bf16.gmra.mxu0 %v546
      %v823 = vpop.f32.mrf.mxu0
      %v824 = vadd.f32 %v342, %v823
      %v825 = vpop.f32.mrf.mxu0
      %v826 = vadd.f32 %v342, %v825
      %827 = vmatmul.bf16.gmra.mxu0 %v549
      %v828 = vpop.f32.mrf.mxu0
      %v829 = vadd.f32 %v342, %v828
      %v830 = vpop.f32.mrf.mxu0
      %v831 = vadd.f32 %v342, %v830
      %832 = vdwg.mxu0
      %833 = vmatpush.bf16.msra.mxu0 %v711
      %834 = vmatpush.bf16.msra.mxu0 %v710
      %835 = vmatpush.bf16.msra.mxu0 %v709
      %836 = vmatpush.bf16.msra.mxu0 %v708
      %837 = vmatpush.bf16.msra.mxu0 %v707
      %838 = vmatpush.bf16.msra.mxu0 %v706
      %839 = vmatpush.bf16.msra.mxu0 %v705
      %840 = vmatpush.bf16.msra.mxu0 %v704
      %841 = vmatmul.bf16.gmra.mxu0 %v505
      %v842 = vpop.f32.mrf.mxu0
      %v843 = vadd.f32 %v754, %v842
      %v844 = vpop.f32.mrf.mxu0
      %v845 = vadd.f32 %v756, %v844
      %846 = vmatmul.bf16.gmra.mxu0 %v508
      %v847 = vpop.f32.mrf.mxu0
      %v848 = vadd.f32 %v759, %v847
      %v849 = vpop.f32.mrf.mxu0
      %v850 = vadd.f32 %v761, %v849
      %851 = vmatmul.bf16.gmra.mxu0 %v511
      %v852 = vpop.f32.mrf.mxu0
      %v853 = vadd.f32 %v764, %v852
      %v854 = vpop.f32.mrf.mxu0
      %v855 = vadd.f32 %v766, %v854
      %856 = vmatmul.bf16.gmra.mxu0 %v514
      %v857 = vpop.f32.mrf.mxu0
      %v858 = vadd.f32 %v769, %v857
      %v859 = vpop.f32.mrf.mxu0
      %v860 = vadd.f32 %v771, %v859
      %861 = vmatmul.bf16.gmra.mxu0 %v517
      %v862 = vpop.f32.mrf.mxu0
      %v863 = vadd.f32 %v774, %v862
      %v864 = vpop.f32.mrf.mxu0
      %v865 = vadd.f32 %v776, %v864
      %866 = vmatmul.bf16.gmra.mxu0 %v520
      %v867 = vpop.f32.mrf.mxu0
      %v868 = vadd.f32 %v779, %v867
      %v869 = vpop.f32.mrf.mxu0
      %v870 = vadd.f32 %v781, %v869
      %871 = vmatmul.bf16.gmra.mxu0 %v523
      %v872 = vpop.f32.mrf.mxu0
      %v873 = vadd.f32 %v784, %v872
      %v874 = vpop.f32.mrf.mxu0
      %v875 = vadd.f32 %v786, %v874
      %876 = vmatmul.bf16.gmra.mxu0 %v526
      %v877 = vpop.f32.mrf.mxu0
      %v878 = vadd.f32 %v789, %v877
      %v879 = vpop.f32.mrf.mxu0
      %v880 = vadd.f32 %v791, %v879
      %881 = vmatmul.bf16.gmra.mxu0 %v529
      %v882 = vpop.f32.mrf.mxu0
      %v883 = vadd.f32 %v794, %v882
      %v884 = vpop.f32.mrf.mxu0
      %v885 = vadd.f32 %v796, %v884
      %886 = vmatmul.bf16.gmra.mxu0 %v532
      %v887 = vpop.f32.mrf.mxu0
      %v888 = vadd.f32 %v799, %v887
      %v889 = vpop.f32.mrf.mxu0
      %v890 = vadd.f32 %v801, %v889
      %891 = vmatmul.bf16.gmra.mxu0 %v535
      %v892 = vpop.f32.mrf.mxu0
      %v893 = vadd.f32 %v804, %v892
      %v894 = vpop.f32.mrf.mxu0
      %v895 = vadd.f32 %v806, %v894
      %896 = vmatmul.bf16.gmra.mxu0 %v538
      %v897 = vpop.f32.mrf.mxu0
      %v898 = vadd.f32 %v809, %v897
      %v899 = vpop.f32.mrf.mxu0
      %v900 = vadd.f32 %v811, %v899
      %901 = vmatmul.bf16.gmra.mxu0 %v541
      %v902 = vpop.f32.mrf.mxu0
      %v903 = vadd.f32 %v814, %v902
      %v904 = vpop.f32.mrf.mxu0
      %v905 = vadd.f32 %v816, %v904
      %906 = vmatmul.bf16.gmra.mxu0 %v544
      %v907 = vpop.f32.mrf.mxu0
      %v908 = vadd.f32 %v819, %v907
      %v909 = vpop.f32.mrf.mxu0
      %v910 = vadd.f32 %v821, %v909
      %911 = vmatmul.bf16.gmra.mxu0 %v547
      %v912 = vpop.f32.mrf.mxu0
      %v913 = vadd.f32 %v824, %v912
      %v914 = vpop.f32.mrf.mxu0
      %v915 = vadd.f32 %v826, %v914
      %916 = vmatmul.bf16.gmra.mxu0 %v550
      %v917 = vpop.f32.mrf.mxu0
      %v918 = vadd.f32 %v829, %v917
      %v919 = vpop.f32.mrf.mxu0
      %v920 = vadd.f32 %v831, %v919
      %921 = vdwg.mxu0
      %922 = vmatpush.bf16.msra.mxu0 %v719
      %923 = vmatpush.bf16.msra.mxu0 %v718
      %924 = vmatpush.bf16.msra.mxu0 %v717
      %925 = vmatpush.bf16.msra.mxu0 %v716
      %926 = vmatpush.bf16.msra.mxu0 %v715
      %927 = vmatpush.bf16.msra.mxu0 %v714
      %928 = vmatpush.bf16.msra.mxu0 %v713
      %929 = vmatpush.bf16.msra.mxu0 %v712
      %930 = vmatmul.bf16.gmra.mxu0 %v506
      %v931 = vpop.f32.mrf.mxu0
      %v932 = vadd.f32 %v843, %v931
      %v933 = vpop.f32.mrf.mxu0
      %v934 = vadd.f32 %v845, %v933
      %935 = vmatmul.bf16.gmra.mxu0 %v509
      %v936 = vpop.f32.mrf.mxu0
      %v937 = vadd.f32 %v848, %v936
      %v938 = vpop.f32.mrf.mxu0
      %v939 = vadd.f32 %v850, %v938
      %940 = vmatmul.bf16.gmra.mxu0 %v512
      %v941 = vpop.f32.mrf.mxu0
      %v942 = vadd.f32 %v853, %v941
      %v943 = vpop.f32.mrf.mxu0
      %v944 = vadd.f32 %v855, %v943
      %945 = vmatmul.bf16.gmra.mxu0 %v515
      %v946 = vpop.f32.mrf.mxu0
      %v947 = vadd.f32 %v858, %v946
      %v948 = vpop.f32.mrf.mxu0
      %v949 = vadd.f32 %v860, %v948
      %950 = vmatmul.bf16.gmra.mxu0 %v518
      %v951 = vpop.f32.mrf.mxu0
      %v952 = vadd.f32 %v863, %v951
      %v953 = vpop.f32.mrf.mxu0
      %v954 = vadd.f32 %v865, %v953
      %955 = vmatmul.bf16.gmra.mxu0 %v521
      %v956 = vpop.f32.mrf.mxu0
      %v957 = vadd.f32 %v868, %v956
      %v958 = vpop.f32.mrf.mxu0
      %v959 = vadd.f32 %v870, %v958
      %960 = vmatmul.bf16.gmra.mxu0 %v524
      %v961 = vpop.f32.mrf.mxu0
      %v962 = vadd.f32 %v873, %v961
      %v963 = vpop.f32.mrf.mxu0
      %v964 = vadd.f32 %v875, %v963
      %965 = vmatmul.bf16.gmra.mxu0 %v527
      %v966 = vpop.f32.mrf.mxu0
      %v967 = vadd.f32 %v878, %v966
      %v968 = vpop.f32.mrf.mxu0
      %v969 = vadd.f32 %v880, %v968
      %970 = vmatmul.bf16.gmra.mxu0 %v530
      %v971 = vpop.f32.mrf.mxu0
      %v972 = vadd.f32 %v883, %v971
      %v973 = vpop.f32.mrf.mxu0
      %v974 = vadd.f32 %v885, %v973
      %975 = vmatmul.bf16.gmra.mxu0 %v533
      %v976 = vpop.f32.mrf.mxu0
      %v977 = vadd.f32 %v888, %v976
      %v978 = vpop.f32.mrf.mxu0
      %v979 = vadd.f32 %v890, %v978
      %980 = vmatmul.bf16.gmra.mxu0 %v536
      %v981 = vpop.f32.mrf.mxu0
      %v982 = vadd.f32 %v893, %v981
      %v983 = vpop.f32.mrf.mxu0
      %v984 = vadd.f32 %v895, %v983
      %985 = vmatmul.bf16.gmra.mxu0 %v539
      %v986 = vpop.f32.mrf.mxu0
      %v987 = vadd.f32 %v898, %v986
      %v988 = vpop.f32.mrf.mxu0
      %v989 = vadd.f32 %v900, %v988
      %990 = vmatmul.bf16.gmra.mxu0 %v542
      %v991 = vpop.f32.mrf.mxu0
      %v992 = vadd.f32 %v903, %v991
      %v993 = vpop.f32.mrf.mxu0
      %v994 = vadd.f32 %v905, %v993
      %995 = vmatmul.bf16.gmra.mxu0 %v545
      %v996 = vpop.f32.mrf.mxu0
      %v997 = vadd.f32 %v908, %v996
      %v998 = vpop.f32.mrf.mxu0
      %v999 = vadd.f32 %v910, %v998
      %1000 = vmatmul.bf16.gmra.mxu0 %v548
      %v1001 = vpop.f32.mrf.mxu0
      %v1002 = vadd.f32 %v913, %v1001
      %v1003 = vpop.f32.mrf.mxu0
      %v1004 = vadd.f32 %v915, %v1003
      %1005 = vmatmul.bf16.gmra.mxu0 %v551
      %v1006 = vpop.f32.mrf.mxu0
      %v1007 = vadd.f32 %v918, %v1006
      %v1008 = vpop.f32.mrf.mxu0
      %v1009 = vadd.f32 %v920, %v1008
      %1010 = vdwg.mxu0
      %v1011 = vmax.f32 %v932, 0.0
      %v1012 = vmax.f32 %v934, 0.0
      %v1013 = vmax.f32 %v937, 0.0
      %v1014 = vmax.f32 %v939, 0.0
      %v1015 = vmax.f32 %v942, 0.0
      %v1016 = vmax.f32 %v944, 0.0
      %v1017 = vmax.f32 %v947, 0.0
      %v1018 = vmax.f32 %v949, 0.0
      %v1019 = vmax.f32 %v952, 0.0
      %v1020 = vmax.f32 %v954, 0.0
      %v1021 = vmax.f32 %v957, 0.0
      %v1022 = vmax.f32 %v959, 0.0
      %v1023 = vmax.f32 %v962, 0.0
      %v1024 = vmax.f32 %v964, 0.0
      %v1025 = vmax.f32 %v967, 0.0
      %v1026 = vmax.f32 %v969, 0.0
      %v1027 = vmax.f32 %v972, 0.0
      %v1028 = vmax.f32 %v974, 0.0
      %v1029 = vmax.f32 %v977, 0.0
      %v1030 = vmax.f32 %v979, 0.0
      %v1031 = vmax.f32 %v982, 0.0
      %v1032 = vmax.f32 %v984, 0.0
      %v1033 = vmax.f32 %v987, 0.0
      %v1034 = vmax.f32 %v989, 0.0
      %v1035 = vmax.f32 %v992, 0.0
      %v1036 = vmax.f32 %v994, 0.0
      %v1037 = vmax.f32 %v997, 0.0
      %v1038 = vmax.f32 %v999, 0.0
      %v1039 = vmax.f32 %v1002, 0.0
      %v1040 = vmax.f32 %v1004, 0.0
      %v1041 = vmax.f32 %v1007, 0.0
      %v1042 = vmax.f32 %v1009, 0.0
      %v1043 = vpack.c.bf16 %v1011, %v1011
      %v1044 = vpack.c.bf16 %v1012, %v1012
      %v1045 = vpack.c.bf16 %v1013, %v1013
      %v1046 = vpack.c.bf16 %v1014, %v1014
      %v1047 = vpack.c.bf16 %v1015, %v1015
      %v1048 = vpack.c.bf16 %v1016, %v1016
      %v1049 = vpack.c.bf16 %v1017, %v1017
      %v1050 = vpack.c.bf16 %v1018, %v1018
      %v1051 = vpack.c.bf16 %v1019, %v1019
      %v1052 = vpack.c.bf16 %v1020, %v1020
      %v1053 = vpack.c.bf16 %v1021, %v1021
      %v1054 = vpack.c.bf16 %v1022, %v1022
      %v1055 = vpack.c.bf16 %v1023, %v1023
      %v1056 = vpack.c.bf16 %v1024, %v1024
      %v1057 = vpack.c.bf16 %v1025, %v1025
      %v1058 = vpack.c.bf16 %v1026, %v1026
      %v1059 = vpack.c.bf16 %v1027, %v1027
      %v1060 = vpack.c.bf16 %v1028, %v1028
      %v1061 = vpack.c.bf16 %v1029, %v1029
      %v1062 = vpack.c.bf16 %v1030, %v1030
      %v1063 = vpack.c.bf16 %v1031, %v1031
      %v1064 = vpack.c.bf16 %v1032, %v1032
      %v1065 = vpack.c.bf16 %v1033, %v1033
      %v1066 = vpack.c.bf16 %v1034, %v1034
      %v1067 = vpack.c.bf16 %v1035, %v1035
      %v1068 = vpack.c.bf16 %v1036, %v1036
      %v1069 = vpack.c.bf16 %v1037, %v1037
      %v1070 = vpack.c.bf16 %v1038, %v1038
      %v1071 = vpack.c.bf16 %v1039, %v1039
      %v1072 = vpack.c.bf16 %v1040, %v1040
      %v1073 = vpack.c.bf16 %v1041, %v1041
      %v1074 = vpack.c.bf16 %v1042, %v1042
      %1075 = vst [vmem:[%s226] sm:$0xf] %v1043
      %1076 = vst [vmem:[%s226 + $0x4] sm:$0xf] %v1044
      %1077 = vst [vmem:[%s226 + $0x8] sm:$0xf] %v1045
      %1078 = vst [vmem:[%s226 + $0xc] sm:$0xf] %v1046
      %1079 = vst [vmem:[%s226 + $0x10] sm:$0xf] %v1047
      %1080 = vst [vmem:[%s226 + $0x14] sm:$0xf] %v1048
      %1081 = vst [vmem:[%s226 + $0x18] sm:$0xf] %v1049
      %1082 = vst [vmem:[%s226 + $0x1c] sm:$0xf] %v1050
      %1083 = vst [vmem:[%s226 + $0x20] sm:$0xf] %v1051
      %1084 = vst [vmem:[%s226 + $0x24] sm:$0xf] %v1052
      %1085 = vst [vmem:[%s226 + $0x28] sm:$0xf] %v1053
      %1086 = vst [vmem:[%s226 + $0x2c] sm:$0xf] %v1054
      %1087 = vst [vmem:[%s226 + $0x30] sm:$0xf] %v1055
      %1088 = vst [vmem:[%s226 + $0x34] sm:$0xf] %v1056
      %1089 = vst [vmem:[%s226 + $0x38] sm:$0xf] %v1057
      %1090 = vst [vmem:[%s226 + $0x3c] sm:$0xf] %v1058
      %1091 = vst [vmem:[%s226 + $0x40] sm:$0xf] %v1059
      %1092 = vst [vmem:[%s226 + $0x44] sm:$0xf] %v1060
      %1093 = vst [vmem:[%s226 + $0x48] sm:$0xf] %v1061
      %1094 = vst [vmem:[%s226 + $0x4c] sm:$0xf] %v1062
      %1095 = vst [vmem:[%s226 + $0x50] sm:$0xf] %v1063
      %1096 = vst [vmem:[%s226 + $0x54] sm:$0xf] %v1064
      %1097 = vst [vmem:[%s226 + $0x58] sm:$0xf] %v1065
      %1098 = vst [vmem:[%s226 + $0x5c] sm:$0xf] %v1066
      %1099 = vst [vmem:[%s226 + $0x60] sm:$0xf] %v1067
      %1100 = vst [vmem:[%s226 + $0x64] sm:$0xf] %v1068
      %1101 = vst [vmem:[%s226 + $0x68] sm:$0xf] %v1069
      %1102 = vst [vmem:[%s226 + $0x6c] sm:$0xf] %v1070
      %1103 = vst [vmem:[%s226 + $0x70] sm:$0xf] %v1071
      %1104 = vst [vmem:[%s226 + $0x74] sm:$0xf] %v1072
      %1105 = vst [vmem:[%s226 + $0x78] sm:$0xf] %v1073
      %1106 = vst [vmem:[%s226 + $0x7c] sm:$0xf] %v1074
      %s1107 = smul.u32 32, %s18
      %p1108 = scmp.lt.s32.totalorder %s1107, 223
      %s1109 = scalar_select %p1108, %s1107, 223
      %p1110 = scmp.lt.s32.totalorder %s19, 0
      %s1111 = scalar_select %p1110, %s19, 0
      %s1112 = sadd.s32 %s1111, %s1109
      %s1113 = smul.addr %s1112, 4
      %s1114 = scalar_lea.vmem %s3, %s1113
      // Predicated region
      $region33: #{branch_0_fun.9} parent=31 // pred_check
        %p1115 = pneg %p124
      $region34: #{branch_0_fun.9} parent=31 // pred_check_branch
        %1117 = sbr.rel (%p1115) target = $region36
      $region35: #{branch_0_fun.9} parent=31 // pred_region
        %s1118 = smul.u32 32, %s18
      $region36: #{branch_0_fun.9} parent=31 // pred_fallthru
        _
    $region32: #{branch_0_fun.9} parent=5 // pred_fallthru
      _
    %p1119 = scmp.le.s32.totalorder 2, %s9
    // Predicated region
    $region37: #{branch_0_fun.9} parent=5 // pred_check
      %p1120 = pneg %p1119
    $region38: #{branch_0_fun.9} parent=5 // pred_check_branch
      %1122 = sbr.rel (%p1120) target = $region40
    $region39: #{branch_0_fun.9} parent=5 // pred_region
      %s1123 = ssub.s32 %s9, 2
      // Predicated region
      $region41: #{branch_0_fun.9} parent=39 // pred_check
        %p1124 = pneg %p130
      $region42: #{branch_0_fun.9} parent=39 // pred_check_branch
        %1126 = sbr.rel (%p1124) target = $region44
      $region43: #{branch_0_fun.9} parent=39 // pred_region
        %s1127 = smul.u32 32, %s20
        %p1128 = scmp.lt.s32.totalorder %s1127, 223
        %s1129 = scalar_select %p1128, %s1127, 223
        %p1130 = scmp.lt.s32.totalorder %s21, 0
        %s1131 = scalar_select %p1130, %s21, 0
        %s1132 = sadd.s32 %s1131, %s1129
        %s1133 = smul.addr %s1132, 4
        %s1134 = scalar_lea.vmem %s3, %s1133
      $region44: #{branch_0_fun.9} parent=39 // pred_fallthru
        _
    $region40: #{branch_0_fun.9} parent=5 // pred_fallthru
      _
  $region6: #{branch_0_fun.9} parent=0 // loop_footer
    %s13 = sadd.s32 1, %s9
  $region7: #{branch_0_fun.9} parent=0 // loop_footer_branch
    %8 = sbr.rel target = $region3
  $region8: #{branch_0_fun.9} parent=0 // loop_exit
    _

// kernel: branch_0_fun.10
$region0: #{branch_0_fun.10}
  #allocation0 [shape = 'u32[]', space=smem, size = 0x4, offset = 0x4, fixed_abs, tag = 'smem constant byte address 0x4 - core index']
  #allocation1 [shape = 'u32[72,128]{1,0:T(1,128)}', space=vmem, size = 0x9000, scoped, tag = 'internal scratch']
  #allocation2 [shape = 'f32[16,512]{1,0:T(8,128)}', space=vmem, size = 0x8000, scoped, tag = 'scratch operand']
  %s0 = inlined_call_operand.vmem [shape: bf16[16,13312], index: 0, kind: input, shape index: {}]
  %s1 = inlined_call_operand.hbm [shape: bf16[13312,1024], index: 1, kind: input, shape index: {}]
  %s2 = inlined_call_operand.vmem [shape: f32[1,1024], index: 2, kind: input, shape index: {}]
  %s3 = inlined_call_operand.vmem [shape: bf16[16,1024], index: 3, kind: output, shape index: {}]
  %s4 = sld [smem:[#allocation0]]
  $region99: #{branch_0_fun.10} parent=0
    _
  %s6 = ssub.s32 1, %s4
  %s7 = scalar_select 0, %s6, %s4
  $region1: #{branch_0_fun.10} parent=0
    #allocation3 [shape = 'u8[65536]{0}', space=vmem, size = 0x10000, scoped, tag = 'input window, operand 0']
    #allocation4 [shape = 'u8[2097152]{0}', space=vmem, size = 0x200000, scoped, tag = 'input window, operand 1']
    #allocation5 [shape = 's32[2]{0}', space=sflag, size = 0x8, scoped, tag = 'scoped memory for branch_0_fun.10']
    #allocation6 [shape = 'u8[32768]{0}', space=vmem, size = 0x8000, scoped, tag = 'output window, operand 0']
    %8 = vsyncpa [#allocation5], 0
    %s9 = scalar_lea.sflag [#allocation5], 1
    %10 = vsyncpa %s9, 0
    loop: start=0, step=1, limit=28
    $region2: #{branch_0_fun.10} parent=1 // loop_pre_header
      _
    $region3: #{branch_0_fun.10} parent=1 // loop_header
      %s12 = sphi 0, %s16
      %p13 = scmp.ge.s32.totalorder %s12, 28
      %s19 = sphi 0, %s38
      %s20 = sphi 0, %s34
      %s21 = sphi 0, %s30
      %s22 = sphi 0, %s19
      %s23 = sphi 0, %s20
      %s24 = sphi 0, %s21
      %s25 = sphi 0, %s22
      %s26 = sphi 0, %s23
      %s27 = sphi 0, %s24
      %s43 = sphi 0, %s45
      %s46 = sphi 0, %s43
      %s47 = sphi 0, %s46
      %s63 = sphi 0, %s47
      %s71 = sphi 0, %s73
      %s74 = sphi 0, %s71
      %s75 = sphi 0, %s74
      %s91 = sphi 0, %s75
      %s97 = sphi 0, %s99
      %s100 = sphi 0, %s97
      %s101 = sphi 0, %s100
      %s117 = sphi 0, %s101
      %s125 = sphi 0, %s127
      %s128 = sphi 0, %s125
      %s129 = sphi 0, %s128
      %s145 = sphi 0, %s129
    $region4: #{branch_0_fun.10} parent=1 // loop_header_branch
      %15 = sbr.rel (%p13) target = $region8
    $region5: #{branch_0_fun.10} parent=1 // loop_body
      %s17 = ssub.s32 %s12, 1
      %s18 = ssub.s32 %s12, 2
      %s28 = sadd.s32 1, %s21
      %p29 = scmp.ge.s32.totalorder %s28, 13
      %s30 = scalar_select %p29, 0, %s28
      %s31 = sadd.s32 1, %s20
      %s32 = scalar_select %p29, %s31, %s20
      %p33 = scmp.ge.s32.totalorder %s32, 2
      %s34 = scalar_select %p33, 0, %s32
      %s35 = sadd.s32 1, %s19
      %s36 = scalar_select %p33, %s35, %s19
      %p37 = scmp.ge.s32.totalorder %s36, 1
      %s38 = scalar_select %p37, 0, %s36
      %s39 = ssub.s32 %s19, %s38
      %s40 = ssub.s32 %s21, %s30
      %s41 = sor.u32 %s39, %s40
      %p42 = scmp.eq.s32.totalorder %s41, 0
      %s44 = sadd.s32 %s43, 1
      %s45 = scalar_select %p42, %s43, %s44
      %p48 = pneg %p42
      %p49 = scmp.eq.s32.totalorder %s12, 25
      %p50 = por %p48, %p49
      %p51 = scmp.ne.s32.totalorder %s43, %s46
      %p52 = scmp.eq.s32.totalorder %s12, 0
      %p53 = por %p51, %p52
      %p54 = scmp.ne.s32.totalorder %s43, %s46
      %p55 = scmp.eq.s32.totalorder %s17, 25
      %p56 = por %p54, %p55
      %p57 = scmp.ne.s32.totalorder %s46, %s47
      %p58 = scmp.eq.s32.totalorder %s17, 0
      %p59 = por %p57, %p58
      %p60 = scmp.ne.s32.totalorder %s46, %s47
      %p61 = scmp.eq.s32.totalorder %s18, 25
      %p62 = por %p60, %p61
      %p64 = scmp.ne.s32.totalorder %s47, %s63
      %p65 = scmp.eq.s32.totalorder %s18, 0
      %p66 = por %p64, %p65
      %s67 = ssub.s32 %s21, %s30
      %s68 = ssub.s32 %s20, %s34
      %s69 = sor.u32 %s67, %s68
      %p70 = scmp.eq.s32.totalorder %s69, 0
      %s72 = sadd.s32 %s71, 1
      %s73 = scalar_select %p70, %s71, %s72
      %p76 = pneg %p70
      %p77 = scmp.eq.s32.totalorder %s12, 25
      %p78 = por %p76, %p77
      %p79 = scmp.ne.s32.totalorder %s71, %s74
      %p80 = scmp.eq.s32.totalorder %s12, 0
      %p81 = por %p79, %p80
      %p82 = scmp.ne.s32.totalorder %s71, %s74
      %p83 = scmp.eq.s32.totalorder %s17, 25
      %p84 = por %p82, %p83
      %p85 = scmp.ne.s32.totalorder %s74, %s75
      %p86 = scmp.eq.s32.totalorder %s17, 0
      %p87 = por %p85, %p86
      %p88 = scmp.ne.s32.totalorder %s74, %s75
      %p89 = scmp.eq.s32.totalorder %s18, 25
      %p90 = por %p88, %p89
      %p92 = scmp.ne.s32.totalorder %s75, %s91
      %p93 = scmp.eq.s32.totalorder %s18, 0
      %p94 = por %p92, %p93
      %s95 = ssub.s32 %s20, %s34
      %p96 = scmp.eq.s32.totalorder %s95, 0
      %s98 = sadd.s32 %s97, 1
      %s99 = scalar_select %p96, %s97, %s98
      %p102 = pneg %p96
      %p103 = scmp.eq.s32.totalorder %s12, 25
      %p104 = por %p102, %p103
      %p105 = scmp.ne.s32.totalorder %s97, %s100
      %p106 = scmp.eq.s32.totalorder %s12, 0
      %p107 = por %p105, %p106
      %p108 = scmp.ne.s32.totalorder %s97, %s100
      %p109 = scmp.eq.s32.totalorder %s17, 25
      %p110 = por %p108, %p109
      %p111 = scmp.ne.s32.totalorder %s100, %s101
      %p112 = scmp.eq.s32.totalorder %s17, 0
      %p113 = por %p111, %p112
      %p114 = scmp.ne.s32.totalorder %s100, %s101
      %p115 = scmp.eq.s32.totalorder %s18, 25
      %p116 = por %p114, %p115
      %p118 = scmp.ne.s32.totalorder %s101, %s117
      %p119 = scmp.eq.s32.totalorder %s18, 0
      %p120 = por %p118, %p119
      %s121 = ssub.s32 %s19, %s38
      %s122 = ssub.s32 %s20, %s34
      %s123 = sor.u32 %s121, %s122
      %p124 = scmp.eq.s32.totalorder %s123, 0
      %s126 = sadd.s32 %s125, 1
      %s127 = scalar_select %p124, %s125, %s126
      %p130 = pneg %p124
      %p131 = scmp.eq.s32.totalorder %s12, 25
      %p132 = por %p130, %p131
      %p133 = scmp.ne.s32.totalorder %s125, %s128
      %p134 = scmp.eq.s32.totalorder %s12, 0
      %p135 = por %p133, %p134
      %p136 = scmp.ne.s32.totalorder %s125, %s128
      %p137 = scmp.eq.s32.totalorder %s17, 25
      %p138 = por %p136, %p137
      %p139 = scmp.ne.s32.totalorder %s128, %s129
      %p140 = scmp.eq.s32.totalorder %s17, 0
      %p141 = por %p139, %p140
      %p142 = scmp.ne.s32.totalorder %s128, %s129
      %p143 = scmp.eq.s32.totalorder %s18, 25
      %p144 = por %p142, %p143
      %p146 = scmp.ne.s32.totalorder %s129, %s145
      %p147 = scmp.eq.s32.totalorder %s18, 0
      %p148 = por %p146, %p147
      %p149 = scmp.le.s32.totalorder 1, %s12
      %p150 = scmp.lt.s32.totalorder %s12, 27
      %p151 = pnand %p149, %p150
      %p152 = pneg %p151
      // Predicated region
      $region9: #{branch_0_fun.10} parent=5 // pred_check
        _
      $region10: #{branch_0_fun.10} parent=5 // pred_check_branch
        %154 = sbr.rel (%p151) target = $region12
      $region11: #{branch_0_fun.10} parent=5 // pred_region
        %s155 = ssub.s32 %s12, 1
      $region12: #{branch_0_fun.10} parent=5 // pred_fallthru
        _
      %p156 = scmp.lt.s32.totalorder %s12, 26
      // Predicated region
      $region13: #{branch_0_fun.10} parent=5 // pred_check
        %p157 = pneg %p156
      $region14: #{branch_0_fun.10} parent=5 // pred_check_branch
        %159 = sbr.rel (%p157) target = $region16
      $region15: #{branch_0_fun.10} parent=5 // pred_region
        // Predicated region
        $region17: #{branch_0_fun.10} parent=15 // pred_check
          %p160 = pneg %p53
        $region18: #{branch_0_fun.10} parent=15 // pred_check_branch
          %162 = sbr.rel (%p160) target = $region20
        $region19: #{branch_0_fun.10} parent=15 // pred_region
          %s163 = sand.u32 %s43, 1
          %s164 = sand.u32 %s43, 1
          %s165 = smul.addr %s164, 64
          %s166 = scalar_lea.vmem [#allocation3], %s165
          %s167 = smul.u32 2, %s19
          %s168 = smul.u32 8, %s21
          %s169 = smul.addr %s167, 104
          %s170 = sadd.s32 %s168, %s169
          %s171 = smul.addr %s170, 4
          %s172 = scalar_lea.vmem %s0, %s171
          // Predicated region
          $region21: #{branch_0_fun.10} parent=19 // pred_check
            _
          $region22: #{branch_0_fun.10} parent=19 // pred_check_branch
            %174 = sbr.rel (0) target = $region24
          $region23: #{branch_0_fun.10} parent=19 // pred_region
            // Predicated region
            $region25: #{branch_0_fun.10} parent=23 // pred_check
              _
            $region26: #{branch_0_fun.10} parent=23 // pred_check_branch
              %176 = sbr.rel (0) target = $region28
            $region27: #{branch_0_fun.10} parent=23 // pred_region
              loop: start=0, step=1, limit=1
              $region29: #{branch_0_fun.10} parent=27 // loop_pre_header
                _
              $region30: #{branch_0_fun.10} parent=27 // loop_header
                %s178 = sphi 0, %s182
                %p179 = scmp.ge.s32.totalorder %s178, 1
                %s183 = sphi %s172, %s172
                %s184 = sphi %s166, %s166
              $region31: #{branch_0_fun.10} parent=27 // loop_header_branch
                %181 = sbr.rel (%p179) target = $region35
              $region32: #{branch_0_fun.10} parent=27 // loop_body
                %v185 = vld [vmem:[%s183] sm:$0xff]
                %186 = vst [vmem:[%s184] sm:$0xff] %v185
                %v187 = vld [vmem:[%s183 + $0x8] sm:$0xff]
                %188 = vst [vmem:[%s184 + $0x8] sm:$0xff] %v187
                %v189 = vld [vmem:[%s183 + $0x10] sm:$0xff]
                %190 = vst [vmem:[%s184 + $0x10] sm:$0xff] %v189
                %v191 = vld [vmem:[%s183 + $0x18] sm:$0xff]
                %192 = vst [vmem:[%s184 + $0x18] sm:$0xff] %v191
                %v193 = vld [vmem:[%s183 + $0x1a0] sm:$0xff]
                %194 = vst [vmem:[%s184 + $0x20] sm:$0xff] %v193
                %v195 = vld [vmem:[%s183 + $0x1a8] sm:$0xff]
                %196 = vst [vmem:[%s184 + $0x28] sm:$0xff] %v195
                %v197 = vld [vmem:[%s183 + $0x1b0] sm:$0xff]
                %198 = vst [vmem:[%s184 + $0x30] sm:$0xff] %v197
                %v199 = vld [vmem:[%s183 + $0x1b8] sm:$0xff]
                %200 = vst [vmem:[%s184 + $0x38] sm:$0xff] %v199
              $region33: #{branch_0_fun.10} parent=27 // loop_footer
                %s182 = sadd.s32 1, %s178
              $region34: #{branch_0_fun.10} parent=27 // loop_footer_branch
                %177 = sbr.rel target = $region30
              $region35: #{branch_0_fun.10} parent=27 // loop_exit
                _
            $region28: #{branch_0_fun.10} parent=23 // pred_fallthru
              _
            // Predicated region
            $region36: #{branch_0_fun.10} parent=23 // pred_check
              _
            $region37: #{branch_0_fun.10} parent=23 // pred_check_branch
              %202 = sbr.rel target = $region39
            $region38: #{branch_0_fun.10} parent=23 // pred_region
              _
            $region39: #{branch_0_fun.10} parent=23 // pred_fallthru
              _
          $region24: #{branch_0_fun.10} parent=19 // pred_fallthru
            _
          %203 = vnop
        $region20: #{branch_0_fun.10} parent=15 // pred_fallthru
          _
        // Predicated region
        $region40: #{branch_0_fun.10} parent=15 // pred_check
          %p204 = pneg %p81
        $region41: #{branch_0_fun.10} parent=15 // pred_check_branch
          %206 = sbr.rel (%p204) target = $region43
        $region42: #{branch_0_fun.10} parent=15 // pred_region
          %s207 = sand.u32 %s71, 1
          %s208 = scalar_lea.sflag [#allocation5], %s207
          %s209 = sand.u32 %s71, 1
          %s210 = smul.addr %s209, 2048
          %s211 = scalar_lea.vmem [#allocation4], %s210
          %s212 = smul.u32 128, %s21
          %s213 = smul.u32 4, %s20
          %215 = vsyncadd %s208, 0
          %s216 = smul.addr %s212, 8
          %s217 = sadd.s32 %s213, %s216
          %s218 = smul.addr %s217, 4
          %s219 = scalar_lea.hbm %s1, %s218
          %s220 = sshll.u32 %s219, 4
          %s221 = int_to_ptr.hbm [resolvable:$true] %s220
          %s222 = sshll.u32 %s211, 4
          %s223 = int_to_ptr.vmem [resolvable:$true] %s222
          %228 = dma.hbm_to_vmem [thread:$0]  %s221, 32768, %s223, %s208, 512, 256, 16
        $region43: #{branch_0_fun.10} parent=15 // pred_fallthru
          _
        // Predicated region
        $region44: #{branch_0_fun.10} parent=15 // pred_check
          %p229 = pneg %p107
        $region45: #{branch_0_fun.10} parent=15 // pred_check_branch
          %231 = sbr.rel (%p229) target = $region47
        $region46: #{branch_0_fun.10} parent=15 // pred_region
          %s232 = smul.u32 4, %s20
          %p233 = scmp.lt.s32.totalorder %s232, 7
          %s234 = scalar_select %p233, %s232, 7
          %s235 = scalar_lea.vmem %s2, %s234
          %s236 = smul.u32 4, %s20
        $region47: #{branch_0_fun.10} parent=15 // pred_fallthru
          _
      $region16: #{branch_0_fun.10} parent=5 // pred_fallthru
        _
      %p237 = scmp.le.s32.totalorder 1, %s12
      %p238 = scmp.lt.s32.totalorder %s12, 27
      %p239 = pnand %p237, %p238
      %p240 = pneg %p239
      // Predicated region
      $region48: #{branch_0_fun.10} parent=5 // pred_check
        _
      $region49: #{branch_0_fun.10} parent=5 // pred_check_branch
        %242 = sbr.rel (%p239) target = $region51
      $region50: #{branch_0_fun.10} parent=5 // pred_region
        %s243 = ssub.s32 %s12, 1
        %s244 = sand.u32 %s46, 1
        %s245 = sand.u32 %s46, 1
        %s246 = smul.addr %s245, 64
        %s247 = scalar_lea.vmem [#allocation3], %s246
        // Predicated region
        $region52: #{branch_0_fun.10} parent=50 // pred_check
          %p248 = pneg %p59
        $region53: #{branch_0_fun.10} parent=50 // pred_check_branch
          %250 = sbr.rel (%p248) target = $region55
        $region54: #{branch_0_fun.10} parent=50 // pred_region
          _
        $region55: #{branch_0_fun.10} parent=50 // pred_fallthru
          _
        %s251 = sand.u32 %s74, 1
        %s252 = scalar_lea.sflag [#allocation5], %s251
        %s253 = sand.u32 %s74, 1
        %s254 = smul.addr %s253, 2048
        %s255 = scalar_lea.vmem [#allocation4], %s254
        // Predicated region
        $region56: #{branch_0_fun.10} parent=50 // pred_check
          %p256 = pneg %p87
        $region57: #{branch_0_fun.10} parent=50 // pred_check_branch
          %258 = sbr.rel (%p256) target = $region59
        $region58: #{branch_0_fun.10} parent=50 // pred_region
          %260 = dma.done %s252, 32768
        $region59: #{branch_0_fun.10} parent=50 // pred_fallthru
          _
        %s261 = sand.u32 %s46, 1
        %s262 = sand.u32 %s46, 1
        %s263 = smul.addr %s262, 64
        %s264 = scalar_lea.vmem [#allocation3], %s263
        %p265 = pneg %p59
        %p266 = pneg %p56
        %s267 = sand.u32 %s74, 1
        %s268 = scalar_lea.sflag [#allocation5], %s267
        %s269 = sand.u32 %s74, 1
        %s270 = smul.addr %s269, 2048
        %s271 = scalar_lea.vmem [#allocation4], %s270
        %p272 = pneg %p87
        %p273 = pneg %p84
        %s274 = smul.u32 4, %s23
        %p275 = scmp.lt.s32.totalorder %s274, 7
        %s276 = scalar_select %p275, %s274, 7
        %s277 = scalar_lea.vmem %s2, %s276
        %p278 = pneg %p113
        %p279 = pneg %p110
        %p280 = pneg %p141
        %p281 = pneg %p138
        %s282 = sand.u32 %s128, 1
        %s283 = sand.u32 %s128, 1
        %s284 = smul.addr %s283, 32
        %s285 = scalar_lea.vmem [#allocation6], %s284
        %s286 = smul.u32 2, %s22
        %s287 = smul.u32 8, %s24
        %s288 = smul.u32 128, %s24
        %s289 = smul.u32 4, %s23
        %s290 = smul.u32 4, %s23
        %p291 = scmp.lt.s32.totalorder %s290, 7
        %s292 = scalar_select %p291, %s290, 7
        %s293 = scalar_lea.vmem %s2, %s292
        %s294 = smul.u32 4, %s23
        %s295 = smul.u32 2, %s22
        %s296 = smul.u32 4, %s23
        %p297 = scmp.eq.s32.totalorder %s24, 0
        // Predicated region
        $region60: #{branch_0_fun.10} parent=50 // pred_check
          %p298 = pneg %p297
        $region61: #{branch_0_fun.10} parent=50 // pred_check_branch
          %300 = sbr.rel (%p298) target = $region63
        $region62: #{branch_0_fun.10} parent=50 // pred_region
          %301 = vst [vmem:[#allocation2] sm:$0xff] 0.0
          %302 = vst [vmem:[#allocation2 + $0x8] sm:$0xff] 0.0
          %303 = vst [vmem:[#allocation2 + $0x10] sm:$0xff] 0.0
          %304 = vst [vmem:[#allocation2 + $0x18] sm:$0xff] 0.0
          %305 = vst [vmem:[#allocation2 + $0x20] sm:$0xff] 0.0
          %306 = vst [vmem:[#allocation2 + $0x28] sm:$0xff] 0.0
          %307 = vst [vmem:[#allocation2 + $0x30] sm:$0xff] 0.0
          %308 = vst [vmem:[#allocation2 + $0x38] sm:$0xff] 0.0
        $region63: #{branch_0_fun.10} parent=50 // pred_fallthru
          _
        %v309 = vld [vmem:[#allocation2] sm:$0xff]
        %v310 = vld [vmem:[#allocation2 + $0x8] sm:$0xff]
        %v311 = vld [vmem:[#allocation2 + $0x10] sm:$0xff]
        %v312 = vld [vmem:[#allocation2 + $0x18] sm:$0xff]
        %v313 = vld [vmem:[#allocation2 + $0x20] sm:$0xff]
        %v314 = vld [vmem:[#allocation2 + $0x28] sm:$0xff]
        %v315 = vld [vmem:[#allocation2 + $0x30] sm:$0xff]
        %v316 = vld [vmem:[#allocation2 + $0x38] sm:$0xff]
        %v317 = vld [vmem:[%s247] sm:$0xff]
        %v318 = vld [vmem:[%s247 + $0x8] sm:$0xff]
        %v319 = vld [vmem:[%s247 + $0x10] sm:$0xff]
        %v320 = vld [vmem:[%s247 + $0x18] sm:$0xff]
        %v321 = vld [vmem:[%s247 + $0x20] sm:$0xff]
        %v322 = vld [vmem:[%s247 + $0x28] sm:$0xff]
        %v323 = vld [vmem:[%s247 + $0x30] sm:$0xff]
        %v324 = vld [vmem:[%s247 + $0x38] sm:$0xff]
        %v325 = vld [vmem:[%s255] sm:$0xff]
        %v326 = vld [vmem:[%s255 + $0x8] sm:$0xff]
        %v327 = vld [vmem:[%s255 + $0x10] sm:$0xff]
        %v328 = vld [vmem:[%s255 + $0x18] sm:$0xff]
        %v329 = vld [vmem:[%s255 + $0x20] sm:$0xff]
        %v330 = vld [vmem:[%s255 + $0x28] sm:$0xff]
        %v331 = vld [vmem:[%s255 + $0x30] sm:$0xff]
        %v332 = vld [vmem:[%s255 + $0x38] sm:$0xff]
        %v333 = vld [vmem:[%s255 + $0x40] sm:$0xff]
        %v334 = vld [vmem:[%s255 + $0x48] sm:$0xff]
        %v335 = vld [vmem:[%s255 + $0x50] sm:$0xff]
        %v336 = vld [vmem:[%s255 + $0x58] sm:$0xff]
        %v337 = vld [vmem:[%s255 + $0x60] sm:$0xff]
        %v338 = vld [vmem:[%s255 + $0x68] sm:$0xff]
        %v339 = vld [vmem:[%s255 + $0x70] sm:$0xff]
        %v340 = vld [vmem:[%s255 + $0x78] sm:$0xff]
        %v341 = vld [vmem:[%s255 + $0x80] sm:$0xff]
        %v342 = vld [vmem:[%s255 + $0x88] sm:$0xff]
        %v343 = vld [vmem:[%s255 + $0x90] sm:$0xff]
        %v344 = vld [vmem:[%s255 + $0x98] sm:$0xff]
        %v345 = vld [vmem:[%s255 + $0xa0] sm:$0xff]
        %v346 = vld [vmem:[%s255 + $0xa8] sm:$0xff]
        %v347 = vld [vmem:[%s255 + $0xb0] sm:$0xff]
        %v348 = vld [vmem:[%s255 + $0xb8] sm:$0xff]
        %v349 = vld [vmem:[%s255 + $0xc0] sm:$0xff]
        %v350 = vld [vmem:[%s255 + $0xc8] sm:$0xff]
        %v351 = vld [vmem:[%s255 + $0xd0] sm:$0xff]
        %v352 = vld [vmem:[%s255 + $0xd8] sm:$0xff]
        %v353 = vld [vmem:[%s255 + $0xe0] sm:$0xff]
        %v354 = vld [vmem:[%s255 + $0xe8] sm:$0xff]
        %v355 = vld [vmem:[%s255 + $0xf0] sm:$0xff]
        %v356 = vld [vmem:[%s255 + $0xf8] sm:$0xff]
        %v357 = vld [vmem:[%s255 + $0x100] sm:$0xff]
        %v358 = vld [vmem:[%s255 + $0x108] sm:$0xff]
        %v359 = vld [vmem:[%s255 + $0x110] sm:$0xff]
        %v360 = vld [vmem:[%s255 + $0x118] sm:$0xff]
        %v361 = vld [vmem:[%s255 + $0x120] sm:$0xff]
        %v362 = vld [vmem:[%s255 + $0x128] sm:$0xff]
        %v363 = vld [vmem:[%s255 + $0x130] sm:$0xff]
        %v364 = vld [vmem:[%s255 + $0x138] sm:$0xff]
        %v365 = vld [vmem:[%s255 + $0x140] sm:$0xff]
        %v366 = vld [vmem:[%s255 + $0x148] sm:$0xff]
        %v367 = vld [vmem:[%s255 + $0x150] sm:$0xff]
        %v368 = vld [vmem:[%s255 + $0x158] sm:$0xff]
        %v369 = vld [vmem:[%s255 + $0x160] sm:$0xff]
        %v370 = vld [vmem:[%s255 + $0x168] sm:$0xff]
        %v371 = vld [vmem:[%s255 + $0x170] sm:$0xff]
        %v372 = vld [vmem:[%s255 + $0x178] sm:$0xff]
        %v373 = vld [vmem:[%s255 + $0x180] sm:$0xff]
        %v374 = vld [vmem:[%s255 + $0x188] sm:$0xff]
        %v375 = vld [vmem:[%s255 + $0x190] sm:$0xff]
        %v376 = vld [vmem:[%s255 + $0x198] sm:$0xff]
        %v377 = vld [vmem:[%s255 + $0x1a0] sm:$0xff]
        %v378 = vld [vmem:[%s255 + $0x1a8] sm:$0xff]
        %v379 = vld [vmem:[%s255 + $0x1b0] sm:$0xff]
        %v380 = vld [vmem:[%s255 + $0x1b8] sm:$0xff]
        %v381 = vld [vmem:[%s255 + $0x1c0] sm:$0xff]
        %v382 = vld [vmem:[%s255 + $0x1c8] sm:$0xff]
        %v383 = vld [vmem:[%s255 + $0x1d0] sm:$0xff]
        %v384 = vld [vmem:[%s255 + $0x1d8] sm:$0xff]
        %v385 = vld [vmem:[%s255 + $0x1e0] sm:$0xff]
        %v386 = vld [vmem:[%s255 + $0x1e8] sm:$0xff]
        %v387 = vld [vmem:[%s255 + $0x1f0] sm:$0xff]
        %v388 = vld [vmem:[%s255 + $0x1f8] sm:$0xff]
        %v389 = vld [vmem:[%s255 + $0x200] sm:$0xff]
        %v390 = vld [vmem:[%s255 + $0x208] sm:$0xff]
        %v391 = vld [vmem:[%s255 + $0x210] sm:$0xff]
        %v392 = vld [vmem:[%s255 + $0x218] sm:$0xff]
        %v393 = vld [vmem:[%s255 + $0x220] sm:$0xff]
        %v394 = vld [vmem:[%s255 + $0x228] sm:$0xff]
        %v395 = vld [vmem:[%s255 + $0x230] sm:$0xff]
        %v396 = vld [vmem:[%s255 + $0x238] sm:$0xff]
        %v397 = vld [vmem:[%s255 + $0x240] sm:$0xff]
        %v398 = vld [vmem:[%s255 + $0x248] sm:$0xff]
        %v399 = vld [vmem:[%s255 + $0x250] sm:$0xff]
        %v400 = vld [vmem:[%s255 + $0x258] sm:$0xff]
        %v401 = vld [vmem:[%s255 + $0x260] sm:$0xff]
        %v402 = vld [vmem:[%s255 + $0x268] sm:$0xff]
        %v403 = vld [vmem:[%s255 + $0x270] sm:$0xff]
        %v404 = vld [vmem:[%s255 + $0x278] sm:$0xff]
        %v405 = vld [vmem:[%s255 + $0x280] sm:$0xff]
        %v406 = vld [vmem:[%s255 + $0x288] sm:$0xff]
        %v407 = vld [vmem:[%s255 + $0x290] sm:$0xff]
        %v408 = vld [vmem:[%s255 + $0x298] sm:$0xff]
        %v409 = vld [vmem:[%s255 + $0x2a0] sm:$0xff]
        %v410 = vld [vmem:[%s255 + $0x2a8] sm:$0xff]
        %v411 = vld [vmem:[%s255 + $0x2b0] sm:$0xff]
        %v412 = vld [vmem:[%s255 + $0x2b8] sm:$0xff]
        %v413 = vld [vmem:[%s255 + $0x2c0] sm:$0xff]
        %v414 = vld [vmem:[%s255 + $0x2c8] sm:$0xff]
        %v415 = vld [vmem:[%s255 + $0x2d0] sm:$0xff]
        %v416 = vld [vmem:[%s255 + $0x2d8] sm:$0xff]
        %v417 = vld [vmem:[%s255 + $0x2e0] sm:$0xff]
        %v418 = vld [vmem:[%s255 + $0x2e8] sm:$0xff]
        %v419 = vld [vmem:[%s255 + $0x2f0] sm:$0xff]
        %v420 = vld [vmem:[%s255 + $0x2f8] sm:$0xff]
        %v421 = vld [vmem:[%s255 + $0x300] sm:$0xff]
        %v422 = vld [vmem:[%s255 + $0x308] sm:$0xff]
        %v423 = vld [vmem:[%s255 + $0x310] sm:$0xff]
        %v424 = vld [vmem:[%s255 + $0x318] sm:$0xff]
        %v425 = vld [vmem:[%s255 + $0x320] sm:$0xff]
        %v426 = vld [vmem:[%s255 + $0x328] sm:$0xff]
        %v427 = vld [vmem:[%s255 + $0x330] sm:$0xff]
        %v428 = vld [vmem:[%s255 + $0x338] sm:$0xff]
        %v429 = vld [vmem:[%s255 + $0x340] sm:$0xff]
        %v430 = vld [vmem:[%s255 + $0x348] sm:$0xff]
        %v431 = vld [vmem:[%s255 + $0x350] sm:$0xff]
        %v432 = vld [vmem:[%s255 + $0x358] sm:$0xff]
        %v433 = vld [vmem:[%s255 + $0x360] sm:$0xff]
        %v434 = vld [vmem:[%s255 + $0x368] sm:$0xff]
        %v435 = vld [vmem:[%s255 + $0x370] sm:$0xff]
        %v436 = vld [vmem:[%s255 + $0x378] sm:$0xff]
        %v437 = vld [vmem:[%s255 + $0x380] sm:$0xff]
        %v438 = vld [vmem:[%s255 + $0x388] sm:$0xff]
        %v439 = vld [vmem:[%s255 + $0x390] sm:$0xff]
        %v440 = vld [vmem:[%s255 + $0x398] sm:$0xff]
        %v441 = vld [vmem:[%s255 + $0x3a0] sm:$0xff]
        %v442 = vld [vmem:[%s255 + $0x3a8] sm:$0xff]
        %v443 = vld [vmem:[%s255 + $0x3b0] sm:$0xff]
        %v444 = vld [vmem:[%s255 + $0x3b8] sm:$0xff]
        %v445 = vld [vmem:[%s255 + $0x3c0] sm:$0xff]
        %v446 = vld [vmem:[%s255 + $0x3c8] sm:$0xff]
        %v447 = vld [vmem:[%s255 + $0x3d0] sm:$0xff]
        %v448 = vld [vmem:[%s255 + $0x3d8] sm:$0xff]
        %v449 = vld [vmem:[%s255 + $0x3e0] sm:$0xff]
        %v450 = vld [vmem:[%s255 + $0x3e8] sm:$0xff]
        %v451 = vld [vmem:[%s255 + $0x3f0] sm:$0xff]
        %v452 = vld [vmem:[%s255 + $0x3f8] sm:$0xff]
        %v453 = vld [vmem:[%s255 + $0x400] sm:$0xff]
        %v454 = vld [vmem:[%s255 + $0x408] sm:$0xff]
        %v455 = vld [vmem:[%s255 + $0x410] sm:$0xff]
        %v456 = vld [vmem:[%s255 + $0x418] sm:$0xff]
        %v457 = vld [vmem:[%s255 + $0x420] sm:$0xff]
        %v458 = vld [vmem:[%s255 + $0x428] sm:$0xff]
        %v459 = vld [vmem:[%s255 + $0x430] sm:$0xff]
        %v460 = vld [vmem:[%s255 + $0x438] sm:$0xff]
        %v461 = vld [vmem:[%s255 + $0x440] sm:$0xff]
        %v462 = vld [vmem:[%s255 + $0x448] sm:$0xff]
        %v463 = vld [vmem:[%s255 + $0x450] sm:$0xff]
        %v464 = vld [vmem:[%s255 + $0x458] sm:$0xff]
        %v465 = vld [vmem:[%s255 + $0x460] sm:$0xff]
        %v466 = vld [vmem:[%s255 + $0x468] sm:$0xff]
        %v467 = vld [vmem:[%s255 + $0x470] sm:$0xff]
        %v468 = vld [vmem:[%s255 + $0x478] sm:$0xff]
        %v469 = vld [vmem:[%s255 + $0x480] sm:$0xff]
        %v470 = vld [vmem:[%s255 + $0x488] sm:$0xff]
        %v471 = vld [vmem:[%s255 + $0x490] sm:$0xff]
        %v472 = vld [vmem:[%s255 + $0x498] sm:$0xff]
        %v473 = vld [vmem:[%s255 + $0x4a0] sm:$0xff]
        %v474 = vld [vmem:[%s255 + $0x4a8] sm:$0xff]
        %v475 = vld [vmem:[%s255 + $0x4b0] sm:$0xff]
        %v476 = vld [vmem:[%s255 + $0x4b8] sm:$0xff]
        %v477 = vld [vmem:[%s255 + $0x4c0] sm:$0xff]
        %v478 = vld [vmem:[%s255 + $0x4c8] sm:$0xff]
        %v479 = vld [vmem:[%s255 + $0x4d0] sm:$0xff]
        %v480 = vld [vmem:[%s255 + $0x4d8] sm:$0xff]
        %v481 = vld [vmem:[%s255 + $0x4e0] sm:$0xff]
        %v482 = vld [vmem:[%s255 + $0x4e8] sm:$0xff]
        %v483 = vld [vmem:[%s255 + $0x4f0] sm:$0xff]
        %v484 = vld [vmem:[%s255 + $0x4f8] sm:$0xff]
        %v485 = vld [vmem:[%s255 + $0x500] sm:$0xff]
        %v486 = vld [vmem:[%s255 + $0x508] sm:$0xff]
        %v487 = vld [vmem:[%s255 + $0x510] sm:$0xff]
        %v488 = vld [vmem:[%s255 + $0x518] sm:$0xff]
        %v489 = vld [vmem:[%s255 + $0x520] sm:$0xff]
        %v490 = vld [vmem:[%s255 + $0x528] sm:$0xff]
        %v491 = vld [vmem:[%s255 + $0x530] sm:$0xff]
        %v492 = vld [vmem:[%s255 + $0x538] sm:$0xff]
        %v493 = vld [vmem:[%s255 + $0x540] sm:$0xff]
        %v494 = vld [vmem:[%s255 + $0x548] sm:$0xff]
        %v495 = vld [vmem:[%s255 + $0x550] sm:$0xff]
        %v496 = vld [vmem:[%s255 + $0x558] sm:$0xff]
        %v497 = vld [vmem:[%s255 + $0x560] sm:$0xff]
        %v498 = vld [vmem:[%s255 + $0x568] sm:$0xff]
        %v499 = vld [vmem:[%s255 + $0x570] sm:$0xff]
        %v500 = vld [vmem:[%s255 + $0x578] sm:$0xff]
        %v501 = vld [vmem:[%s255 + $0x580] sm:$0xff]
        %v502 = vld [vmem:[%s255 + $0x588] sm:$0xff]
        %v503 = vld [vmem:[%s255 + $0x590] sm:$0xff]
        %v504 = vld [vmem:[%s255 + $0x598] sm:$0xff]
        %v505 = vld [vmem:[%s255 + $0x5a0] sm:$0xff]
        %v506 = vld [vmem:[%s255 + $0x5a8] sm:$0xff]
        %v507 = vld [vmem:[%s255 + $0x5b0] sm:$0xff]
        %v508 = vld [vmem:[%s255 + $0x5b8] sm:$0xff]
        %v509 = vld [vmem:[%s255 + $0x5c0] sm:$0xff]
        %v510 = vld [vmem:[%s255 + $0x5c8] sm:$0xff]
        %v511 = vld [vmem:[%s255 + $0x5d0] sm:$0xff]
        %v512 = vld [vmem:[%s255 + $0x5d8] sm:$0xff]
        %v513 = vld [vmem:[%s255 + $0x5e0] sm:$0xff]
        %v514 = vld [vmem:[%s255 + $0x5e8] sm:$0xff]
        %v515 = vld [vmem:[%s255 + $0x5f0] sm:$0xff]
        %v516 = vld [vmem:[%s255 + $0x5f8] sm:$0xff]
        %v517 = vld [vmem:[%s255 + $0x600] sm:$0xff]
        %v518 = vld [vmem:[%s255 + $0x608] sm:$0xff]
        %v519 = vld [vmem:[%s255 + $0x610] sm:$0xff]
        %v520 = vld [vmem:[%s255 + $0x618] sm:$0xff]
        %v521 = vld [vmem:[%s255 + $0x620] sm:$0xff]
        %v522 = vld [vmem:[%s255 + $0x628] sm:$0xff]
        %v523 = vld [vmem:[%s255 + $0x630] sm:$0xff]
        %v524 = vld [vmem:[%s255 + $0x638] sm:$0xff]
        %v525 = vld [vmem:[%s255 + $0x640] sm:$0xff]
        %v526 = vld [vmem:[%s255 + $0x648] sm:$0xff]
        %v527 = vld [vmem:[%s255 + $0x650] sm:$0xff]
        %v528 = vld [vmem:[%s255 + $0x658] sm:$0xff]
        %v529 = vld [vmem:[%s255 + $0x660] sm:$0xff]
        %v530 = vld [vmem:[%s255 + $0x668] sm:$0xff]
        %v531 = vld [vmem:[%s255 + $0x670] sm:$0xff]
        %v532 = vld [vmem:[%s255 + $0x678] sm:$0xff]
        %v533 = vld [vmem:[%s255 + $0x680] sm:$0xff]
        %v534 = vld [vmem:[%s255 + $0x688] sm:$0xff]
        %v535 = vld [vmem:[%s255 + $0x690] sm:$0xff]
        %v536 = vld [vmem:[%s255 + $0x698] sm:$0xff]
        %v537 = vld [vmem:[%s255 + $0x6a0] sm:$0xff]
        %v538 = vld [vmem:[%s255 + $0x6a8] sm:$0xff]
        %v539 = vld [vmem:[%s255 + $0x6b0] sm:$0xff]
        %v540 = vld [vmem:[%s255 + $0x6b8] sm:$0xff]
        %v541 = vld [vmem:[%s255 + $0x6c0] sm:$0xff]
        %v542 = vld [vmem:[%s255 + $0x6c8] sm:$0xff]
        %v543 = vld [vmem:[%s255 + $0x6d0] sm:$0xff]
        %v544 = vld [vmem:[%s255 + $0x6d8] sm:$0xff]
        %v545 = vld [vmem:[%s255 + $0x6e0] sm:$0xff]
        %v546 = vld [vmem:[%s255 + $0x6e8] sm:$0xff]
        %v547 = vld [vmem:[%s255 + $0x6f0] sm:$0xff]
        %v548 = vld [vmem:[%s255 + $0x6f8] sm:$0xff]
        %v549 = vld [vmem:[%s255 + $0x700] sm:$0xff]
        %v550 = vld [vmem:[%s255 + $0x708] sm:$0xff]
        %v551 = vld [vmem:[%s255 + $0x710] sm:$0xff]
        %v552 = vld [vmem:[%s255 + $0x718] sm:$0xff]
        %v553 = vld [vmem:[%s255 + $0x720] sm:$0xff]
        %v554 = vld [vmem:[%s255 + $0x728] sm:$0xff]
        %v555 = vld [vmem:[%s255 + $0x730] sm:$0xff]
        %v556 = vld [vmem:[%s255 + $0x738] sm:$0xff]
        %v557 = vld [vmem:[%s255 + $0x740] sm:$0xff]
        %v558 = vld [vmem:[%s255 + $0x748] sm:$0xff]
        %v559 = vld [vmem:[%s255 + $0x750] sm:$0xff]
        %v560 = vld [vmem:[%s255 + $0x758] sm:$0xff]
        %v561 = vld [vmem:[%s255 + $0x760] sm:$0xff]
        %v562 = vld [vmem:[%s255 + $0x768] sm:$0xff]
        %v563 = vld [vmem:[%s255 + $0x770] sm:$0xff]
        %v564 = vld [vmem:[%s255 + $0x778] sm:$0xff]
        %v565 = vld [vmem:[%s255 + $0x780] sm:$0xff]
        %v566 = vld [vmem:[%s255 + $0x788] sm:$0xff]
        %v567 = vld [vmem:[%s255 + $0x790] sm:$0xff]
        %v568 = vld [vmem:[%s255 + $0x798] sm:$0xff]
        %v569 = vld [vmem:[%s255 + $0x7a0] sm:$0xff]
        %v570 = vld [vmem:[%s255 + $0x7a8] sm:$0xff]
        %v571 = vld [vmem:[%s255 + $0x7b0] sm:$0xff]
        %v572 = vld [vmem:[%s255 + $0x7b8] sm:$0xff]
        %v573 = vld [vmem:[%s255 + $0x7c0] sm:$0xff]
        %v574 = vld [vmem:[%s255 + $0x7c8] sm:$0xff]
        %v575 = vld [vmem:[%s255 + $0x7d0] sm:$0xff]
        %v576 = vld [vmem:[%s255 + $0x7d8] sm:$0xff]
        %v577 = vld [vmem:[%s255 + $0x7e0] sm:$0xff]
        %v578 = vld [vmem:[%s255 + $0x7e8] sm:$0xff]
        %v579 = vld [vmem:[%s255 + $0x7f0] sm:$0xff]
        %v580 = vld [vmem:[%s255 + $0x7f8] sm:$0xff]
        %v589 = vunpack.c.l.b16 %v317
        %v590 = vunpack.c.h.b16 %v317
        %v591 = vunpack.c.l.b16 %v318
        %v592 = vunpack.c.h.b16 %v318
        %v593 = vunpack.c.l.b16 %v319
        %v594 = vunpack.c.h.b16 %v319
        %v595 = vunpack.c.l.b16 %v320
        %v596 = vunpack.c.h.b16 %v320
        %v597 = vunpack.c.l.b16 %v321
        %v598 = vunpack.c.h.b16 %v321
        %v599 = vunpack.c.l.b16 %v322
        %v600 = vunpack.c.h.b16 %v322
        %v601 = vunpack.c.l.b16 %v323
        %v602 = vunpack.c.h.b16 %v323
        %v603 = vunpack.c.l.b16 %v324
        %v604 = vunpack.c.h.b16 %v324
        %v605 = vpack.c.b16 %v597, %v589
        %v606 = vpack.c.b16 %v598, %v590
        %v607 = vpack.c.b16 %v599, %v591
        %v608 = vpack.c.b16 %v600, %v592
        %v609 = vpack.c.b16 %v601, %v593
        %v610 = vpack.c.b16 %v602, %v594
        %v611 = vpack.c.b16 %v603, %v595
        %v612 = vpack.c.b16 %v604, %v596
        %v877 = vunpack.c.l.b16 %v325
        %v878 = vunpack.c.h.b16 %v325
        %v879 = vunpack.c.l.b16 %v326
        %v880 = vunpack.c.h.b16 %v326
        %v881 = vunpack.c.l.b16 %v327
        %v882 = vunpack.c.h.b16 %v327
        %v883 = vunpack.c.l.b16 %v328
        %v884 = vunpack.c.h.b16 %v328
        %v885 = vunpack.c.l.b16 %v329
        %v886 = vunpack.c.h.b16 %v329
        %v887 = vunpack.c.l.b16 %v330
        %v888 = vunpack.c.h.b16 %v330
        %v889 = vunpack.c.l.b16 %v331
        %v890 = vunpack.c.h.b16 %v331
        %v891 = vunpack.c.l.b16 %v332
        %v892 = vunpack.c.h.b16 %v332
        %v893 = vunpack.c.l.b16 %v333
        %v894 = vunpack.c.h.b16 %v333
        %v895 = vunpack.c.l.b16 %v334
        %v896 = vunpack.c.h.b16 %v334
        %v897 = vunpack.c.l.b16 %v335
        %v898 = vunpack.c.h.b16 %v335
        %v899 = vunpack.c.l.b16 %v336
        %v900 = vunpack.c.h.b16 %v336
        %v901 = vunpack.c.l.b16 %v337
        %v902 = vunpack.c.h.b16 %v337
        %v903 = vunpack.c.l.b16 %v338
        %v904 = vunpack.c.h.b16 %v338
        %v905 = vunpack.c.l.b16 %v339
        %v906 = vunpack.c.h.b16 %v339
        %v907 = vunpack.c.l.b16 %v340
        %v908 = vunpack.c.h.b16 %v340
        %v909 = vunpack.c.l.b16 %v341
        %v910 = vunpack.c.h.b16 %v341
        %v911 = vunpack.c.l.b16 %v342
        %v912 = vunpack.c.h.b16 %v342
        %v913 = vunpack.c.l.b16 %v343
        %v914 = vunpack.c.h.b16 %v343
        %v915 = vunpack.c.l.b16 %v344
        %v916 = vunpack.c.h.b16 %v344
        %v917 = vunpack.c.l.b16 %v345
        %v918 = vunpack.c.h.b16 %v345
        %v919 = vunpack.c.l.b16 %v346
        %v920 = vunpack.c.h.b16 %v346
        %v921 = vunpack.c.l.b16 %v347
        %v922 = vunpack.c.h.b16 %v347
        %v923 = vunpack.c.l.b16 %v348
        %v924 = vunpack.c.h.b16 %v348
        %v925 = vunpack.c.l.b16 %v349
        %v926 = vunpack.c.h.b16 %v349
        %v927 = vunpack.c.l.b16 %v350
        %v928 = vunpack.c.h.b16 %v350
        %v929 = vunpack.c.l.b16 %v351
        %v930 = vunpack.c.h.b16 %v351
        %v931 = vunpack.c.l.b16 %v352
        %v932 = vunpack.c.h.b16 %v352
        %v933 = vunpack.c.l.b16 %v353
        %v934 = vunpack.c.h.b16 %v353
        %v935 = vunpack.c.l.b16 %v354
        %v936 = vunpack.c.h.b16 %v354
        %v937 = vunpack.c.l.b16 %v355
        %v938 = vunpack.c.h.b16 %v355
        %v939 = vunpack.c.l.b16 %v356
        %v940 = vunpack.c.h.b16 %v356
        %v941 = vunpack.c.l.b16 %v357
        %v942 = vunpack.c.h.b16 %v357
        %v943 = vunpack.c.l.b16 %v358
        %v944 = vunpack.c.h.b16 %v358
        %v945 = vunpack.c.l.b16 %v359
        %v946 = vunpack.c.h.b16 %v359
        %v947 = vunpack.c.l.b16 %v360
        %v948 = vunpack.c.h.b16 %v360
        %v949 = vunpack.c.l.b16 %v361
        %v950 = vunpack.c.h.b16 %v361
        %v951 = vunpack.c.l.b16 %v362
        %v952 = vunpack.c.h.b16 %v362
        %v953 = vunpack.c.l.b16 %v363
        %v954 = vunpack.c.h.b16 %v363
        %v955 = vunpack.c.l.b16 %v364
        %v956 = vunpack.c.h.b16 %v364
        %v957 = vunpack.c.l.b16 %v365
        %v958 = vunpack.c.h.b16 %v365
        %v959 = vunpack.c.l.b16 %v366
        %v960 = vunpack.c.h.b16 %v366
        %v961 = vunpack.c.l.b16 %v367
        %v962 = vunpack.c.h.b16 %v367
        %v963 = vunpack.c.l.b16 %v368
        %v964 = vunpack.c.h.b16 %v368
        %v965 = vunpack.c.l.b16 %v369
        %v966 = vunpack.c.h.b16 %v369
        %v967 = vunpack.c.l.b16 %v370
        %v968 = vunpack.c.h.b16 %v370
        %v969 = vunpack.c.l.b16 %v371
        %v970 = vunpack.c.h.b16 %v371
        %v971 = vunpack.c.l.b16 %v372
        %v972 = vunpack.c.h.b16 %v372
        %v973 = vunpack.c.l.b16 %v373
        %v974 = vunpack.c.h.b16 %v373
        %v975 = vunpack.c.l.b16 %v374
        %v976 = vunpack.c.h.b16 %v374
        %v977 = vunpack.c.l.b16 %v375
        %v978 = vunpack.c.h.b16 %v375
        %v979 = vunpack.c.l.b16 %v376
        %v980 = vunpack.c.h.b16 %v376
        %v981 = vunpack.c.l.b16 %v377
        %v982 = vunpack.c.h.b16 %v377
        %v983 = vunpack.c.l.b16 %v378
        %v984 = vunpack.c.h.b16 %v378
        %v985 = vunpack.c.l.b16 %v379
        %v986 = vunpack.c.h.b16 %v379
        %v987 = vunpack.c.l.b16 %v380
        %v988 = vunpack.c.h.b16 %v380
        %v989 = vunpack.c.l.b16 %v381
        %v990 = vunpack.c.h.b16 %v381
        %v991 = vunpack.c.l.b16 %v382
        %v992 = vunpack.c.h.b16 %v382
        %v993 = vunpack.c.l.b16 %v383
        %v994 = vunpack.c.h.b16 %v383
        %v995 = vunpack.c.l.b16 %v384
        %v996 = vunpack.c.h.b16 %v384
        %v997 = vunpack.c.l.b16 %v385
        %v998 = vunpack.c.h.b16 %v385
        %v999 = vunpack.c.l.b16 %v386
        %v1000 = vunpack.c.h.b16 %v386
        %v1001 = vunpack.c.l.b16 %v387
        %v1002 = vunpack.c.h.b16 %v387
        %v1003 = vunpack.c.l.b16 %v388
        %v1004 = vunpack.c.h.b16 %v388
        %v1005 = vunpack.c.l.b16 %v389
        %v1006 = vunpack.c.h.b16 %v389
        %v1007 = vunpack.c.l.b16 %v390
        %v1008 = vunpack.c.h.b16 %v390
        %v1009 = vunpack.c.l.b16 %v391
        %v1010 = vunpack.c.h.b16 %v391
        %v1011 = vunpack.c.l.b16 %v392
        %v1012 = vunpack.c.h.b16 %v392
        %v1013 = vunpack.c.l.b16 %v393
        %v1014 = vunpack.c.h.b16 %v393
        %v1015 = vunpack.c.l.b16 %v394
        %v1016 = vunpack.c.h.b16 %v394
        %v1017 = vunpack.c.l.b16 %v395
        %v1018 = vunpack.c.h.b16 %v395
        %v1019 = vunpack.c.l.b16 %v396
        %v1020 = vunpack.c.h.b16 %v396
        %v1021 = vunpack.c.l.b16 %v397
        %v1022 = vunpack.c.h.b16 %v397
        %v1023 = vunpack.c.l.b16 %v398
        %v1024 = vunpack.c.h.b16 %v398
        %v1025 = vunpack.c.l.b16 %v399
        %v1026 = vunpack.c.h.b16 %v399
        %v1027 = vunpack.c.l.b16 %v400
        %v1028 = vunpack.c.h.b16 %v400
        %v1029 = vunpack.c.l.b16 %v401
        %v1030 = vunpack.c.h.b16 %v401
        %v1031 = vunpack.c.l.b16 %v402
        %v1032 = vunpack.c.h.b16 %v402
        %v1033 = vunpack.c.l.b16 %v403
        %v1034 = vunpack.c.h.b16 %v403
        %v1035 = vunpack.c.l.b16 %v404
        %v1036 = vunpack.c.h.b16 %v404
        %v1037 = vunpack.c.l.b16 %v405
        %v1038 = vunpack.c.h.b16 %v405
        %v1039 = vunpack.c.l.b16 %v406
        %v1040 = vunpack.c.h.b16 %v406
        %v1041 = vunpack.c.l.b16 %v407
        %v1042 = vunpack.c.h.b16 %v407
        %v1043 = vunpack.c.l.b16 %v408
        %v1044 = vunpack.c.h.b16 %v408
        %v1045 = vunpack.c.l.b16 %v409
        %v1046 = vunpack.c.h.b16 %v409
        %v1047 = vunpack.c.l.b16 %v410
        %v1048 = vunpack.c.h.b16 %v410
        %v1049 = vunpack.c.l.b16 %v411
        %v1050 = vunpack.c.h.b16 %v411
        %v1051 = vunpack.c.l.b16 %v412
        %v1052 = vunpack.c.h.b16 %v412
        %v1053 = vunpack.c.l.b16 %v413
        %v1054 = vunpack.c.h.b16 %v413
        %v1055 = vunpack.c.l.b16 %v414
        %v1056 = vunpack.c.h.b16 %v414
        %v1057 = vunpack.c.l.b16 %v415
        %v1058 = vunpack.c.h.b16 %v415
        %v1059 = vunpack.c.l.b16 %v416
        %v1060 = vunpack.c.h.b16 %v416
        %v1061 = vunpack.c.l.b16 %v417
        %v1062 = vunpack.c.h.b16 %v417
        %v1063 = vunpack.c.l.b16 %v418
        %v1064 = vunpack.c.h.b16 %v418
        %v1065 = vunpack.c.l.b16 %v419
        %v1066 = vunpack.c.h.b16 %v419
        %v1067 = vunpack.c.l.b16 %v420
        %v1068 = vunpack.c.h.b16 %v420
        %v1069 = vunpack.c.l.b16 %v421
        %v1070 = vunpack.c.h.b16 %v421
        %v1071 = vunpack.c.l.b16 %v422
        %v1072 = vunpack.c.h.b16 %v422
        %v1073 = vunpack.c.l.b16 %v423
        %v1074 = vunpack.c.h.b16 %v423
        %v1075 = vunpack.c.l.b16 %v424
        %v1076 = vunpack.c.h.b16 %v424
        %v1077 = vunpack.c.l.b16 %v425
        %v1078 = vunpack.c.h.b16 %v425
        %v1079 = vunpack.c.l.b16 %v426
        %v1080 = vunpack.c.h.b16 %v426
        %v1081 = vunpack.c.l.b16 %v427
        %v1082 = vunpack.c.h.b16 %v427
        %v1083 = vunpack.c.l.b16 %v428
        %v1084 = vunpack.c.h.b16 %v428
        %v1085 = vunpack.c.l.b16 %v429
        %v1086 = vunpack.c.h.b16 %v429
        %v1087 = vunpack.c.l.b16 %v430
        %v1088 = vunpack.c.h.b16 %v430
        %v1089 = vunpack.c.l.b16 %v431
        %v1090 = vunpack.c.h.b16 %v431
        %v1091 = vunpack.c.l.b16 %v432
        %v1092 = vunpack.c.h.b16 %v432
        %v1093 = vunpack.c.l.b16 %v433
        %v1094 = vunpack.c.h.b16 %v433
        %v1095 = vunpack.c.l.b16 %v434
        %v1096 = vunpack.c.h.b16 %v434
        %v1097 = vunpack.c.l.b16 %v435
        %v1098 = vunpack.c.h.b16 %v435
        %v1099 = vunpack.c.l.b16 %v436
        %v1100 = vunpack.c.h.b16 %v436
        %v1101 = vunpack.c.l.b16 %v437
        %v1102 = vunpack.c.h.b16 %v437
        %v1103 = vunpack.c.l.b16 %v438
        %v1104 = vunpack.c.h.b16 %v438
        %v1105 = vunpack.c.l.b16 %v439
        %v1106 = vunpack.c.h.b16 %v439
        %v1107 = vunpack.c.l.b16 %v440
        %v1108 = vunpack.c.h.b16 %v440
        %v1109 = vunpack.c.l.b16 %v441
        %v1110 = vunpack.c.h.b16 %v441
        %v1111 = vunpack.c.l.b16 %v442
        %v1112 = vunpack.c.h.b16 %v442
        %v1113 = vunpack.c.l.b16 %v443
        %v1114 = vunpack.c.h.b16 %v443
        %v1115 = vunpack.c.l.b16 %v444
        %v1116 = vunpack.c.h.b16 %v444
        %v1117 = vunpack.c.l.b16 %v445
        %v1118 = vunpack.c.h.b16 %v445
        %v1119 = vunpack.c.l.b16 %v446
        %v1120 = vunpack.c.h.b16 %v446
        %v1121 = vunpack.c.l.b16 %v447
        %v1122 = vunpack.c.h.b16 %v447
        %v1123 = vunpack.c.l.b16 %v448
        %v1124 = vunpack.c.h.b16 %v448
        %v1125 = vunpack.c.l.b16 %v449
        %v1126 = vunpack.c.h.b16 %v449
        %v1127 = vunpack.c.l.b16 %v450
        %v1128 = vunpack.c.h.b16 %v450
        %v1129 = vunpack.c.l.b16 %v451
        %v1130 = vunpack.c.h.b16 %v451
        %v1131 = vunpack.c.l.b16 %v452
        %v1132 = vunpack.c.h.b16 %v452
        %v1133 = vunpack.c.l.b16 %v453
        %v1134 = vunpack.c.h.b16 %v453
        %v1135 = vunpack.c.l.b16 %v454
        %v1136 = vunpack.c.h.b16 %v454
        %v1137 = vunpack.c.l.b16 %v455
        %v1138 = vunpack.c.h.b16 %v455
        %v1139 = vunpack.c.l.b16 %v456
        %v1140 = vunpack.c.h.b16 %v456
        %v1141 = vunpack.c.l.b16 %v457
        %v1142 = vunpack.c.h.b16 %v457
        %v1143 = vunpack.c.l.b16 %v458
        %v1144 = vunpack.c.h.b16 %v458
        %v1145 = vunpack.c.l.b16 %v459
        %v1146 = vunpack.c.h.b16 %v459
        %v1147 = vunpack.c.l.b16 %v460
        %v1148 = vunpack.c.h.b16 %v460
        %v1149 = vunpack.c.l.b16 %v461
        %v1150 = vunpack.c.h.b16 %v461
        %v1151 = vunpack.c.l.b16 %v462
        %v1152 = vunpack.c.h.b16 %v462
        %v1153 = vunpack.c.l.b16 %v463
        %v1154 = vunpack.c.h.b16 %v463
        %v1155 = vunpack.c.l.b16 %v464
        %v1156 = vunpack.c.h.b16 %v464
        %v1157 = vunpack.c.l.b16 %v465
        %v1158 = vunpack.c.h.b16 %v465
        %v1159 = vunpack.c.l.b16 %v466
        %v1160 = vunpack.c.h.b16 %v466
        %v1161 = vunpack.c.l.b16 %v467
        %v1162 = vunpack.c.h.b16 %v467
        %v1163 = vunpack.c.l.b16 %v468
        %v1164 = vunpack.c.h.b16 %v468
        %v1165 = vunpack.c.l.b16 %v469
        %v1166 = vunpack.c.h.b16 %v469
        %v1167 = vunpack.c.l.b16 %v470
        %v1168 = vunpack.c.h.b16 %v470
        %v1169 = vunpack.c.l.b16 %v471
        %v1170 = vunpack.c.h.b16 %v471
        %v1171 = vunpack.c.l.b16 %v472
        %v1172 = vunpack.c.h.b16 %v472
        %v1173 = vunpack.c.l.b16 %v473
        %v1174 = vunpack.c.h.b16 %v473
        %v1175 = vunpack.c.l.b16 %v474
        %v1176 = vunpack.c.h.b16 %v474
        %v1177 = vunpack.c.l.b16 %v475
        %v1178 = vunpack.c.h.b16 %v475
        %v1179 = vunpack.c.l.b16 %v476
        %v1180 = vunpack.c.h.b16 %v476
        %v1181 = vunpack.c.l.b16 %v477
        %v1182 = vunpack.c.h.b16 %v477
        %v1183 = vunpack.c.l.b16 %v478
        %v1184 = vunpack.c.h.b16 %v478
        %v1185 = vunpack.c.l.b16 %v479
        %v1186 = vunpack.c.h.b16 %v479
        %v1187 = vunpack.c.l.b16 %v480
        %v1188 = vunpack.c.h.b16 %v480
        %v1189 = vunpack.c.l.b16 %v481
        %v1190 = vunpack.c.h.b16 %v481
        %v1191 = vunpack.c.l.b16 %v482
        %v1192 = vunpack.c.h.b16 %v482
        %v1193 = vunpack.c.l.b16 %v483
        %v1194 = vunpack.c.h.b16 %v483
        %v1195 = vunpack.c.l.b16 %v484
        %v1196 = vunpack.c.h.b16 %v484
        %v1197 = vunpack.c.l.b16 %v485
        %v1198 = vunpack.c.h.b16 %v485
        %v1199 = vunpack.c.l.b16 %v486
        %v1200 = vunpack.c.h.b16 %v486
        %v1201 = vunpack.c.l.b16 %v487
        %v1202 = vunpack.c.h.b16 %v487
        %v1203 = vunpack.c.l.b16 %v488
        %v1204 = vunpack.c.h.b16 %v488
        %v1205 = vunpack.c.l.b16 %v489
        %v1206 = vunpack.c.h.b16 %v489
        %v1207 = vunpack.c.l.b16 %v490
        %v1208 = vunpack.c.h.b16 %v490
        %v1209 = vunpack.c.l.b16 %v491
        %v1210 = vunpack.c.h.b16 %v491
        %v1211 = vunpack.c.l.b16 %v492
        %v1212 = vunpack.c.h.b16 %v492
        %v1213 = vunpack.c.l.b16 %v493
        %v1214 = vunpack.c.h.b16 %v493
        %v1215 = vunpack.c.l.b16 %v494
        %v1216 = vunpack.c.h.b16 %v494
        %v1217 = vunpack.c.l.b16 %v495
        %v1218 = vunpack.c.h.b16 %v495
        %v1219 = vunpack.c.l.b16 %v496
        %v1220 = vunpack.c.h.b16 %v496
        %v1221 = vunpack.c.l.b16 %v497
        %v1222 = vunpack.c.h.b16 %v497
        %v1223 = vunpack.c.l.b16 %v498
        %v1224 = vunpack.c.h.b16 %v498
        %v1225 = vunpack.c.l.b16 %v499
        %v1226 = vunpack.c.h.b16 %v499
        %v1227 = vunpack.c.l.b16 %v500
        %v1228 = vunpack.c.h.b16 %v500
        %v1229 = vunpack.c.l.b16 %v501
        %v1230 = vunpack.c.h.b16 %v501
        %v1231 = vunpack.c.l.b16 %v502
        %v1232 = vunpack.c.h.b16 %v502
        %v1233 = vunpack.c.l.b16 %v503
        %v1234 = vunpack.c.h.b16 %v503
        %v1235 = vunpack.c.l.b16 %v504
        %v1236 = vunpack.c.h.b16 %v504
        %v1237 = vunpack.c.l.b16 %v505
        %v1238 = vunpack.c.h.b16 %v505
        %v1239 = vunpack.c.l.b16 %v506
        %v1240 = vunpack.c.h.b16 %v506
        %v1241 = vunpack.c.l.b16 %v507
        %v1242 = vunpack.c.h.b16 %v507
        %v1243 = vunpack.c.l.b16 %v508
        %v1244 = vunpack.c.h.b16 %v508
        %v1245 = vunpack.c.l.b16 %v509
        %v1246 = vunpack.c.h.b16 %v509
        %v1247 = vunpack.c.l.b16 %v510
        %v1248 = vunpack.c.h.b16 %v510
        %v1249 = vunpack.c.l.b16 %v511
        %v1250 = vunpack.c.h.b16 %v511
        %v1251 = vunpack.c.l.b16 %v512
        %v1252 = vunpack.c.h.b16 %v512
        %v1253 = vunpack.c.l.b16 %v513
        %v1254 = vunpack.c.h.b16 %v513
        %v1255 = vunpack.c.l.b16 %v514
        %v1256 = vunpack.c.h.b16 %v514
        %v1257 = vunpack.c.l.b16 %v515
        %v1258 = vunpack.c.h.b16 %v515
        %v1259 = vunpack.c.l.b16 %v516
        %v1260 = vunpack.c.h.b16 %v516
        %v1261 = vunpack.c.l.b16 %v517
        %v1262 = vunpack.c.h.b16 %v517
        %v1263 = vunpack.c.l.b16 %v518
        %v1264 = vunpack.c.h.b16 %v518
        %v1265 = vunpack.c.l.b16 %v519
        %v1266 = vunpack.c.h.b16 %v519
        %v1267 = vunpack.c.l.b16 %v520
        %v1268 = vunpack.c.h.b16 %v520
        %v1269 = vunpack.c.l.b16 %v521
        %v1270 = vunpack.c.h.b16 %v521
        %v1271 = vunpack.c.l.b16 %v522
        %v1272 = vunpack.c.h.b16 %v522
        %v1273 = vunpack.c.l.b16 %v523
        %v1274 = vunpack.c.h.b16 %v523
        %v1275 = vunpack.c.l.b16 %v524
        %v1276 = vunpack.c.h.b16 %v524
        %v1277 = vunpack.c.l.b16 %v525
        %v1278 = vunpack.c.h.b16 %v525
        %v1279 = vunpack.c.l.b16 %v526
        %v1280 = vunpack.c.h.b16 %v526
        %v1281 = vunpack.c.l.b16 %v527
        %v1282 = vunpack.c.h.b16 %v527
        %v1283 = vunpack.c.l.b16 %v528
        %v1284 = vunpack.c.h.b16 %v528
        %v1285 = vunpack.c.l.b16 %v529
        %v1286 = vunpack.c.h.b16 %v529
        %v1287 = vunpack.c.l.b16 %v530
        %v1288 = vunpack.c.h.b16 %v530
        %v1289 = vunpack.c.l.b16 %v531
        %v1290 = vunpack.c.h.b16 %v531
        %v1291 = vunpack.c.l.b16 %v532
        %v1292 = vunpack.c.h.b16 %v532
        %v1293 = vunpack.c.l.b16 %v533
        %v1294 = vunpack.c.h.b16 %v533
        %v1295 = vunpack.c.l.b16 %v534
        %v1296 = vunpack.c.h.b16 %v534
        %v1297 = vunpack.c.l.b16 %v535
        %v1298 = vunpack.c.h.b16 %v535
        %v1299 = vunpack.c.l.b16 %v536
        %v1300 = vunpack.c.h.b16 %v536
        %v1301 = vunpack.c.l.b16 %v537
        %v1302 = vunpack.c.h.b16 %v537
        %v1303 = vunpack.c.l.b16 %v538
        %v1304 = vunpack.c.h.b16 %v538
        %v1305 = vunpack.c.l.b16 %v539
        %v1306 = vunpack.c.h.b16 %v539
        %v1307 = vunpack.c.l.b16 %v540
        %v1308 = vunpack.c.h.b16 %v540
        %v1309 = vunpack.c.l.b16 %v541
        %v1310 = vunpack.c.h.b16 %v541
        %v1311 = vunpack.c.l.b16 %v542
        %v1312 = vunpack.c.h.b16 %v542
        %v1313 = vunpack.c.l.b16 %v543
        %v1314 = vunpack.c.h.b16 %v543
        %v1315 = vunpack.c.l.b16 %v544
        %v1316 = vunpack.c.h.b16 %v544
        %v1317 = vunpack.c.l.b16 %v545
        %v1318 = vunpack.c.h.b16 %v545
        %v1319 = vunpack.c.l.b16 %v546
        %v1320 = vunpack.c.h.b16 %v546
        %v1321 = vunpack.c.l.b16 %v547
        %v1322 = vunpack.c.h.b16 %v547
        %v1323 = vunpack.c.l.b16 %v548
        %v1324 = vunpack.c.h.b16 %v548
        %v1325 = vunpack.c.l.b16 %v549
        %v1326 = vunpack.c.h.b16 %v549
        %v1327 = vunpack.c.l.b16 %v550
        %v1328 = vunpack.c.h.b16 %v550
        %v1329 = vunpack.c.l.b16 %v551
        %v1330 = vunpack.c.h.b16 %v551
        %v1331 = vunpack.c.l.b16 %v552
        %v1332 = vunpack.c.h.b16 %v552
        %v1333 = vunpack.c.l.b16 %v553
        %v1334 = vunpack.c.h.b16 %v553
        %v1335 = vunpack.c.l.b16 %v554
        %v1336 = vunpack.c.h.b16 %v554
        %v1337 = vunpack.c.l.b16 %v555
        %v1338 = vunpack.c.h.b16 %v555
        %v1339 = vunpack.c.l.b16 %v556
        %v1340 = vunpack.c.h.b16 %v556
        %v1341 = vunpack.c.l.b16 %v557
        %v1342 = vunpack.c.h.b16 %v557
        %v1343 = vunpack.c.l.b16 %v558
        %v1344 = vunpack.c.h.b16 %v558
        %v1345 = vunpack.c.l.b16 %v559
        %v1346 = vunpack.c.h.b16 %v559
        %v1347 = vunpack.c.l.b16 %v560
        %v1348 = vunpack.c.h.b16 %v560
        %v1349 = vunpack.c.l.b16 %v561
        %v1350 = vunpack.c.h.b16 %v561
        %v1351 = vunpack.c.l.b16 %v562
        %v1352 = vunpack.c.h.b16 %v562
        %v1353 = vunpack.c.l.b16 %v563
        %v1354 = vunpack.c.h.b16 %v563
        %v1355 = vunpack.c.l.b16 %v564
        %v1356 = vunpack.c.h.b16 %v564
        %v1357 = vunpack.c.l.b16 %v565
        %v1358 = vunpack.c.h.b16 %v565
        %v1359 = vunpack.c.l.b16 %v566
        %v1360 = vunpack.c.h.b16 %v566
        %v1361 = vunpack.c.l.b16 %v567
        %v1362 = vunpack.c.h.b16 %v567
        %v1363 = vunpack.c.l.b16 %v568
        %v1364 = vunpack.c.h.b16 %v568
        %v1365 = vunpack.c.l.b16 %v569
        %v1366 = vunpack.c.h.b16 %v569
        %v1367 = vunpack.c.l.b16 %v570
        %v1368 = vunpack.c.h.b16 %v570
        %v1369 = vunpack.c.l.b16 %v571
        %v1370 = vunpack.c.h.b16 %v571
        %v1371 = vunpack.c.l.b16 %v572
        %v1372 = vunpack.c.h.b16 %v572
        %v1373 = vunpack.c.l.b16 %v573
        %v1374 = vunpack.c.h.b16 %v573
        %v1375 = vunpack.c.l.b16 %v574
        %v1376 = vunpack.c.h.b16 %v574
        %v1377 = vunpack.c.l.b16 %v575
        %v1378 = vunpack.c.h.b16 %v575
        %v1379 = vunpack.c.l.b16 %v576
        %v1380 = vunpack.c.h.b16 %v576
        %v1381 = vunpack.c.l.b16 %v577
        %v1382 = vunpack.c.h.b16 %v577
        %v1383 = vunpack.c.l.b16 %v578
        %v1384 = vunpack.c.h.b16 %v578
        %v1385 = vunpack.c.l.b16 %v579
        %v1386 = vunpack.c.h.b16 %v579
        %v1387 = vunpack.c.l.b16 %v580
        %v1388 = vunpack.c.h.b16 %v580
        %v1389 = vpack.c.b16 %v881, %v877
        %v1390 = vpack.c.b16 %v882, %v878
        %v1391 = vpack.c.b16 %v883, %v879
        %v1392 = vpack.c.b16 %v884, %v880
        %v1393 = vpack.c.b16 %v889, %v885
        %v1394 = vpack.c.b16 %v890, %v886
        %v1395 = vpack.c.b16 %v891, %v887
        %v1396 = vpack.c.b16 %v892, %v888
        %v1397 = vpack.c.b16 %v897, %v893
        %v1398 = vpack.c.b16 %v898, %v894
        %v1399 = vpack.c.b16 %v899, %v895
        %v1400 = vpack.c.b16 %v900, %v896
        %v1401 = vpack.c.b16 %v905, %v901
        %v1402 = vpack.c.b16 %v906, %v902
        %v1403 = vpack.c.b16 %v907, %v903
        %v1404 = vpack.c.b16 %v908, %v904
        %v1405 = vpack.c.b16 %v913, %v909
        %v1406 = vpack.c.b16 %v914, %v910
        %v1407 = vpack.c.b16 %v915, %v911
        %v1408 = vpack.c.b16 %v916, %v912
        %v1409 = vpack.c.b16 %v921, %v917
        %v1410 = vpack.c.b16 %v922, %v918
        %v1411 = vpack.c.b16 %v923, %v919
        %v1412 = vpack.c.b16 %v924, %v920
        %v1413 = vpack.c.b16 %v929, %v925
        %v1414 = vpack.c.b16 %v930, %v926
        %v1415 = vpack.c.b16 %v931, %v927
        %v1416 = vpack.c.b16 %v932, %v928
        %v1417 = vpack.c.b16 %v937, %v933
        %v1418 = vpack.c.b16 %v938, %v934
        %v1419 = vpack.c.b16 %v939, %v935
        %v1420 = vpack.c.b16 %v940, %v936
        %v1421 = vpack.c.b16 %v945, %v941
        %v1422 = vpack.c.b16 %v946, %v942
        %v1423 = vpack.c.b16 %v947, %v943
        %v1424 = vpack.c.b16 %v948, %v944
        %v1425 = vpack.c.b16 %v953, %v949
        %v1426 = vpack.c.b16 %v954, %v950
        %v1427 = vpack.c.b16 %v955, %v951
        %v1428 = vpack.c.b16 %v956, %v952
        %v1429 = vpack.c.b16 %v961, %v957
        %v1430 = vpack.c.b16 %v962, %v958
        %v1431 = vpack.c.b16 %v963, %v959
        %v1432 = vpack.c.b16 %v964, %v960
        %v1433 = vpack.c.b16 %v969, %v965
        %v1434 = vpack.c.b16 %v970, %v966
        %v1435 = vpack.c.b16 %v971, %v967
        %v1436 = vpack.c.b16 %v972, %v968
        %v1437 = vpack.c.b16 %v977, %v973
        %v1438 = vpack.c.b16 %v978, %v974
        %v1439 = vpack.c.b16 %v979, %v975
        %v1440 = vpack.c.b16 %v980, %v976
        %v1441 = vpack.c.b16 %v985, %v981
        %v1442 = vpack.c.b16 %v986, %v982
        %v1443 = vpack.c.b16 %v987, %v983
        %v1444 = vpack.c.b16 %v988, %v984
        %v1445 = vpack.c.b16 %v993, %v989
        %v1446 = vpack.c.b16 %v994, %v990
        %v1447 = vpack.c.b16 %v995, %v991
        %v1448 = vpack.c.b16 %v996, %v992
        %v1449 = vpack.c.b16 %v1001, %v997
        %v1450 = vpack.c.b16 %v1002, %v998
        %v1451 = vpack.c.b16 %v1003, %v999
        %v1452 = vpack.c.b16 %v1004, %v1000
        %v1453 = vpack.c.b16 %v1009, %v1005
        %v1454 = vpack.c.b16 %v1010, %v1006
        %v1455 = vpack.c.b16 %v1011, %v1007
        %v1456 = vpack.c.b16 %v1012, %v1008
        %v1457 = vpack.c.b16 %v1017, %v1013
        %v1458 = vpack.c.b16 %v1018, %v1014
        %v1459 = vpack.c.b16 %v1019, %v1015
        %v1460 = vpack.c.b16 %v1020, %v1016
        %v1461 = vpack.c.b16 %v1025, %v1021
        %v1462 = vpack.c.b16 %v1026, %v1022
        %v1463 = vpack.c.b16 %v1027, %v1023
        %v1464 = vpack.c.b16 %v1028, %v1024
        %v1465 = vpack.c.b16 %v1033, %v1029
        %v1466 = vpack.c.b16 %v1034, %v1030
        %v1467 = vpack.c.b16 %v1035, %v1031
        %v1468 = vpack.c.b16 %v1036, %v1032
        %v1469 = vpack.c.b16 %v1041, %v1037
        %v1470 = vpack.c.b16 %v1042, %v1038
        %v1471 = vpack.c.b16 %v1043, %v1039
        %v1472 = vpack.c.b16 %v1044, %v1040
        %v1473 = vpack.c.b16 %v1049, %v1045
        %v1474 = vpack.c.b16 %v1050, %v1046
        %v1475 = vpack.c.b16 %v1051, %v1047
        %v1476 = vpack.c.b16 %v1052, %v1048
        %v1477 = vpack.c.b16 %v1057, %v1053
        %v1478 = vpack.c.b16 %v1058, %v1054
        %v1479 = vpack.c.b16 %v1059, %v1055
        %v1480 = vpack.c.b16 %v1060, %v1056
        %v1481 = vpack.c.b16 %v1065, %v1061
        %v1482 = vpack.c.b16 %v1066, %v1062
        %v1483 = vpack.c.b16 %v1067, %v1063
        %v1484 = vpack.c.b16 %v1068, %v1064
        %v1485 = vpack.c.b16 %v1073, %v1069
        %v1486 = vpack.c.b16 %v1074, %v1070
        %v1487 = vpack.c.b16 %v1075, %v1071
        %v1488 = vpack.c.b16 %v1076, %v1072
        %v1489 = vpack.c.b16 %v1081, %v1077
        %v1490 = vpack.c.b16 %v1082, %v1078
        %v1491 = vpack.c.b16 %v1083, %v1079
        %v1492 = vpack.c.b16 %v1084, %v1080
        %v1493 = vpack.c.b16 %v1089, %v1085
        %v1494 = vpack.c.b16 %v1090, %v1086
        %v1495 = vpack.c.b16 %v1091, %v1087
        %v1496 = vpack.c.b16 %v1092, %v1088
        %v1497 = vpack.c.b16 %v1097, %v1093
        %v1498 = vpack.c.b16 %v1098, %v1094
        %v1499 = vpack.c.b16 %v1099, %v1095
        %v1500 = vpack.c.b16 %v1100, %v1096
        %v1501 = vpack.c.b16 %v1105, %v1101
        %v1502 = vpack.c.b16 %v1106, %v1102
        %v1503 = vpack.c.b16 %v1107, %v1103
        %v1504 = vpack.c.b16 %v1108, %v1104
        %v1505 = vpack.c.b16 %v1113, %v1109
        %v1506 = vpack.c.b16 %v1114, %v1110
        %v1507 = vpack.c.b16 %v1115, %v1111
        %v1508 = vpack.c.b16 %v1116, %v1112
        %v1509 = vpack.c.b16 %v1121, %v1117
        %v1510 = vpack.c.b16 %v1122, %v1118
        %v1511 = vpack.c.b16 %v1123, %v1119
        %v1512 = vpack.c.b16 %v1124, %v1120
        %v1513 = vpack.c.b16 %v1129, %v1125
        %v1514 = vpack.c.b16 %v1130, %v1126
        %v1515 = vpack.c.b16 %v1131, %v1127
        %v1516 = vpack.c.b16 %v1132, %v1128
        %v1517 = vpack.c.b16 %v1137, %v1133
        %v1518 = vpack.c.b16 %v1138, %v1134
        %v1519 = vpack.c.b16 %v1139, %v1135
        %v1520 = vpack.c.b16 %v1140, %v1136
        %v1521 = vpack.c.b16 %v1145, %v1141
        %v1522 = vpack.c.b16 %v1146, %v1142
        %v1523 = vpack.c.b16 %v1147, %v1143
        %v1524 = vpack.c.b16 %v1148, %v1144
        %v1525 = vpack.c.b16 %v1153, %v1149
        %v1526 = vpack.c.b16 %v1154, %v1150
        %v1527 = vpack.c.b16 %v1155, %v1151
        %v1528 = vpack.c.b16 %v1156, %v1152
        %v1529 = vpack.c.b16 %v1161, %v1157
        %v1530 = vpack.c.b16 %v1162, %v1158
        %v1531 = vpack.c.b16 %v1163, %v1159
        %v1532 = vpack.c.b16 %v1164, %v1160
        %v1533 = vpack.c.b16 %v1169, %v1165
        %v1534 = vpack.c.b16 %v1170, %v1166
        %v1535 = vpack.c.b16 %v1171, %v1167
        %v1536 = vpack.c.b16 %v1172, %v1168
        %v1537 = vpack.c.b16 %v1177, %v1173
        %v1538 = vpack.c.b16 %v1178, %v1174
        %v1539 = vpack.c.b16 %v1179, %v1175
        %v1540 = vpack.c.b16 %v1180, %v1176
        %v1541 = vpack.c.b16 %v1185, %v1181
        %v1542 = vpack.c.b16 %v1186, %v1182
        %v1543 = vpack.c.b16 %v1187, %v1183
        %v1544 = vpack.c.b16 %v1188, %v1184
        %v1545 = vpack.c.b16 %v1193, %v1189
        %v1546 = vpack.c.b16 %v1194, %v1190
        %v1547 = vpack.c.b16 %v1195, %v1191
        %v1548 = vpack.c.b16 %v1196, %v1192
        %v1549 = vpack.c.b16 %v1201, %v1197
        %v1550 = vpack.c.b16 %v1202, %v1198
        %v1551 = vpack.c.b16 %v1203, %v1199
        %v1552 = vpack.c.b16 %v1204, %v1200
        %v1553 = vpack.c.b16 %v1209, %v1205
        %v1554 = vpack.c.b16 %v1210, %v1206
        %v1555 = vpack.c.b16 %v1211, %v1207
        %v1556 = vpack.c.b16 %v1212, %v1208
        %v1557 = vpack.c.b16 %v1217, %v1213
        %v1558 = vpack.c.b16 %v1218, %v1214
        %v1559 = vpack.c.b16 %v1219, %v1215
        %v1560 = vpack.c.b16 %v1220, %v1216
        %v1561 = vpack.c.b16 %v1225, %v1221
        %v1562 = vpack.c.b16 %v1226, %v1222
        %v1563 = vpack.c.b16 %v1227, %v1223
        %v1564 = vpack.c.b16 %v1228, %v1224
        %v1565 = vpack.c.b16 %v1233, %v1229
        %v1566 = vpack.c.b16 %v1234, %v1230
        %v1567 = vpack.c.b16 %v1235, %v1231
        %v1568 = vpack.c.b16 %v1236, %v1232
        %v1569 = vpack.c.b16 %v1241, %v1237
        %v1570 = vpack.c.b16 %v1242, %v1238
        %v1571 = vpack.c.b16 %v1243, %v1239
        %v1572 = vpack.c.b16 %v1244, %v1240
        %v1573 = vpack.c.b16 %v1249, %v1245
        %v1574 = vpack.c.b16 %v1250, %v1246
        %v1575 = vpack.c.b16 %v1251, %v1247
        %v1576 = vpack.c.b16 %v1252, %v1248
        %v1577 = vpack.c.b16 %v1257, %v1253
        %v1578 = vpack.c.b16 %v1258, %v1254
        %v1579 = vpack.c.b16 %v1259, %v1255
        %v1580 = vpack.c.b16 %v1260, %v1256
        %v1581 = vpack.c.b16 %v1265, %v1261
        %v1582 = vpack.c.b16 %v1266, %v1262
        %v1583 = vpack.c.b16 %v1267, %v1263
        %v1584 = vpack.c.b16 %v1268, %v1264
        %v1585 = vpack.c.b16 %v1273, %v1269
        %v1586 = vpack.c.b16 %v1274, %v1270
        %v1587 = vpack.c.b16 %v1275, %v1271
        %v1588 = vpack.c.b16 %v1276, %v1272
        %v1589 = vpack.c.b16 %v1281, %v1277
        %v1590 = vpack.c.b16 %v1282, %v1278
        %v1591 = vpack.c.b16 %v1283, %v1279
        %v1592 = vpack.c.b16 %v1284, %v1280
        %v1593 = vpack.c.b16 %v1289, %v1285
        %v1594 = vpack.c.b16 %v1290, %v1286
        %v1595 = vpack.c.b16 %v1291, %v1287
        %v1596 = vpack.c.b16 %v1292, %v1288
        %v1597 = vpack.c.b16 %v1297, %v1293
        %v1598 = vpack.c.b16 %v1298, %v1294
        %v1599 = vpack.c.b16 %v1299, %v1295
        %v1600 = vpack.c.b16 %v1300, %v1296
        %v1601 = vpack.c.b16 %v1305, %v1301
        %v1602 = vpack.c.b16 %v1306, %v1302
        %v1603 = vpack.c.b16 %v1307, %v1303
        %v1604 = vpack.c.b16 %v1308, %v1304
        %v1605 = vpack.c.b16 %v1313, %v1309
        %v1606 = vpack.c.b16 %v1314, %v1310
        %v1607 = vpack.c.b16 %v1315, %v1311
        %v1608 = vpack.c.b16 %v1316, %v1312
        %v1609 = vpack.c.b16 %v1321, %v1317
        %v1610 = vpack.c.b16 %v1322, %v1318
        %v1611 = vpack.c.b16 %v1323, %v1319
        %v1612 = vpack.c.b16 %v1324, %v1320
        %v1613 = vpack.c.b16 %v1329, %v1325
        %v1614 = vpack.c.b16 %v1330, %v1326
        %v1615 = vpack.c.b16 %v1331, %v1327
        %v1616 = vpack.c.b16 %v1332, %v1328
        %v1617 = vpack.c.b16 %v1337, %v1333
        %v1618 = vpack.c.b16 %v1338, %v1334
        %v1619 = vpack.c.b16 %v1339, %v1335
        %v1620 = vpack.c.b16 %v1340, %v1336
        %v1621 = vpack.c.b16 %v1345, %v1341
        %v1622 = vpack.c.b16 %v1346, %v1342
        %v1623 = vpack.c.b16 %v1347, %v1343
        %v1624 = vpack.c.b16 %v1348, %v1344
        %v1625 = vpack.c.b16 %v1353, %v1349
        %v1626 = vpack.c.b16 %v1354, %v1350
        %v1627 = vpack.c.b16 %v1355, %v1351
        %v1628 = vpack.c.b16 %v1356, %v1352
        %v1629 = vpack.c.b16 %v1361, %v1357
        %v1630 = vpack.c.b16 %v1362, %v1358
        %v1631 = vpack.c.b16 %v1363, %v1359
        %v1632 = vpack.c.b16 %v1364, %v1360
        %v1633 = vpack.c.b16 %v1369, %v1365
        %v1634 = vpack.c.b16 %v1370, %v1366
        %v1635 = vpack.c.b16 %v1371, %v1367
        %v1636 = vpack.c.b16 %v1372, %v1368
        %v1637 = vpack.c.b16 %v1377, %v1373
        %v1638 = vpack.c.b16 %v1378, %v1374
        %v1639 = vpack.c.b16 %v1379, %v1375
        %v1640 = vpack.c.b16 %v1380, %v1376
        %v1641 = vpack.c.b16 %v1385, %v1381
        %v1642 = vpack.c.b16 %v1386, %v1382
        %v1643 = vpack.c.b16 %v1387, %v1383
        %v1644 = vpack.c.b16 %v1388, %v1384
        %1901 = vmatpush.bf16.msra.mxu0 %v1417
        %1902 = vmatpush.bf16.msra.mxu0 %v1413
        %1903 = vmatpush.bf16.msra.mxu0 %v1409
        %1904 = vmatpush.bf16.msra.mxu0 %v1405
        %1905 = vmatpush.bf16.msra.mxu0 %v1401
        %1906 = vmatpush.bf16.msra.mxu0 %v1397
        %1907 = vmatpush.bf16.msra.mxu0 %v1393
        %1908 = vmatpush.bf16.msra.mxu0 %v1389
        %1909 = vmatmul.bf16.gmra.mxu0 %v605
        %v1910 = vpop.f32.mrf.mxu0
        %v1911 = vadd.f32 0.0, %v1910
        %v1912 = vpop.f32.mrf.mxu0
        %v1913 = vadd.f32 0.0, %v1912
        %1914 = vdwg.mxu0
        %1915 = vmatpush.bf16.msra.mxu0 %v1449
        %1916 = vmatpush.bf16.msra.mxu0 %v1445
        %1917 = vmatpush.bf16.msra.mxu0 %v1441
        %1918 = vmatpush.bf16.msra.mxu0 %v1437
        %1919 = vmatpush.bf16.msra.mxu0 %v1433
        %1920 = vmatpush.bf16.msra.mxu0 %v1429
        %1921 = vmatpush.bf16.msra.mxu0 %v1425
        %1922 = vmatpush.bf16.msra.mxu0 %v1421
        %1923 = vmatmul.bf16.gmra.mxu0 %v606
        %v1924 = vpop.f32.mrf.mxu0
        %v1925 = vadd.f32 %v1911, %v1924
        %v1926 = vpop.f32.mrf.mxu0
        %v1927 = vadd.f32 %v1913, %v1926
        %1928 = vdwg.mxu0
        %1929 = vmatpush.bf16.msra.mxu0 %v1481
        %1930 = vmatpush.bf16.msra.mxu0 %v1477
        %1931 = vmatpush.bf16.msra.mxu0 %v1473
        %1932 = vmatpush.bf16.msra.mxu0 %v1469
        %1933 = vmatpush.bf16.msra.mxu0 %v1465
        %1934 = vmatpush.bf16.msra.mxu0 %v1461
        %1935 = vmatpush.bf16.msra.mxu0 %v1457
        %1936 = vmatpush.bf16.msra.mxu0 %v1453
        %1937 = vmatmul.bf16.gmra.mxu0 %v607
        %v1938 = vpop.f32.mrf.mxu0
        %v1939 = vadd.f32 %v1925, %v1938
        %v1940 = vpop.f32.mrf.mxu0
        %v1941 = vadd.f32 %v1927, %v1940
        %1942 = vdwg.mxu0
        %1943 = vmatpush.bf16.msra.mxu0 %v1513
        %1944 = vmatpush.bf16.msra.mxu0 %v1509
        %1945 = vmatpush.bf16.msra.mxu0 %v1505
        %1946 = vmatpush.bf16.msra.mxu0 %v1501
        %1947 = vmatpush.bf16.msra.mxu0 %v1497
        %1948 = vmatpush.bf16.msra.mxu0 %v1493
        %1949 = vmatpush.bf16.msra.mxu0 %v1489
        %1950 = vmatpush.bf16.msra.mxu0 %v1485
        %1951 = vmatmul.bf16.gmra.mxu0 %v608
        %v1952 = vpop.f32.mrf.mxu0
        %v1953 = vadd.f32 %v1939, %v1952
        %v1954 = vpop.f32.mrf.mxu0
        %v1955 = vadd.f32 %v1941, %v1954
        %1956 = vdwg.mxu0
        %1957 = vmatpush.bf16.msra.mxu0 %v1545
        %1958 = vmatpush.bf16.msra.mxu0 %v1541
        %1959 = vmatpush.bf16.msra.mxu0 %v1537
        %1960 = vmatpush.bf16.msra.mxu0 %v1533
        %1961 = vmatpush.bf16.msra.mxu0 %v1529
        %1962 = vmatpush.bf16.msra.mxu0 %v1525
        %1963 = vmatpush.bf16.msra.mxu0 %v1521
        %1964 = vmatpush.bf16.msra.mxu0 %v1517
        %1965 = vmatmul.bf16.gmra.mxu0 %v609
        %v1966 = vpop.f32.mrf.mxu0
        %v1967 = vadd.f32 %v1953, %v1966
        %v1968 = vpop.f32.mrf.mxu0
        %v1969 = vadd.f32 %v1955, %v1968
        %1970 = vdwg.mxu0
        %1971 = vmatpush.bf16.msra.mxu0 %v1577
        %1972 = vmatpush.bf16.msra.mxu0 %v1573
        %1973 = vmatpush.bf16.msra.mxu0 %v1569
        %1974 = vmatpush.bf16.msra.mxu0 %v1565
        %1975 = vmatpush.bf16.msra.mxu0 %v1561
        %1976 = vmatpush.bf16.msra.mxu0 %v1557
        %1977 = vmatpush.bf16.msra.mxu0 %v1553
        %1978 = vmatpush.bf16.msra.mxu0 %v1549
        %1979 = vmatmul.bf16.gmra.mxu0 %v610
        %v1980 = vpop.f32.mrf.mxu0
        %v1981 = vadd.f32 %v1967, %v1980
        %v1982 = vpop.f32.mrf.mxu0
        %v1983 = vadd.f32 %v1969, %v1982
        %1984 = vdwg.mxu0
        %1985 = vmatpush.bf16.msra.mxu0 %v1609
        %1986 = vmatpush.bf16.msra.mxu0 %v1605
        %1987 = vmatpush.bf16.msra.mxu0 %v1601
        %1988 = vmatpush.bf16.msra.mxu0 %v1597
        %1989 = vmatpush.bf16.msra.mxu0 %v1593
        %1990 = vmatpush.bf16.msra.mxu0 %v1589
        %1991 = vmatpush.bf16.msra.mxu0 %v1585
        %1992 = vmatpush.bf16.msra.mxu0 %v1581
        %1993 = vmatmul.bf16.gmra.mxu0 %v611
        %v1994 = vpop.f32.mrf.mxu0
        %v1995 = vadd.f32 %v1981, %v1994
        %v1996 = vpop.f32.mrf.mxu0
        %v1997 = vadd.f32 %v1983, %v1996
        %1998 = vdwg.mxu0
        %1999 = vmatpush.bf16.msra.mxu0 %v1641
        %2000 = vmatpush.bf16.msra.mxu0 %v1637
        %2001 = vmatpush.bf16.msra.mxu0 %v1633
        %2002 = vmatpush.bf16.msra.mxu0 %v1629
        %2003 = vmatpush.bf16.msra.mxu0 %v1625
        %2004 = vmatpush.bf16.msra.mxu0 %v1621
        %2005 = vmatpush.bf16.msra.mxu0 %v1617
        %2006 = vmatpush.bf16.msra.mxu0 %v1613
        %2007 = vmatmul.bf16.gmra.mxu0 %v612
        %v2008 = vpop.f32.mrf.mxu0
        %v2009 = vadd.f32 %v1995, %v2008
        %v2010 = vpop.f32.mrf.mxu0
        %v2011 = vadd.f32 %v1997, %v2010
        %2012 = vdwg.mxu0
        %2013 = vmatpush.bf16.msra.mxu0 %v1418
        %2014 = vmatpush.bf16.msra.mxu0 %v1414
        %2015 = vmatpush.bf16.msra.mxu0 %v1410
        %2016 = vmatpush.bf16.msra.mxu0 %v1406
        %2017 = vmatpush.bf16.msra.mxu0 %v1402
        %2018 = vmatpush.bf16.msra.mxu0 %v1398
        %2019 = vmatpush.bf16.msra.mxu0 %v1394
        %2020 = vmatpush.bf16.msra.mxu0 %v1390
        %2021 = vmatmul.bf16.gmra.mxu0 %v605
        %v2022 = vpop.f32.mrf.mxu0
        %v2023 = vadd.f32 0.0, %v2022
        %v2024 = vpop.f32.mrf.mxu0
        %v2025 = vadd.f32 0.0, %v2024
        %2026 = vdwg.mxu0
        %2027 = vmatpush.bf16.msra.mxu0 %v1450
        %2028 = vmatpush.bf16.msra.mxu0 %v1446
        %2029 = vmatpush.bf16.msra.mxu0 %v1442
        %2030 = vmatpush.bf16.msra.mxu0 %v1438
        %2031 = vmatpush.bf16.msra.mxu0 %v1434
        %2032 = vmatpush.bf16.msra.mxu0 %v1430
        %2033 = vmatpush.bf16.msra.mxu0 %v1426
        %2034 = vmatpush.bf16.msra.mxu0 %v1422
        %2035 = vmatmul.bf16.gmra.mxu0 %v606
        %v2036 = vpop.f32.mrf.mxu0
        %v2037 = vadd.f32 %v2023, %v2036
        %v2038 = vpop.f32.mrf.mxu0
        %v2039 = vadd.f32 %v2025, %v2038
        %2040 = vdwg.mxu0
        %2041 = vmatpush.bf16.msra.mxu0 %v1482
        %2042 = vmatpush.bf16.msra.mxu0 %v1478
        %2043 = vmatpush.bf16.msra.mxu0 %v1474
        %2044 = vmatpush.bf16.msra.mxu0 %v1470
        %2045 = vmatpush.bf16.msra.mxu0 %v1466
        %2046 = vmatpush.bf16.msra.mxu0 %v1462
        %2047 = vmatpush.bf16.msra.mxu0 %v1458
        %2048 = vmatpush.bf16.msra.mxu0 %v1454
        %2049 = vmatmul.bf16.gmra.mxu0 %v607
        %v2050 = vpop.f32.mrf.mxu0
        %v2051 = vadd.f32 %v2037, %v2050
        %v2052 = vpop.f32.mrf.mxu0
        %v2053 = vadd.f32 %v2039, %v2052
        %2054 = vdwg.mxu0
        %2055 = vmatpush.bf16.msra.mxu0 %v1514
        %2056 = vmatpush.bf16.msra.mxu0 %v1510
        %2057 = vmatpush.bf16.msra.mxu0 %v1506
        %2058 = vmatpush.bf16.msra.mxu0 %v1502
        %2059 = vmatpush.bf16.msra.mxu0 %v1498
        %2060 = vmatpush.bf16.msra.mxu0 %v1494
        %2061 = vmatpush.bf16.msra.mxu0 %v1490
        %2062 = vmatpush.bf16.msra.mxu0 %v1486
        %2063 = vmatmul.bf16.gmra.mxu0 %v608
        %v2064 = vpop.f32.mrf.mxu0
        %v2065 = vadd.f32 %v2051, %v2064
        %v2066 = vpop.f32.mrf.mxu0
        %v2067 = vadd.f32 %v2053, %v2066
        %2068 = vdwg.mxu0
        %2069 = vmatpush.bf16.msra.mxu0 %v1546
        %2070 = vmatpush.bf16.msra.mxu0 %v1542
        %2071 = vmatpush.bf16.msra.mxu0 %v1538
        %2072 = vmatpush.bf16.msra.mxu0 %v1534
        %2073 = vmatpush.bf16.msra.mxu0 %v1530
        %2074 = vmatpush.bf16.msra.mxu0 %v1526
        %2075 = vmatpush.bf16.msra.mxu0 %v1522
        %2076 = vmatpush.bf16.msra.mxu0 %v1518
        %2077 = vmatmul.bf16.gmra.mxu0 %v609
        %v2078 = vpop.f32.mrf.mxu0
        %v2079 = vadd.f32 %v2065, %v2078
        %v2080 = vpop.f32.mrf.mxu0
        %v2081 = vadd.f32 %v2067, %v2080
        %2082 = vdwg.mxu0
        %2083 = vmatpush.bf16.msra.mxu0 %v1578
        %2084 = vmatpush.bf16.msra.mxu0 %v1574
        %2085 = vmatpush.bf16.msra.mxu0 %v1570
        %2086 = vmatpush.bf16.msra.mxu0 %v1566
        %2087 = vmatpush.bf16.msra.mxu0 %v1562
        %2088 = vmatpush.bf16.msra.mxu0 %v1558
        %2089 = vmatpush.bf16.msra.mxu0 %v1554
        %2090 = vmatpush.bf16.msra.mxu0 %v1550
        %2091 = vmatmul.bf16.gmra.mxu0 %v610
        %v2092 = vpop.f32.mrf.mxu0
        %v2093 = vadd.f32 %v2079, %v2092
        %v2094 = vpop.f32.mrf.mxu0
        %v2095 = vadd.f32 %v2081, %v2094
        %2096 = vdwg.mxu0
        %2097 = vmatpush.bf16.msra.mxu0 %v1610
        %2098 = vmatpush.bf16.msra.mxu0 %v1606
        %2099 = vmatpush.bf16.msra.mxu0 %v1602
        %2100 = vmatpush.bf16.msra.mxu0 %v1598
        %2101 = vmatpush.bf16.msra.mxu0 %v1594
        %2102 = vmatpush.bf16.msra.mxu0 %v1590
        %2103 = vmatpush.bf16.msra.mxu0 %v1586
        %2104 = vmatpush.bf16.msra.mxu0 %v1582
        %2105 = vmatmul.bf16.gmra.mxu0 %v611
        %v2106 = vpop.f32.mrf.mxu0
        %v2107 = vadd.f32 %v2093, %v2106
        %v2108 = vpop.f32.mrf.mxu0
        %v2109 = vadd.f32 %v2095, %v2108
        %2110 = vdwg.mxu0
        %2111 = vmatpush.bf16.msra.mxu0 %v1642
        %2112 = vmatpush.bf16.msra.mxu0 %v1638
        %2113 = vmatpush.bf16.msra.mxu0 %v1634
        %2114 = vmatpush.bf16.msra.mxu0 %v1630
        %2115 = vmatpush.bf16.msra.mxu0 %v1626
        %2116 = vmatpush.bf16.msra.mxu0 %v1622
        %2117 = vmatpush.bf16.msra.mxu0 %v1618
        %2118 = vmatpush.bf16.msra.mxu0 %v1614
        %2119 = vmatmul.bf16.gmra.mxu0 %v612
        %v2120 = vpop.f32.mrf.mxu0
        %v2121 = vadd.f32 %v2107, %v2120
        %v2122 = vpop.f32.mrf.mxu0
        %v2123 = vadd.f32 %v2109, %v2122
        %2124 = vdwg.mxu0
        %2125 = vmatpush.bf16.msra.mxu0 %v1419
        %2126 = vmatpush.bf16.msra.mxu0 %v1415
        %2127 = vmatpush.bf16.msra.mxu0 %v1411
        %2128 = vmatpush.bf16.msra.mxu0 %v1407
        %2129 = vmatpush.bf16.msra.mxu0 %v1403
        %2130 = vmatpush.bf16.msra.mxu0 %v1399
        %2131 = vmatpush.bf16.msra.mxu0 %v1395
        %2132 = vmatpush.bf16.msra.mxu0 %v1391
        %2133 = vmatmul.bf16.gmra.mxu0 %v605
        %v2134 = vpop.f32.mrf.mxu0
        %v2135 = vadd.f32 0.0, %v2134
        %v2136 = vpop.f32.mrf.mxu0
        %v2137 = vadd.f32 0.0, %v2136
        %2138 = vdwg.mxu0
        %2139 = vmatpush.bf16.msra.mxu0 %v1451
        %2140 = vmatpush.bf16.msra.mxu0 %v1447
        %2141 = vmatpush.bf16.msra.mxu0 %v1443
        %2142 = vmatpush.bf16.msra.mxu0 %v1439
        %2143 = vmatpush.bf16.msra.mxu0 %v1435
        %2144 = vmatpush.bf16.msra.mxu0 %v1431
        %2145 = vmatpush.bf16.msra.mxu0 %v1427
        %2146 = vmatpush.bf16.msra.mxu0 %v1423
        %2147 = vmatmul.bf16.gmra.mxu0 %v606
        %v2148 = vpop.f32.mrf.mxu0
        %v2149 = vadd.f32 %v2135, %v2148
        %v2150 = vpop.f32.mrf.mxu0
        %v2151 = vadd.f32 %v2137, %v2150
        %2152 = vdwg.mxu0
        %2153 = vmatpush.bf16.msra.mxu0 %v1483
        %2154 = vmatpush.bf16.msra.mxu0 %v1479
        %2155 = vmatpush.bf16.msra.mxu0 %v1475
        %2156 = vmatpush.bf16.msra.mxu0 %v1471
        %2157 = vmatpush.bf16.msra.mxu0 %v1467
        %2158 = vmatpush.bf16.msra.mxu0 %v1463
        %2159 = vmatpush.bf16.msra.mxu0 %v1459
        %2160 = vmatpush.bf16.msra.mxu0 %v1455
        %2161 = vmatmul.bf16.gmra.mxu0 %v607
        %v2162 = vpop.f32.mrf.mxu0
        %v2163 = vadd.f32 %v2149, %v2162
        %v2164 = vpop.f32.mrf.mxu0
        %v2165 = vadd.f32 %v2151, %v2164
        %2166 = vdwg.mxu0
        %2167 = vmatpush.bf16.msra.mxu0 %v1515
        %2168 = vmatpush.bf16.msra.mxu0 %v1511
        %2169 = vmatpush.bf16.msra.mxu0 %v1507
        %2170 = vmatpush.bf16.msra.mxu0 %v1503
        %2171 = vmatpush.bf16.msra.mxu0 %v1499
        %2172 = vmatpush.bf16.msra.mxu0 %v1495
        %2173 = vmatpush.bf16.msra.mxu0 %v1491
        %2174 = vmatpush.bf16.msra.mxu0 %v1487
        %2175 = vmatmul.bf16.gmra.mxu0 %v608
        %v2176 = vpop.f32.mrf.mxu0
        %v2177 = vadd.f32 %v2163, %v2176
        %v2178 = vpop.f32.mrf.mxu0
        %v2179 = vadd.f32 %v2165, %v2178
        %2180 = vdwg.mxu0
        %2181 = vmatpush.bf16.msra.mxu0 %v1547
        %2182 = vmatpush.bf16.msra.mxu0 %v1543
        %2183 = vmatpush.bf16.msra.mxu0 %v1539
        %2184 = vmatpush.bf16.msra.mxu0 %v1535
        %2185 = vmatpush.bf16.msra.mxu0 %v1531
        %2186 = vmatpush.bf16.msra.mxu0 %v1527
        %2187 = vmatpush.bf16.msra.mxu0 %v1523
        %2188 = vmatpush.bf16.msra.mxu0 %v1519
        %2189 = vmatmul.bf16.gmra.mxu0 %v609
        %v2190 = vpop.f32.mrf.mxu0
        %v2191 = vadd.f32 %v2177, %v2190
        %v2192 = vpop.f32.mrf.mxu0
        %v2193 = vadd.f32 %v2179, %v2192
        %2194 = vdwg.mxu0
        %2195 = vmatpush.bf16.msra.mxu0 %v1579
        %2196 = vmatpush.bf16.msra.mxu0 %v1575
        %2197 = vmatpush.bf16.msra.mxu0 %v1571
        %2198 = vmatpush.bf16.msra.mxu0 %v1567
        %2199 = vmatpush.bf16.msra.mxu0 %v1563
        %2200 = vmatpush.bf16.msra.mxu0 %v1559
        %2201 = vmatpush.bf16.msra.mxu0 %v1555
        %2202 = vmatpush.bf16.msra.mxu0 %v1551
        %2203 = vmatmul.bf16.gmra.mxu0 %v610
        %v2204 = vpop.f32.mrf.mxu0
        %v2205 = vadd.f32 %v2191, %v2204
        %v2206 = vpop.f32.mrf.mxu0
        %v2207 = vadd.f32 %v2193, %v2206
        %2208 = vdwg.mxu0
        %2209 = vmatpush.bf16.msra.mxu0 %v1611
        %2210 = vmatpush.bf16.msra.mxu0 %v1607
        %2211 = vmatpush.bf16.msra.mxu0 %v1603
        %2212 = vmatpush.bf16.msra.mxu0 %v1599
        %2213 = vmatpush.bf16.msra.mxu0 %v1595
        %2214 = vmatpush.bf16.msra.mxu0 %v1591
        %2215 = vmatpush.bf16.msra.mxu0 %v1587
        %2216 = vmatpush.bf16.msra.mxu0 %v1583
        %2217 = vmatmul.bf16.gmra.mxu0 %v611
        %v2218 = vpop.f32.mrf.mxu0
        %v2219 = vadd.f32 %v2205, %v2218
        %v2220 = vpop.f32.mrf.mxu0
        %v2221 = vadd.f32 %v2207, %v2220
        %2222 = vdwg.mxu0
        %2223 = vmatpush.bf16.msra.mxu0 %v1643
        %2224 = vmatpush.bf16.msra.mxu0 %v1639
        %2225 = vmatpush.bf16.msra.mxu0 %v1635
        %2226 = vmatpush.bf16.msra.mxu0 %v1631
        %2227 = vmatpush.bf16.msra.mxu0 %v1627
        %2228 = vmatpush.bf16.msra.mxu0 %v1623
        %2229 = vmatpush.bf16.msra.mxu0 %v1619
        %2230 = vmatpush.bf16.msra.mxu0 %v1615
        %2231 = vmatmul.bf16.gmra.mxu0 %v612
        %v2232 = vpop.f32.mrf.mxu0
        %v2233 = vadd.f32 %v2219, %v2232
        %v2234 = vpop.f32.mrf.mxu0
        %v2235 = vadd.f32 %v2221, %v2234
        %2236 = vdwg.mxu0
        %2237 = vmatpush.bf16.msra.mxu0 %v1420
        %2238 = vmatpush.bf16.msra.mxu0 %v1416
        %2239 = vmatpush.bf16.msra.mxu0 %v1412
        %2240 = vmatpush.bf16.msra.mxu0 %v1408
        %2241 = vmatpush.bf16.msra.mxu0 %v1404
        %2242 = vmatpush.bf16.msra.mxu0 %v1400
        %2243 = vmatpush.bf16.msra.mxu0 %v1396
        %2244 = vmatpush.bf16.msra.mxu0 %v1392
        %2245 = vmatmul.bf16.gmra.mxu0 %v605
        %v2246 = vpop.f32.mrf.mxu0
        %v2247 = vadd.f32 0.0, %v2246
        %v2248 = vpop.f32.mrf.mxu0
        %v2249 = vadd.f32 0.0, %v2248
        %2250 = vdwg.mxu0
        %2251 = vmatpush.bf16.msra.mxu0 %v1452
        %2252 = vmatpush.bf16.msra.mxu0 %v1448
        %2253 = vmatpush.bf16.msra.mxu0 %v1444
        %2254 = vmatpush.bf16.msra.mxu0 %v1440
        %2255 = vmatpush.bf16.msra.mxu0 %v1436
        %2256 = vmatpush.bf16.msra.mxu0 %v1432
        %2257 = vmatpush.bf16.msra.mxu0 %v1428
        %2258 = vmatpush.bf16.msra.mxu0 %v1424
        %2259 = vmatmul.bf16.gmra.mxu0 %v606
        %v2260 = vpop.f32.mrf.mxu0
        %v2261 = vadd.f32 %v2247, %v2260
        %v2262 = vpop.f32.mrf.mxu0
        %v2263 = vadd.f32 %v2249, %v2262
        %2264 = vdwg.mxu0
        %2265 = vmatpush.bf16.msra.mxu0 %v1484
        %2266 = vmatpush.bf16.msra.mxu0 %v1480
        %2267 = vmatpush.bf16.msra.mxu0 %v1476
        %2268 = vmatpush.bf16.msra.mxu0 %v1472
        %2269 = vmatpush.bf16.msra.mxu0 %v1468
        %2270 = vmatpush.bf16.msra.mxu0 %v1464
        %2271 = vmatpush.bf16.msra.mxu0 %v1460
        %2272 = vmatpush.bf16.msra.mxu0 %v1456
        %2273 = vmatmul.bf16.gmra.mxu0 %v607
        %v2274 = vpop.f32.mrf.mxu0
        %v2275 = vadd.f32 %v2261, %v2274
        %v2276 = vpop.f32.mrf.mxu0
        %v2277 = vadd.f32 %v2263, %v2276
        %2278 = vdwg.mxu0
        %2279 = vmatpush.bf16.msra.mxu0 %v1516
        %2280 = vmatpush.bf16.msra.mxu0 %v1512
        %2281 = vmatpush.bf16.msra.mxu0 %v1508
        %2282 = vmatpush.bf16.msra.mxu0 %v1504
        %2283 = vmatpush.bf16.msra.mxu0 %v1500
        %2284 = vmatpush.bf16.msra.mxu0 %v1496
        %2285 = vmatpush.bf16.msra.mxu0 %v1492
        %2286 = vmatpush.bf16.msra.mxu0 %v1488
        %2287 = vmatmul.bf16.gmra.mxu0 %v608
        %v2288 = vpop.f32.mrf.mxu0
        %v2289 = vadd.f32 %v2275, %v2288
        %v2290 = vpop.f32.mrf.mxu0
        %v2291 = vadd.f32 %v2277, %v2290
        %2292 = vdwg.mxu0
        %2293 = vmatpush.bf16.msra.mxu0 %v1548
        %2294 = vmatpush.bf16.msra.mxu0 %v1544
        %2295 = vmatpush.bf16.msra.mxu0 %v1540
        %2296 = vmatpush.bf16.msra.mxu0 %v1536
        %2297 = vmatpush.bf16.msra.mxu0 %v1532
        %2298 = vmatpush.bf16.msra.mxu0 %v1528
        %2299 = vmatpush.bf16.msra.mxu0 %v1524
        %2300 = vmatpush.bf16.msra.mxu0 %v1520
        %2301 = vmatmul.bf16.gmra.mxu0 %v609
        %v2302 = vpop.f32.mrf.mxu0
        %v2303 = vadd.f32 %v2289, %v2302
        %v2304 = vpop.f32.mrf.mxu0
        %v2305 = vadd.f32 %v2291, %v2304
        %2306 = vdwg.mxu0
        %2307 = vmatpush.bf16.msra.mxu0 %v1580
        %2308 = vmatpush.bf16.msra.mxu0 %v1576
        %2309 = vmatpush.bf16.msra.mxu0 %v1572
        %2310 = vmatpush.bf16.msra.mxu0 %v1568
        %2311 = vmatpush.bf16.msra.mxu0 %v1564
        %2312 = vmatpush.bf16.msra.mxu0 %v1560
        %2313 = vmatpush.bf16.msra.mxu0 %v1556
        %2314 = vmatpush.bf16.msra.mxu0 %v1552
        %2315 = vmatmul.bf16.gmra.mxu0 %v610
        %v2316 = vpop.f32.mrf.mxu0
        %v2317 = vadd.f32 %v2303, %v2316
        %v2318 = vpop.f32.mrf.mxu0
        %v2319 = vadd.f32 %v2305, %v2318
        %2320 = vdwg.mxu0
        %2321 = vmatpush.bf16.msra.mxu0 %v1612
        %2322 = vmatpush.bf16.msra.mxu0 %v1608
        %2323 = vmatpush.bf16.msra.mxu0 %v1604
        %2324 = vmatpush.bf16.msra.mxu0 %v1600
        %2325 = vmatpush.bf16.msra.mxu0 %v1596
        %2326 = vmatpush.bf16.msra.mxu0 %v1592
        %2327 = vmatpush.bf16.msra.mxu0 %v1588
        %2328 = vmatpush.bf16.msra.mxu0 %v1584
        %2329 = vmatmul.bf16.gmra.mxu0 %v611
        %v2330 = vpop.f32.mrf.mxu0
        %v2331 = vadd.f32 %v2317, %v2330
        %v2332 = vpop.f32.mrf.mxu0
        %v2333 = vadd.f32 %v2319, %v2332
        %2334 = vdwg.mxu0
        %2335 = vmatpush.bf16.msra.mxu0 %v1644
        %2336 = vmatpush.bf16.msra.mxu0 %v1640
        %2337 = vmatpush.bf16.msra.mxu0 %v1636
        %2338 = vmatpush.bf16.msra.mxu0 %v1632
        %2339 = vmatpush.bf16.msra.mxu0 %v1628
        %2340 = vmatpush.bf16.msra.mxu0 %v1624
        %2341 = vmatpush.bf16.msra.mxu0 %v1620
        %2342 = vmatpush.bf16.msra.mxu0 %v1616
        %2343 = vmatmul.bf16.gmra.mxu0 %v612
        %v2344 = vpop.f32.mrf.mxu0
        %v2345 = vadd.f32 %v2331, %v2344
        %v2346 = vpop.f32.mrf.mxu0
        %v2347 = vadd.f32 %v2333, %v2346
        %2348 = vdwg.mxu0
        %v2349 = vadd.f32 %v309, %v2009
        %v2350 = vadd.f32 %v310, %v2121
        %v2351 = vadd.f32 %v311, %v2233
        %v2352 = vadd.f32 %v312, %v2345
        %v2353 = vadd.f32 %v313, %v2011
        %v2354 = vadd.f32 %v314, %v2123
        %v2355 = vadd.f32 %v315, %v2235
        %v2356 = vadd.f32 %v316, %v2347
        %2357 = vst [vmem:[#allocation2] sm:$0xff] %v2349
        %2358 = vst [vmem:[#allocation2 + $0x8] sm:$0xff] %v2350
        %2359 = vst [vmem:[#allocation2 + $0x10] sm:$0xff] %v2351
        %2360 = vst [vmem:[#allocation2 + $0x18] sm:$0xff] %v2352
        %2361 = vst [vmem:[#allocation2 + $0x20] sm:$0xff] %v2353
        %2362 = vst [vmem:[#allocation2 + $0x28] sm:$0xff] %v2354
        %2363 = vst [vmem:[#allocation2 + $0x30] sm:$0xff] %v2355
        %2364 = vst [vmem:[#allocation2 + $0x38] sm:$0xff] %v2356
        %p2365 = scmp.eq.s32.totalorder %s24, 12
        // Predicated region
        $region64: #{branch_0_fun.10} parent=50 // pred_check
          %p2366 = pneg %p2365
        $region65: #{branch_0_fun.10} parent=50 // pred_check_branch
          %2368 = sbr.rel (%p2366) target = $region67
        $region66: #{branch_0_fun.10} parent=50 // pred_region
          %v2369 = vld [vmem:[#allocation2] sm:$0xff]
          %v2370 = vld [vmem:[#allocation2 + $0x8] sm:$0xff]
          %v2371 = vld [vmem:[#allocation2 + $0x10] sm:$0xff]
          %v2372 = vld [vmem:[#allocation2 + $0x18] sm:$0xff]
          %v2373 = vld [vmem:[#allocation2 + $0x20] sm:$0xff]
          %v2374 = vld [vmem:[#allocation2 + $0x28] sm:$0xff]
          %v2375 = vld [vmem:[#allocation2 + $0x30] sm:$0xff]
          %v2376 = vld [vmem:[#allocation2 + $0x38] sm:$0xff]
          %v2377 = vld [vmem:[%s293] sm:$0xf]
          %v2379 = vperm.slane %v2377, 0
          %v2380 = vperm.slane %v2377, 1
          %v2381 = vperm.slane %v2377, 2
          %v2382 = vperm.slane %v2377, 3
          %v2387 = vadd.f32 %v2369, %v2379
          %v2388 = vadd.f32 %v2370, %v2380
          %v2389 = vadd.f32 %v2371, %v2381
          %v2390 = vadd.f32 %v2372, %v2382
          %v2391 = vadd.f32 %v2373, %v2379
          %v2392 = vadd.f32 %v2374, %v2380
          %v2393 = vadd.f32 %v2375, %v2381
          %v2394 = vadd.f32 %v2376, %v2382
          %v2395 = vmax.f32 %v2387, 0.0
          %v2396 = vmax.f32 %v2388, 0.0
          %v2397 = vmax.f32 %v2389, 0.0
          %v2398 = vmax.f32 %v2390, 0.0
          %v2399 = vmax.f32 %v2391, 0.0
          %v2400 = vmax.f32 %v2392, 0.0
          %v2401 = vmax.f32 %v2393, 0.0
          %v2402 = vmax.f32 %v2394, 0.0
          %v2403 = vpack.c.bf16 %v2396, %v2395
          %v2404 = vpack.c.bf16 %v2398, %v2397
          %v2405 = vpack.c.bf16 %v2400, %v2399
          %v2406 = vpack.c.bf16 %v2402, %v2401
          %2407 = vst [vmem:[%s285] sm:$0xff] %v2403
          %2408 = vst [vmem:[%s285 + $0x8] sm:$0xff] %v2404
          %2409 = vst [vmem:[%s285 + $0x10] sm:$0xff] %v2405
          %2410 = vst [vmem:[%s285 + $0x18] sm:$0xff] %v2406
        $region67: #{branch_0_fun.10} parent=50 // pred_fallthru
          _
        %s2411 = sand.u32 %s128, 1
        %s2412 = sand.u32 %s128, 1
        %s2413 = smul.addr %s2412, 32
        %s2414 = scalar_lea.vmem [#allocation6], %s2413
        // Predicated region
        $region68: #{branch_0_fun.10} parent=50 // pred_check
          %p2415 = pneg %p138
        $region69: #{branch_0_fun.10} parent=50 // pred_check_branch
          %2417 = sbr.rel (%p2415) target = $region71
        $region70: #{branch_0_fun.10} parent=50 // pred_region
          %s2418 = smul.u32 2, %s22
          %s2419 = smul.u32 4, %s23
          %s2420 = smul.addr %s2418, 8
          %s2421 = sadd.s32 %s2419, %s2420
          %s2422 = smul.addr %s2421, 4
          %s2423 = scalar_lea.vmem %s3, %s2422
          // Predicated region
          $region72: #{branch_0_fun.10} parent=70 // pred_check
            _
          $region73: #{branch_0_fun.10} parent=70 // pred_check_branch
            %2425 = sbr.rel (0) target = $region75
          $region74: #{branch_0_fun.10} parent=70 // pred_region
            // Predicated region
            $region76: #{branch_0_fun.10} parent=74 // pred_check
              _
            $region77: #{branch_0_fun.10} parent=74 // pred_check_branch
              %2427 = sbr.rel (0) target = $region79
            $region78: #{branch_0_fun.10} parent=74 // pred_region
              loop: start=0, step=1, limit=1
              $region80: #{branch_0_fun.10} parent=78 // loop_pre_header
                _
              $region81: #{branch_0_fun.10} parent=78 // loop_header
                %s2429 = sphi 0, %s2433
                %p2430 = scmp.ge.s32.totalorder %s2429, 1
                %s2434 = sphi %s2414, %s2414
                %s2435 = sphi %s2423, %s2423
              $region82: #{branch_0_fun.10} parent=78 // loop_header_branch
                %2432 = sbr.rel (%p2430) target = $region86
              $region83: #{branch_0_fun.10} parent=78 // loop_body
                %v2436 = vld [vmem:[%s2434] sm:$0xff]
                %2437 = vst [vmem:[%s2435] sm:$0xff] %v2436
                %v2438 = vld [vmem:[%s2434 + $0x8] sm:$0xff]
                %2439 = vst [vmem:[%s2435 + $0x8] sm:$0xff] %v2438
                %v2440 = vld [vmem:[%s2434 + $0x10] sm:$0xff]
                %2441 = vst [vmem:[%s2435 + $0x20] sm:$0xff] %v2440
                %v2442 = vld [vmem:[%s2434 + $0x18] sm:$0xff]
                %2443 = vst [vmem:[%s2435 + $0x28] sm:$0xff] %v2442
              $region84: #{branch_0_fun.10} parent=78 // loop_footer
                %s2433 = sadd.s32 1, %s2429
              $region85: #{branch_0_fun.10} parent=78 // loop_footer_branch
                %2428 = sbr.rel target = $region81
              $region86: #{branch_0_fun.10} parent=78 // loop_exit
                _
            $region79: #{branch_0_fun.10} parent=74 // pred_fallthru
              _
            // Predicated region
            $region87: #{branch_0_fun.10} parent=74 // pred_check
              _
            $region88: #{branch_0_fun.10} parent=74 // pred_check_branch
              %2445 = sbr.rel target = $region90
            $region89: #{branch_0_fun.10} parent=74 // pred_region
              _
            $region90: #{branch_0_fun.10} parent=74 // pred_fallthru
              _
          $region75: #{branch_0_fun.10} parent=70 // pred_fallthru
            _
          %2446 = vnop
        $region71: #{branch_0_fun.10} parent=50 // pred_fallthru
          _
      $region51: #{branch_0_fun.10} parent=5 // pred_fallthru
        _
      %p2447 = scmp.le.s32.totalorder 2, %s12
      // Predicated region
      $region91: #{branch_0_fun.10} parent=5 // pred_check
        %p2448 = pneg %p2447
      $region92: #{branch_0_fun.10} parent=5 // pred_check_branch
        %2450 = sbr.rel (%p2448) target = $region94
      $region93: #{branch_0_fun.10} parent=5 // pred_region
        %s2451 = ssub.s32 %s12, 2
        // Predicated region
        $region95: #{branch_0_fun.10} parent=93 // pred_check
          %p2452 = pneg %p144
        $region96: #{branch_0_fun.10} parent=93 // pred_check_branch
          %2454 = sbr.rel (%p2452) target = $region98
        $region97: #{branch_0_fun.10} parent=93 // pred_region
          %s2455 = sand.u32 %s129, 1
          %s2456 = sand.u32 %s129, 1
          %s2457 = smul.addr %s2456, 32
          %s2458 = scalar_lea.vmem [#allocation6], %s2457
        $region98: #{branch_0_fun.10} parent=93 // pred_fallthru
          _
      $region94: #{branch_0_fun.10} parent=5 // pred_fallthru
        _
    $region6: #{branch_0_fun.10} parent=1 // loop_footer
      %s16 = sadd.s32 1, %s12
    $region7: #{branch_0_fun.10} parent=1 // loop_footer_branch
      %11 = sbr.rel target = $region3
    $region8: #{branch_0_fun.10} parent=1 // loop_exit
      _
    %2459 = vsyncpa [#allocation5], 1
    %s2460 = scalar_lea.sflag [#allocation5], 1
    %2461 = vsyncpa %s2460, 1

// kernel: branch_0_fun.6
$region0: #{branch_0_fun.6}
  #allocation0 [shape = 'u32[]', space=smem, size = 0x4, offset = 0x4, fixed_abs, tag = 'smem constant byte address 0x4 - core index']
  #allocation1 [shape = 'u32[72,128]{1,0:T(1,128)}', space=vmem, size = 0x9000, scoped, tag = 'internal scratch']
  %s0 = inlined_call_operand.vmem [shape: bf16[1536,640], index: 0, kind: input, shape index: {}]
  %s1 = inlined_call_operand.vmem [shape: bf16[640,128], index: 1, kind: input, shape index: {}]
  %s2 = inlined_call_operand.vmem [shape: f32[1,128], index: 2, kind: input, shape index: {}]
  %s3 = inlined_call_operand.vmem [shape: bf16[1536,128], index: 3, kind: output, shape index: {}]
  %s4 = sld [smem:[#allocation0]]
  $region45: #{branch_0_fun.6} parent=0
    _
  %s6 = ssub.s32 1, %s4
  %s7 = scalar_select 0, %s6, %s4
  loop: start=0, step=1, limit=8
  $region2: #{branch_0_fun.6} parent=0 // loop_pre_header
    _
  $region3: #{branch_0_fun.6} parent=0 // loop_header
    %s9 = sphi 0, %s13
    %p10 = scmp.ge.s32.totalorder %s9, 8
    %s16 = sphi 0, %s28
    %s17 = sphi 0, %s24
    %s18 = sphi 0, %s16
    %s19 = sphi 0, %s17
    %s20 = sphi 0, %s18
    %s21 = sphi 0, %s19
    %s31 = sphi 0, %s33
    %s34 = sphi 0, %s31
    %s35 = sphi 0, %s34
    %s51 = sphi 0, %s35
    %s57 = sphi 0, %s59
    %s60 = sphi 0, %s57
    %s61 = sphi 0, %s60
    %s77 = sphi 0, %s61
    %s83 = sphi 0, %s85
    %s86 = sphi 0, %s83
    %s87 = sphi 0, %s86
    %s103 = sphi 0, %s87
    %s111 = sphi 0, %s113
    %s114 = sphi 0, %s111
    %s115 = sphi 0, %s114
    %s131 = sphi 0, %s115
  $region4: #{branch_0_fun.6} parent=0 // loop_header_branch
    %12 = sbr.rel (%p10) target = $region8
  $region5: #{branch_0_fun.6} parent=0 // loop_body
    %s14 = ssub.s32 %s9, 1
    %s15 = ssub.s32 %s9, 2
    %s22 = sadd.s32 1, %s17
    %p23 = scmp.ge.s32.totalorder %s22, 1
    %s24 = scalar_select %p23, 0, %s22
    %s25 = sadd.s32 1, %s16
    %s26 = scalar_select %p23, %s25, %s16
    %p27 = scmp.ge.s32.totalorder %s26, 6
    %s28 = scalar_select %p27, 0, %s26
    %s29 = ssub.s32 %s16, %s28
    %p30 = scmp.eq.s32.totalorder %s29, 0
    %s32 = sadd.s32 %s31, 1
    %s33 = scalar_select %p30, %s31, %s32
    %p36 = pneg %p30
    %p37 = scmp.eq.s32.totalorder %s9, 5
    %p38 = por %p36, %p37
    %p39 = scmp.ne.s32.totalorder %s31, %s34
    %p40 = scmp.eq.s32.totalorder %s9, 0
    %p41 = por %p39, %p40
    %p42 = scmp.ne.s32.totalorder %s31, %s34
    %p43 = scmp.eq.s32.totalorder %s14, 5
    %p44 = por %p42, %p43
    %p45 = scmp.ne.s32.totalorder %s34, %s35
    %p46 = scmp.eq.s32.totalorder %s14, 0
    %p47 = por %p45, %p46
    %p48 = scmp.ne.s32.totalorder %s34, %s35
    %p49 = scmp.eq.s32.totalorder %s15, 5
    %p50 = por %p48, %p49
    %p52 = scmp.ne.s32.totalorder %s35, %s51
    %p53 = scmp.eq.s32.totalorder %s15, 0
    %p54 = por %p52, %p53
    %s55 = ssub.s32 %s17, %s24
    %p56 = scmp.eq.s32.totalorder %s55, 0
    %s58 = sadd.s32 %s57, 1
    %s59 = scalar_select %p56, %s57, %s58
    %p62 = pneg %p56
    %p63 = scmp.eq.s32.totalorder %s9, 5
    %p64 = por %p62, %p63
    %p65 = scmp.ne.s32.totalorder %s57, %s60
    %p66 = scmp.eq.s32.totalorder %s9, 0
    %p67 = por %p65, %p66
    %p68 = scmp.ne.s32.totalorder %s57, %s60
    %p69 = scmp.eq.s32.totalorder %s14, 5
    %p70 = por %p68, %p69
    %p71 = scmp.ne.s32.totalorder %s60, %s61
    %p72 = scmp.eq.s32.totalorder %s14, 0
    %p73 = por %p71, %p72
    %p74 = scmp.ne.s32.totalorder %s60, %s61
    %p75 = scmp.eq.s32.totalorder %s15, 5
    %p76 = por %p74, %p75
    %p78 = scmp.ne.s32.totalorder %s61, %s77
    %p79 = scmp.eq.s32.totalorder %s15, 0
    %p80 = por %p78, %p79
    %s81 = ssub.s32 %s17, %s24
    %p82 = scmp.eq.s32.totalorder %s81, 0
    %s84 = sadd.s32 %s83, 1
    %s85 = scalar_select %p82, %s83, %s84
    %p88 = pneg %p82
    %p89 = scmp.eq.s32.totalorder %s9, 5
    %p90 = por %p88, %p89
    %p91 = scmp.ne.s32.totalorder %s83, %s86
    %p92 = scmp.eq.s32.totalorder %s9, 0
    %p93 = por %p91, %p92
    %p94 = scmp.ne.s32.totalorder %s83, %s86
    %p95 = scmp.eq.s32.totalorder %s14, 5
    %p96 = por %p94, %p95
    %p97 = scmp.ne.s32.totalorder %s86, %s87
    %p98 = scmp.eq.s32.totalorder %s14, 0
    %p99 = por %p97, %p98
    %p100 = scmp.ne.s32.totalorder %s86, %s87
    %p101 = scmp.eq.s32.totalorder %s15, 5
    %p102 = por %p100, %p101
    %p104 = scmp.ne.s32.totalorder %s87, %s103
    %p105 = scmp.eq.s32.totalorder %s15, 0
    %p106 = por %p104, %p105
    %s107 = ssub.s32 %s16, %s28
    %s108 = ssub.s32 %s17, %s24
    %s109 = sor.u32 %s107, %s108
    %p110 = scmp.eq.s32.totalorder %s109, 0
    %s112 = sadd.s32 %s111, 1
    %s113 = scalar_select %p110, %s111, %s112
    %p116 = pneg %p110
    %p117 = scmp.eq.s32.totalorder %s9, 5
    %p118 = por %p116, %p117
    %p119 = scmp.ne.s32.totalorder %s111, %s114
    %p120 = scmp.eq.s32.totalorder %s9, 0
    %p121 = por %p119, %p120
    %p122 = scmp.ne.s32.totalorder %s111, %s114
    %p123 = scmp.eq.s32.totalorder %s14, 5
    %p124 = por %p122, %p123
    %p125 = scmp.ne.s32.totalorder %s114, %s115
    %p126 = scmp.eq.s32.totalorder %s14, 0
    %p127 = por %p125, %p126
    %p128 = scmp.ne.s32.totalorder %s114, %s115
    %p129 = scmp.eq.s32.totalorder %s15, 5
    %p130 = por %p128, %p129
    %p132 = scmp.ne.s32.totalorder %s115, %s131
    %p133 = scmp.eq.s32.totalorder %s15, 0
    %p134 = por %p132, %p133
    %p135 = scmp.le.s32.totalorder 1, %s9
    %p136 = scmp.lt.s32.totalorder %s9, 7
    %p137 = pnand %p135, %p136
    %p138 = pneg %p137
    // Predicated region
    $region9: #{branch_0_fun.6} parent=5 // pred_check
      _
    $region10: #{branch_0_fun.6} parent=5 // pred_check_branch
      %140 = sbr.rel (%p137) target = $region12
    $region11: #{branch_0_fun.6} parent=5 // pred_region
      %s141 = ssub.s32 %s9, 1
      // Predicated region
      $region13: #{branch_0_fun.6} parent=11 // pred_check
        %p142 = pneg %p73
      $region14: #{branch_0_fun.6} parent=11 // pred_check_branch
        %144 = sbr.rel (%p142) target = $region16
      $region15: #{branch_0_fun.6} parent=11 // pred_region
        %p145 = scmp.lt.s32.totalorder %s19, 0
        %s146 = scalar_select %p145, %s19, 0
        %s147 = smul.addr %s146, 4
        %s148 = scalar_lea.vmem %s1, %s147
      $region16: #{branch_0_fun.6} parent=11 // pred_fallthru
        _
      // Predicated region
      $region17: #{branch_0_fun.6} parent=11 // pred_check
        %p149 = pneg %p99
      $region18: #{branch_0_fun.6} parent=11 // pred_check_branch
        %151 = sbr.rel (%p149) target = $region20
      $region19: #{branch_0_fun.6} parent=11 // pred_region
        %p152 = scmp.lt.s32.totalorder %s19, 0
        %s153 = scalar_select %p152, %s19, 0
        %s154 = scalar_lea.vmem %s2, %s153
      $region20: #{branch_0_fun.6} parent=11 // pred_fallthru
        _
    $region12: #{branch_0_fun.6} parent=5 // pred_fallthru
      _
    %p155 = scmp.lt.s32.totalorder %s9, 6
    // Predicated region
    $region21: #{branch_0_fun.6} parent=5 // pred_check
      %p156 = pneg %p155
    $region22: #{branch_0_fun.6} parent=5 // pred_check_branch
      %158 = sbr.rel (%p156) target = $region24
    $region23: #{branch_0_fun.6} parent=5 // pred_region
      // Predicated region
      $region25: #{branch_0_fun.6} parent=23 // pred_check
        %p159 = pneg %p41
      $region26: #{branch_0_fun.6} parent=23 // pred_check_branch
        %161 = sbr.rel (%p159) target = $region28
      $region27: #{branch_0_fun.6} parent=23 // pred_region
        %s162 = smul.u32 32, %s16
        %p163 = scmp.lt.s32.totalorder %s162, 191
        %s164 = scalar_select %p163, %s162, 191
        %s165 = smul.addr %s164, 5
        %s166 = smul.addr %s165, 4
        %s167 = scalar_lea.vmem %s0, %s166
        %s168 = smul.u32 32, %s16
      $region28: #{branch_0_fun.6} parent=23 // pred_fallthru
        _
    $region24: #{branch_0_fun.6} parent=5 // pred_fallthru
      _
    %p169 = scmp.le.s32.totalorder 1, %s9
    %p170 = scmp.lt.s32.totalorder %s9, 7
    %p171 = pnand %p169, %p170
    %p172 = pneg %p171
    // Predicated region
    $region29: #{branch_0_fun.6} parent=5 // pred_check
      _
    $region30: #{branch_0_fun.6} parent=5 // pred_check_branch
      %174 = sbr.rel (%p171) target = $region32
    $region31: #{branch_0_fun.6} parent=5 // pred_region
      %s175 = ssub.s32 %s9, 1
      %s176 = smul.u32 32, %s18
      %p177 = scmp.lt.s32.totalorder %s176, 191
      %s178 = scalar_select %p177, %s176, 191
      %s179 = smul.addr %s178, 5
      %s180 = smul.addr %s179, 4
      %s181 = scalar_lea.vmem %s0, %s180
      %p182 = pneg %p47
      %p183 = pneg %p44
      %p184 = scmp.lt.s32.totalorder %s19, 0
      %s185 = scalar_select %p184, %s19, 0
      %s186 = smul.addr %s185, 4
      %s187 = scalar_lea.vmem %s1, %s186
      %p188 = pneg %p73
      %p189 = pneg %p70
      %p190 = scmp.lt.s32.totalorder %s19, 0
      %s191 = scalar_select %p190, %s19, 0
      %s192 = scalar_lea.vmem %s2, %s191
      %p193 = pneg %p99
      %p194 = pneg %p96
      %p195 = pneg %p127
      %p196 = pneg %p124
      %s197 = smul.u32 32, %s18
      %p198 = scmp.lt.s32.totalorder %s197, 191
      %s199 = scalar_select %p198, %s197, 191
      %p200 = scmp.lt.s32.totalorder %s19, 0
      %s201 = scalar_select %p200, %s19, 0
      %s202 = sadd.s32 %s201, %s199
      %s203 = smul.addr %s202, 4
      %s204 = scalar_lea.vmem %s3, %s203
      %s205 = smul.u32 32, %s18
      %p206 = scmp.lt.s32.totalorder %s205, 191
      %s207 = scalar_select %p206, %s205, 191
      %s208 = smul.addr %s207, 5
      %s209 = smul.addr %s208, 4
      %s210 = scalar_lea.vmem %s0, %s209
      %s211 = smul.u32 32, %s18
      %p212 = scmp.lt.s32.totalorder %s19, 0
      %s213 = scalar_select %p212, %s19, 0
      %s214 = smul.addr %s213, 4
      %s215 = scalar_lea.vmem %s1, %s214
      %p216 = scmp.lt.s32.totalorder %s19, 0
      %s217 = scalar_select %p216, %s19, 0
      %s218 = scalar_lea.vmem %s2, %s217
      %s219 = smul.u32 32, %s18
      %p220 = scmp.lt.s32.totalorder %s219, 191
      %s221 = scalar_select %p220, %s219, 191
      %p222 = scmp.lt.s32.totalorder %s19, 0
      %s223 = scalar_select %p222, %s19, 0
      %s224 = sadd.s32 %s223, %s221
      %s225 = smul.addr %s224, 4
      %s226 = scalar_lea.vmem %s3, %s225
      %s227 = smul.u32 32, %s18
      %v228 = vld [vmem:[%s210] sm:$0xff]
      %v229 = vld [vmem:[%s210 + $0x8] sm:$0xff]
      %v230 = vld [vmem:[%s210 + $0x10] sm:$0xf]
      %v231 = vld [vmem:[%s210 + $0x14] sm:$0xff]
      %v232 = vld [vmem:[%s210 + $0x1c] sm:$0xff]
      %v233 = vld [vmem:[%s210 + $0x24] sm:$0xf]
      %v234 = vld [vmem:[%s210 + $0x28] sm:$0xff]
      %v235 = vld [vmem:[%s210 + $0x30] sm:$0xff]
      %v236 = vld [vmem:[%s210 + $0x38] sm:$0xf]
      %v237 = vld [vmem:[%s210 + $0x3c] sm:$0xff]
      %v238 = vld [vmem:[%s210 + $0x44] sm:$0xff]
      %v239 = vld [vmem:[%s210 + $0x4c] sm:$0xf]
      %v240 = vld [vmem:[%s210 + $0x50] sm:$0xff]
      %v241 = vld [vmem:[%s210 + $0x58] sm:$0xff]
      %v242 = vld [vmem:[%s210 + $0x60] sm:$0xf]
      %v243 = vld [vmem:[%s210 + $0x64] sm:$0xff]
      %v244 = vld [vmem:[%s210 + $0x6c] sm:$0xff]
      %v245 = vld [vmem:[%s210 + $0x74] sm:$0xf]
      %v246 = vld [vmem:[%s210 + $0x78] sm:$0xff]
      %v247 = vld [vmem:[%s210 + $0x80] sm:$0xff]
      %v248 = vld [vmem:[%s210 + $0x88] sm:$0xf]
      %v249 = vld [vmem:[%s210 + $0x8c] sm:$0xff]
      %v250 = vld [vmem:[%s210 + $0x94] sm:$0xff]
      %v251 = vld [vmem:[%s210 + $0x9c] sm:$0xf]
      %v252 = vld [vmem:[%s210 + $0xa0] sm:$0xff]
      %v253 = vld [vmem:[%s210 + $0xa8] sm:$0xff]
      %v254 = vld [vmem:[%s210 + $0xb0] sm:$0xf]
      %v255 = vld [vmem:[%s210 + $0xb4] sm:$0xff]
      %v256 = vld [vmem:[%s210 + $0xbc] sm:$0xff]
      %v257 = vld [vmem:[%s210 + $0xc4] sm:$0xf]
      %v258 = vld [vmem:[%s210 + $0xc8] sm:$0xff]
      %v259 = vld [vmem:[%s210 + $0xd0] sm:$0xff]
      %v260 = vld [vmem:[%s210 + $0xd8] sm:$0xf]
      %v261 = vld [vmem:[%s210 + $0xdc] sm:$0xff]
      %v262 = vld [vmem:[%s210 + $0xe4] sm:$0xff]
      %v263 = vld [vmem:[%s210 + $0xec] sm:$0xf]
      %v264 = vld [vmem:[%s210 + $0xf0] sm:$0xff]
      %v265 = vld [vmem:[%s210 + $0xf8] sm:$0xff]
      %v266 = vld [vmem:[%s210 + $0x100] sm:$0xf]
      %v267 = vld [vmem:[%s210 + $0x104] sm:$0xff]
      %v268 = vld [vmem:[%s210 + $0x10c] sm:$0xff]
      %v269 = vld [vmem:[%s210 + $0x114] sm:$0xf]
      %v270 = vld [vmem:[%s210 + $0x118] sm:$0xff]
      %v271 = vld [vmem:[%s210 + $0x120] sm:$0xff]
      %v272 = vld [vmem:[%s210 + $0x128] sm:$0xf]
      %v273 = vld [vmem:[%s210 + $0x12c] sm:$0xff]
      %v274 = vld [vmem:[%s210 + $0x134] sm:$0xff]
      %v275 = vld [vmem:[%s210 + $0x13c] sm:$0xf]
      %v276 = vld [vmem:[%s210 + $0x140] sm:$0xff]
      %v277 = vld [vmem:[%s210 + $0x148] sm:$0xff]
      %v278 = vld [vmem:[%s210 + $0x150] sm:$0xf]
      %v279 = vld [vmem:[%s210 + $0x154] sm:$0xff]
      %v280 = vld [vmem:[%s210 + $0x15c] sm:$0xff]
      %v281 = vld [vmem:[%s210 + $0x164] sm:$0xf]
      %v282 = vld [vmem:[%s210 + $0x168] sm:$0xff]
      %v283 = vld [vmem:[%s210 + $0x170] sm:$0xff]
      %v284 = vld [vmem:[%s210 + $0x178] sm:$0xf]
      %v285 = vld [vmem:[%s210 + $0x17c] sm:$0xff]
      %v286 = vld [vmem:[%s210 + $0x184] sm:$0xff]
      %v287 = vld [vmem:[%s210 + $0x18c] sm:$0xf]
      %v288 = vld [vmem:[%s210 + $0x190] sm:$0xff]
      %v289 = vld [vmem:[%s210 + $0x198] sm:$0xff]
      %v290 = vld [vmem:[%s210 + $0x1a0] sm:$0xf]
      %v291 = vld [vmem:[%s210 + $0x1a4] sm:$0xff]
      %v292 = vld [vmem:[%s210 + $0x1ac] sm:$0xff]
      %v293 = vld [vmem:[%s210 + $0x1b4] sm:$0xf]
      %v294 = vld [vmem:[%s210 + $0x1b8] sm:$0xff]
      %v295 = vld [vmem:[%s210 + $0x1c0] sm:$0xff]
      %v296 = vld [vmem:[%s210 + $0x1c8] sm:$0xf]
      %v297 = vld [vmem:[%s210 + $0x1cc] sm:$0xff]
      %v298 = vld [vmem:[%s210 + $0x1d4] sm:$0xff]
      %v299 = vld [vmem:[%s210 + $0x1dc] sm:$0xf]
      %v300 = vld [vmem:[%s210 + $0x1e0] sm:$0xff]
      %v301 = vld [vmem:[%s210 + $0x1e8] sm:$0xff]
      %v302 = vld [vmem:[%s210 + $0x1f0] sm:$0xf]
      %v303 = vld [vmem:[%s210 + $0x1f4] sm:$0xff]
      %v304 = vld [vmem:[%s210 + $0x1fc] sm:$0xff]
      %v305 = vld [vmem:[%s210 + $0x204] sm:$0xf]
      %v306 = vld [vmem:[%s210 + $0x208] sm:$0xff]
      %v307 = vld [vmem:[%s210 + $0x210] sm:$0xff]
      %v308 = vld [vmem:[%s210 + $0x218] sm:$0xf]
      %v309 = vld [vmem:[%s210 + $0x21c] sm:$0xff]
      %v310 = vld [vmem:[%s210 + $0x224] sm:$0xff]
      %v311 = vld [vmem:[%s210 + $0x22c] sm:$0xf]
      %v312 = vld [vmem:[%s210 + $0x230] sm:$0xff]
      %v313 = vld [vmem:[%s210 + $0x238] sm:$0xff]
      %v314 = vld [vmem:[%s210 + $0x240] sm:$0xf]
      %v315 = vld [vmem:[%s210 + $0x244] sm:$0xff]
      %v316 = vld [vmem:[%s210 + $0x24c] sm:$0xff]
      %v317 = vld [vmem:[%s210 + $0x254] sm:$0xf]
      %v318 = vld [vmem:[%s210 + $0x258] sm:$0xff]
      %v319 = vld [vmem:[%s210 + $0x260] sm:$0xff]
      %v320 = vld [vmem:[%s210 + $0x268] sm:$0xf]
      %v321 = vld [vmem:[%s210 + $0x26c] sm:$0xff]
      %v322 = vld [vmem:[%s210 + $0x274] sm:$0xff]
      %v323 = vld [vmem:[%s210 + $0x27c] sm:$0xf]
      %v324 = vld [vmem:[%s215] sm:$0xf]
      %v325 = vld [vmem:[%s215 + $0x4] sm:$0xf]
      %v326 = vld [vmem:[%s215 + $0x8] sm:$0xf]
      %v327 = vld [vmem:[%s215 + $0xc] sm:$0xf]
      %v328 = vld [vmem:[%s215 + $0x10] sm:$0xf]
      %v329 = vld [vmem:[%s215 + $0x14] sm:$0xf]
      %v330 = vld [vmem:[%s215 + $0x18] sm:$0xf]
      %v331 = vld [vmem:[%s215 + $0x1c] sm:$0xf]
      %v332 = vld [vmem:[%s215 + $0x20] sm:$0xf]
      %v333 = vld [vmem:[%s215 + $0x24] sm:$0xf]
      %v334 = vld [vmem:[%s215 + $0x28] sm:$0xf]
      %v335 = vld [vmem:[%s215 + $0x2c] sm:$0xf]
      %v336 = vld [vmem:[%s215 + $0x30] sm:$0xf]
      %v337 = vld [vmem:[%s215 + $0x34] sm:$0xf]
      %v338 = vld [vmem:[%s215 + $0x38] sm:$0xf]
      %v339 = vld [vmem:[%s215 + $0x3c] sm:$0xf]
      %v340 = vld [vmem:[%s215 + $0x40] sm:$0xf]
      %v341 = vld [vmem:[%s215 + $0x44] sm:$0xf]
      %v342 = vld [vmem:[%s215 + $0x48] sm:$0xf]
      %v343 = vld [vmem:[%s215 + $0x4c] sm:$0xf]
      %v344 = vld [vmem:[%s215 + $0x50] sm:$0xf]
      %v345 = vld [vmem:[%s215 + $0x54] sm:$0xf]
      %v346 = vld [vmem:[%s215 + $0x58] sm:$0xf]
      %v347 = vld [vmem:[%s215 + $0x5c] sm:$0xf]
      %v348 = vld [vmem:[%s215 + $0x60] sm:$0xf]
      %v349 = vld [vmem:[%s215 + $0x64] sm:$0xf]
      %v350 = vld [vmem:[%s215 + $0x68] sm:$0xf]
      %v351 = vld [vmem:[%s215 + $0x6c] sm:$0xf]
      %v352 = vld [vmem:[%s215 + $0x70] sm:$0xf]
      %v353 = vld [vmem:[%s215 + $0x74] sm:$0xf]
      %v354 = vld [vmem:[%s215 + $0x78] sm:$0xf]
      %v355 = vld [vmem:[%s215 + $0x7c] sm:$0xf]
      %v356 = vld [vmem:[%s215 + $0x80] sm:$0xf]
      %v357 = vld [vmem:[%s215 + $0x84] sm:$0xf]
      %v358 = vld [vmem:[%s215 + $0x88] sm:$0xf]
      %v359 = vld [vmem:[%s215 + $0x8c] sm:$0xf]
      %v360 = vld [vmem:[%s215 + $0x90] sm:$0xf]
      %v361 = vld [vmem:[%s215 + $0x94] sm:$0xf]
      %v362 = vld [vmem:[%s215 + $0x98] sm:$0xf]
      %v363 = vld [vmem:[%s215 + $0x9c] sm:$0xf]
      %v364 = vld [vmem:[%s215 + $0xa0] sm:$0xf]
      %v365 = vld [vmem:[%s215 + $0xa4] sm:$0xf]
      %v366 = vld [vmem:[%s215 + $0xa8] sm:$0xf]
      %v367 = vld [vmem:[%s215 + $0xac] sm:$0xf]
      %v368 = vld [vmem:[%s215 + $0xb0] sm:$0xf]
      %v369 = vld [vmem:[%s215 + $0xb4] sm:$0xf]
      %v370 = vld [vmem:[%s215 + $0xb8] sm:$0xf]
      %v371 = vld [vmem:[%s215 + $0xbc] sm:$0xf]
      %v372 = vld [vmem:[%s215 + $0xc0] sm:$0xf]
      %v373 = vld [vmem:[%s215 + $0xc4] sm:$0xf]
      %v374 = vld [vmem:[%s215 + $0xc8] sm:$0xf]
      %v375 = vld [vmem:[%s215 + $0xcc] sm:$0xf]
      %v376 = vld [vmem:[%s215 + $0xd0] sm:$0xf]
      %v377 = vld [vmem:[%s215 + $0xd4] sm:$0xf]
      %v378 = vld [vmem:[%s215 + $0xd8] sm:$0xf]
      %v379 = vld [vmem:[%s215 + $0xdc] sm:$0xf]
      %v380 = vld [vmem:[%s215 + $0xe0] sm:$0xf]
      %v381 = vld [vmem:[%s215 + $0xe4] sm:$0xf]
      %v382 = vld [vmem:[%s215 + $0xe8] sm:$0xf]
      %v383 = vld [vmem:[%s215 + $0xec] sm:$0xf]
      %v384 = vld [vmem:[%s215 + $0xf0] sm:$0xf]
      %v385 = vld [vmem:[%s215 + $0xf4] sm:$0xf]
      %v386 = vld [vmem:[%s215 + $0xf8] sm:$0xf]
      %v387 = vld [vmem:[%s215 + $0xfc] sm:$0xf]
      %v388 = vld [vmem:[%s215 + $0x100] sm:$0xf]
      %v389 = vld [vmem:[%s215 + $0x104] sm:$0xf]
      %v390 = vld [vmem:[%s215 + $0x108] sm:$0xf]
      %v391 = vld [vmem:[%s215 + $0x10c] sm:$0xf]
      %v392 = vld [vmem:[%s215 + $0x110] sm:$0xf]
      %v393 = vld [vmem:[%s215 + $0x114] sm:$0xf]
      %v394 = vld [vmem:[%s215 + $0x118] sm:$0xf]
      %v395 = vld [vmem:[%s215 + $0x11c] sm:$0xf]
      %v396 = vld [vmem:[%s215 + $0x120] sm:$0xf]
      %v397 = vld [vmem:[%s215 + $0x124] sm:$0xf]
      %v398 = vld [vmem:[%s215 + $0x128] sm:$0xf]
      %v399 = vld [vmem:[%s215 + $0x12c] sm:$0xf]
      %v400 = vld [vmem:[%s215 + $0x130] sm:$0xf]
      %v401 = vld [vmem:[%s215 + $0x134] sm:$0xf]
      %v402 = vld [vmem:[%s215 + $0x138] sm:$0xf]
      %v403 = vld [vmem:[%s215 + $0x13c] sm:$0xf]
      %v404 = vld [vmem:[%s218] sm:$0x1]
      %v406 = vperm.slane %v404, 0
      %v504 = vunpack.c.l.b16 %v228
      %v505 = vunpack.c.h.b16 %v228
      %v506 = vunpack.c.l.b16 %v229
      %v507 = vunpack.c.h.b16 %v229
      %v508 = vunpack.c.l.b16 %v230
      %v509 = vunpack.c.l.b16 %v231
      %v510 = vunpack.c.h.b16 %v231
      %v511 = vunpack.c.l.b16 %v232
      %v512 = vunpack.c.h.b16 %v232
      %v513 = vunpack.c.l.b16 %v233
      %v514 = vunpack.c.l.b16 %v234
      %v515 = vunpack.c.h.b16 %v234
      %v516 = vunpack.c.l.b16 %v235
      %v517 = vunpack.c.h.b16 %v235
      %v518 = vunpack.c.l.b16 %v236
      %v519 = vunpack.c.l.b16 %v237
      %v520 = vunpack.c.h.b16 %v237
      %v521 = vunpack.c.l.b16 %v238
      %v522 = vunpack.c.h.b16 %v238
      %v523 = vunpack.c.l.b16 %v239
      %v524 = vunpack.c.l.b16 %v240
      %v525 = vunpack.c.h.b16 %v240
      %v526 = vunpack.c.l.b16 %v241
      %v527 = vunpack.c.h.b16 %v241
      %v528 = vunpack.c.l.b16 %v242
      %v529 = vunpack.c.l.b16 %v243
      %v530 = vunpack.c.h.b16 %v243
      %v531 = vunpack.c.l.b16 %v244
      %v532 = vunpack.c.h.b16 %v244
      %v533 = vunpack.c.l.b16 %v245
      %v534 = vunpack.c.l.b16 %v246
      %v535 = vunpack.c.h.b16 %v246
      %v536 = vunpack.c.l.b16 %v247
      %v537 = vunpack.c.h.b16 %v247
      %v538 = vunpack.c.l.b16 %v248
      %v539 = vunpack.c.l.b16 %v249
      %v540 = vunpack.c.h.b16 %v249
      %v541 = vunpack.c.l.b16 %v250
      %v542 = vunpack.c.h.b16 %v250
      %v543 = vunpack.c.l.b16 %v251
      %v544 = vunpack.c.l.b16 %v252
      %v545 = vunpack.c.h.b16 %v252
      %v546 = vunpack.c.l.b16 %v253
      %v547 = vunpack.c.h.b16 %v253
      %v548 = vunpack.c.l.b16 %v254
      %v549 = vunpack.c.l.b16 %v255
      %v550 = vunpack.c.h.b16 %v255
      %v551 = vunpack.c.l.b16 %v256
      %v552 = vunpack.c.h.b16 %v256
      %v553 = vunpack.c.l.b16 %v257
      %v554 = vunpack.c.l.b16 %v258
      %v555 = vunpack.c.h.b16 %v258
      %v556 = vunpack.c.l.b16 %v259
      %v557 = vunpack.c.h.b16 %v259
      %v558 = vunpack.c.l.b16 %v260
      %v559 = vunpack.c.l.b16 %v261
      %v560 = vunpack.c.h.b16 %v261
      %v561 = vunpack.c.l.b16 %v262
      %v562 = vunpack.c.h.b16 %v262
      %v563 = vunpack.c.l.b16 %v263
      %v564 = vunpack.c.l.b16 %v264
      %v565 = vunpack.c.h.b16 %v264
      %v566 = vunpack.c.l.b16 %v265
      %v567 = vunpack.c.h.b16 %v265
      %v568 = vunpack.c.l.b16 %v266
      %v569 = vunpack.c.l.b16 %v267
      %v570 = vunpack.c.h.b16 %v267
      %v571 = vunpack.c.l.b16 %v268
      %v572 = vunpack.c.h.b16 %v268
      %v573 = vunpack.c.l.b16 %v269
      %v574 = vunpack.c.l.b16 %v270
      %v575 = vunpack.c.h.b16 %v270
      %v576 = vunpack.c.l.b16 %v271
      %v577 = vunpack.c.h.b16 %v271
      %v578 = vunpack.c.l.b16 %v272
      %v579 = vunpack.c.l.b16 %v273
      %v580 = vunpack.c.h.b16 %v273
      %v581 = vunpack.c.l.b16 %v274
      %v582 = vunpack.c.h.b16 %v274
      %v583 = vunpack.c.l.b16 %v275
      %v584 = vunpack.c.l.b16 %v276
      %v585 = vunpack.c.h.b16 %v276
      %v586 = vunpack.c.l.b16 %v277
      %v587 = vunpack.c.h.b16 %v277
      %v588 = vunpack.c.l.b16 %v278
      %v589 = vunpack.c.l.b16 %v279
      %v590 = vunpack.c.h.b16 %v279
      %v591 = vunpack.c.l.b16 %v280
      %v592 = vunpack.c.h.b16 %v280
      %v593 = vunpack.c.l.b16 %v281
      %v594 = vunpack.c.l.b16 %v282
      %v595 = vunpack.c.h.b16 %v282
      %v596 = vunpack.c.l.b16 %v283
      %v597 = vunpack.c.h.b16 %v283
      %v598 = vunpack.c.l.b16 %v284
      %v599 = vunpack.c.l.b16 %v285
      %v600 = vunpack.c.h.b16 %v285
      %v601 = vunpack.c.l.b16 %v286
      %v602 = vunpack.c.h.b16 %v286
      %v603 = vunpack.c.l.b16 %v287
      %v604 = vunpack.c.l.b16 %v288
      %v605 = vunpack.c.h.b16 %v288
      %v606 = vunpack.c.l.b16 %v289
      %v607 = vunpack.c.h.b16 %v289
      %v608 = vunpack.c.l.b16 %v290
      %v609 = vunpack.c.l.b16 %v291
      %v610 = vunpack.c.h.b16 %v291
      %v611 = vunpack.c.l.b16 %v292
      %v612 = vunpack.c.h.b16 %v292
      %v613 = vunpack.c.l.b16 %v293
      %v614 = vunpack.c.l.b16 %v294
      %v615 = vunpack.c.h.b16 %v294
      %v616 = vunpack.c.l.b16 %v295
      %v617 = vunpack.c.h.b16 %v295
      %v618 = vunpack.c.l.b16 %v296
      %v619 = vunpack.c.l.b16 %v297
      %v620 = vunpack.c.h.b16 %v297
      %v621 = vunpack.c.l.b16 %v298
      %v622 = vunpack.c.h.b16 %v298
      %v623 = vunpack.c.l.b16 %v299
      %v624 = vunpack.c.l.b16 %v300
      %v625 = vunpack.c.h.b16 %v300
      %v626 = vunpack.c.l.b16 %v301
      %v627 = vunpack.c.h.b16 %v301
      %v628 = vunpack.c.l.b16 %v302
      %v629 = vunpack.c.l.b16 %v303
      %v630 = vunpack.c.h.b16 %v303
      %v631 = vunpack.c.l.b16 %v304
      %v632 = vunpack.c.h.b16 %v304
      %v633 = vunpack.c.l.b16 %v305
      %v634 = vunpack.c.l.b16 %v306
      %v635 = vunpack.c.h.b16 %v306
      %v636 = vunpack.c.l.b16 %v307
      %v637 = vunpack.c.h.b16 %v307
      %v638 = vunpack.c.l.b16 %v308
      %v639 = vunpack.c.l.b16 %v309
      %v640 = vunpack.c.h.b16 %v309
      %v641 = vunpack.c.l.b16 %v310
      %v642 = vunpack.c.h.b16 %v310
      %v643 = vunpack.c.l.b16 %v311
      %v644 = vunpack.c.l.b16 %v312
      %v645 = vunpack.c.h.b16 %v312
      %v646 = vunpack.c.l.b16 %v313
      %v647 = vunpack.c.h.b16 %v313
      %v648 = vunpack.c.l.b16 %v314
      %v649 = vunpack.c.l.b16 %v315
      %v650 = vunpack.c.h.b16 %v315
      %v651 = vunpack.c.l.b16 %v316
      %v652 = vunpack.c.h.b16 %v316
      %v653 = vunpack.c.l.b16 %v317
      %v654 = vunpack.c.l.b16 %v318
      %v655 = vunpack.c.h.b16 %v318
      %v656 = vunpack.c.l.b16 %v319
      %v657 = vunpack.c.h.b16 %v319
      %v658 = vunpack.c.l.b16 %v320
      %v659 = vunpack.c.l.b16 %v321
      %v660 = vunpack.c.h.b16 %v321
      %v661 = vunpack.c.l.b16 %v322
      %v662 = vunpack.c.h.b16 %v322
      %v663 = vunpack.c.l.b16 %v323
      %v664 = vpack.c.b16 %v509, %v504
      %v665 = vpack.c.b16 %v510, %v505
      %v666 = vpack.c.b16 %v511, %v506
      %v667 = vpack.c.b16 %v512, %v507
      %v668 = vpack.c.b16 %v513, %v508
      %v669 = vpack.c.b16 %v519, %v514
      %v670 = vpack.c.b16 %v520, %v515
      %v671 = vpack.c.b16 %v521, %v516
      %v672 = vpack.c.b16 %v522, %v517
      %v673 = vpack.c.b16 %v523, %v518
      %v674 = vpack.c.b16 %v529, %v524
      %v675 = vpack.c.b16 %v530, %v525
      %v676 = vpack.c.b16 %v531, %v526
      %v677 = vpack.c.b16 %v532, %v527
      %v678 = vpack.c.b16 %v533, %v528
      %v679 = vpack.c.b16 %v539, %v534
      %v680 = vpack.c.b16 %v540, %v535
      %v681 = vpack.c.b16 %v541, %v536
      %v682 = vpack.c.b16 %v542, %v537
      %v683 = vpack.c.b16 %v543, %v538
      %v684 = vpack.c.b16 %v549, %v544
      %v685 = vpack.c.b16 %v550, %v545
      %v686 = vpack.c.b16 %v551, %v546
      %v687 = vpack.c.b16 %v552, %v547
      %v688 = vpack.c.b16 %v553, %v548
      %v689 = vpack.c.b16 %v559, %v554
      %v690 = vpack.c.b16 %v560, %v555
      %v691 = vpack.c.b16 %v561, %v556
      %v692 = vpack.c.b16 %v562, %v557
      %v693 = vpack.c.b16 %v563, %v558
      %v694 = vpack.c.b16 %v569, %v564
      %v695 = vpack.c.b16 %v570, %v565
      %v696 = vpack.c.b16 %v571, %v566
      %v697 = vpack.c.b16 %v572, %v567
      %v698 = vpack.c.b16 %v573, %v568
      %v699 = vpack.c.b16 %v579, %v574
      %v700 = vpack.c.b16 %v580, %v575
      %v701 = vpack.c.b16 %v581, %v576
      %v702 = vpack.c.b16 %v582, %v577
      %v703 = vpack.c.b16 %v583, %v578
      %v704 = vpack.c.b16 %v589, %v584
      %v705 = vpack.c.b16 %v590, %v585
      %v706 = vpack.c.b16 %v591, %v586
      %v707 = vpack.c.b16 %v592, %v587
      %v708 = vpack.c.b16 %v593, %v588
      %v709 = vpack.c.b16 %v599, %v594
      %v710 = vpack.c.b16 %v600, %v595
      %v711 = vpack.c.b16 %v601, %v596
      %v712 = vpack.c.b16 %v602, %v597
      %v713 = vpack.c.b16 %v603, %v598
      %v714 = vpack.c.b16 %v609, %v604
      %v715 = vpack.c.b16 %v610, %v605
      %v716 = vpack.c.b16 %v611, %v606
      %v717 = vpack.c.b16 %v612, %v607
      %v718 = vpack.c.b16 %v613, %v608
      %v719 = vpack.c.b16 %v619, %v614
      %v720 = vpack.c.b16 %v620, %v615
      %v721 = vpack.c.b16 %v621, %v616
      %v722 = vpack.c.b16 %v622, %v617
      %v723 = vpack.c.b16 %v623, %v618
      %v724 = vpack.c.b16 %v629, %v624
      %v725 = vpack.c.b16 %v630, %v625
      %v726 = vpack.c.b16 %v631, %v626
      %v727 = vpack.c.b16 %v632, %v627
      %v728 = vpack.c.b16 %v633, %v628
      %v729 = vpack.c.b16 %v639, %v634
      %v730 = vpack.c.b16 %v640, %v635
      %v731 = vpack.c.b16 %v641, %v636
      %v732 = vpack.c.b16 %v642, %v637
      %v733 = vpack.c.b16 %v643, %v638
      %v734 = vpack.c.b16 %v649, %v644
      %v735 = vpack.c.b16 %v650, %v645
      %v736 = vpack.c.b16 %v651, %v646
      %v737 = vpack.c.b16 %v652, %v647
      %v738 = vpack.c.b16 %v653, %v648
      %v739 = vpack.c.b16 %v659, %v654
      %v740 = vpack.c.b16 %v660, %v655
      %v741 = vpack.c.b16 %v661, %v656
      %v742 = vpack.c.b16 %v662, %v657
      %v743 = vpack.c.b16 %v663, %v658
      %v904 = vunpack.c.l.b16 %v324
      %v905 = vunpack.c.l.b16 %v325
      %v906 = vunpack.c.l.b16 %v326
      %v907 = vunpack.c.l.b16 %v327
      %v908 = vunpack.c.l.b16 %v328
      %v909 = vunpack.c.l.b16 %v329
      %v910 = vunpack.c.l.b16 %v330
      %v911 = vunpack.c.l.b16 %v331
      %v912 = vunpack.c.l.b16 %v332
      %v913 = vunpack.c.l.b16 %v333
      %v914 = vunpack.c.l.b16 %v334
      %v915 = vunpack.c.l.b16 %v335
      %v916 = vunpack.c.l.b16 %v336
      %v917 = vunpack.c.l.b16 %v337
      %v918 = vunpack.c.l.b16 %v338
      %v919 = vunpack.c.l.b16 %v339
      %v920 = vunpack.c.l.b16 %v340
      %v921 = vunpack.c.l.b16 %v341
      %v922 = vunpack.c.l.b16 %v342
      %v923 = vunpack.c.l.b16 %v343
      %v924 = vunpack.c.l.b16 %v344
      %v925 = vunpack.c.l.b16 %v345
      %v926 = vunpack.c.l.b16 %v346
      %v927 = vunpack.c.l.b16 %v347
      %v928 = vunpack.c.l.b16 %v348
      %v929 = vunpack.c.l.b16 %v349
      %v930 = vunpack.c.l.b16 %v350
      %v931 = vunpack.c.l.b16 %v351
      %v932 = vunpack.c.l.b16 %v352
      %v933 = vunpack.c.l.b16 %v353
      %v934 = vunpack.c.l.b16 %v354
      %v935 = vunpack.c.l.b16 %v355
      %v936 = vunpack.c.l.b16 %v356
      %v937 = vunpack.c.l.b16 %v357
      %v938 = vunpack.c.l.b16 %v358
      %v939 = vunpack.c.l.b16 %v359
      %v940 = vunpack.c.l.b16 %v360
      %v941 = vunpack.c.l.b16 %v361
      %v942 = vunpack.c.l.b16 %v362
      %v943 = vunpack.c.l.b16 %v363
      %v944 = vunpack.c.l.b16 %v364
      %v945 = vunpack.c.l.b16 %v365
      %v946 = vunpack.c.l.b16 %v366
      %v947 = vunpack.c.l.b16 %v367
      %v948 = vunpack.c.l.b16 %v368
      %v949 = vunpack.c.l.b16 %v369
      %v950 = vunpack.c.l.b16 %v370
      %v951 = vunpack.c.l.b16 %v371
      %v952 = vunpack.c.l.b16 %v372
      %v953 = vunpack.c.l.b16 %v373
      %v954 = vunpack.c.l.b16 %v374
      %v955 = vunpack.c.l.b16 %v375
      %v956 = vunpack.c.l.b16 %v376
      %v957 = vunpack.c.l.b16 %v377
      %v958 = vunpack.c.l.b16 %v378
      %v959 = vunpack.c.l.b16 %v379
      %v960 = vunpack.c.l.b16 %v380
      %v961 = vunpack.c.l.b16 %v381
      %v962 = vunpack.c.l.b16 %v382
      %v963 = vunpack.c.l.b16 %v383
      %v964 = vunpack.c.l.b16 %v384
      %v965 = vunpack.c.l.b16 %v385
      %v966 = vunpack.c.l.b16 %v386
      %v967 = vunpack.c.l.b16 %v387
      %v968 = vunpack.c.l.b16 %v388
      %v969 = vunpack.c.l.b16 %v389
      %v970 = vunpack.c.l.b16 %v390
      %v971 = vunpack.c.l.b16 %v391
      %v972 = vunpack.c.l.b16 %v392
      %v973 = vunpack.c.l.b16 %v393
      %v974 = vunpack.c.l.b16 %v394
      %v975 = vunpack.c.l.b16 %v395
      %v976 = vunpack.c.l.b16 %v396
      %v977 = vunpack.c.l.b16 %v397
      %v978 = vunpack.c.l.b16 %v398
      %v979 = vunpack.c.l.b16 %v399
      %v980 = vunpack.c.l.b16 %v400
      %v981 = vunpack.c.l.b16 %v401
      %v982 = vunpack.c.l.b16 %v402
      %v983 = vunpack.c.l.b16 %v403
      %v984 = vpack.c.b16 %v905, %v904
      %v985 = vpack.c.b16 %v907, %v906
      %v986 = vpack.c.b16 %v909, %v908
      %v987 = vpack.c.b16 %v911, %v910
      %v988 = vpack.c.b16 %v913, %v912
      %v989 = vpack.c.b16 %v915, %v914
      %v990 = vpack.c.b16 %v917, %v916
      %v991 = vpack.c.b16 %v919, %v918
      %v992 = vpack.c.b16 %v921, %v920
      %v993 = vpack.c.b16 %v923, %v922
      %v994 = vpack.c.b16 %v925, %v924
      %v995 = vpack.c.b16 %v927, %v926
      %v996 = vpack.c.b16 %v929, %v928
      %v997 = vpack.c.b16 %v931, %v930
      %v998 = vpack.c.b16 %v933, %v932
      %v999 = vpack.c.b16 %v935, %v934
      %v1000 = vpack.c.b16 %v937, %v936
      %v1001 = vpack.c.b16 %v939, %v938
      %v1002 = vpack.c.b16 %v941, %v940
      %v1003 = vpack.c.b16 %v943, %v942
      %v1004 = vpack.c.b16 %v945, %v944
      %v1005 = vpack.c.b16 %v947, %v946
      %v1006 = vpack.c.b16 %v949, %v948
      %v1007 = vpack.c.b16 %v951, %v950
      %v1008 = vpack.c.b16 %v953, %v952
      %v1009 = vpack.c.b16 %v955, %v954
      %v1010 = vpack.c.b16 %v957, %v956
      %v1011 = vpack.c.b16 %v959, %v958
      %v1012 = vpack.c.b16 %v961, %v960
      %v1013 = vpack.c.b16 %v963, %v962
      %v1014 = vpack.c.b16 %v965, %v964
      %v1015 = vpack.c.b16 %v967, %v966
      %v1016 = vpack.c.b16 %v969, %v968
      %v1017 = vpack.c.b16 %v971, %v970
      %v1018 = vpack.c.b16 %v973, %v972
      %v1019 = vpack.c.b16 %v975, %v974
      %v1020 = vpack.c.b16 %v977, %v976
      %v1021 = vpack.c.b16 %v979, %v978
      %v1022 = vpack.c.b16 %v981, %v980
      %v1023 = vpack.c.b16 %v983, %v982
      %1064 = vmatpush.bf16.msra.mxu0 %v991
      %1065 = vmatpush.bf16.msra.mxu0 %v990
      %1066 = vmatpush.bf16.msra.mxu0 %v989
      %1067 = vmatpush.bf16.msra.mxu0 %v988
      %1068 = vmatpush.bf16.msra.mxu0 %v987
      %1069 = vmatpush.bf16.msra.mxu0 %v986
      %1070 = vmatpush.bf16.msra.mxu0 %v985
      %1071 = vmatpush.bf16.msra.mxu0 %v984
      %1072 = vmatmul.bf16.gmra.mxu0 %v664
      %v1073 = vpop.f32.mrf.mxu0
      %v1074 = vadd.f32 %v406, %v1073
      %v1075 = vpop.f32.mrf.mxu0
      %v1076 = vadd.f32 %v406, %v1075
      %1077 = vmatmul.bf16.gmra.mxu0 %v669
      %v1078 = vpop.f32.mrf.mxu0
      %v1079 = vadd.f32 %v406, %v1078
      %v1080 = vpop.f32.mrf.mxu0
      %v1081 = vadd.f32 %v406, %v1080
      %1082 = vmatmul.bf16.gmra.mxu0 %v674
      %v1083 = vpop.f32.mrf.mxu0
      %v1084 = vadd.f32 %v406, %v1083
      %v1085 = vpop.f32.mrf.mxu0
      %v1086 = vadd.f32 %v406, %v1085
      %1087 = vmatmul.bf16.gmra.mxu0 %v679
      %v1088 = vpop.f32.mrf.mxu0
      %v1089 = vadd.f32 %v406, %v1088
      %v1090 = vpop.f32.mrf.mxu0
      %v1091 = vadd.f32 %v406, %v1090
      %1092 = vmatmul.bf16.gmra.mxu0 %v684
      %v1093 = vpop.f32.mrf.mxu0
      %v1094 = vadd.f32 %v406, %v1093
      %v1095 = vpop.f32.mrf.mxu0
      %v1096 = vadd.f32 %v406, %v1095
      %1097 = vmatmul.bf16.gmra.mxu0 %v689
      %v1098 = vpop.f32.mrf.mxu0
      %v1099 = vadd.f32 %v406, %v1098
      %v1100 = vpop.f32.mrf.mxu0
      %v1101 = vadd.f32 %v406, %v1100
      %1102 = vmatmul.bf16.gmra.mxu0 %v694
      %v1103 = vpop.f32.mrf.mxu0
      %v1104 = vadd.f32 %v406, %v1103
      %v1105 = vpop.f32.mrf.mxu0
      %v1106 = vadd.f32 %v406, %v1105
      %1107 = vmatmul.bf16.gmra.mxu0 %v699
      %v1108 = vpop.f32.mrf.mxu0
      %v1109 = vadd.f32 %v406, %v1108
      %v1110 = vpop.f32.mrf.mxu0
      %v1111 = vadd.f32 %v406, %v1110
      %1112 = vmatmul.bf16.gmra.mxu0 %v704
      %v1113 = vpop.f32.mrf.mxu0
      %v1114 = vadd.f32 %v406, %v1113
      %v1115 = vpop.f32.mrf.mxu0
      %v1116 = vadd.f32 %v406, %v1115
      %1117 = vmatmul.bf16.gmra.mxu0 %v709
      %v1118 = vpop.f32.mrf.mxu0
      %v1119 = vadd.f32 %v406, %v1118
      %v1120 = vpop.f32.mrf.mxu0
      %v1121 = vadd.f32 %v406, %v1120
      %1122 = vmatmul.bf16.gmra.mxu0 %v714
      %v1123 = vpop.f32.mrf.mxu0
      %v1124 = vadd.f32 %v406, %v1123
      %v1125 = vpop.f32.mrf.mxu0
      %v1126 = vadd.f32 %v406, %v1125
      %1127 = vmatmul.bf16.gmra.mxu0 %v719
      %v1128 = vpop.f32.mrf.mxu0
      %v1129 = vadd.f32 %v406, %v1128
      %v1130 = vpop.f32.mrf.mxu0
      %v1131 = vadd.f32 %v406, %v1130
      %1132 = vmatmul.bf16.gmra.mxu0 %v724
      %v1133 = vpop.f32.mrf.mxu0
      %v1134 = vadd.f32 %v406, %v1133
      %v1135 = vpop.f32.mrf.mxu0
      %v1136 = vadd.f32 %v406, %v1135
      %1137 = vmatmul.bf16.gmra.mxu0 %v729
      %v1138 = vpop.f32.mrf.mxu0
      %v1139 = vadd.f32 %v406, %v1138
      %v1140 = vpop.f32.mrf.mxu0
      %v1141 = vadd.f32 %v406, %v1140
      %1142 = vmatmul.bf16.gmra.mxu0 %v734
      %v1143 = vpop.f32.mrf.mxu0
      %v1144 = vadd.f32 %v406, %v1143
      %v1145 = vpop.f32.mrf.mxu0
      %v1146 = vadd.f32 %v406, %v1145
      %1147 = vmatmul.bf16.gmra.mxu0 %v739
      %v1148 = vpop.f32.mrf.mxu0
      %v1149 = vadd.f32 %v406, %v1148
      %v1150 = vpop.f32.mrf.mxu0
      %v1151 = vadd.f32 %v406, %v1150
      %1152 = vdwg.mxu0
      %1153 = vmatpush.bf16.msra.mxu0 %v999
      %1154 = vmatpush.bf16.msra.mxu0 %v998
      %1155 = vmatpush.bf16.msra.mxu0 %v997
      %1156 = vmatpush.bf16.msra.mxu0 %v996
      %1157 = vmatpush.bf16.msra.mxu0 %v995
      %1158 = vmatpush.bf16.msra.mxu0 %v994
      %1159 = vmatpush.bf16.msra.mxu0 %v993
      %1160 = vmatpush.bf16.msra.mxu0 %v992
      %1161 = vmatmul.bf16.gmra.mxu0 %v665
      %v1162 = vpop.f32.mrf.mxu0
      %v1163 = vadd.f32 %v1074, %v1162
      %v1164 = vpop.f32.mrf.mxu0
      %v1165 = vadd.f32 %v1076, %v1164
      %1166 = vmatmul.bf16.gmra.mxu0 %v670
      %v1167 = vpop.f32.mrf.mxu0
      %v1168 = vadd.f32 %v1079, %v1167
      %v1169 = vpop.f32.mrf.mxu0
      %v1170 = vadd.f32 %v1081, %v1169
      %1171 = vmatmul.bf16.gmra.mxu0 %v675
      %v1172 = vpop.f32.mrf.mxu0
      %v1173 = vadd.f32 %v1084, %v1172
      %v1174 = vpop.f32.mrf.mxu0
      %v1175 = vadd.f32 %v1086, %v1174
      %1176 = vmatmul.bf16.gmra.mxu0 %v680
      %v1177 = vpop.f32.mrf.mxu0
      %v1178 = vadd.f32 %v1089, %v1177
      %v1179 = vpop.f32.mrf.mxu0
      %v1180 = vadd.f32 %v1091, %v1179
      %1181 = vmatmul.bf16.gmra.mxu0 %v685
      %v1182 = vpop.f32.mrf.mxu0
      %v1183 = vadd.f32 %v1094, %v1182
      %v1184 = vpop.f32.mrf.mxu0
      %v1185 = vadd.f32 %v1096, %v1184
      %1186 = vmatmul.bf16.gmra.mxu0 %v690
      %v1187 = vpop.f32.mrf.mxu0
      %v1188 = vadd.f32 %v1099, %v1187
      %v1189 = vpop.f32.mrf.mxu0
      %v1190 = vadd.f32 %v1101, %v1189
      %1191 = vmatmul.bf16.gmra.mxu0 %v695
      %v1192 = vpop.f32.mrf.mxu0
      %v1193 = vadd.f32 %v1104, %v1192
      %v1194 = vpop.f32.mrf.mxu0
      %v1195 = vadd.f32 %v1106, %v1194
      %1196 = vmatmul.bf16.gmra.mxu0 %v700
      %v1197 = vpop.f32.mrf.mxu0
      %v1198 = vadd.f32 %v1109, %v1197
      %v1199 = vpop.f32.mrf.mxu0
      %v1200 = vadd.f32 %v1111, %v1199
      %1201 = vmatmul.bf16.gmra.mxu0 %v705
      %v1202 = vpop.f32.mrf.mxu0
      %v1203 = vadd.f32 %v1114, %v1202
      %v1204 = vpop.f32.mrf.mxu0
      %v1205 = vadd.f32 %v1116, %v1204
      %1206 = vmatmul.bf16.gmra.mxu0 %v710
      %v1207 = vpop.f32.mrf.mxu0
      %v1208 = vadd.f32 %v1119, %v1207
      %v1209 = vpop.f32.mrf.mxu0
      %v1210 = vadd.f32 %v1121, %v1209
      %1211 = vmatmul.bf16.gmra.mxu0 %v715
      %v1212 = vpop.f32.mrf.mxu0
      %v1213 = vadd.f32 %v1124, %v1212
      %v1214 = vpop.f32.mrf.mxu0
      %v1215 = vadd.f32 %v1126, %v1214
      %1216 = vmatmul.bf16.gmra.mxu0 %v720
      %v1217 = vpop.f32.mrf.mxu0
      %v1218 = vadd.f32 %v1129, %v1217
      %v1219 = vpop.f32.mrf.mxu0
      %v1220 = vadd.f32 %v1131, %v1219
      %1221 = vmatmul.bf16.gmra.mxu0 %v725
      %v1222 = vpop.f32.mrf.mxu0
      %v1223 = vadd.f32 %v1134, %v1222
      %v1224 = vpop.f32.mrf.mxu0
      %v1225 = vadd.f32 %v1136, %v1224
      %1226 = vmatmul.bf16.gmra.mxu0 %v730
      %v1227 = vpop.f32.mrf.mxu0
      %v1228 = vadd.f32 %v1139, %v1227
      %v1229 = vpop.f32.mrf.mxu0
      %v1230 = vadd.f32 %v1141, %v1229
      %1231 = vmatmul.bf16.gmra.mxu0 %v735
      %v1232 = vpop.f32.mrf.mxu0
      %v1233 = vadd.f32 %v1144, %v1232
      %v1234 = vpop.f32.mrf.mxu0
      %v1235 = vadd.f32 %v1146, %v1234
      %1236 = vmatmul.bf16.gmra.mxu0 %v740
      %v1237 = vpop.f32.mrf.mxu0
      %v1238 = vadd.f32 %v1149, %v1237
      %v1239 = vpop.f32.mrf.mxu0
      %v1240 = vadd.f32 %v1151, %v1239
      %1241 = vdwg.mxu0
      %1242 = vmatpush.bf16.msra.mxu0 %v1007
      %1243 = vmatpush.bf16.msra.mxu0 %v1006
      %1244 = vmatpush.bf16.msra.mxu0 %v1005
      %1245 = vmatpush.bf16.msra.mxu0 %v1004
      %1246 = vmatpush.bf16.msra.mxu0 %v1003
      %1247 = vmatpush.bf16.msra.mxu0 %v1002
      %1248 = vmatpush.bf16.msra.mxu0 %v1001
      %1249 = vmatpush.bf16.msra.mxu0 %v1000
      %1250 = vmatmul.bf16.gmra.mxu0 %v666
      %v1251 = vpop.f32.mrf.mxu0
      %v1252 = vadd.f32 %v1163, %v1251
      %v1253 = vpop.f32.mrf.mxu0
      %v1254 = vadd.f32 %v1165, %v1253
      %1255 = vmatmul.bf16.gmra.mxu0 %v671
      %v1256 = vpop.f32.mrf.mxu0
      %v1257 = vadd.f32 %v1168, %v1256
      %v1258 = vpop.f32.mrf.mxu0
      %v1259 = vadd.f32 %v1170, %v1258
      %1260 = vmatmul.bf16.gmra.mxu0 %v676
      %v1261 = vpop.f32.mrf.mxu0
      %v1262 = vadd.f32 %v1173, %v1261
      %v1263 = vpop.f32.mrf.mxu0
      %v1264 = vadd.f32 %v1175, %v1263
      %1265 = vmatmul.bf16.gmra.mxu0 %v681
      %v1266 = vpop.f32.mrf.mxu0
      %v1267 = vadd.f32 %v1178, %v1266
      %v1268 = vpop.f32.mrf.mxu0
      %v1269 = vadd.f32 %v1180, %v1268
      %1270 = vmatmul.bf16.gmra.mxu0 %v686
      %v1271 = vpop.f32.mrf.mxu0
      %v1272 = vadd.f32 %v1183, %v1271
      %v1273 = vpop.f32.mrf.mxu0
      %v1274 = vadd.f32 %v1185, %v1273
      %1275 = vmatmul.bf16.gmra.mxu0 %v691
      %v1276 = vpop.f32.mrf.mxu0
      %v1277 = vadd.f32 %v1188, %v1276
      %v1278 = vpop.f32.mrf.mxu0
      %v1279 = vadd.f32 %v1190, %v1278
      %1280 = vmatmul.bf16.gmra.mxu0 %v696
      %v1281 = vpop.f32.mrf.mxu0
      %v1282 = vadd.f32 %v1193, %v1281
      %v1283 = vpop.f32.mrf.mxu0
      %v1284 = vadd.f32 %v1195, %v1283
      %1285 = vmatmul.bf16.gmra.mxu0 %v701
      %v1286 = vpop.f32.mrf.mxu0
      %v1287 = vadd.f32 %v1198, %v1286
      %v1288 = vpop.f32.mrf.mxu0
      %v1289 = vadd.f32 %v1200, %v1288
      %1290 = vmatmul.bf16.gmra.mxu0 %v706
      %v1291 = vpop.f32.mrf.mxu0
      %v1292 = vadd.f32 %v1203, %v1291
      %v1293 = vpop.f32.mrf.mxu0
      %v1294 = vadd.f32 %v1205, %v1293
      %1295 = vmatmul.bf16.gmra.mxu0 %v711
      %v1296 = vpop.f32.mrf.mxu0
      %v1297 = vadd.f32 %v1208, %v1296
      %v1298 = vpop.f32.mrf.mxu0
      %v1299 = vadd.f32 %v1210, %v1298
      %1300 = vmatmul.bf16.gmra.mxu0 %v716
      %v1301 = vpop.f32.mrf.mxu0
      %v1302 = vadd.f32 %v1213, %v1301
      %v1303 = vpop.f32.mrf.mxu0
      %v1304 = vadd.f32 %v1215, %v1303
      %1305 = vmatmul.bf16.gmra.mxu0 %v721
      %v1306 = vpop.f32.mrf.mxu0
      %v1307 = vadd.f32 %v1218, %v1306
      %v1308 = vpop.f32.mrf.mxu0
      %v1309 = vadd.f32 %v1220, %v1308
      %1310 = vmatmul.bf16.gmra.mxu0 %v726
      %v1311 = vpop.f32.mrf.mxu0
      %v1312 = vadd.f32 %v1223, %v1311
      %v1313 = vpop.f32.mrf.mxu0
      %v1314 = vadd.f32 %v1225, %v1313
      %1315 = vmatmul.bf16.gmra.mxu0 %v731
      %v1316 = vpop.f32.mrf.mxu0
      %v1317 = vadd.f32 %v1228, %v1316
      %v1318 = vpop.f32.mrf.mxu0
      %v1319 = vadd.f32 %v1230, %v1318
      %1320 = vmatmul.bf16.gmra.mxu0 %v736
      %v1321 = vpop.f32.mrf.mxu0
      %v1322 = vadd.f32 %v1233, %v1321
      %v1323 = vpop.f32.mrf.mxu0
      %v1324 = vadd.f32 %v1235, %v1323
      %1325 = vmatmul.bf16.gmra.mxu0 %v741
      %v1326 = vpop.f32.mrf.mxu0
      %v1327 = vadd.f32 %v1238, %v1326
      %v1328 = vpop.f32.mrf.mxu0
      %v1329 = vadd.f32 %v1240, %v1328
      %1330 = vdwg.mxu0
      %1331 = vmatpush.bf16.msra.mxu0 %v1015
      %1332 = vmatpush.bf16.msra.mxu0 %v1014
      %1333 = vmatpush.bf16.msra.mxu0 %v1013
      %1334 = vmatpush.bf16.msra.mxu0 %v1012
      %1335 = vmatpush.bf16.msra.mxu0 %v1011
      %1336 = vmatpush.bf16.msra.mxu0 %v1010
      %1337 = vmatpush.bf16.msra.mxu0 %v1009
      %1338 = vmatpush.bf16.msra.mxu0 %v1008
      %1339 = vmatmul.bf16.gmra.mxu0 %v667
      %v1340 = vpop.f32.mrf.mxu0
      %v1341 = vadd.f32 %v1252, %v1340
      %v1342 = vpop.f32.mrf.mxu0
      %v1343 = vadd.f32 %v1254, %v1342
      %1344 = vmatmul.bf16.gmra.mxu0 %v672
      %v1345 = vpop.f32.mrf.mxu0
      %v1346 = vadd.f32 %v1257, %v1345
      %v1347 = vpop.f32.mrf.mxu0
      %v1348 = vadd.f32 %v1259, %v1347
      %1349 = vmatmul.bf16.gmra.mxu0 %v677
      %v1350 = vpop.f32.mrf.mxu0
      %v1351 = vadd.f32 %v1262, %v1350
      %v1352 = vpop.f32.mrf.mxu0
      %v1353 = vadd.f32 %v1264, %v1352
      %1354 = vmatmul.bf16.gmra.mxu0 %v682
      %v1355 = vpop.f32.mrf.mxu0
      %v1356 = vadd.f32 %v1267, %v1355
      %v1357 = vpop.f32.mrf.mxu0
      %v1358 = vadd.f32 %v1269, %v1357
      %1359 = vmatmul.bf16.gmra.mxu0 %v687
      %v1360 = vpop.f32.mrf.mxu0
      %v1361 = vadd.f32 %v1272, %v1360
      %v1362 = vpop.f32.mrf.mxu0
      %v1363 = vadd.f32 %v1274, %v1362
      %1364 = vmatmul.bf16.gmra.mxu0 %v692
      %v1365 = vpop.f32.mrf.mxu0
      %v1366 = vadd.f32 %v1277, %v1365
      %v1367 = vpop.f32.mrf.mxu0
      %v1368 = vadd.f32 %v1279, %v1367
      %1369 = vmatmul.bf16.gmra.mxu0 %v697
      %v1370 = vpop.f32.mrf.mxu0
      %v1371 = vadd.f32 %v1282, %v1370
      %v1372 = vpop.f32.mrf.mxu0
      %v1373 = vadd.f32 %v1284, %v1372
      %1374 = vmatmul.bf16.gmra.mxu0 %v702
      %v1375 = vpop.f32.mrf.mxu0
      %v1376 = vadd.f32 %v1287, %v1375
      %v1377 = vpop.f32.mrf.mxu0
      %v1378 = vadd.f32 %v1289, %v1377
      %1379 = vmatmul.bf16.gmra.mxu0 %v707
      %v1380 = vpop.f32.mrf.mxu0
      %v1381 = vadd.f32 %v1292, %v1380
      %v1382 = vpop.f32.mrf.mxu0
      %v1383 = vadd.f32 %v1294, %v1382
      %1384 = vmatmul.bf16.gmra.mxu0 %v712
      %v1385 = vpop.f32.mrf.mxu0
      %v1386 = vadd.f32 %v1297, %v1385
      %v1387 = vpop.f32.mrf.mxu0
      %v1388 = vadd.f32 %v1299, %v1387
      %1389 = vmatmul.bf16.gmra.mxu0 %v717
      %v1390 = vpop.f32.mrf.mxu0
      %v1391 = vadd.f32 %v1302, %v1390
      %v1392 = vpop.f32.mrf.mxu0
      %v1393 = vadd.f32 %v1304, %v1392
      %1394 = vmatmul.bf16.gmra.mxu0 %v722
      %v1395 = vpop.f32.mrf.mxu0
      %v1396 = vadd.f32 %v1307, %v1395
      %v1397 = vpop.f32.mrf.mxu0
      %v1398 = vadd.f32 %v1309, %v1397
      %1399 = vmatmul.bf16.gmra.mxu0 %v727
      %v1400 = vpop.f32.mrf.mxu0
      %v1401 = vadd.f32 %v1312, %v1400
      %v1402 = vpop.f32.mrf.mxu0
      %v1403 = vadd.f32 %v1314, %v1402
      %1404 = vmatmul.bf16.gmra.mxu0 %v732
      %v1405 = vpop.f32.mrf.mxu0
      %v1406 = vadd.f32 %v1317, %v1405
      %v1407 = vpop.f32.mrf.mxu0
      %v1408 = vadd.f32 %v1319, %v1407
      %1409 = vmatmul.bf16.gmra.mxu0 %v737
      %v1410 = vpop.f32.mrf.mxu0
      %v1411 = vadd.f32 %v1322, %v1410
      %v1412 = vpop.f32.mrf.mxu0
      %v1413 = vadd.f32 %v1324, %v1412
      %1414 = vmatmul.bf16.gmra.mxu0 %v742
      %v1415 = vpop.f32.mrf.mxu0
      %v1416 = vadd.f32 %v1327, %v1415
      %v1417 = vpop.f32.mrf.mxu0
      %v1418 = vadd.f32 %v1329, %v1417
      %1419 = vdwg.mxu0
      %1420 = vmatpush.bf16.msra.mxu0 %v1023
      %1421 = vmatpush.bf16.msra.mxu0 %v1022
      %1422 = vmatpush.bf16.msra.mxu0 %v1021
      %1423 = vmatpush.bf16.msra.mxu0 %v1020
      %1424 = vmatpush.bf16.msra.mxu0 %v1019
      %1425 = vmatpush.bf16.msra.mxu0 %v1018
      %1426 = vmatpush.bf16.msra.mxu0 %v1017
      %1427 = vmatpush.bf16.msra.mxu0 %v1016
      %1428 = vmatmul.bf16.gmra.mxu0 %v668
      %v1429 = vpop.f32.mrf.mxu0
      %v1430 = vadd.f32 %v1341, %v1429
      %v1431 = vpop.f32.mrf.mxu0
      %v1432 = vadd.f32 %v1343, %v1431
      %1433 = vmatmul.bf16.gmra.mxu0 %v673
      %v1434 = vpop.f32.mrf.mxu0
      %v1435 = vadd.f32 %v1346, %v1434
      %v1436 = vpop.f32.mrf.mxu0
      %v1437 = vadd.f32 %v1348, %v1436
      %1438 = vmatmul.bf16.gmra.mxu0 %v678
      %v1439 = vpop.f32.mrf.mxu0
      %v1440 = vadd.f32 %v1351, %v1439
      %v1441 = vpop.f32.mrf.mxu0
      %v1442 = vadd.f32 %v1353, %v1441
      %1443 = vmatmul.bf16.gmra.mxu0 %v683
      %v1444 = vpop.f32.mrf.mxu0
      %v1445 = vadd.f32 %v1356, %v1444
      %v1446 = vpop.f32.mrf.mxu0
      %v1447 = vadd.f32 %v1358, %v1446
      %1448 = vmatmul.bf16.gmra.mxu0 %v688
      %v1449 = vpop.f32.mrf.mxu0
      %v1450 = vadd.f32 %v1361, %v1449
      %v1451 = vpop.f32.mrf.mxu0
      %v1452 = vadd.f32 %v1363, %v1451
      %1453 = vmatmul.bf16.gmra.mxu0 %v693
      %v1454 = vpop.f32.mrf.mxu0
      %v1455 = vadd.f32 %v1366, %v1454
      %v1456 = vpop.f32.mrf.mxu0
      %v1457 = vadd.f32 %v1368, %v1456
      %1458 = vmatmul.bf16.gmra.mxu0 %v698
      %v1459 = vpop.f32.mrf.mxu0
      %v1460 = vadd.f32 %v1371, %v1459
      %v1461 = vpop.f32.mrf.mxu0
      %v1462 = vadd.f32 %v1373, %v1461
      %1463 = vmatmul.bf16.gmra.mxu0 %v703
      %v1464 = vpop.f32.mrf.mxu0
      %v1465 = vadd.f32 %v1376, %v1464
      %v1466 = vpop.f32.mrf.mxu0
      %v1467 = vadd.f32 %v1378, %v1466
      %1468 = vmatmul.bf16.gmra.mxu0 %v708
      %v1469 = vpop.f32.mrf.mxu0
      %v1470 = vadd.f32 %v1381, %v1469
      %v1471 = vpop.f32.mrf.mxu0
      %v1472 = vadd.f32 %v1383, %v1471
      %1473 = vmatmul.bf16.gmra.mxu0 %v713
      %v1474 = vpop.f32.mrf.mxu0
      %v1475 = vadd.f32 %v1386, %v1474
      %v1476 = vpop.f32.mrf.mxu0
      %v1477 = vadd.f32 %v1388, %v1476
      %1478 = vmatmul.bf16.gmra.mxu0 %v718
      %v1479 = vpop.f32.mrf.mxu0
      %v1480 = vadd.f32 %v1391, %v1479
      %v1481 = vpop.f32.mrf.mxu0
      %v1482 = vadd.f32 %v1393, %v1481
      %1483 = vmatmul.bf16.gmra.mxu0 %v723
      %v1484 = vpop.f32.mrf.mxu0
      %v1485 = vadd.f32 %v1396, %v1484
      %v1486 = vpop.f32.mrf.mxu0
      %v1487 = vadd.f32 %v1398, %v1486
      %1488 = vmatmul.bf16.gmra.mxu0 %v728
      %v1489 = vpop.f32.mrf.mxu0
      %v1490 = vadd.f32 %v1401, %v1489
      %v1491 = vpop.f32.mrf.mxu0
      %v1492 = vadd.f32 %v1403, %v1491
      %1493 = vmatmul.bf16.gmra.mxu0 %v733
      %v1494 = vpop.f32.mrf.mxu0
      %v1495 = vadd.f32 %v1406, %v1494
      %v1496 = vpop.f32.mrf.mxu0
      %v1497 = vadd.f32 %v1408, %v1496
      %1498 = vmatmul.bf16.gmra.mxu0 %v738
      %v1499 = vpop.f32.mrf.mxu0
      %v1500 = vadd.f32 %v1411, %v1499
      %v1501 = vpop.f32.mrf.mxu0
      %v1502 = vadd.f32 %v1413, %v1501
      %1503 = vmatmul.bf16.gmra.mxu0 %v743
      %v1504 = vpop.f32.mrf.mxu0
      %v1505 = vadd.f32 %v1416, %v1504
      %v1506 = vpop.f32.mrf.mxu0
      %v1507 = vadd.f32 %v1418, %v1506
      %1508 = vdwg.mxu0
      %v1509 = vmax.f32 %v1430, 0.0
      %v1510 = vmax.f32 %v1432, 0.0
      %v1511 = vmax.f32 %v1435, 0.0
      %v1512 = vmax.f32 %v1437, 0.0
      %v1513 = vmax.f32 %v1440, 0.0
      %v1514 = vmax.f32 %v1442, 0.0
      %v1515 = vmax.f32 %v1445, 0.0
      %v1516 = vmax.f32 %v1447, 0.0
      %v1517 = vmax.f32 %v1450, 0.0
      %v1518 = vmax.f32 %v1452, 0.0
      %v1519 = vmax.f32 %v1455, 0.0
      %v1520 = vmax.f32 %v1457, 0.0
      %v1521 = vmax.f32 %v1460, 0.0
      %v1522 = vmax.f32 %v1462, 0.0
      %v1523 = vmax.f32 %v1465, 0.0
      %v1524 = vmax.f32 %v1467, 0.0
      %v1525 = vmax.f32 %v1470, 0.0
      %v1526 = vmax.f32 %v1472, 0.0
      %v1527 = vmax.f32 %v1475, 0.0
      %v1528 = vmax.f32 %v1477, 0.0
      %v1529 = vmax.f32 %v1480, 0.0
      %v1530 = vmax.f32 %v1482, 0.0
      %v1531 = vmax.f32 %v1485, 0.0
      %v1532 = vmax.f32 %v1487, 0.0
      %v1533 = vmax.f32 %v1490, 0.0
      %v1534 = vmax.f32 %v1492, 0.0
      %v1535 = vmax.f32 %v1495, 0.0
      %v1536 = vmax.f32 %v1497, 0.0
      %v1537 = vmax.f32 %v1500, 0.0
      %v1538 = vmax.f32 %v1502, 0.0
      %v1539 = vmax.f32 %v1505, 0.0
      %v1540 = vmax.f32 %v1507, 0.0
      %v1541 = vpack.c.bf16 %v1509, %v1509
      %v1542 = vpack.c.bf16 %v1510, %v1510
      %v1543 = vpack.c.bf16 %v1511, %v1511
      %v1544 = vpack.c.bf16 %v1512, %v1512
      %v1545 = vpack.c.bf16 %v1513, %v1513
      %v1546 = vpack.c.bf16 %v1514, %v1514
      %v1547 = vpack.c.bf16 %v1515, %v1515
      %v1548 = vpack.c.bf16 %v1516, %v1516
      %v1549 = vpack.c.bf16 %v1517, %v1517
      %v1550 = vpack.c.bf16 %v1518, %v1518
      %v1551 = vpack.c.bf16 %v1519, %v1519
      %v1552 = vpack.c.bf16 %v1520, %v1520
      %v1553 = vpack.c.bf16 %v1521, %v1521
      %v1554 = vpack.c.bf16 %v1522, %v1522
      %v1555 = vpack.c.bf16 %v1523, %v1523
      %v1556 = vpack.c.bf16 %v1524, %v1524
      %v1557 = vpack.c.bf16 %v1525, %v1525
      %v1558 = vpack.c.bf16 %v1526, %v1526
      %v1559 = vpack.c.bf16 %v1527, %v1527
      %v1560 = vpack.c.bf16 %v1528, %v1528
      %v1561 = vpack.c.bf16 %v1529, %v1529
      %v1562 = vpack.c.bf16 %v1530, %v1530
      %v1563 = vpack.c.bf16 %v1531, %v1531
      %v1564 = vpack.c.bf16 %v1532, %v1532
      %v1565 = vpack.c.bf16 %v1533, %v1533
      %v1566 = vpack.c.bf16 %v1534, %v1534
      %v1567 = vpack.c.bf16 %v1535, %v1535
      %v1568 = vpack.c.bf16 %v1536, %v1536
      %v1569 = vpack.c.bf16 %v1537, %v1537
      %v1570 = vpack.c.bf16 %v1538, %v1538
      %v1571 = vpack.c.bf16 %v1539, %v1539
      %v1572 = vpack.c.bf16 %v1540, %v1540
      %1573 = vst [vmem:[%s226] sm:$0xf] %v1541
      %1574 = vst [vmem:[%s226 + $0x4] sm:$0xf] %v1542
      %1575 = vst [vmem:[%s226 + $0x8] sm:$0xf] %v1543
      %1576 = vst [vmem:[%s226 + $0xc] sm:$0xf] %v1544
      %1577 = vst [vmem:[%s226 + $0x10] sm:$0xf] %v1545
      %1578 = vst [vmem:[%s226 + $0x14] sm:$0xf] %v1546
      %1579 = vst [vmem:[%s226 + $0x18] sm:$0xf] %v1547
      %1580 = vst [vmem:[%s226 + $0x1c] sm:$0xf] %v1548
      %1581 = vst [vmem:[%s226 + $0x20] sm:$0xf] %v1549
      %1582 = vst [vmem:[%s226 + $0x24] sm:$0xf] %v1550
      %1583 = vst [vmem:[%s226 + $0x28] sm:$0xf] %v1551
      %1584 = vst [vmem:[%s226 + $0x2c] sm:$0xf] %v1552
      %1585 = vst [vmem:[%s226 + $0x30] sm:$0xf] %v1553
      %1586 = vst [vmem:[%s226 + $0x34] sm:$0xf] %v1554
      %1587 = vst [vmem:[%s226 + $0x38] sm:$0xf] %v1555
      %1588 = vst [vmem:[%s226 + $0x3c] sm:$0xf] %v1556
      %1589 = vst [vmem:[%s226 + $0x40] sm:$0xf] %v1557
      %1590 = vst [vmem:[%s226 + $0x44] sm:$0xf] %v1558
      %1591 = vst [vmem:[%s226 + $0x48] sm:$0xf] %v1559
      %1592 = vst [vmem:[%s226 + $0x4c] sm:$0xf] %v1560
      %1593 = vst [vmem:[%s226 + $0x50] sm:$0xf] %v1561
      %1594 = vst [vmem:[%s226 + $0x54] sm:$0xf] %v1562
      %1595 = vst [vmem:[%s226 + $0x58] sm:$0xf] %v1563
      %1596 = vst [vmem:[%s226 + $0x5c] sm:$0xf] %v1564
      %1597 = vst [vmem:[%s226 + $0x60] sm:$0xf] %v1565
      %1598 = vst [vmem:[%s226 + $0x64] sm:$0xf] %v1566
      %1599 = vst [vmem:[%s226 + $0x68] sm:$0xf] %v1567
      %1600 = vst [vmem:[%s226 + $0x6c] sm:$0xf] %v1568
      %1601 = vst [vmem:[%s226 + $0x70] sm:$0xf] %v1569
      %1602 = vst [vmem:[%s226 + $0x74] sm:$0xf] %v1570
      %1603 = vst [vmem:[%s226 + $0x78] sm:$0xf] %v1571
      %1604 = vst [vmem:[%s226 + $0x7c] sm:$0xf] %v1572
      %s1605 = smul.u32 32, %s18
      %p1606 = scmp.lt.s32.totalorder %s1605, 191
      %s1607 = scalar_select %p1606, %s1605, 191
      %p1608 = scmp.lt.s32.totalorder %s19, 0
      %s1609 = scalar_select %p1608, %s19, 0
      %s1610 = sadd.s32 %s1609, %s1607
      %s1611 = smul.addr %s1610, 4
      %s1612 = scalar_lea.vmem %s3, %s1611
      // Predicated region
      $region33: #{branch_0_fun.6} parent=31 // pred_check
        %p1613 = pneg %p124
      $region34: #{branch_0_fun.6} parent=31 // pred_check_branch
        %1615 = sbr.rel (%p1613) target = $region36
      $region35: #{branch_0_fun.6} parent=31 // pred_region
        %s1616 = smul.u32 32, %s18
      $region36: #{branch_0_fun.6} parent=31 // pred_fallthru
        _
    $region32: #{branch_0_fun.6} parent=5 // pred_fallthru
      _
    %p1617 = scmp.le.s32.totalorder 2, %s9
    // Predicated region
    $region37: #{branch_0_fun.6} parent=5 // pred_check
      %p1618 = pneg %p1617
    $region38: #{branch_0_fun.6} parent=5 // pred_check_branch
      %1620 = sbr.rel (%p1618) target = $region40
    $region39: #{branch_0_fun.6} parent=5 // pred_region
      %s1621 = ssub.s32 %s9, 2
      // Predicated region
      $region41: #{branch_0_fun.6} parent=39 // pred_check
        %p1622 = pneg %p130
      $region42: #{branch_0_fun.6} parent=39 // pred_check_branch
        %1624 = sbr.rel (%p1622) target = $region44
      $region43: #{branch_0_fun.6} parent=39 // pred_region
        %s1625 = smul.u32 32, %s20
        %p1626 = scmp.lt.s32.totalorder %s1625, 191
        %s1627 = scalar_select %p1626, %s1625, 191
        %p1628 = scmp.lt.s32.totalorder %s21, 0
        %s1629 = scalar_select %p1628, %s21, 0
        %s1630 = sadd.s32 %s1629, %s1627
        %s1631 = smul.addr %s1630, 4
        %s1632 = scalar_lea.vmem %s3, %s1631
      $region44: #{branch_0_fun.6} parent=39 // pred_fallthru
        _
    $region40: #{branch_0_fun.6} parent=5 // pred_fallthru
      _
  $region6: #{branch_0_fun.6} parent=0 // loop_footer
    %s13 = sadd.s32 1, %s9
  $region7: #{branch_0_fun.6} parent=0 // loop_footer_branch
    %8 = sbr.rel target = $region3
  $region8: #{branch_0_fun.6} parent=0 // loop_exit
    _

// kernel: branch_0_fun.7
$region0: #{branch_0_fun.7}
  #allocation0 [shape = 'u32[]', space=smem, size = 0x4, offset = 0x4, fixed_abs, tag = 'smem constant byte address 0x4 - core index']
  #allocation1 [shape = 'u32[72,128]{1,0:T(1,128)}', space=vmem, size = 0x9000, scoped, tag = 'internal scratch']
  #allocation2 [shape = 'f32[16,512]{1,0:T(8,128)}', space=vmem, size = 0x8000, scoped, tag = 'scratch operand']
  %s0 = inlined_call_operand.vmem [shape: bf16[16,22528], index: 0, kind: input, shape index: {}]
  %s1 = inlined_call_operand.hbm [shape: bf16[22528,1024], index: 1, kind: input, shape index: {}]
  %s2 = inlined_call_operand.vmem [shape: f32[1,1024], index: 2, kind: input, shape index: {}]
  %s3 = inlined_call_operand.vmem [shape: bf16[16,1024], index: 3, kind: output, shape index: {}]
  %s4 = sld [smem:[#allocation0]]
  $region99: #{branch_0_fun.7} parent=0
    _
  %s6 = ssub.s32 1, %s4
  %s7 = scalar_select 0, %s6, %s4
  $region1: #{branch_0_fun.7} parent=0
    #allocation3 [shape = 'u8[65536]{0}', space=vmem, size = 0x10000, scoped, tag = 'input window, operand 0']
    #allocation4 [shape = 'u8[2097152]{0}', space=vmem, size = 0x200000, scoped, tag = 'input window, operand 1']
    #allocation5 [shape = 's32[2]{0}', space=sflag, size = 0x8, scoped, tag = 'scoped memory for branch_0_fun.7']
    #allocation6 [shape = 'u8[32768]{0}', space=vmem, size = 0x8000, scoped, tag = 'output window, operand 0']
    %8 = vsyncpa [#allocation5], 0
    %s9 = scalar_lea.sflag [#allocation5], 1
    %10 = vsyncpa %s9, 0
    loop: start=0, step=1, limit=46
    $region2: #{branch_0_fun.7} parent=1 // loop_pre_header
      _
    $region3: #{branch_0_fun.7} parent=1 // loop_header
      %s12 = sphi 0, %s16
      %p13 = scmp.ge.s32.totalorder %s12, 46
      %s19 = sphi 0, %s38
      %s20 = sphi 0, %s34
      %s21 = sphi 0, %s30
      %s22 = sphi 0, %s19
      %s23 = sphi 0, %s20
      %s24 = sphi 0, %s21
      %s25 = sphi 0, %s22
      %s26 = sphi 0, %s23
      %s27 = sphi 0, %s24
      %s43 = sphi 0, %s45
      %s46 = sphi 0, %s43
      %s47 = sphi 0, %s46
      %s63 = sphi 0, %s47
      %s71 = sphi 0, %s73
      %s74 = sphi 0, %s71
      %s75 = sphi 0, %s74
      %s91 = sphi 0, %s75
      %s97 = sphi 0, %s99
      %s100 = sphi 0, %s97
      %s101 = sphi 0, %s100
      %s117 = sphi 0, %s101
      %s125 = sphi 0, %s127
      %s128 = sphi 0, %s125
      %s129 = sphi 0, %s128
      %s145 = sphi 0, %s129
    $region4: #{branch_0_fun.7} parent=1 // loop_header_branch
      %15 = sbr.rel (%p13) target = $region8
    $region5: #{branch_0_fun.7} parent=1 // loop_body
      %s17 = ssub.s32 %s12, 1
      %s18 = ssub.s32 %s12, 2
      %s28 = sadd.s32 1, %s21
      %p29 = scmp.ge.s32.totalorder %s28, 22
      %s30 = scalar_select %p29, 0, %s28
      %s31 = sadd.s32 1, %s20
      %s32 = scalar_select %p29, %s31, %s20
      %p33 = scmp.ge.s32.totalorder %s32, 2
      %s34 = scalar_select %p33, 0, %s32
      %s35 = sadd.s32 1, %s19
      %s36 = scalar_select %p33, %s35, %s19
      %p37 = scmp.ge.s32.totalorder %s36, 1
      %s38 = scalar_select %p37, 0, %s36
      %s39 = ssub.s32 %s19, %s38
      %s40 = ssub.s32 %s21, %s30
      %s41 = sor.u32 %s39, %s40
      %p42 = scmp.eq.s32.totalorder %s41, 0
      %s44 = sadd.s32 %s43, 1
      %s45 = scalar_select %p42, %s43, %s44
      %p48 = pneg %p42
      %p49 = scmp.eq.s32.totalorder %s12, 43
      %p50 = por %p48, %p49
      %p51 = scmp.ne.s32.totalorder %s43, %s46
      %p52 = scmp.eq.s32.totalorder %s12, 0
      %p53 = por %p51, %p52
      %p54 = scmp.ne.s32.totalorder %s43, %s46
      %p55 = scmp.eq.s32.totalorder %s17, 43
      %p56 = por %p54, %p55
      %p57 = scmp.ne.s32.totalorder %s46, %s47
      %p58 = scmp.eq.s32.totalorder %s17, 0
      %p59 = por %p57, %p58
      %p60 = scmp.ne.s32.totalorder %s46, %s47
      %p61 = scmp.eq.s32.totalorder %s18, 43
      %p62 = por %p60, %p61
      %p64 = scmp.ne.s32.totalorder %s47, %s63
      %p65 = scmp.eq.s32.totalorder %s18, 0
      %p66 = por %p64, %p65
      %s67 = ssub.s32 %s21, %s30
      %s68 = ssub.s32 %s20, %s34
      %s69 = sor.u32 %s67, %s68
      %p70 = scmp.eq.s32.totalorder %s69, 0
      %s72 = sadd.s32 %s71, 1
      %s73 = scalar_select %p70, %s71, %s72
      %p76 = pneg %p70
      %p77 = scmp.eq.s32.totalorder %s12, 43
      %p78 = por %p76, %p77
      %p79 = scmp.ne.s32.totalorder %s71, %s74
      %p80 = scmp.eq.s32.totalorder %s12, 0
      %p81 = por %p79, %p80
      %p82 = scmp.ne.s32.totalorder %s71, %s74
      %p83 = scmp.eq.s32.totalorder %s17, 43
      %p84 = por %p82, %p83
      %p85 = scmp.ne.s32.totalorder %s74, %s75
      %p86 = scmp.eq.s32.totalorder %s17, 0
      %p87 = por %p85, %p86
      %p88 = scmp.ne.s32.totalorder %s74, %s75
      %p89 = scmp.eq.s32.totalorder %s18, 43
      %p90 = por %p88, %p89
      %p92 = scmp.ne.s32.totalorder %s75, %s91
      %p93 = scmp.eq.s32.totalorder %s18, 0
      %p94 = por %p92, %p93
      %s95 = ssub.s32 %s20, %s34
      %p96 = scmp.eq.s32.totalorder %s95, 0
      %s98 = sadd.s32 %s97, 1
      %s99 = scalar_select %p96, %s97, %s98
      %p102 = pneg %p96
      %p103 = scmp.eq.s32.totalorder %s12, 43
      %p104 = por %p102, %p103
      %p105 = scmp.ne.s32.totalorder %s97, %s100
      %p106 = scmp.eq.s32.totalorder %s12, 0
      %p107 = por %p105, %p106
      %p108 = scmp.ne.s32.totalorder %s97, %s100
      %p109 = scmp.eq.s32.totalorder %s17, 43
      %p110 = por %p108, %p109
      %p111 = scmp.ne.s32.totalorder %s100, %s101
      %p112 = scmp.eq.s32.totalorder %s17, 0
      %p113 = por %p111, %p112
      %p114 = scmp.ne.s32.totalorder %s100, %s101
      %p115 = scmp.eq.s32.totalorder %s18, 43
      %p116 = por %p114, %p115
      %p118 = scmp.ne.s32.totalorder %s101, %s117
      %p119 = scmp.eq.s32.totalorder %s18, 0
      %p120 = por %p118, %p119
      %s121 = ssub.s32 %s19, %s38
      %s122 = ssub.s32 %s20, %s34
      %s123 = sor.u32 %s121, %s122
      %p124 = scmp.eq.s32.totalorder %s123, 0
      %s126 = sadd.s32 %s125, 1
      %s127 = scalar_select %p124, %s125, %s126
      %p130 = pneg %p124
      %p131 = scmp.eq.s32.totalorder %s12, 43
      %p132 = por %p130, %p131
      %p133 = scmp.ne.s32.totalorder %s125, %s128
      %p134 = scmp.eq.s32.totalorder %s12, 0
      %p135 = por %p133, %p134
      %p136 = scmp.ne.s32.totalorder %s125, %s128
      %p137 = scmp.eq.s32.totalorder %s17, 43
      %p138 = por %p136, %p137
      %p139 = scmp.ne.s32.totalorder %s128, %s129
      %p140 = scmp.eq.s32.totalorder %s17, 0
      %p141 = por %p139, %p140
      %p142 = scmp.ne.s32.totalorder %s128, %s129
      %p143 = scmp.eq.s32.totalorder %s18, 43
      %p144 = por %p142, %p143
      %p146 = scmp.ne.s32.totalorder %s129, %s145
      %p147 = scmp.eq.s32.totalorder %s18, 0
      %p148 = por %p146, %p147
      %p149 = scmp.le.s32.totalorder 1, %s12
      %p150 = scmp.lt.s32.totalorder %s12, 45
      %p151 = pnand %p149, %p150
      %p152 = pneg %p151
      // Predicated region
      $region9: #{branch_0_fun.7} parent=5 // pred_check
        _
      $region10: #{branch_0_fun.7} parent=5 // pred_check_branch
        %154 = sbr.rel (%p151) target = $region12
      $region11: #{branch_0_fun.7} parent=5 // pred_region
        %s155 = ssub.s32 %s12, 1
      $region12: #{branch_0_fun.7} parent=5 // pred_fallthru
        _
      %p156 = scmp.lt.s32.totalorder %s12, 44
      // Predicated region
      $region13: #{branch_0_fun.7} parent=5 // pred_check
        %p157 = pneg %p156
      $region14: #{branch_0_fun.7} parent=5 // pred_check_branch
        %159 = sbr.rel (%p157) target = $region16
      $region15: #{branch_0_fun.7} parent=5 // pred_region
        // Predicated region
        $region17: #{branch_0_fun.7} parent=15 // pred_check
          %p160 = pneg %p53
        $region18: #{branch_0_fun.7} parent=15 // pred_check_branch
          %162 = sbr.rel (%p160) target = $region20
        $region19: #{branch_0_fun.7} parent=15 // pred_region
          %s163 = sand.u32 %s43, 1
          %s164 = sand.u32 %s43, 1
          %s165 = smul.addr %s164, 64
          %s166 = scalar_lea.vmem [#allocation3], %s165
          %s167 = smul.u32 2, %s19
          %s168 = smul.u32 8, %s21
          %s169 = smul.addr %s167, 176
          %s170 = sadd.s32 %s168, %s169
          %s171 = smul.addr %s170, 4
          %s172 = scalar_lea.vmem %s0, %s171
          // Predicated region
          $region21: #{branch_0_fun.7} parent=19 // pred_check
            _
          $region22: #{branch_0_fun.7} parent=19 // pred_check_branch
            %174 = sbr.rel (0) target = $region24
          $region23: #{branch_0_fun.7} parent=19 // pred_region
            // Predicated region
            $region25: #{branch_0_fun.7} parent=23 // pred_check
              _
            $region26: #{branch_0_fun.7} parent=23 // pred_check_branch
              %176 = sbr.rel (0) target = $region28
            $region27: #{branch_0_fun.7} parent=23 // pred_region
              loop: start=0, step=1, limit=1
              $region29: #{branch_0_fun.7} parent=27 // loop_pre_header
                _
              $region30: #{branch_0_fun.7} parent=27 // loop_header
                %s178 = sphi 0, %s182
                %p179 = scmp.ge.s32.totalorder %s178, 1
                %s183 = sphi %s172, %s172
                %s184 = sphi %s166, %s166
              $region31: #{branch_0_fun.7} parent=27 // loop_header_branch
                %181 = sbr.rel (%p179) target = $region35
              $region32: #{branch_0_fun.7} parent=27 // loop_body
                %v185 = vld [vmem:[%s183] sm:$0xff]
                %186 = vst [vmem:[%s184] sm:$0xff] %v185
                %v187 = vld [vmem:[%s183 + $0x8] sm:$0xff]
                %188 = vst [vmem:[%s184 + $0x8] sm:$0xff] %v187
                %v189 = vld [vmem:[%s183 + $0x10] sm:$0xff]
                %190 = vst [vmem:[%s184 + $0x10] sm:$0xff] %v189
                %v191 = vld [vmem:[%s183 + $0x18] sm:$0xff]
                %192 = vst [vmem:[%s184 + $0x18] sm:$0xff] %v191
                %v193 = vld [vmem:[%s183 + $0x2c0] sm:$0xff]
                %194 = vst [vmem:[%s184 + $0x20] sm:$0xff] %v193
                %v195 = vld [vmem:[%s183 + $0x2c8] sm:$0xff]
                %196 = vst [vmem:[%s184 + $0x28] sm:$0xff] %v195
                %v197 = vld [vmem:[%s183 + $0x2d0] sm:$0xff]
                %198 = vst [vmem:[%s184 + $0x30] sm:$0xff] %v197
                %v199 = vld [vmem:[%s183 + $0x2d8] sm:$0xff]
                %200 = vst [vmem:[%s184 + $0x38] sm:$0xff] %v199
              $region33: #{branch_0_fun.7} parent=27 // loop_footer
                %s182 = sadd.s32 1, %s178
              $region34: #{branch_0_fun.7} parent=27 // loop_footer_branch
                %177 = sbr.rel target = $region30
              $region35: #{branch_0_fun.7} parent=27 // loop_exit
                _
            $region28: #{branch_0_fun.7} parent=23 // pred_fallthru
              _
            // Predicated region
            $region36: #{branch_0_fun.7} parent=23 // pred_check
              _
            $region37: #{branch_0_fun.7} parent=23 // pred_check_branch
              %202 = sbr.rel target = $region39
            $region38: #{branch_0_fun.7} parent=23 // pred_region
              _
            $region39: #{branch_0_fun.7} parent=23 // pred_fallthru
              _
          $region24: #{branch_0_fun.7} parent=19 // pred_fallthru
            _
          %203 = vnop
        $region20: #{branch_0_fun.7} parent=15 // pred_fallthru
          _
        // Predicated region
        $region40: #{branch_0_fun.7} parent=15 // pred_check
          %p204 = pneg %p81
        $region41: #{branch_0_fun.7} parent=15 // pred_check_branch
          %206 = sbr.rel (%p204) target = $region43
        $region42: #{branch_0_fun.7} parent=15 // pred_region
          %s207 = sand.u32 %s71, 1
          %s208 = scalar_lea.sflag [#allocation5], %s207
          %s209 = sand.u32 %s71, 1
          %s210 = smul.addr %s209, 2048
          %s211 = scalar_lea.vmem [#allocation4], %s210
          %s212 = smul.u32 128, %s21
          %s213 = smul.u32 4, %s20
          %215 = vsyncadd %s208, 0
          %s216 = smul.addr %s212, 8
          %s217 = sadd.s32 %s213, %s216
          %s218 = smul.addr %s217, 4
          %s219 = scalar_lea.hbm %s1, %s218
          %s220 = sshll.u32 %s219, 4
          %s221 = int_to_ptr.hbm [resolvable:$true] %s220
          %s222 = sshll.u32 %s211, 4
          %s223 = int_to_ptr.vmem [resolvable:$true] %s222
          %228 = dma.hbm_to_vmem [thread:$0]  %s221, 32768, %s223, %s208, 512, 256, 16
        $region43: #{branch_0_fun.7} parent=15 // pred_fallthru
          _
        // Predicated region
        $region44: #{branch_0_fun.7} parent=15 // pred_check
          %p229 = pneg %p107
        $region45: #{branch_0_fun.7} parent=15 // pred_check_branch
          %231 = sbr.rel (%p229) target = $region47
        $region46: #{branch_0_fun.7} parent=15 // pred_region
          %s232 = smul.u32 4, %s20
          %p233 = scmp.lt.s32.totalorder %s232, 7
          %s234 = scalar_select %p233, %s232, 7
          %s235 = scalar_lea.vmem %s2, %s234
          %s236 = smul.u32 4, %s20
        $region47: #{branch_0_fun.7} parent=15 // pred_fallthru
          _
      $region16: #{branch_0_fun.7} parent=5 // pred_fallthru
        _
      %p237 = scmp.le.s32.totalorder 1, %s12
      %p238 = scmp.lt.s32.totalorder %s12, 45
      %p239 = pnand %p237, %p238
      %p240 = pneg %p239
      // Predicated region
      $region48: #{branch_0_fun.7} parent=5 // pred_check
        _
      $region49: #{branch_0_fun.7} parent=5 // pred_check_branch
        %242 = sbr.rel (%p239) target = $region51
      $region50: #{branch_0_fun.7} parent=5 // pred_region
        %s243 = ssub.s32 %s12, 1
        %s244 = sand.u32 %s46, 1
        %s245 = sand.u32 %s46, 1
        %s246 = smul.addr %s245, 64
        %s247 = scalar_lea.vmem [#allocation3], %s246
        // Predicated region
        $region52: #{branch_0_fun.7} parent=50 // pred_check
          %p248 = pneg %p59
        $region53: #{branch_0_fun.7} parent=50 // pred_check_branch
          %250 = sbr.rel (%p248) target = $region55
        $region54: #{branch_0_fun.7} parent=50 // pred_region
          _
        $region55: #{branch_0_fun.7} parent=50 // pred_fallthru
          _
        %s251 = sand.u32 %s74, 1
        %s252 = scalar_lea.sflag [#allocation5], %s251
        %s253 = sand.u32 %s74, 1
        %s254 = smul.addr %s253, 2048
        %s255 = scalar_lea.vmem [#allocation4], %s254
        // Predicated region
        $region56: #{branch_0_fun.7} parent=50 // pred_check
          %p256 = pneg %p87
        $region57: #{branch_0_fun.7} parent=50 // pred_check_branch
          %258 = sbr.rel (%p256) target = $region59
        $region58: #{branch_0_fun.7} parent=50 // pred_region
          %260 = dma.done %s252, 32768
        $region59: #{branch_0_fun.7} parent=50 // pred_fallthru
          _
        %s261 = sand.u32 %s46, 1
        %s262 = sand.u32 %s46, 1
        %s263 = smul.addr %s262, 64
        %s264 = scalar_lea.vmem [#allocation3], %s263
        %p265 = pneg %p59
        %p266 = pneg %p56
        %s267 = sand.u32 %s74, 1
        %s268 = scalar_lea.sflag [#allocation5], %s267
        %s269 = sand.u32 %s74, 1
        %s270 = smul.addr %s269, 2048
        %s271 = scalar_lea.vmem [#allocation4], %s270
        %p272 = pneg %p87
        %p273 = pneg %p84
        %s274 = smul.u32 4, %s23
        %p275 = scmp.lt.s32.totalorder %s274, 7
        %s276 = scalar_select %p275, %s274, 7
        %s277 = scalar_lea.vmem %s2, %s276
        %p278 = pneg %p113
        %p279 = pneg %p110
        %p280 = pneg %p141
        %p281 = pneg %p138
        %s282 = sand.u32 %s128, 1
        %s283 = sand.u32 %s128, 1
        %s284 = smul.addr %s283, 32
        %s285 = scalar_lea.vmem [#allocation6], %s284
        %s286 = smul.u32 2, %s22
        %s287 = smul.u32 8, %s24
        %s288 = smul.u32 128, %s24
        %s289 = smul.u32 4, %s23
        %s290 = smul.u32 4, %s23
        %p291 = scmp.lt.s32.totalorder %s290, 7
        %s292 = scalar_select %p291, %s290, 7
        %s293 = scalar_lea.vmem %s2, %s292
        %s294 = smul.u32 4, %s23
        %s295 = smul.u32 2, %s22
        %s296 = smul.u32 4, %s23
        %p297 = scmp.eq.s32.totalorder %s24, 0
        // Predicated region
        $region60: #{branch_0_fun.7} parent=50 // pred_check
          %p298 = pneg %p297
        $region61: #{branch_0_fun.7} parent=50 // pred_check_branch
          %300 = sbr.rel (%p298) target = $region63
        $region62: #{branch_0_fun.7} parent=50 // pred_region
          %301 = vst [vmem:[#allocation2] sm:$0xff] 0.0
          %302 = vst [vmem:[#allocation2 + $0x8] sm:$0xff] 0.0
          %303 = vst [vmem:[#allocation2 + $0x10] sm:$0xff] 0.0
          %304 = vst [vmem:[#allocation2 + $0x18] sm:$0xff] 0.0
          %305 = vst [vmem:[#allocation2 + $0x20] sm:$0xff] 0.0
          %306 = vst [vmem:[#allocation2 + $0x28] sm:$0xff] 0.0
          %307 = vst [vmem:[#allocation2 + $0x30] sm:$0xff] 0.0
          %308 = vst [vmem:[#allocation2 + $0x38] sm:$0xff] 0.0
        $region63: #{branch_0_fun.7} parent=50 // pred_fallthru
          _
        %v309 = vld [vmem:[#allocation2] sm:$0xff]
        %v310 = vld [vmem:[#allocation2 + $0x8] sm:$0xff]
        %v311 = vld [vmem:[#allocation2 + $0x10] sm:$0xff]
        %v312 = vld [vmem:[#allocation2 + $0x18] sm:$0xff]
        %v313 = vld [vmem:[#allocation2 + $0x20] sm:$0xff]
        %v314 = vld [vmem:[#allocation2 + $0x28] sm:$0xff]
        %v315 = vld [vmem:[#allocation2 + $0x30] sm:$0xff]
        %v316 = vld [vmem:[#allocation2 + $0x38] sm:$0xff]
        %v317 = vld [vmem:[%s247] sm:$0xff]
        %v318 = vld [vmem:[%s247 + $0x8] sm:$0xff]
        %v319 = vld [vmem:[%s247 + $0x10] sm:$0xff]
        %v320 = vld [vmem:[%s247 + $0x18] sm:$0xff]
        %v321 = vld [vmem:[%s247 + $0x20] sm:$0xff]
        %v322 = vld [vmem:[%s247 + $0x28] sm:$0xff]
        %v323 = vld [vmem:[%s247 + $0x30] sm:$0xff]
        %v324 = vld [vmem:[%s247 + $0x38] sm:$0xff]
        %v325 = vld [vmem:[%s255] sm:$0xff]
        %v326 = vld [vmem:[%s255 + $0x8] sm:$0xff]
        %v327 = vld [vmem:[%s255 + $0x10] sm:$0xff]
        %v328 = vld [vmem:[%s255 + $0x18] sm:$0xff]
        %v329 = vld [vmem:[%s255 + $0x20] sm:$0xff]
        %v330 = vld [vmem:[%s255 + $0x28] sm:$0xff]
        %v331 = vld [vmem:[%s255 + $0x30] sm:$0xff]
        %v332 = vld [vmem:[%s255 + $0x38] sm:$0xff]
        %v333 = vld [vmem:[%s255 + $0x40] sm:$0xff]
        %v334 = vld [vmem:[%s255 + $0x48] sm:$0xff]
        %v335 = vld [vmem:[%s255 + $0x50] sm:$0xff]
        %v336 = vld [vmem:[%s255 + $0x58] sm:$0xff]
        %v337 = vld [vmem:[%s255 + $0x60] sm:$0xff]
        %v338 = vld [vmem:[%s255 + $0x68] sm:$0xff]
        %v339 = vld [vmem:[%s255 + $0x70] sm:$0xff]
        %v340 = vld [vmem:[%s255 + $0x78] sm:$0xff]
        %v341 = vld [vmem:[%s255 + $0x80] sm:$0xff]
        %v342 = vld [vmem:[%s255 + $0x88] sm:$0xff]
        %v343 = vld [vmem:[%s255 + $0x90] sm:$0xff]
        %v344 = vld [vmem:[%s255 + $0x98] sm:$0xff]
        %v345 = vld [vmem:[%s255 + $0xa0] sm:$0xff]
        %v346 = vld [vmem:[%s255 + $0xa8] sm:$0xff]
        %v347 = vld [vmem:[%s255 + $0xb0] sm:$0xff]
        %v348 = vld [vmem:[%s255 + $0xb8] sm:$0xff]
        %v349 = vld [vmem:[%s255 + $0xc0] sm:$0xff]
        %v350 = vld [vmem:[%s255 + $0xc8] sm:$0xff]
        %v351 = vld [vmem:[%s255 + $0xd0] sm:$0xff]
        %v352 = vld [vmem:[%s255 + $0xd8] sm:$0xff]
        %v353 = vld [vmem:[%s255 + $0xe0] sm:$0xff]
        %v354 = vld [vmem:[%s255 + $0xe8] sm:$0xff]
        %v355 = vld [vmem:[%s255 + $0xf0] sm:$0xff]
        %v356 = vld [vmem:[%s255 + $0xf8] sm:$0xff]
        %v357 = vld [vmem:[%s255 + $0x100] sm:$0xff]
        %v358 = vld [vmem:[%s255 + $0x108] sm:$0xff]
        %v359 = vld [vmem:[%s255 + $0x110] sm:$0xff]
        %v360 = vld [vmem:[%s255 + $0x118] sm:$0xff]
        %v361 = vld [vmem:[%s255 + $0x120] sm:$0xff]
        %v362 = vld [vmem:[%s255 + $0x128] sm:$0xff]
        %v363 = vld [vmem:[%s255 + $0x130] sm:$0xff]
        %v364 = vld [vmem:[%s255 + $0x138] sm:$0xff]
        %v365 = vld [vmem:[%s255 + $0x140] sm:$0xff]
        %v366 = vld [vmem:[%s255 + $0x148] sm:$0xff]
        %v367 = vld [vmem:[%s255 + $0x150] sm:$0xff]
        %v368 = vld [vmem:[%s255 + $0x158] sm:$0xff]
        %v369 = vld [vmem:[%s255 + $0x160] sm:$0xff]
        %v370 = vld [vmem:[%s255 + $0x168] sm:$0xff]
        %v371 = vld [vmem:[%s255 + $0x170] sm:$0xff]
        %v372 = vld [vmem:[%s255 + $0x178] sm:$0xff]
        %v373 = vld [vmem:[%s255 + $0x180] sm:$0xff]
        %v374 = vld [vmem:[%s255 + $0x188] sm:$0xff]
        %v375 = vld [vmem:[%s255 + $0x190] sm:$0xff]
        %v376 = vld [vmem:[%s255 + $0x198] sm:$0xff]
        %v377 = vld [vmem:[%s255 + $0x1a0] sm:$0xff]
        %v378 = vld [vmem:[%s255 + $0x1a8] sm:$0xff]
        %v379 = vld [vmem:[%s255 + $0x1b0] sm:$0xff]
        %v380 = vld [vmem:[%s255 + $0x1b8] sm:$0xff]
        %v381 = vld [vmem:[%s255 + $0x1c0] sm:$0xff]
        %v382 = vld [vmem:[%s255 + $0x1c8] sm:$0xff]
        %v383 = vld [vmem:[%s255 + $0x1d0] sm:$0xff]
        %v384 = vld [vmem:[%s255 + $0x1d8] sm:$0xff]
        %v385 = vld [vmem:[%s255 + $0x1e0] sm:$0xff]
        %v386 = vld [vmem:[%s255 + $0x1e8] sm:$0xff]
        %v387 = vld [vmem:[%s255 + $0x1f0] sm:$0xff]
        %v388 = vld [vmem:[%s255 + $0x1f8] sm:$0xff]
        %v389 = vld [vmem:[%s255 + $0x200] sm:$0xff]
        %v390 = vld [vmem:[%s255 + $0x208] sm:$0xff]
        %v391 = vld [vmem:[%s255 + $0x210] sm:$0xff]
        %v392 = vld [vmem:[%s255 + $0x218] sm:$0xff]
        %v393 = vld [vmem:[%s255 + $0x220] sm:$0xff]
        %v394 = vld [vmem:[%s255 + $0x228] sm:$0xff]
        %v395 = vld [vmem:[%s255 + $0x230] sm:$0xff]
        %v396 = vld [vmem:[%s255 + $0x238] sm:$0xff]
        %v397 = vld [vmem:[%s255 + $0x240] sm:$0xff]
        %v398 = vld [vmem:[%s255 + $0x248] sm:$0xff]
        %v399 = vld [vmem:[%s255 + $0x250] sm:$0xff]
        %v400 = vld [vmem:[%s255 + $0x258] sm:$0xff]
        %v401 = vld [vmem:[%s255 + $0x260] sm:$0xff]
        %v402 = vld [vmem:[%s255 + $0x268] sm:$0xff]
        %v403 = vld [vmem:[%s255 + $0x270] sm:$0xff]
        %v404 = vld [vmem:[%s255 + $0x278] sm:$0xff]
        %v405 = vld [vmem:[%s255 + $0x280] sm:$0xff]
        %v406 = vld [vmem:[%s255 + $0x288] sm:$0xff]
        %v407 = vld [vmem:[%s255 + $0x290] sm:$0xff]
        %v408 = vld [vmem:[%s255 + $0x298] sm:$0xff]
        %v409 = vld [vmem:[%s255 + $0x2a0] sm:$0xff]
        %v410 = vld [vmem:[%s255 + $0x2a8] sm:$0xff]
        %v411 = vld [vmem:[%s255 + $0x2b0] sm:$0xff]
        %v412 = vld [vmem:[%s255 + $0x2b8] sm:$0xff]
        %v413 = vld [vmem:[%s255 + $0x2c0] sm:$0xff]
        %v414 = vld [vmem:[%s255 + $0x2c8] sm:$0xff]
        %v415 = vld [vmem:[%s255 + $0x2d0] sm:$0xff]
        %v416 = vld [vmem:[%s255 + $0x2d8] sm:$0xff]
        %v417 = vld [vmem:[%s255 + $0x2e0] sm:$0xff]
        %v418 = vld [vmem:[%s255 + $0x2e8] sm:$0xff]
        %v419 = vld [vmem:[%s255 + $0x2f0] sm:$0xff]
        %v420 = vld [vmem:[%s255 + $0x2f8] sm:$0xff]
        %v421 = vld [vmem:[%s255 + $0x300] sm:$0xff]
        %v422 = vld [vmem:[%s255 + $0x308] sm:$0xff]
        %v423 = vld [vmem:[%s255 + $0x310] sm:$0xff]
        %v424 = vld [vmem:[%s255 + $0x318] sm:$0xff]
        %v425 = vld [vmem:[%s255 + $0x320] sm:$0xff]
        %v426 = vld [vmem:[%s255 + $0x328] sm:$0xff]
        %v427 = vld [vmem:[%s255 + $0x330] sm:$0xff]
        %v428 = vld [vmem:[%s255 + $0x338] sm:$0xff]
        %v429 = vld [vmem:[%s255 + $0x340] sm:$0xff]
        %v430 = vld [vmem:[%s255 + $0x348] sm:$0xff]
        %v431 = vld [vmem:[%s255 + $0x350] sm:$0xff]
        %v432 = vld [vmem:[%s255 + $0x358] sm:$0xff]
        %v433 = vld [vmem:[%s255 + $0x360] sm:$0xff]
        %v434 = vld [vmem:[%s255 + $0x368] sm:$0xff]
        %v435 = vld [vmem:[%s255 + $0x370] sm:$0xff]
        %v436 = vld [vmem:[%s255 + $0x378] sm:$0xff]
        %v437 = vld [vmem:[%s255 + $0x380] sm:$0xff]
        %v438 = vld [vmem:[%s255 + $0x388] sm:$0xff]
        %v439 = vld [vmem:[%s255 + $0x390] sm:$0xff]
        %v440 = vld [vmem:[%s255 + $0x398] sm:$0xff]
        %v441 = vld [vmem:[%s255 + $0x3a0] sm:$0xff]
        %v442 = vld [vmem:[%s255 + $0x3a8] sm:$0xff]
        %v443 = vld [vmem:[%s255 + $0x3b0] sm:$0xff]
        %v444 = vld [vmem:[%s255 + $0x3b8] sm:$0xff]
        %v445 = vld [vmem:[%s255 + $0x3c0] sm:$0xff]
        %v446 = vld [vmem:[%s255 + $0x3c8] sm:$0xff]
        %v447 = vld [vmem:[%s255 + $0x3d0] sm:$0xff]
        %v448 = vld [vmem:[%s255 + $0x3d8] sm:$0xff]
        %v449 = vld [vmem:[%s255 + $0x3e0] sm:$0xff]
        %v450 = vld [vmem:[%s255 + $0x3e8] sm:$0xff]
        %v451 = vld [vmem:[%s255 + $0x3f0] sm:$0xff]
        %v452 = vld [vmem:[%s255 + $0x3f8] sm:$0xff]
        %v453 = vld [vmem:[%s255 + $0x400] sm:$0xff]
        %v454 = vld [vmem:[%s255 + $0x408] sm:$0xff]
        %v455 = vld [vmem:[%s255 + $0x410] sm:$0xff]
        %v456 = vld [vmem:[%s255 + $0x418] sm:$0xff]
        %v457 = vld [vmem:[%s255 + $0x420] sm:$0xff]
        %v458 = vld [vmem:[%s255 + $0x428] sm:$0xff]
        %v459 = vld [vmem:[%s255 + $0x430] sm:$0xff]
        %v460 = vld [vmem:[%s255 + $0x438] sm:$0xff]
        %v461 = vld [vmem:[%s255 + $0x440] sm:$0xff]
        %v462 = vld [vmem:[%s255 + $0x448] sm:$0xff]
        %v463 = vld [vmem:[%s255 + $0x450] sm:$0xff]
        %v464 = vld [vmem:[%s255 + $0x458] sm:$0xff]
        %v465 = vld [vmem:[%s255 + $0x460] sm:$0xff]
        %v466 = vld [vmem:[%s255 + $0x468] sm:$0xff]
        %v467 = vld [vmem:[%s255 + $0x470] sm:$0xff]
        %v468 = vld [vmem:[%s255 + $0x478] sm:$0xff]
        %v469 = vld [vmem:[%s255 + $0x480] sm:$0xff]
        %v470 = vld [vmem:[%s255 + $0x488] sm:$0xff]
        %v471 = vld [vmem:[%s255 + $0x490] sm:$0xff]
        %v472 = vld [vmem:[%s255 + $0x498] sm:$0xff]
        %v473 = vld [vmem:[%s255 + $0x4a0] sm:$0xff]
        %v474 = vld [vmem:[%s255 + $0x4a8] sm:$0xff]
        %v475 = vld [vmem:[%s255 + $0x4b0] sm:$0xff]
        %v476 = vld [vmem:[%s255 + $0x4b8] sm:$0xff]
        %v477 = vld [vmem:[%s255 + $0x4c0] sm:$0xff]
        %v478 = vld [vmem:[%s255 + $0x4c8] sm:$0xff]
        %v479 = vld [vmem:[%s255 + $0x4d0] sm:$0xff]
        %v480 = vld [vmem:[%s255 + $0x4d8] sm:$0xff]
        %v481 = vld [vmem:[%s255 + $0x4e0] sm:$0xff]
        %v482 = vld [vmem:[%s255 + $0x4e8] sm:$0xff]
        %v483 = vld [vmem:[%s255 + $0x4f0] sm:$0xff]
        %v484 = vld [vmem:[%s255 + $0x4f8] sm:$0xff]
        %v485 = vld [vmem:[%s255 + $0x500] sm:$0xff]
        %v486 = vld [vmem:[%s255 + $0x508] sm:$0xff]
        %v487 = vld [vmem:[%s255 + $0x510] sm:$0xff]
        %v488 = vld [vmem:[%s255 + $0x518] sm:$0xff]
        %v489 = vld [vmem:[%s255 + $0x520] sm:$0xff]
        %v490 = vld [vmem:[%s255 + $0x528] sm:$0xff]
        %v491 = vld [vmem:[%s255 + $0x530] sm:$0xff]
        %v492 = vld [vmem:[%s255 + $0x538] sm:$0xff]
        %v493 = vld [vmem:[%s255 + $0x540] sm:$0xff]
        %v494 = vld [vmem:[%s255 + $0x548] sm:$0xff]
        %v495 = vld [vmem:[%s255 + $0x550] sm:$0xff]
        %v496 = vld [vmem:[%s255 + $0x558] sm:$0xff]
        %v497 = vld [vmem:[%s255 + $0x560] sm:$0xff]
        %v498 = vld [vmem:[%s255 + $0x568] sm:$0xff]
        %v499 = vld [vmem:[%s255 + $0x570] sm:$0xff]
        %v500 = vld [vmem:[%s255 + $0x578] sm:$0xff]
        %v501 = vld [vmem:[%s255 + $0x580] sm:$0xff]
        %v502 = vld [vmem:[%s255 + $0x588] sm:$0xff]
        %v503 = vld [vmem:[%s255 + $0x590] sm:$0xff]
        %v504 = vld [vmem:[%s255 + $0x598] sm:$0xff]
        %v505 = vld [vmem:[%s255 + $0x5a0] sm:$0xff]
        %v506 = vld [vmem:[%s255 + $0x5a8] sm:$0xff]
        %v507 = vld [vmem:[%s255 + $0x5b0] sm:$0xff]
        %v508 = vld [vmem:[%s255 + $0x5b8] sm:$0xff]
        %v509 = vld [vmem:[%s255 + $0x5c0] sm:$0xff]
        %v510 = vld [vmem:[%s255 + $0x5c8] sm:$0xff]
        %v511 = vld [vmem:[%s255 + $0x5d0] sm:$0xff]
        %v512 = vld [vmem:[%s255 + $0x5d8] sm:$0xff]
        %v513 = vld [vmem:[%s255 + $0x5e0] sm:$0xff]
        %v514 = vld [vmem:[%s255 + $0x5e8] sm:$0xff]
        %v515 = vld [vmem:[%s255 + $0x5f0] sm:$0xff]
        %v516 = vld [vmem:[%s255 + $0x5f8] sm:$0xff]
        %v517 = vld [vmem:[%s255 + $0x600] sm:$0xff]
        %v518 = vld [vmem:[%s255 + $0x608] sm:$0xff]
        %v519 = vld [vmem:[%s255 + $0x610] sm:$0xff]
        %v520 = vld [vmem:[%s255 + $0x618] sm:$0xff]
        %v521 = vld [vmem:[%s255 + $0x620] sm:$0xff]
        %v522 = vld [vmem:[%s255 + $0x628] sm:$0xff]
        %v523 = vld [vmem:[%s255 + $0x630] sm:$0xff]
        %v524 = vld [vmem:[%s255 + $0x638] sm:$0xff]
        %v525 = vld [vmem:[%s255 + $0x640] sm:$0xff]
        %v526 = vld [vmem:[%s255 + $0x648] sm:$0xff]
        %v527 = vld [vmem:[%s255 + $0x650] sm:$0xff]
        %v528 = vld [vmem:[%s255 + $0x658] sm:$0xff]
        %v529 = vld [vmem:[%s255 + $0x660] sm:$0xff]
        %v530 = vld [vmem:[%s255 + $0x668] sm:$0xff]
        %v531 = vld [vmem:[%s255 + $0x670] sm:$0xff]
        %v532 = vld [vmem:[%s255 + $0x678] sm:$0xff]
        %v533 = vld [vmem:[%s255 + $0x680] sm:$0xff]
        %v534 = vld [vmem:[%s255 + $0x688] sm:$0xff]
        %v535 = vld [vmem:[%s255 + $0x690] sm:$0xff]
        %v536 = vld [vmem:[%s255 + $0x698] sm:$0xff]
        %v537 = vld [vmem:[%s255 + $0x6a0] sm:$0xff]
        %v538 = vld [vmem:[%s255 + $0x6a8] sm:$0xff]
        %v539 = vld [vmem:[%s255 + $0x6b0] sm:$0xff]
        %v540 = vld [vmem:[%s255 + $0x6b8] sm:$0xff]
        %v541 = vld [vmem:[%s255 + $0x6c0] sm:$0xff]
        %v542 = vld [vmem:[%s255 + $0x6c8] sm:$0xff]
        %v543 = vld [vmem:[%s255 + $0x6d0] sm:$0xff]
        %v544 = vld [vmem:[%s255 + $0x6d8] sm:$0xff]
        %v545 = vld [vmem:[%s255 + $0x6e0] sm:$0xff]
        %v546 = vld [vmem:[%s255 + $0x6e8] sm:$0xff]
        %v547 = vld [vmem:[%s255 + $0x6f0] sm:$0xff]
        %v548 = vld [vmem:[%s255 + $0x6f8] sm:$0xff]
        %v549 = vld [vmem:[%s255 + $0x700] sm:$0xff]
        %v550 = vld [vmem:[%s255 + $0x708] sm:$0xff]
        %v551 = vld [vmem:[%s255 + $0x710] sm:$0xff]
        %v552 = vld [vmem:[%s255 + $0x718] sm:$0xff]
        %v553 = vld [vmem:[%s255 + $0x720] sm:$0xff]
        %v554 = vld [vmem:[%s255 + $0x728] sm:$0xff]
        %v555 = vld [vmem:[%s255 + $0x730] sm:$0xff]
        %v556 = vld [vmem:[%s255 + $0x738] sm:$0xff]
        %v557 = vld [vmem:[%s255 + $0x740] sm:$0xff]
        %v558 = vld [vmem:[%s255 + $0x748] sm:$0xff]
        %v559 = vld [vmem:[%s255 + $0x750] sm:$0xff]
        %v560 = vld [vmem:[%s255 + $0x758] sm:$0xff]
        %v561 = vld [vmem:[%s255 + $0x760] sm:$0xff]
        %v562 = vld [vmem:[%s255 + $0x768] sm:$0xff]
        %v563 = vld [vmem:[%s255 + $0x770] sm:$0xff]
        %v564 = vld [vmem:[%s255 + $0x778] sm:$0xff]
        %v565 = vld [vmem:[%s255 + $0x780] sm:$0xff]
        %v566 = vld [vmem:[%s255 + $0x788] sm:$0xff]
        %v567 = vld [vmem:[%s255 + $0x790] sm:$0xff]
        %v568 = vld [vmem:[%s255 + $0x798] sm:$0xff]
        %v569 = vld [vmem:[%s255 + $0x7a0] sm:$0xff]
        %v570 = vld [vmem:[%s255 + $0x7a8] sm:$0xff]
        %v571 = vld [vmem:[%s255 + $0x7b0] sm:$0xff]
        %v572 = vld [vmem:[%s255 + $0x7b8] sm:$0xff]
        %v573 = vld [vmem:[%s255 + $0x7c0] sm:$0xff]
        %v574 = vld [vmem:[%s255 + $0x7c8] sm:$0xff]
        %v575 = vld [vmem:[%s255 + $0x7d0] sm:$0xff]
        %v576 = vld [vmem:[%s255 + $0x7d8] sm:$0xff]
        %v577 = vld [vmem:[%s255 + $0x7e0] sm:$0xff]
        %v578 = vld [vmem:[%s255 + $0x7e8] sm:$0xff]
        %v579 = vld [vmem:[%s255 + $0x7f0] sm:$0xff]
        %v580 = vld [vmem:[%s255 + $0x7f8] sm:$0xff]
        %v589 = vunpack.c.l.b16 %v317
        %v590 = vunpack.c.h.b16 %v317
        %v591 = vunpack.c.l.b16 %v318
        %v592 = vunpack.c.h.b16 %v318
        %v593 = vunpack.c.l.b16 %v319
        %v594 = vunpack.c.h.b16 %v319
        %v595 = vunpack.c.l.b16 %v320
        %v596 = vunpack.c.h.b16 %v320
        %v597 = vunpack.c.l.b16 %v321
        %v598 = vunpack.c.h.b16 %v321
        %v599 = vunpack.c.l.b16 %v322
        %v600 = vunpack.c.h.b16 %v322
        %v601 = vunpack.c.l.b16 %v323
        %v602 = vunpack.c.h.b16 %v323
        %v603 = vunpack.c.l.b16 %v324
        %v604 = vunpack.c.h.b16 %v324
        %v605 = vpack.c.b16 %v597, %v589
        %v606 = vpack.c.b16 %v598, %v590
        %v607 = vpack.c.b16 %v599, %v591
        %v608 = vpack.c.b16 %v600, %v592
        %v609 = vpack.c.b16 %v601, %v593
        %v610 = vpack.c.b16 %v602, %v594
        %v611 = vpack.c.b16 %v603, %v595
        %v612 = vpack.c.b16 %v604, %v596
        %v877 = vunpack.c.l.b16 %v325
        %v878 = vunpack.c.h.b16 %v325
        %v879 = vunpack.c.l.b16 %v326
        %v880 = vunpack.c.h.b16 %v326
        %v881 = vunpack.c.l.b16 %v327
        %v882 = vunpack.c.h.b16 %v327
        %v883 = vunpack.c.l.b16 %v328
        %v884 = vunpack.c.h.b16 %v328
        %v885 = vunpack.c.l.b16 %v329
        %v886 = vunpack.c.h.b16 %v329
        %v887 = vunpack.c.l.b16 %v330
        %v888 = vunpack.c.h.b16 %v330
        %v889 = vunpack.c.l.b16 %v331
        %v890 = vunpack.c.h.b16 %v331
        %v891 = vunpack.c.l.b16 %v332
        %v892 = vunpack.c.h.b16 %v332
        %v893 = vunpack.c.l.b16 %v333
        %v894 = vunpack.c.h.b16 %v333
        %v895 = vunpack.c.l.b16 %v334
        %v896 = vunpack.c.h.b16 %v334
        %v897 = vunpack.c.l.b16 %v335
        %v898 = vunpack.c.h.b16 %v335
        %v899 = vunpack.c.l.b16 %v336
        %v900 = vunpack.c.h.b16 %v336
        %v901 = vunpack.c.l.b16 %v337
        %v902 = vunpack.c.h.b16 %v337
        %v903 = vunpack.c.l.b16 %v338
        %v904 = vunpack.c.h.b16 %v338
        %v905 = vunpack.c.l.b16 %v339
        %v906 = vunpack.c.h.b16 %v339
        %v907 = vunpack.c.l.b16 %v340
        %v908 = vunpack.c.h.b16 %v340
        %v909 = vunpack.c.l.b16 %v341
        %v910 = vunpack.c.h.b16 %v341
        %v911 = vunpack.c.l.b16 %v342
        %v912 = vunpack.c.h.b16 %v342
        %v913 = vunpack.c.l.b16 %v343
        %v914 = vunpack.c.h.b16 %v343
        %v915 = vunpack.c.l.b16 %v344
        %v916 = vunpack.c.h.b16 %v344
        %v917 = vunpack.c.l.b16 %v345
        %v918 = vunpack.c.h.b16 %v345
        %v919 = vunpack.c.l.b16 %v346
        %v920 = vunpack.c.h.b16 %v346
        %v921 = vunpack.c.l.b16 %v347
        %v922 = vunpack.c.h.b16 %v347
        %v923 = vunpack.c.l.b16 %v348
        %v924 = vunpack.c.h.b16 %v348
        %v925 = vunpack.c.l.b16 %v349
        %v926 = vunpack.c.h.b16 %v349
        %v927 = vunpack.c.l.b16 %v350
        %v928 = vunpack.c.h.b16 %v350
        %v929 = vunpack.c.l.b16 %v351
        %v930 = vunpack.c.h.b16 %v351
        %v931 = vunpack.c.l.b16 %v352
        %v932 = vunpack.c.h.b16 %v352
        %v933 = vunpack.c.l.b16 %v353
        %v934 = vunpack.c.h.b16 %v353
        %v935 = vunpack.c.l.b16 %v354
        %v936 = vunpack.c.h.b16 %v354
        %v937 = vunpack.c.l.b16 %v355
        %v938 = vunpack.c.h.b16 %v355
        %v939 = vunpack.c.l.b16 %v356
        %v940 = vunpack.c.h.b16 %v356
        %v941 = vunpack.c.l.b16 %v357
        %v942 = vunpack.c.h.b16 %v357
        %v943 = vunpack.c.l.b16 %v358
        %v944 = vunpack.c.h.b16 %v358
        %v945 = vunpack.c.l.b16 %v359
        %v946 = vunpack.c.h.b16 %v359
        %v947 = vunpack.c.l.b16 %v360
        %v948 = vunpack.c.h.b16 %v360
        %v949 = vunpack.c.l.b16 %v361
        %v950 = vunpack.c.h.b16 %v361
        %v951 = vunpack.c.l.b16 %v362
        %v952 = vunpack.c.h.b16 %v362
        %v953 = vunpack.c.l.b16 %v363
        %v954 = vunpack.c.h.b16 %v363
        %v955 = vunpack.c.l.b16 %v364
        %v956 = vunpack.c.h.b16 %v364
        %v957 = vunpack.c.l.b16 %v365
        %v958 = vunpack.c.h.b16 %v365
        %v959 = vunpack.c.l.b16 %v366
        %v960 = vunpack.c.h.b16 %v366
        %v961 = vunpack.c.l.b16 %v367
        %v962 = vunpack.c.h.b16 %v367
        %v963 = vunpack.c.l.b16 %v368
        %v964 = vunpack.c.h.b16 %v368
        %v965 = vunpack.c.l.b16 %v369
        %v966 = vunpack.c.h.b16 %v369
        %v967 = vunpack.c.l.b16 %v370
        %v968 = vunpack.c.h.b16 %v370
        %v969 = vunpack.c.l.b16 %v371
        %v970 = vunpack.c.h.b16 %v371
        %v971 = vunpack.c.l.b16 %v372
        %v972 = vunpack.c.h.b16 %v372
        %v973 = vunpack.c.l.b16 %v373
        %v974 = vunpack.c.h.b16 %v373
        %v975 = vunpack.c.l.b16 %v374
        %v976 = vunpack.c.h.b16 %v374
        %v977 = vunpack.c.l.b16 %v375
        %v978 = vunpack.c.h.b16 %v375
        %v979 = vunpack.c.l.b16 %v376
        %v980 = vunpack.c.h.b16 %v376
        %v981 = vunpack.c.l.b16 %v377
        %v982 = vunpack.c.h.b16 %v377
        %v983 = vunpack.c.l.b16 %v378
        %v984 = vunpack.c.h.b16 %v378
        %v985 = vunpack.c.l.b16 %v379
        %v986 = vunpack.c.h.b16 %v379
        %v987 = vunpack.c.l.b16 %v380
        %v988 = vunpack.c.h.b16 %v380
        %v989 = vunpack.c.l.b16 %v381
        %v990 = vunpack.c.h.b16 %v381
        %v991 = vunpack.c.l.b16 %v382
        %v992 = vunpack.c.h.b16 %v382
        %v993 = vunpack.c.l.b16 %v383
        %v994 = vunpack.c.h.b16 %v383
        %v995 = vunpack.c.l.b16 %v384
        %v996 = vunpack.c.h.b16 %v384
        %v997 = vunpack.c.l.b16 %v385
        %v998 = vunpack.c.h.b16 %v385
        %v999 = vunpack.c.l.b16 %v386
        %v1000 = vunpack.c.h.b16 %v386
        %v1001 = vunpack.c.l.b16 %v387
        %v1002 = vunpack.c.h.b16 %v387
        %v1003 = vunpack.c.l.b16 %v388
        %v1004 = vunpack.c.h.b16 %v388
        %v1005 = vunpack.c.l.b16 %v389
        %v1006 = vunpack.c.h.b16 %v389
        %v1007 = vunpack.c.l.b16 %v390
        %v1008 = vunpack.c.h.b16 %v390
        %v1009 = vunpack.c.l.b16 %v391
        %v1010 = vunpack.c.h.b16 %v391
        %v1011 = vunpack.c.l.b16 %v392
        %v1012 = vunpack.c.h.b16 %v392
        %v1013 = vunpack.c.l.b16 %v393
        %v1014 = vunpack.c.h.b16 %v393
        %v1015 = vunpack.c.l.b16 %v394
        %v1016 = vunpack.c.h.b16 %v394
        %v1017 = vunpack.c.l.b16 %v395
        %v1018 = vunpack.c.h.b16 %v395
        %v1019 = vunpack.c.l.b16 %v396
        %v1020 = vunpack.c.h.b16 %v396
        %v1021 = vunpack.c.l.b16 %v397
        %v1022 = vunpack.c.h.b16 %v397
        %v1023 = vunpack.c.l.b16 %v398
        %v1024 = vunpack.c.h.b16 %v398
        %v1025 = vunpack.c.l.b16 %v399
        %v1026 = vunpack.c.h.b16 %v399
        %v1027 = vunpack.c.l.b16 %v400
        %v1028 = vunpack.c.h.b16 %v400
        %v1029 = vunpack.c.l.b16 %v401
        %v1030 = vunpack.c.h.b16 %v401
        %v1031 = vunpack.c.l.b16 %v402
        %v1032 = vunpack.c.h.b16 %v402
        %v1033 = vunpack.c.l.b16 %v403
        %v1034 = vunpack.c.h.b16 %v403
        %v1035 = vunpack.c.l.b16 %v404
        %v1036 = vunpack.c.h.b16 %v404
        %v1037 = vunpack.c.l.b16 %v405
        %v1038 = vunpack.c.h.b16 %v405
        %v1039 = vunpack.c.l.b16 %v406
        %v1040 = vunpack.c.h.b16 %v406
        %v1041 = vunpack.c.l.b16 %v407
        %v1042 = vunpack.c.h.b16 %v407
        %v1043 = vunpack.c.l.b16 %v408
        %v1044 = vunpack.c.h.b16 %v408
        %v1045 = vunpack.c.l.b16 %v409
        %v1046 = vunpack.c.h.b16 %v409
        %v1047 = vunpack.c.l.b16 %v410
        %v1048 = vunpack.c.h.b16 %v410
        %v1049 = vunpack.c.l.b16 %v411
        %v1050 = vunpack.c.h.b16 %v411
        %v1051 = vunpack.c.l.b16 %v412
        %v1052 = vunpack.c.h.b16 %v412
        %v1053 = vunpack.c.l.b16 %v413
        %v1054 = vunpack.c.h.b16 %v413
        %v1055 = vunpack.c.l.b16 %v414
        %v1056 = vunpack.c.h.b16 %v414
        %v1057 = vunpack.c.l.b16 %v415
        %v1058 = vunpack.c.h.b16 %v415
        %v1059 = vunpack.c.l.b16 %v416
        %v1060 = vunpack.c.h.b16 %v416
        %v1061 = vunpack.c.l.b16 %v417
        %v1062 = vunpack.c.h.b16 %v417
        %v1063 = vunpack.c.l.b16 %v418
        %v1064 = vunpack.c.h.b16 %v418
        %v1065 = vunpack.c.l.b16 %v419
        %v1066 = vunpack.c.h.b16 %v419
        %v1067 = vunpack.c.l.b16 %v420
        %v1068 = vunpack.c.h.b16 %v420
        %v1069 = vunpack.c.l.b16 %v421
        %v1070 = vunpack.c.h.b16 %v421
        %v1071 = vunpack.c.l.b16 %v422
        %v1072 = vunpack.c.h.b16 %v422
        %v1073 = vunpack.c.l.b16 %v423
        %v1074 = vunpack.c.h.b16 %v423
        %v1075 = vunpack.c.l.b16 %v424
        %v1076 = vunpack.c.h.b16 %v424
        %v1077 = vunpack.c.l.b16 %v425
        %v1078 = vunpack.c.h.b16 %v425
        %v1079 = vunpack.c.l.b16 %v426
        %v1080 = vunpack.c.h.b16 %v426
        %v1081 = vunpack.c.l.b16 %v427
        %v1082 = vunpack.c.h.b16 %v427
        %v1083 = vunpack.c.l.b16 %v428
        %v1084 = vunpack.c.h.b16 %v428
        %v1085 = vunpack.c.l.b16 %v429
        %v1086 = vunpack.c.h.b16 %v429
        %v1087 = vunpack.c.l.b16 %v430
        %v1088 = vunpack.c.h.b16 %v430
        %v1089 = vunpack.c.l.b16 %v431
        %v1090 = vunpack.c.h.b16 %v431
        %v1091 = vunpack.c.l.b16 %v432
        %v1092 = vunpack.c.h.b16 %v432
        %v1093 = vunpack.c.l.b16 %v433
        %v1094 = vunpack.c.h.b16 %v433
        %v1095 = vunpack.c.l.b16 %v434
        %v1096 = vunpack.c.h.b16 %v434
        %v1097 = vunpack.c.l.b16 %v435
        %v1098 = vunpack.c.h.b16 %v435
        %v1099 = vunpack.c.l.b16 %v436
        %v1100 = vunpack.c.h.b16 %v436
        %v1101 = vunpack.c.l.b16 %v437
        %v1102 = vunpack.c.h.b16 %v437
        %v1103 = vunpack.c.l.b16 %v438
        %v1104 = vunpack.c.h.b16 %v438
        %v1105 = vunpack.c.l.b16 %v439
        %v1106 = vunpack.c.h.b16 %v439
        %v1107 = vunpack.c.l.b16 %v440
        %v1108 = vunpack.c.h.b16 %v440
        %v1109 = vunpack.c.l.b16 %v441
        %v1110 = vunpack.c.h.b16 %v441
        %v1111 = vunpack.c.l.b16 %v442
        %v1112 = vunpack.c.h.b16 %v442
        %v1113 = vunpack.c.l.b16 %v443
        %v1114 = vunpack.c.h.b16 %v443
        %v1115 = vunpack.c.l.b16 %v444
        %v1116 = vunpack.c.h.b16 %v444
        %v1117 = vunpack.c.l.b16 %v445
        %v1118 = vunpack.c.h.b16 %v445
        %v1119 = vunpack.c.l.b16 %v446
        %v1120 = vunpack.c.h.b16 %v446
        %v1121 = vunpack.c.l.b16 %v447
        %v1122 = vunpack.c.h.b16 %v447
        %v1123 = vunpack.c.l.b16 %v448
        %v1124 = vunpack.c.h.b16 %v448
        %v1125 = vunpack.c.l.b16 %v449
        %v1126 = vunpack.c.h.b16 %v449
        %v1127 = vunpack.c.l.b16 %v450
        %v1128 = vunpack.c.h.b16 %v450
        %v1129 = vunpack.c.l.b16 %v451
        %v1130 = vunpack.c.h.b16 %v451
        %v1131 = vunpack.c.l.b16 %v452
        %v1132 = vunpack.c.h.b16 %v452
        %v1133 = vunpack.c.l.b16 %v453
        %v1134 = vunpack.c.h.b16 %v453
        %v1135 = vunpack.c.l.b16 %v454
        %v1136 = vunpack.c.h.b16 %v454
        %v1137 = vunpack.c.l.b16 %v455
        %v1138 = vunpack.c.h.b16 %v455
        %v1139 = vunpack.c.l.b16 %v456
        %v1140 = vunpack.c.h.b16 %v456
        %v1141 = vunpack.c.l.b16 %v457
        %v1142 = vunpack.c.h.b16 %v457
        %v1143 = vunpack.c.l.b16 %v458
        %v1144 = vunpack.c.h.b16 %v458
        %v1145 = vunpack.c.l.b16 %v459
        %v1146 = vunpack.c.h.b16 %v459
        %v1147 = vunpack.c.l.b16 %v460
        %v1148 = vunpack.c.h.b16 %v460
        %v1149 = vunpack.c.l.b16 %v461
        %v1150 = vunpack.c.h.b16 %v461
        %v1151 = vunpack.c.l.b16 %v462
        %v1152 = vunpack.c.h.b16 %v462
        %v1153 = vunpack.c.l.b16 %v463
        %v1154 = vunpack.c.h.b16 %v463
        %v1155 = vunpack.c.l.b16 %v464
        %v1156 = vunpack.c.h.b16 %v464
        %v1157 = vunpack.c.l.b16 %v465
        %v1158 = vunpack.c.h.b16 %v465
        %v1159 = vunpack.c.l.b16 %v466
        %v1160 = vunpack.c.h.b16 %v466
        %v1161 = vunpack.c.l.b16 %v467
        %v1162 = vunpack.c.h.b16 %v467
        %v1163 = vunpack.c.l.b16 %v468
        %v1164 = vunpack.c.h.b16 %v468
        %v1165 = vunpack.c.l.b16 %v469
        %v1166 = vunpack.c.h.b16 %v469
        %v1167 = vunpack.c.l.b16 %v470
        %v1168 = vunpack.c.h.b16 %v470
        %v1169 = vunpack.c.l.b16 %v471
        %v1170 = vunpack.c.h.b16 %v471
        %v1171 = vunpack.c.l.b16 %v472
        %v1172 = vunpack.c.h.b16 %v472
        %v1173 = vunpack.c.l.b16 %v473
        %v1174 = vunpack.c.h.b16 %v473
        %v1175 = vunpack.c.l.b16 %v474
        %v1176 = vunpack.c.h.b16 %v474
        %v1177 = vunpack.c.l.b16 %v475
        %v1178 = vunpack.c.h.b16 %v475
        %v1179 = vunpack.c.l.b16 %v476
        %v1180 = vunpack.c.h.b16 %v476
        %v1181 = vunpack.c.l.b16 %v477
        %v1182 = vunpack.c.h.b16 %v477
        %v1183 = vunpack.c.l.b16 %v478
        %v1184 = vunpack.c.h.b16 %v478
        %v1185 = vunpack.c.l.b16 %v479
        %v1186 = vunpack.c.h.b16 %v479
        %v1187 = vunpack.c.l.b16 %v480
        %v1188 = vunpack.c.h.b16 %v480
        %v1189 = vunpack.c.l.b16 %v481
        %v1190 = vunpack.c.h.b16 %v481
        %v1191 = vunpack.c.l.b16 %v482
        %v1192 = vunpack.c.h.b16 %v482
        %v1193 = vunpack.c.l.b16 %v483
        %v1194 = vunpack.c.h.b16 %v483
        %v1195 = vunpack.c.l.b16 %v484
        %v1196 = vunpack.c.h.b16 %v484
        %v1197 = vunpack.c.l.b16 %v485
        %v1198 = vunpack.c.h.b16 %v485
        %v1199 = vunpack.c.l.b16 %v486
        %v1200 = vunpack.c.h.b16 %v486
        %v1201 = vunpack.c.l.b16 %v487
        %v1202 = vunpack.c.h.b16 %v487
        %v1203 = vunpack.c.l.b16 %v488
        %v1204 = vunpack.c.h.b16 %v488
        %v1205 = vunpack.c.l.b16 %v489
        %v1206 = vunpack.c.h.b16 %v489
        %v1207 = vunpack.c.l.b16 %v490
        %v1208 = vunpack.c.h.b16 %v490
        %v1209 = vunpack.c.l.b16 %v491
        %v1210 = vunpack.c.h.b16 %v491
        %v1211 = vunpack.c.l.b16 %v492
        %v1212 = vunpack.c.h.b16 %v492
        %v1213 = vunpack.c.l.b16 %v493
        %v1214 = vunpack.c.h.b16 %v493
        %v1215 = vunpack.c.l.b16 %v494
        %v1216 = vunpack.c.h.b16 %v494
        %v1217 = vunpack.c.l.b16 %v495
        %v1218 = vunpack.c.h.b16 %v495
        %v1219 = vunpack.c.l.b16 %v496
        %v1220 = vunpack.c.h.b16 %v496
        %v1221 = vunpack.c.l.b16 %v497
        %v1222 = vunpack.c.h.b16 %v497
        %v1223 = vunpack.c.l.b16 %v498
        %v1224 = vunpack.c.h.b16 %v498
        %v1225 = vunpack.c.l.b16 %v499
        %v1226 = vunpack.c.h.b16 %v499
        %v1227 = vunpack.c.l.b16 %v500
        %v1228 = vunpack.c.h.b16 %v500
        %v1229 = vunpack.c.l.b16 %v501
        %v1230 = vunpack.c.h.b16 %v501
        %v1231 = vunpack.c.l.b16 %v502
        %v1232 = vunpack.c.h.b16 %v502
        %v1233 = vunpack.c.l.b16 %v503
        %v1234 = vunpack.c.h.b16 %v503
        %v1235 = vunpack.c.l.b16 %v504
        %v1236 = vunpack.c.h.b16 %v504
        %v1237 = vunpack.c.l.b16 %v505
        %v1238 = vunpack.c.h.b16 %v505
        %v1239 = vunpack.c.l.b16 %v506
        %v1240 = vunpack.c.h.b16 %v506
        %v1241 = vunpack.c.l.b16 %v507
        %v1242 = vunpack.c.h.b16 %v507
        %v1243 = vunpack.c.l.b16 %v508
        %v1244 = vunpack.c.h.b16 %v508
        %v1245 = vunpack.c.l.b16 %v509
        %v1246 = vunpack.c.h.b16 %v509
        %v1247 = vunpack.c.l.b16 %v510
        %v1248 = vunpack.c.h.b16 %v510
        %v1249 = vunpack.c.l.b16 %v511
        %v1250 = vunpack.c.h.b16 %v511
        %v1251 = vunpack.c.l.b16 %v512
        %v1252 = vunpack.c.h.b16 %v512
        %v1253 = vunpack.c.l.b16 %v513
        %v1254 = vunpack.c.h.b16 %v513
        %v1255 = vunpack.c.l.b16 %v514
        %v1256 = vunpack.c.h.b16 %v514
        %v1257 = vunpack.c.l.b16 %v515
        %v1258 = vunpack.c.h.b16 %v515
        %v1259 = vunpack.c.l.b16 %v516
        %v1260 = vunpack.c.h.b16 %v516
        %v1261 = vunpack.c.l.b16 %v517
        %v1262 = vunpack.c.h.b16 %v517
        %v1263 = vunpack.c.l.b16 %v518
        %v1264 = vunpack.c.h.b16 %v518
        %v1265 = vunpack.c.l.b16 %v519
        %v1266 = vunpack.c.h.b16 %v519
        %v1267 = vunpack.c.l.b16 %v520
        %v1268 = vunpack.c.h.b16 %v520
        %v1269 = vunpack.c.l.b16 %v521
        %v1270 = vunpack.c.h.b16 %v521
        %v1271 = vunpack.c.l.b16 %v522
        %v1272 = vunpack.c.h.b16 %v522
        %v1273 = vunpack.c.l.b16 %v523
        %v1274 = vunpack.c.h.b16 %v523
        %v1275 = vunpack.c.l.b16 %v524
        %v1276 = vunpack.c.h.b16 %v524
        %v1277 = vunpack.c.l.b16 %v525
        %v1278 = vunpack.c.h.b16 %v525
        %v1279 = vunpack.c.l.b16 %v526
        %v1280 = vunpack.c.h.b16 %v526
        %v1281 = vunpack.c.l.b16 %v527
        %v1282 = vunpack.c.h.b16 %v527
        %v1283 = vunpack.c.l.b16 %v528
        %v1284 = vunpack.c.h.b16 %v528
        %v1285 = vunpack.c.l.b16 %v529
        %v1286 = vunpack.c.h.b16 %v529
        %v1287 = vunpack.c.l.b16 %v530
        %v1288 = vunpack.c.h.b16 %v530
        %v1289 = vunpack.c.l.b16 %v531
        %v1290 = vunpack.c.h.b16 %v531
        %v1291 = vunpack.c.l.b16 %v532
        %v1292 = vunpack.c.h.b16 %v532
        %v1293 = vunpack.c.l.b16 %v533
        %v1294 = vunpack.c.h.b16 %v533
        %v1295 = vunpack.c.l.b16 %v534
        %v1296 = vunpack.c.h.b16 %v534
        %v1297 = vunpack.c.l.b16 %v535
        %v1298 = vunpack.c.h.b16 %v535
        %v1299 = vunpack.c.l.b16 %v536
        %v1300 = vunpack.c.h.b16 %v536
        %v1301 = vunpack.c.l.b16 %v537
        %v1302 = vunpack.c.h.b16 %v537
        %v1303 = vunpack.c.l.b16 %v538
        %v1304 = vunpack.c.h.b16 %v538
        %v1305 = vunpack.c.l.b16 %v539
        %v1306 = vunpack.c.h.b16 %v539
        %v1307 = vunpack.c.l.b16 %v540
        %v1308 = vunpack.c.h.b16 %v540
        %v1309 = vunpack.c.l.b16 %v541
        %v1310 = vunpack.c.h.b16 %v541
        %v1311 = vunpack.c.l.b16 %v542
        %v1312 = vunpack.c.h.b16 %v542
        %v1313 = vunpack.c.l.b16 %v543
        %v1314 = vunpack.c.h.b16 %v543
        %v1315 = vunpack.c.l.b16 %v544
        %v1316 = vunpack.c.h.b16 %v544
        %v1317 = vunpack.c.l.b16 %v545
        %v1318 = vunpack.c.h.b16 %v545
        %v1319 = vunpack.c.l.b16 %v546
        %v1320 = vunpack.c.h.b16 %v546
        %v1321 = vunpack.c.l.b16 %v547
        %v1322 = vunpack.c.h.b16 %v547
        %v1323 = vunpack.c.l.b16 %v548
        %v1324 = vunpack.c.h.b16 %v548
        %v1325 = vunpack.c.l.b16 %v549
        %v1326 = vunpack.c.h.b16 %v549
        %v1327 = vunpack.c.l.b16 %v550
        %v1328 = vunpack.c.h.b16 %v550
        %v1329 = vunpack.c.l.b16 %v551
        %v1330 = vunpack.c.h.b16 %v551
        %v1331 = vunpack.c.l.b16 %v552
        %v1332 = vunpack.c.h.b16 %v552
        %v1333 = vunpack.c.l.b16 %v553
        %v1334 = vunpack.c.h.b16 %v553
        %v1335 = vunpack.c.l.b16 %v554
        %v1336 = vunpack.c.h.b16 %v554
        %v1337 = vunpack.c.l.b16 %v555
        %v1338 = vunpack.c.h.b16 %v555
        %v1339 = vunpack.c.l.b16 %v556
        %v1340 = vunpack.c.h.b16 %v556
        %v1341 = vunpack.c.l.b16 %v557
        %v1342 = vunpack.c.h.b16 %v557
        %v1343 = vunpack.c.l.b16 %v558
        %v1344 = vunpack.c.h.b16 %v558
        %v1345 = vunpack.c.l.b16 %v559
        %v1346 = vunpack.c.h.b16 %v559
        %v1347 = vunpack.c.l.b16 %v560
        %v1348 = vunpack.c.h.b16 %v560
        %v1349 = vunpack.c.l.b16 %v561
        %v1350 = vunpack.c.h.b16 %v561
        %v1351 = vunpack.c.l.b16 %v562
        %v1352 = vunpack.c.h.b16 %v562
        %v1353 = vunpack.c.l.b16 %v563
        %v1354 = vunpack.c.h.b16 %v563
        %v1355 = vunpack.c.l.b16 %v564
        %v1356 = vunpack.c.h.b16 %v564
        %v1357 = vunpack.c.l.b16 %v565
        %v1358 = vunpack.c.h.b16 %v565
        %v1359 = vunpack.c.l.b16 %v566
        %v1360 = vunpack.c.h.b16 %v566
        %v1361 = vunpack.c.l.b16 %v567
        %v1362 = vunpack.c.h.b16 %v567
        %v1363 = vunpack.c.l.b16 %v568
        %v1364 = vunpack.c.h.b16 %v568
        %v1365 = vunpack.c.l.b16 %v569
        %v1366 = vunpack.c.h.b16 %v569
        %v1367 = vunpack.c.l.b16 %v570
        %v1368 = vunpack.c.h.b16 %v570
        %v1369 = vunpack.c.l.b16 %v571
        %v1370 = vunpack.c.h.b16 %v571
        %v1371 = vunpack.c.l.b16 %v572
        %v1372 = vunpack.c.h.b16 %v572
        %v1373 = vunpack.c.l.b16 %v573
        %v1374 = vunpack.c.h.b16 %v573
        %v1375 = vunpack.c.l.b16 %v574
        %v1376 = vunpack.c.h.b16 %v574
        %v1377 = vunpack.c.l.b16 %v575
        %v1378 = vunpack.c.h.b16 %v575
        %v1379 = vunpack.c.l.b16 %v576
        %v1380 = vunpack.c.h.b16 %v576
        %v1381 = vunpack.c.l.b16 %v577
        %v1382 = vunpack.c.h.b16 %v577
        %v1383 = vunpack.c.l.b16 %v578
        %v1384 = vunpack.c.h.b16 %v578
        %v1385 = vunpack.c.l.b16 %v579
        %v1386 = vunpack.c.h.b16 %v579
        %v1387 = vunpack.c.l.b16 %v580
        %v1388 = vunpack.c.h.b16 %v580
        %v1389 = vpack.c.b16 %v881, %v877
        %v1390 = vpack.c.b16 %v882, %v878
        %v1391 = vpack.c.b16 %v883, %v879
        %v1392 = vpack.c.b16 %v884, %v880
        %v1393 = vpack.c.b16 %v889, %v885
        %v1394 = vpack.c.b16 %v890, %v886
        %v1395 = vpack.c.b16 %v891, %v887
        %v1396 = vpack.c.b16 %v892, %v888
        %v1397 = vpack.c.b16 %v897, %v893
        %v1398 = vpack.c.b16 %v898, %v894
        %v1399 = vpack.c.b16 %v899, %v895
        %v1400 = vpack.c.b16 %v900, %v896
        %v1401 = vpack.c.b16 %v905, %v901
        %v1402 = vpack.c.b16 %v906, %v902
        %v1403 = vpack.c.b16 %v907, %v903
        %v1404 = vpack.c.b16 %v908, %v904
        %v1405 = vpack.c.b16 %v913, %v909
        %v1406 = vpack.c.b16 %v914, %v910
        %v1407 = vpack.c.b16 %v915, %v911
        %v1408 = vpack.c.b16 %v916, %v912
        %v1409 = vpack.c.b16 %v921, %v917
        %v1410 = vpack.c.b16 %v922, %v918
        %v1411 = vpack.c.b16 %v923, %v919
        %v1412 = vpack.c.b16 %v924, %v920
        %v1413 = vpack.c.b16 %v929, %v925
        %v1414 = vpack.c.b16 %v930, %v926
        %v1415 = vpack.c.b16 %v931, %v927
        %v1416 = vpack.c.b16 %v932, %v928
        %v1417 = vpack.c.b16 %v937, %v933
        %v1418 = vpack.c.b16 %v938, %v934
        %v1419 = vpack.c.b16 %v939, %v935
        %v1420 = vpack.c.b16 %v940, %v936
        %v1421 = vpack.c.b16 %v945, %v941
        %v1422 = vpack.c.b16 %v946, %v942
        %v1423 = vpack.c.b16 %v947, %v943
        %v1424 = vpack.c.b16 %v948, %v944
        %v1425 = vpack.c.b16 %v953, %v949
        %v1426 = vpack.c.b16 %v954, %v950
        %v1427 = vpack.c.b16 %v955, %v951
        %v1428 = vpack.c.b16 %v956, %v952
        %v1429 = vpack.c.b16 %v961, %v957
        %v1430 = vpack.c.b16 %v962, %v958
        %v1431 = vpack.c.b16 %v963, %v959
        %v1432 = vpack.c.b16 %v964, %v960
        %v1433 = vpack.c.b16 %v969, %v965
        %v1434 = vpack.c.b16 %v970, %v966
        %v1435 = vpack.c.b16 %v971, %v967
        %v1436 = vpack.c.b16 %v972, %v968
        %v1437 = vpack.c.b16 %v977, %v973
        %v1438 = vpack.c.b16 %v978, %v974
        %v1439 = vpack.c.b16 %v979, %v975
        %v1440 = vpack.c.b16 %v980, %v976
        %v1441 = vpack.c.b16 %v985, %v981
        %v1442 = vpack.c.b16 %v986, %v982
        %v1443 = vpack.c.b16 %v987, %v983
        %v1444 = vpack.c.b16 %v988, %v984
        %v1445 = vpack.c.b16 %v993, %v989
        %v1446 = vpack.c.b16 %v994, %v990
        %v1447 = vpack.c.b16 %v995, %v991
        %v1448 = vpack.c.b16 %v996, %v992
        %v1449 = vpack.c.b16 %v1001, %v997
        %v1450 = vpack.c.b16 %v1002, %v998
        %v1451 = vpack.c.b16 %v1003, %v999
        %v1452 = vpack.c.b16 %v1004, %v1000
        %v1453 = vpack.c.b16 %v1009, %v1005
        %v1454 = vpack.c.b16 %v1010, %v1006
        %v1455 = vpack.c.b16 %v1011, %v1007
        %v1456 = vpack.c.b16 %v1012, %v1008
        %v1457 = vpack.c.b16 %v1017, %v1013
        %v1458 = vpack.c.b16 %v1018, %v1014
        %v1459 = vpack.c.b16 %v1019, %v1015
        %v1460 = vpack.c.b16 %v1020, %v1016
        %v1461 = vpack.c.b16 %v1025, %v1021
        %v1462 = vpack.c.b16 %v1026, %v1022
        %v1463 = vpack.c.b16 %v1027, %v1023
        %v1464 = vpack.c.b16 %v1028, %v1024
        %v1465 = vpack.c.b16 %v1033, %v1029
        %v1466 = vpack.c.b16 %v1034, %v1030
        %v1467 = vpack.c.b16 %v1035, %v1031
        %v1468 = vpack.c.b16 %v1036, %v1032
        %v1469 = vpack.c.b16 %v1041, %v1037
        %v1470 = vpack.c.b16 %v1042, %v1038
        %v1471 = vpack.c.b16 %v1043, %v1039
        %v1472 = vpack.c.b16 %v1044, %v1040
        %v1473 = vpack.c.b16 %v1049, %v1045
        %v1474 = vpack.c.b16 %v1050, %v1046
        %v1475 = vpack.c.b16 %v1051, %v1047
        %v1476 = vpack.c.b16 %v1052, %v1048
        %v1477 = vpack.c.b16 %v1057, %v1053
        %v1478 = vpack.c.b16 %v1058, %v1054
        %v1479 = vpack.c.b16 %v1059, %v1055
        %v1480 = vpack.c.b16 %v1060, %v1056
        %v1481 = vpack.c.b16 %v1065, %v1061
        %v1482 = vpack.c.b16 %v1066, %v1062
        %v1483 = vpack.c.b16 %v1067, %v1063
        %v1484 = vpack.c.b16 %v1068, %v1064
        %v1485 = vpack.c.b16 %v1073, %v1069
        %v1486 = vpack.c.b16 %v1074, %v1070
        %v1487 = vpack.c.b16 %v1075, %v1071
        %v1488 = vpack.c.b16 %v1076, %v1072
        %v1489 = vpack.c.b16 %v1081, %v1077
        %v1490 = vpack.c.b16 %v1082, %v1078
        %v1491 = vpack.c.b16 %v1083, %v1079
        %v1492 = vpack.c.b16 %v1084, %v1080
        %v1493 = vpack.c.b16 %v1089, %v1085
        %v1494 = vpack.c.b16 %v1090, %v1086
        %v1495 = vpack.c.b16 %v1091, %v1087
        %v1496 = vpack.c.b16 %v1092, %v1088
        %v1497 = vpack.c.b16 %v1097, %v1093
        %v1498 = vpack.c.b16 %v1098, %v1094
        %v1499 = vpack.c.b16 %v1099, %v1095
        %v1500 = vpack.c.b16 %v1100, %v1096
        %v1501 = vpack.c.b16 %v1105, %v1101
        %v1502 = vpack.c.b16 %v1106, %v1102
        %v1503 = vpack.c.b16 %v1107, %v1103
        %v1504 = vpack.c.b16 %v1108, %v1104
        %v1505 = vpack.c.b16 %v1113, %v1109
        %v1506 = vpack.c.b16 %v1114, %v1110
        %v1507 = vpack.c.b16 %v1115, %v1111
        %v1508 = vpack.c.b16 %v1116, %v1112
        %v1509 = vpack.c.b16 %v1121, %v1117
        %v1510 = vpack.c.b16 %v1122, %v1118
        %v1511 = vpack.c.b16 %v1123, %v1119
        %v1512 = vpack.c.b16 %v1124, %v1120
        %v1513 = vpack.c.b16 %v1129, %v1125
        %v1514 = vpack.c.b16 %v1130, %v1126
        %v1515 = vpack.c.b16 %v1131, %v1127
        %v1516 = vpack.c.b16 %v1132, %v1128
        %v1517 = vpack.c.b16 %v1137, %v1133
        %v1518 = vpack.c.b16 %v1138, %v1134
        %v1519 = vpack.c.b16 %v1139, %v1135
        %v1520 = vpack.c.b16 %v1140, %v1136
        %v1521 = vpack.c.b16 %v1145, %v1141
        %v1522 = vpack.c.b16 %v1146, %v1142
        %v1523 = vpack.c.b16 %v1147, %v1143
        %v1524 = vpack.c.b16 %v1148, %v1144
        %v1525 = vpack.c.b16 %v1153, %v1149
        %v1526 = vpack.c.b16 %v1154, %v1150
        %v1527 = vpack.c.b16 %v1155, %v1151
        %v1528 = vpack.c.b16 %v1156, %v1152
        %v1529 = vpack.c.b16 %v1161, %v1157
        %v1530 = vpack.c.b16 %v1162, %v1158
        %v1531 = vpack.c.b16 %v1163, %v1159
        %v1532 = vpack.c.b16 %v1164, %v1160
        %v1533 = vpack.c.b16 %v1169, %v1165
        %v1534 = vpack.c.b16 %v1170, %v1166
        %v1535 = vpack.c.b16 %v1171, %v1167
        %v1536 = vpack.c.b16 %v1172, %v1168
        %v1537 = vpack.c.b16 %v1177, %v1173
        %v1538 = vpack.c.b16 %v1178, %v1174
        %v1539 = vpack.c.b16 %v1179, %v1175
        %v1540 = vpack.c.b16 %v1180, %v1176
        %v1541 = vpack.c.b16 %v1185, %v1181
        %v1542 = vpack.c.b16 %v1186, %v1182
        %v1543 = vpack.c.b16 %v1187, %v1183
        %v1544 = vpack.c.b16 %v1188, %v1184
        %v1545 = vpack.c.b16 %v1193, %v1189
        %v1546 = vpack.c.b16 %v1194, %v1190
        %v1547 = vpack.c.b16 %v1195, %v1191
        %v1548 = vpack.c.b16 %v1196, %v1192
        %v1549 = vpack.c.b16 %v1201, %v1197
        %v1550 = vpack.c.b16 %v1202, %v1198
        %v1551 = vpack.c.b16 %v1203, %v1199
        %v1552 = vpack.c.b16 %v1204, %v1200
        %v1553 = vpack.c.b16 %v1209, %v1205
        %v1554 = vpack.c.b16 %v1210, %v1206
        %v1555 = vpack.c.b16 %v1211, %v1207
        %v1556 = vpack.c.b16 %v1212, %v1208
        %v1557 = vpack.c.b16 %v1217, %v1213
        %v1558 = vpack.c.b16 %v1218, %v1214
        %v1559 = vpack.c.b16 %v1219, %v1215
        %v1560 = vpack.c.b16 %v1220, %v1216
        %v1561 = vpack.c.b16 %v1225, %v1221
        %v1562 = vpack.c.b16 %v1226, %v1222
        %v1563 = vpack.c.b16 %v1227, %v1223
        %v1564 = vpack.c.b16 %v1228, %v1224
        %v1565 = vpack.c.b16 %v1233, %v1229
        %v1566 = vpack.c.b16 %v1234, %v1230
        %v1567 = vpack.c.b16 %v1235, %v1231
        %v1568 = vpack.c.b16 %v1236, %v1232
        %v1569 = vpack.c.b16 %v1241, %v1237
        %v1570 = vpack.c.b16 %v1242, %v1238
        %v1571 = vpack.c.b16 %v1243, %v1239
        %v1572 = vpack.c.b16 %v1244, %v1240
        %v1573 = vpack.c.b16 %v1249, %v1245
        %v1574 = vpack.c.b16 %v1250, %v1246
        %v1575 = vpack.c.b16 %v1251, %v1247
        %v1576 = vpack.c.b16 %v1252, %v1248
        %v1577 = vpack.c.b16 %v1257, %v1253
        %v1578 = vpack.c.b16 %v1258, %v1254
        %v1579 = vpack.c.b16 %v1259, %v1255
        %v1580 = vpack.c.b16 %v1260, %v1256
        %v1581 = vpack.c.b16 %v1265, %v1261
        %v1582 = vpack.c.b16 %v1266, %v1262
        %v1583 = vpack.c.b16 %v1267, %v1263
        %v1584 = vpack.c.b16 %v1268, %v1264
        %v1585 = vpack.c.b16 %v1273, %v1269
        %v1586 = vpack.c.b16 %v1274, %v1270
        %v1587 = vpack.c.b16 %v1275, %v1271
        %v1588 = vpack.c.b16 %v1276, %v1272
        %v1589 = vpack.c.b16 %v1281, %v1277
        %v1590 = vpack.c.b16 %v1282, %v1278
        %v1591 = vpack.c.b16 %v1283, %v1279
        %v1592 = vpack.c.b16 %v1284, %v1280
        %v1593 = vpack.c.b16 %v1289, %v1285
        %v1594 = vpack.c.b16 %v1290, %v1286
        %v1595 = vpack.c.b16 %v1291, %v1287
        %v1596 = vpack.c.b16 %v1292, %v1288
        %v1597 = vpack.c.b16 %v1297, %v1293
        %v1598 = vpack.c.b16 %v1298, %v1294
        %v1599 = vpack.c.b16 %v1299, %v1295
        %v1600 = vpack.c.b16 %v1300, %v1296
        %v1601 = vpack.c.b16 %v1305, %v1301
        %v1602 = vpack.c.b16 %v1306, %v1302
        %v1603 = vpack.c.b16 %v1307, %v1303
        %v1604 = vpack.c.b16 %v1308, %v1304
        %v1605 = vpack.c.b16 %v1313, %v1309
        %v1606 = vpack.c.b16 %v1314, %v1310
        %v1607 = vpack.c.b16 %v1315, %v1311
        %v1608 = vpack.c.b16 %v1316, %v1312
        %v1609 = vpack.c.b16 %v1321, %v1317
        %v1610 = vpack.c.b16 %v1322, %v1318
        %v1611 = vpack.c.b16 %v1323, %v1319
        %v1612 = vpack.c.b16 %v1324, %v1320
        %v1613 = vpack.c.b16 %v1329, %v1325
        %v1614 = vpack.c.b16 %v1330, %v1326
        %v1615 = vpack.c.b16 %v1331, %v1327
        %v1616 = vpack.c.b16 %v1332, %v1328
        %v1617 = vpack.c.b16 %v1337, %v1333
        %v1618 = vpack.c.b16 %v1338, %v1334
        %v1619 = vpack.c.b16 %v1339, %v1335
        %v1620 = vpack.c.b16 %v1340, %v1336
        %v1621 = vpack.c.b16 %v1345, %v1341
        %v1622 = vpack.c.b16 %v1346, %v1342
        %v1623 = vpack.c.b16 %v1347, %v1343
        %v1624 = vpack.c.b16 %v1348, %v1344
        %v1625 = vpack.c.b16 %v1353, %v1349
        %v1626 = vpack.c.b16 %v1354, %v1350
        %v1627 = vpack.c.b16 %v1355, %v1351
        %v1628 = vpack.c.b16 %v1356, %v1352
        %v1629 = vpack.c.b16 %v1361, %v1357
        %v1630 = vpack.c.b16 %v1362, %v1358
        %v1631 = vpack.c.b16 %v1363, %v1359
        %v1632 = vpack.c.b16 %v1364, %v1360
        %v1633 = vpack.c.b16 %v1369, %v1365
        %v1634 = vpack.c.b16 %v1370, %v1366
        %v1635 = vpack.c.b16 %v1371, %v1367
        %v1636 = vpack.c.b16 %v1372, %v1368
        %v1637 = vpack.c.b16 %v1377, %v1373
        %v1638 = vpack.c.b16 %v1378, %v1374
        %v1639 = vpack.c.b16 %v1379, %v1375
        %v1640 = vpack.c.b16 %v1380, %v1376
        %v1641 = vpack.c.b16 %v1385, %v1381
        %v1642 = vpack.c.b16 %v1386, %v1382
        %v1643 = vpack.c.b16 %v1387, %v1383
        %v1644 = vpack.c.b16 %v1388, %v1384
        %1901 = vmatpush.bf16.msra.mxu0 %v1417
        %1902 = vmatpush.bf16.msra.mxu0 %v1413
        %1903 = vmatpush.bf16.msra.mxu0 %v1409
        %1904 = vmatpush.bf16.msra.mxu0 %v1405
        %1905 = vmatpush.bf16.msra.mxu0 %v1401
        %1906 = vmatpush.bf16.msra.mxu0 %v1397
        %1907 = vmatpush.bf16.msra.mxu0 %v1393
        %1908 = vmatpush.bf16.msra.mxu0 %v1389
        %1909 = vmatmul.bf16.gmra.mxu0 %v605
        %v1910 = vpop.f32.mrf.mxu0
        %v1911 = vadd.f32 0.0, %v1910
        %v1912 = vpop.f32.mrf.mxu0
        %v1913 = vadd.f32 0.0, %v1912
        %1914 = vdwg.mxu0
        %1915 = vmatpush.bf16.msra.mxu0 %v1449
        %1916 = vmatpush.bf16.msra.mxu0 %v1445
        %1917 = vmatpush.bf16.msra.mxu0 %v1441
        %1918 = vmatpush.bf16.msra.mxu0 %v1437
        %1919 = vmatpush.bf16.msra.mxu0 %v1433
        %1920 = vmatpush.bf16.msra.mxu0 %v1429
        %1921 = vmatpush.bf16.msra.mxu0 %v1425
        %1922 = vmatpush.bf16.msra.mxu0 %v1421
        %1923 = vmatmul.bf16.gmra.mxu0 %v606
        %v1924 = vpop.f32.mrf.mxu0
        %v1925 = vadd.f32 %v1911, %v1924
        %v1926 = vpop.f32.mrf.mxu0
        %v1927 = vadd.f32 %v1913, %v1926
        %1928 = vdwg.mxu0
        %1929 = vmatpush.bf16.msra.mxu0 %v1481
        %1930 = vmatpush.bf16.msra.mxu0 %v1477
        %1931 = vmatpush.bf16.msra.mxu0 %v1473
        %1932 = vmatpush.bf16.msra.mxu0 %v1469
        %1933 = vmatpush.bf16.msra.mxu0 %v1465
        %1934 = vmatpush.bf16.msra.mxu0 %v1461
        %1935 = vmatpush.bf16.msra.mxu0 %v1457
        %1936 = vmatpush.bf16.msra.mxu0 %v1453
        %1937 = vmatmul.bf16.gmra.mxu0 %v607
        %v1938 = vpop.f32.mrf.mxu0
        %v1939 = vadd.f32 %v1925, %v1938
        %v1940 = vpop.f32.mrf.mxu0
        %v1941 = vadd.f32 %v1927, %v1940
        %1942 = vdwg.mxu0
        %1943 = vmatpush.bf16.msra.mxu0 %v1513
        %1944 = vmatpush.bf16.msra.mxu0 %v1509
        %1945 = vmatpush.bf16.msra.mxu0 %v1505
        %1946 = vmatpush.bf16.msra.mxu0 %v1501
        %1947 = vmatpush.bf16.msra.mxu0 %v1497
        %1948 = vmatpush.bf16.msra.mxu0 %v1493
        %1949 = vmatpush.bf16.msra.mxu0 %v1489
        %1950 = vmatpush.bf16.msra.mxu0 %v1485
        %1951 = vmatmul.bf16.gmra.mxu0 %v608
        %v1952 = vpop.f32.mrf.mxu0
        %v1953 = vadd.f32 %v1939, %v1952
        %v1954 = vpop.f32.mrf.mxu0
        %v1955 = vadd.f32 %v1941, %v1954
        %1956 = vdwg.mxu0
        %1957 = vmatpush.bf16.msra.mxu0 %v1545
        %1958 = vmatpush.bf16.msra.mxu0 %v1541
        %1959 = vmatpush.bf16.msra.mxu0 %v1537
        %1960 = vmatpush.bf16.msra.mxu0 %v1533
        %1961 = vmatpush.bf16.msra.mxu0 %v1529
        %1962 = vmatpush.bf16.msra.mxu0 %v1525
        %1963 = vmatpush.bf16.msra.mxu0 %v1521
        %1964 = vmatpush.bf16.msra.mxu0 %v1517
        %1965 = vmatmul.bf16.gmra.mxu0 %v609
        %v1966 = vpop.f32.mrf.mxu0
        %v1967 = vadd.f32 %v1953, %v1966
        %v1968 = vpop.f32.mrf.mxu0
        %v1969 = vadd.f32 %v1955, %v1968
        %1970 = vdwg.mxu0
        %1971 = vmatpush.bf16.msra.mxu0 %v1577
        %1972 = vmatpush.bf16.msra.mxu0 %v1573
        %1973 = vmatpush.bf16.msra.mxu0 %v1569
        %1974 = vmatpush.bf16.msra.mxu0 %v1565
        %1975 = vmatpush.bf16.msra.mxu0 %v1561
        %1976 = vmatpush.bf16.msra.mxu0 %v1557
        %1977 = vmatpush.bf16.msra.mxu0 %v1553
        %1978 = vmatpush.bf16.msra.mxu0 %v1549
        %1979 = vmatmul.bf16.gmra.mxu0 %v610
        %v1980 = vpop.f32.mrf.mxu0
        %v1981 = vadd.f32 %v1967, %v1980
        %v1982 = vpop.f32.mrf.mxu0
        %v1983 = vadd.f32 %v1969, %v1982
        %1984 = vdwg.mxu0
        %1985 = vmatpush.bf16.msra.mxu0 %v1609
        %1986 = vmatpush.bf16.msra.mxu0 %v1605
        %1987 = vmatpush.bf16.msra.mxu0 %v1601
        %1988 = vmatpush.bf16.msra.mxu0 %v1597
        %1989 = vmatpush.bf16.msra.mxu0 %v1593
        %1990 = vmatpush.bf16.msra.mxu0 %v1589
        %1991 = vmatpush.bf16.msra.mxu0 %v1585
        %1992 = vmatpush.bf16.msra.mxu0 %v1581
        %1993 = vmatmul.bf16.gmra.mxu0 %v611
        %v1994 = vpop.f32.mrf.mxu0
        %v1995 = vadd.f32 %v1981, %v1994
        %v1996 = vpop.f32.mrf.mxu0
        %v1997 = vadd.f32 %v1983, %v1996
        %1998 = vdwg.mxu0
        %1999 = vmatpush.bf16.msra.mxu0 %v1641
        %2000 = vmatpush.bf16.msra.mxu0 %v1637
        %2001 = vmatpush.bf16.msra.mxu0 %v1633
        %2002 = vmatpush.bf16.msra.mxu0 %v1629
        %2003 = vmatpush.bf16.msra.mxu0 %v1625
        %2004 = vmatpush.bf16.msra.mxu0 %v1621
        %2005 = vmatpush.bf16.msra.mxu0 %v1617
        %2006 = vmatpush.bf16.msra.mxu0 %v1613
        %2007 = vmatmul.bf16.gmra.mxu0 %v612
        %v2008 = vpop.f32.mrf.mxu0
        %v2009 = vadd.f32 %v1995, %v2008
        %v2010 = vpop.f32.mrf.mxu0
        %v2011 = vadd.f32 %v1997, %v2010
        %2012 = vdwg.mxu0
        %2013 = vmatpush.bf16.msra.mxu0 %v1418
        %2014 = vmatpush.bf16.msra.mxu0 %v1414
        %2015 = vmatpush.bf16.msra.mxu0 %v1410
        %2016 = vmatpush.bf16.msra.mxu0 %v1406
        %2017 = vmatpush.bf16.msra.mxu0 %v1402
        %2018 = vmatpush.bf16.msra.mxu0 %v1398
        %2019 = vmatpush.bf16.msra.mxu0 %v1394
        %2020 = vmatpush.bf16.msra.mxu0 %v1390
        %2021 = vmatmul.bf16.gmra.mxu0 %v605
        %v2022 = vpop.f32.mrf.mxu0
        %v2023 = vadd.f32 0.0, %v2022
        %v2024 = vpop.f32.mrf.mxu0
        %v2025 = vadd.f32 0.0, %v2024
        %2026 = vdwg.mxu0
        %2027 = vmatpush.bf16.msra.mxu0 %v1450
        %2028 = vmatpush.bf16.msra.mxu0 %v1446
        %2029 = vmatpush.bf16.msra.mxu0 %v1442
        %2030 = vmatpush.bf16.msra.mxu0 %v1438
        %2031 = vmatpush.bf16.msra.mxu0 %v1434
        %2032 = vmatpush.bf16.msra.mxu0 %v1430
        %2033 = vmatpush.bf16.msra.mxu0 %v1426
        %2034 = vmatpush.bf16.msra.mxu0 %v1422
        %2035 = vmatmul.bf16.gmra.mxu0 %v606
        %v2036 = vpop.f32.mrf.mxu0
        %v2037 = vadd.f32 %v2023, %v2036
        %v2038 = vpop.f32.mrf.mxu0
        %v2039 = vadd.f32 %v2025, %v2038
        %2040 = vdwg.mxu0
        %2041 = vmatpush.bf16.msra.mxu0 %v1482
        %2042 = vmatpush.bf16.msra.mxu0 %v1478
        %2043 = vmatpush.bf16.msra.mxu0 %v1474
        %2044 = vmatpush.bf16.msra.mxu0 %v1470
        %2045 = vmatpush.bf16.msra.mxu0 %v1466
        %2046 = vmatpush.bf16.msra.mxu0 %v1462
        %2047 = vmatpush.bf16.msra.mxu0 %v1458
        %2048 = vmatpush.bf16.msra.mxu0 %v1454
        %2049 = vmatmul.bf16.gmra.mxu0 %v607
        %v2050 = vpop.f32.mrf.mxu0
        %v2051 = vadd.f32 %v2037, %v2050
        %v2052 = vpop.f32.mrf.mxu0
        %v2053 = vadd.f32 %v2039, %v2052
        %2054 = vdwg.mxu0
        %2055 = vmatpush.bf16.msra.mxu0 %v1514
        %2056 = vmatpush.bf16.msra.mxu0 %v1510
        %2057 = vmatpush.bf16.msra.mxu0 %v1506
        %2058 = vmatpush.bf16.msra.mxu0 %v1502
        %2059 = vmatpush.bf16.msra.mxu0 %v1498
        %2060 = vmatpush.bf16.msra.mxu0 %v1494
        %2061 = vmatpush.bf16.msra.mxu0 %v1490
        %2062 = vmatpush.bf16.msra.mxu0 %v1486
        %2063 = vmatmul.bf16.gmra.mxu0 %v608
        %v2064 = vpop.f32.mrf.mxu0
        %v2065 = vadd.f32 %v2051, %v2064
        %v2066 = vpop.f32.mrf.mxu0
        %v2067 = vadd.f32 %v2053, %v2066
        %2068 = vdwg.mxu0
        %2069 = vmatpush.bf16.msra.mxu0 %v1546
        %2070 = vmatpush.bf16.msra.mxu0 %v1542
        %2071 = vmatpush.bf16.msra.mxu0 %v1538
        %2072 = vmatpush.bf16.msra.mxu0 %v1534
        %2073 = vmatpush.bf16.msra.mxu0 %v1530
        %2074 = vmatpush.bf16.msra.mxu0 %v1526
        %2075 = vmatpush.bf16.msra.mxu0 %v1522
        %2076 = vmatpush.bf16.msra.mxu0 %v1518
        %2077 = vmatmul.bf16.gmra.mxu0 %v609
        %v2078 = vpop.f32.mrf.mxu0
        %v2079 = vadd.f32 %v2065, %v2078
        %v2080 = vpop.f32.mrf.mxu0
        %v2081 = vadd.f32 %v2067, %v2080
        %2082 = vdwg.mxu0
        %2083 = vmatpush.bf16.msra.mxu0 %v1578
        %2084 = vmatpush.bf16.msra.mxu0 %v1574
        %2085 = vmatpush.bf16.msra.mxu0 %v1570
        %2086 = vmatpush.bf16.msra.mxu0 %v1566
        %2087 = vmatpush.bf16.msra.mxu0 %v1562
        %2088 = vmatpush.bf16.msra.mxu0 %v1558
        %2089 = vmatpush.bf16.msra.mxu0 %v1554
        %2090 = vmatpush.bf16.msra.mxu0 %v1550
        %2091 = vmatmul.bf16.gmra.mxu0 %v610
        %v2092 = vpop.f32.mrf.mxu0
        %v2093 = vadd.f32 %v2079, %v2092
        %v2094 = vpop.f32.mrf.mxu0
        %v2095 = vadd.f32 %v2081, %v2094
        %2096 = vdwg.mxu0
        %2097 = vmatpush.bf16.msra.mxu0 %v1610
        %2098 = vmatpush.bf16.msra.mxu0 %v1606
        %2099 = vmatpush.bf16.msra.mxu0 %v1602
        %2100 = vmatpush.bf16.msra.mxu0 %v1598
        %2101 = vmatpush.bf16.msra.mxu0 %v1594
        %2102 = vmatpush.bf16.msra.mxu0 %v1590
        %2103 = vmatpush.bf16.msra.mxu0 %v1586
        %2104 = vmatpush.bf16.msra.mxu0 %v1582
        %2105 = vmatmul.bf16.gmra.mxu0 %v611
        %v2106 = vpop.f32.mrf.mxu0
        %v2107 = vadd.f32 %v2093, %v2106
        %v2108 = vpop.f32.mrf.mxu0
        %v2109 = vadd.f32 %v2095, %v2108
        %2110 = vdwg.mxu0
        %2111 = vmatpush.bf16.msra.mxu0 %v1642
        %2112 = vmatpush.bf16.msra.mxu0 %v1638
        %2113 = vmatpush.bf16.msra.mxu0 %v1634
        %2114 = vmatpush.bf16.msra.mxu0 %v1630
        %2115 = vmatpush.bf16.msra.mxu0 %v1626
        %2116 = vmatpush.bf16.msra.mxu0 %v1622
        %2117 = vmatpush.bf16.msra.mxu0 %v1618
        %2118 = vmatpush.bf16.msra.mxu0 %v1614
        %2119 = vmatmul.bf16.gmra.mxu0 %v612
        %v2120 = vpop.f32.mrf.mxu0
        %v2121 = vadd.f32 %v2107, %v2120
        %v2122 = vpop.f32.mrf.mxu0
        %v2123 = vadd.f32 %v2109, %v2122
        %2124 = vdwg.mxu0
        %2125 = vmatpush.bf16.msra.mxu0 %v1419
        %2126 = vmatpush.bf16.msra.mxu0 %v1415
        %2127 = vmatpush.bf16.msra.mxu0 %v1411
        %2128 = vmatpush.bf16.msra.mxu0 %v1407
        %2129 = vmatpush.bf16.msra.mxu0 %v1403
        %2130 = vmatpush.bf16.msra.mxu0 %v1399
        %2131 = vmatpush.bf16.msra.mxu0 %v1395
        %2132 = vmatpush.bf16.msra.mxu0 %v1391
        %2133 = vmatmul.bf16.gmra.mxu0 %v605
        %v2134 = vpop.f32.mrf.mxu0
        %v2135 = vadd.f32 0.0, %v2134
        %v2136 = vpop.f32.mrf.mxu0
        %v2137 = vadd.f32 0.0, %v2136
        %2138 = vdwg.mxu0
        %2139 = vmatpush.bf16.msra.mxu0 %v1451
        %2140 = vmatpush.bf16.msra.mxu0 %v1447
        %2141 = vmatpush.bf16.msra.mxu0 %v1443
        %2142 = vmatpush.bf16.msra.mxu0 %v1439
        %2143 = vmatpush.bf16.msra.mxu0 %v1435
        %2144 = vmatpush.bf16.msra.mxu0 %v1431
        %2145 = vmatpush.bf16.msra.mxu0 %v1427
        %2146 = vmatpush.bf16.msra.mxu0 %v1423
        %2147 = vmatmul.bf16.gmra.mxu0 %v606
        %v2148 = vpop.f32.mrf.mxu0
        %v2149 = vadd.f32 %v2135, %v2148
        %v2150 = vpop.f32.mrf.mxu0
        %v2151 = vadd.f32 %v2137, %v2150
        %2152 = vdwg.mxu0
        %2153 = vmatpush.bf16.msra.mxu0 %v1483
        %2154 = vmatpush.bf16.msra.mxu0 %v1479
        %2155 = vmatpush.bf16.msra.mxu0 %v1475
        %2156 = vmatpush.bf16.msra.mxu0 %v1471
        %2157 = vmatpush.bf16.msra.mxu0 %v1467
        %2158 = vmatpush.bf16.msra.mxu0 %v1463
        %2159 = vmatpush.bf16.msra.mxu0 %v1459
        %2160 = vmatpush.bf16.msra.mxu0 %v1455
        %2161 = vmatmul.bf16.gmra.mxu0 %v607
        %v2162 = vpop.f32.mrf.mxu0
        %v2163 = vadd.f32 %v2149, %v2162
        %v2164 = vpop.f32.mrf.mxu0
        %v2165 = vadd.f32 %v2151, %v2164
        %2166 = vdwg.mxu0
        %2167 = vmatpush.bf16.msra.mxu0 %v1515
        %2168 = vmatpush.bf16.msra.mxu0 %v1511
        %2169 = vmatpush.bf16.msra.mxu0 %v1507
        %2170 = vmatpush.bf16.msra.mxu0 %v1503
        %2171 = vmatpush.bf16.msra.mxu0 %v1499
        %2172 = vmatpush.bf16.msra.mxu0 %v1495
        %2173 = vmatpush.bf16.msra.mxu0 %v1491
        %2174 = vmatpush.bf16.msra.mxu0 %v1487
        %2175 = vmatmul.bf16.gmra.mxu0 %v608
        %v2176 = vpop.f32.mrf.mxu0
        %v2177 = vadd.f32 %v2163, %v2176
        %v2178 = vpop.f32.mrf.mxu0
        %v2179 = vadd.f32 %v2165, %v2178
        %2180 = vdwg.mxu0
        %2181 = vmatpush.bf16.msra.mxu0 %v1547
        %2182 = vmatpush.bf16.msra.mxu0 %v1543
        %2183 = vmatpush.bf16.msra.mxu0 %v1539
        %2184 = vmatpush.bf16.msra.mxu0 %v1535
        %2185 = vmatpush.bf16.msra.mxu0 %v1531
        %2186 = vmatpush.bf16.msra.mxu0 %v1527
        %2187 = vmatpush.bf16.msra.mxu0 %v1523
        %2188 = vmatpush.bf16.msra.mxu0 %v1519
        %2189 = vmatmul.bf16.gmra.mxu0 %v609
        %v2190 = vpop.f32.mrf.mxu0
        %v2191 = vadd.f32 %v2177, %v2190
        %v2192 = vpop.f32.mrf.mxu0
        %v2193 = vadd.f32 %v2179, %v2192
        %2194 = vdwg.mxu0
        %2195 = vmatpush.bf16.msra.mxu0 %v1579
        %2196 = vmatpush.bf16.msra.mxu0 %v1575
        %2197 = vmatpush.bf16.msra.mxu0 %v1571
        %2198 = vmatpush.bf16.msra.mxu0 %v1567
        %2199 = vmatpush.bf16.msra.mxu0 %v1563
        %2200 = vmatpush.bf16.msra.mxu0 %v1559
        %2201 = vmatpush.bf16.msra.mxu0 %v1555
        %2202 = vmatpush.bf16.msra.mxu0 %v1551
        %2203 = vmatmul.bf16.gmra.mxu0 %v610
        %v2204 = vpop.f32.mrf.mxu0
        %v2205 = vadd.f32 %v2191, %v2204
        %v2206 = vpop.f32.mrf.mxu0
        %v2207 = vadd.f32 %v2193, %v2206
        %2208 = vdwg.mxu0
        %2209 = vmatpush.bf16.msra.mxu0 %v1611
        %2210 = vmatpush.bf16.msra.mxu0 %v1607
        %2211 = vmatpush.bf16.msra.mxu0 %v1603
        %2212 = vmatpush.bf16.msra.mxu0 %v1599
        %2213 = vmatpush.bf16.msra.mxu0 %v1595
        %2214 = vmatpush.bf16.msra.mxu0 %v1591
        %2215 = vmatpush.bf16.msra.mxu0 %v1587
        %2216 = vmatpush.bf16.msra.mxu0 %v1583
        %2217 = vmatmul.bf16.gmra.mxu0 %v611
        %v2218 = vpop.f32.mrf.mxu0
        %v2219 = vadd.f32 %v2205, %v2218
        %v2220 = vpop.f32.mrf.mxu0
        %v2221 = vadd.f32 %v2207, %v2220
        %2222 = vdwg.mxu0
        %2223 = vmatpush.bf16.msra.mxu0 %v1643
        %2224 = vmatpush.bf16.msra.mxu0 %v1639
        %2225 = vmatpush.bf16.msra.mxu0 %v1635
        %2226 = vmatpush.bf16.msra.mxu0 %v1631
        %2227 = vmatpush.bf16.msra.mxu0 %v1627
        %2228 = vmatpush.bf16.msra.mxu0 %v1623
        %2229 = vmatpush.bf16.msra.mxu0 %v1619
        %2230 = vmatpush.bf16.msra.mxu0 %v1615
        %2231 = vmatmul.bf16.gmra.mxu0 %v612
        %v2232 = vpop.f32.mrf.mxu0
        %v2233 = vadd.f32 %v2219, %v2232
        %v2234 = vpop.f32.mrf.mxu0
        %v2235 = vadd.f32 %v2221, %v2234
        %2236 = vdwg.mxu0
        %2237 = vmatpush.bf16.msra.mxu0 %v1420
        %2238 = vmatpush.bf16.msra.mxu0 %v1416
        %2239 = vmatpush.bf16.msra.mxu0 %v1412
        %2240 = vmatpush.bf16.msra.mxu0 %v1408
        %2241 = vmatpush.bf16.msra.mxu0 %v1404
        %2242 = vmatpush.bf16.msra.mxu0 %v1400
        %2243 = vmatpush.bf16.msra.mxu0 %v1396
        %2244 = vmatpush.bf16.msra.mxu0 %v1392
        %2245 = vmatmul.bf16.gmra.mxu0 %v605
        %v2246 = vpop.f32.mrf.mxu0
        %v2247 = vadd.f32 0.0, %v2246
        %v2248 = vpop.f32.mrf.mxu0
        %v2249 = vadd.f32 0.0, %v2248
        %2250 = vdwg.mxu0
        %2251 = vmatpush.bf16.msra.mxu0 %v1452
        %2252 = vmatpush.bf16.msra.mxu0 %v1448
        %2253 = vmatpush.bf16.msra.mxu0 %v1444
        %2254 = vmatpush.bf16.msra.mxu0 %v1440
        %2255 = vmatpush.bf16.msra.mxu0 %v1436
        %2256 = vmatpush.bf16.msra.mxu0 %v1432
        %2257 = vmatpush.bf16.msra.mxu0 %v1428
        %2258 = vmatpush.bf16.msra.mxu0 %v1424
        %2259 = vmatmul.bf16.gmra.mxu0 %v606
        %v2260 = vpop.f32.mrf.mxu0
        %v2261 = vadd.f32 %v2247, %v2260
        %v2262 = vpop.f32.mrf.mxu0
        %v2263 = vadd.f32 %v2249, %v2262
        %2264 = vdwg.mxu0
        %2265 = vmatpush.bf16.msra.mxu0 %v1484
        %2266 = vmatpush.bf16.msra.mxu0 %v1480
        %2267 = vmatpush.bf16.msra.mxu0 %v1476
        %2268 = vmatpush.bf16.msra.mxu0 %v1472
        %2269 = vmatpush.bf16.msra.mxu0 %v1468
        %2270 = vmatpush.bf16.msra.mxu0 %v1464
        %2271 = vmatpush.bf16.msra.mxu0 %v1460
        %2272 = vmatpush.bf16.msra.mxu0 %v1456
        %2273 = vmatmul.bf16.gmra.mxu0 %v607
        %v2274 = vpop.f32.mrf.mxu0
        %v2275 = vadd.f32 %v2261, %v2274
        %v2276 = vpop.f32.mrf.mxu0
        %v2277 = vadd.f32 %v2263, %v2276
        %2278 = vdwg.mxu0
        %2279 = vmatpush.bf16.msra.mxu0 %v1516
        %2280 = vmatpush.bf16.msra.mxu0 %v1512
        %2281 = vmatpush.bf16.msra.mxu0 %v1508
        %2282 = vmatpush.bf16.msra.mxu0 %v1504
        %2283 = vmatpush.bf16.msra.mxu0 %v1500
        %2284 = vmatpush.bf16.msra.mxu0 %v1496
        %2285 = vmatpush.bf16.msra.mxu0 %v1492
        %2286 = vmatpush.bf16.msra.mxu0 %v1488
        %2287 = vmatmul.bf16.gmra.mxu0 %v608
        %v2288 = vpop.f32.mrf.mxu0
        %v2289 = vadd.f32 %v2275, %v2288
        %v2290 = vpop.f32.mrf.mxu0
        %v2291 = vadd.f32 %v2277, %v2290
        %2292 = vdwg.mxu0
        %2293 = vmatpush.bf16.msra.mxu0 %v1548
        %2294 = vmatpush.bf16.msra.mxu0 %v1544
        %2295 = vmatpush.bf16.msra.mxu0 %v1540
        %2296 = vmatpush.bf16.msra.mxu0 %v1536
        %2297 = vmatpush.bf16.msra.mxu0 %v1532
        %2298 = vmatpush.bf16.msra.mxu0 %v1528
        %2299 = vmatpush.bf16.msra.mxu0 %v1524
        %2300 = vmatpush.bf16.msra.mxu0 %v1520
        %2301 = vmatmul.bf16.gmra.mxu0 %v609
        %v2302 = vpop.f32.mrf.mxu0
        %v2303 = vadd.f32 %v2289, %v2302
        %v2304 = vpop.f32.mrf.mxu0
        %v2305 = vadd.f32 %v2291, %v2304
        %2306 = vdwg.mxu0
        %2307 = vmatpush.bf16.msra.mxu0 %v1580
        %2308 = vmatpush.bf16.msra.mxu0 %v1576
        %2309 = vmatpush.bf16.msra.mxu0 %v1572
        %2310 = vmatpush.bf16.msra.mxu0 %v1568
        %2311 = vmatpush.bf16.msra.mxu0 %v1564
        %2312 = vmatpush.bf16.msra.mxu0 %v1560
        %2313 = vmatpush.bf16.msra.mxu0 %v1556
        %2314 = vmatpush.bf16.msra.mxu0 %v1552
        %2315 = vmatmul.bf16.gmra.mxu0 %v610
        %v2316 = vpop.f32.mrf.mxu0
        %v2317 = vadd.f32 %v2303, %v2316
        %v2318 = vpop.f32.mrf.mxu0
        %v2319 = vadd.f32 %v2305, %v2318
        %2320 = vdwg.mxu0
        %2321 = vmatpush.bf16.msra.mxu0 %v1612
        %2322 = vmatpush.bf16.msra.mxu0 %v1608
        %2323 = vmatpush.bf16.msra.mxu0 %v1604
        %2324 = vmatpush.bf16.msra.mxu0 %v1600
        %2325 = vmatpush.bf16.msra.mxu0 %v1596
        %2326 = vmatpush.bf16.msra.mxu0 %v1592
        %2327 = vmatpush.bf16.msra.mxu0 %v1588
        %2328 = vmatpush.bf16.msra.mxu0 %v1584
        %2329 = vmatmul.bf16.gmra.mxu0 %v611
        %v2330 = vpop.f32.mrf.mxu0
        %v2331 = vadd.f32 %v2317, %v2330
        %v2332 = vpop.f32.mrf.mxu0
        %v2333 = vadd.f32 %v2319, %v2332
        %2334 = vdwg.mxu0
        %2335 = vmatpush.bf16.msra.mxu0 %v1644
        %2336 = vmatpush.bf16.msra.mxu0 %v1640
        %2337 = vmatpush.bf16.msra.mxu0 %v1636
        %2338 = vmatpush.bf16.msra.mxu0 %v1632
        %2339 = vmatpush.bf16.msra.mxu0 %v1628
        %2340 = vmatpush.bf16.msra.mxu0 %v1624
        %2341 = vmatpush.bf16.msra.mxu0 %v1620
        %2342 = vmatpush.bf16.msra.mxu0 %v1616
        %2343 = vmatmul.bf16.gmra.mxu0 %v612
        %v2344 = vpop.f32.mrf.mxu0
        %v2345 = vadd.f32 %v2331, %v2344
        %v2346 = vpop.f32.mrf.mxu0
        %v2347 = vadd.f32 %v2333, %v2346
        %2348 = vdwg.mxu0
        %v2349 = vadd.f32 %v309, %v2009
        %v2350 = vadd.f32 %v310, %v2121
        %v2351 = vadd.f32 %v311, %v2233
        %v2352 = vadd.f32 %v312, %v2345
        %v2353 = vadd.f32 %v313, %v2011
        %v2354 = vadd.f32 %v314, %v2123
        %v2355 = vadd.f32 %v315, %v2235
        %v2356 = vadd.f32 %v316, %v2347
        %2357 = vst [vmem:[#allocation2] sm:$0xff] %v2349
        %2358 = vst [vmem:[#allocation2 + $0x8] sm:$0xff] %v2350
        %2359 = vst [vmem:[#allocation2 + $0x10] sm:$0xff] %v2351
        %2360 = vst [vmem:[#allocation2 + $0x18] sm:$0xff] %v2352
        %2361 = vst [vmem:[#allocation2 + $0x20] sm:$0xff] %v2353
        %2362 = vst [vmem:[#allocation2 + $0x28] sm:$0xff] %v2354
        %2363 = vst [vmem:[#allocation2 + $0x30] sm:$0xff] %v2355
        %2364 = vst [vmem:[#allocation2 + $0x38] sm:$0xff] %v2356
        %p2365 = scmp.eq.s32.totalorder %s24, 21
        // Predicated region
        $region64: #{branch_0_fun.7} parent=50 // pred_check
          %p2366 = pneg %p2365
        $region65: #{branch_0_fun.7} parent=50 // pred_check_branch
          %2368 = sbr.rel (%p2366) target = $region67
        $region66: #{branch_0_fun.7} parent=50 // pred_region
          %v2369 = vld [vmem:[#allocation2] sm:$0xff]
          %v2370 = vld [vmem:[#allocation2 + $0x8] sm:$0xff]
          %v2371 = vld [vmem:[#allocation2 + $0x10] sm:$0xff]
          %v2372 = vld [vmem:[#allocation2 + $0x18] sm:$0xff]
          %v2373 = vld [vmem:[#allocation2 + $0x20] sm:$0xff]
          %v2374 = vld [vmem:[#allocation2 + $0x28] sm:$0xff]
          %v2375 = vld [vmem:[#allocation2 + $0x30] sm:$0xff]
          %v2376 = vld [vmem:[#allocation2 + $0x38] sm:$0xff]
          %v2377 = vld [vmem:[%s293] sm:$0xf]
          %v2379 = vperm.slane %v2377, 0
          %v2380 = vperm.slane %v2377, 1
          %v2381 = vperm.slane %v2377, 2
          %v2382 = vperm.slane %v2377, 3
          %v2387 = vadd.f32 %v2369, %v2379
          %v2388 = vadd.f32 %v2370, %v2380
          %v2389 = vadd.f32 %v2371, %v2381
          %v2390 = vadd.f32 %v2372, %v2382
          %v2391 = vadd.f32 %v2373, %v2379
          %v2392 = vadd.f32 %v2374, %v2380
          %v2393 = vadd.f32 %v2375, %v2381
          %v2394 = vadd.f32 %v2376, %v2382
          %v2395 = vmax.f32 %v2387, 0.0
          %v2396 = vmax.f32 %v2388, 0.0
          %v2397 = vmax.f32 %v2389, 0.0
          %v2398 = vmax.f32 %v2390, 0.0
          %v2399 = vmax.f32 %v2391, 0.0
          %v2400 = vmax.f32 %v2392, 0.0
          %v2401 = vmax.f32 %v2393, 0.0
          %v2402 = vmax.f32 %v2394, 0.0
          %v2403 = vpack.c.bf16 %v2396, %v2395
          %v2404 = vpack.c.bf16 %v2398, %v2397
          %v2405 = vpack.c.bf16 %v2400, %v2399
          %v2406 = vpack.c.bf16 %v2402, %v2401
          %2407 = vst [vmem:[%s285] sm:$0xff] %v2403
          %2408 = vst [vmem:[%s285 + $0x8] sm:$0xff] %v2404
          %2409 = vst [vmem:[%s285 + $0x10] sm:$0xff] %v2405
          %2410 = vst [vmem:[%s285 + $0x18] sm:$0xff] %v2406
        $region67: #{branch_0_fun.7} parent=50 // pred_fallthru
          _
        %s2411 = sand.u32 %s128, 1
        %s2412 = sand.u32 %s128, 1
        %s2413 = smul.addr %s2412, 32
        %s2414 = scalar_lea.vmem [#allocation6], %s2413
        // Predicated region
        $region68: #{branch_0_fun.7} parent=50 // pred_check
          %p2415 = pneg %p138
        $region69: #{branch_0_fun.7} parent=50 // pred_check_branch
          %2417 = sbr.rel (%p2415) target = $region71
        $region70: #{branch_0_fun.7} parent=50 // pred_region
          %s2418 = smul.u32 2, %s22
          %s2419 = smul.u32 4, %s23
          %s2420 = smul.addr %s2418, 8
          %s2421 = sadd.s32 %s2419, %s2420
          %s2422 = smul.addr %s2421, 4
          %s2423 = scalar_lea.vmem %s3, %s2422
          // Predicated region
          $region72: #{branch_0_fun.7} parent=70 // pred_check
            _
          $region73: #{branch_0_fun.7} parent=70 // pred_check_branch
            %2425 = sbr.rel (0) target = $region75
          $region74: #{branch_0_fun.7} parent=70 // pred_region
            // Predicated region
            $region76: #{branch_0_fun.7} parent=74 // pred_check
              _
            $region77: #{branch_0_fun.7} parent=74 // pred_check_branch
              %2427 = sbr.rel (0) target = $region79
            $region78: #{branch_0_fun.7} parent=74 // pred_region
              loop: start=0, step=1, limit=1
              $region80: #{branch_0_fun.7} parent=78 // loop_pre_header
                _
              $region81: #{branch_0_fun.7} parent=78 // loop_header
                %s2429 = sphi 0, %s2433
                %p2430 = scmp.ge.s32.totalorder %s2429, 1
                %s2434 = sphi %s2414, %s2414
                %s2435 = sphi %s2423, %s2423
              $region82: #{branch_0_fun.7} parent=78 // loop_header_branch
                %2432 = sbr.rel (%p2430) target = $region86
              $region83: #{branch_0_fun.7} parent=78 // loop_body
                %v2436 = vld [vmem:[%s2434] sm:$0xff]
                %2437 = vst [vmem:[%s2435] sm:$0xff] %v2436
                %v2438 = vld [vmem:[%s2434 + $0x8] sm:$0xff]
                %2439 = vst [vmem:[%s2435 + $0x8] sm:$0xff] %v2438
                %v2440 = vld [vmem:[%s2434 + $0x10] sm:$0xff]
                %2441 = vst [vmem:[%s2435 + $0x20] sm:$0xff] %v2440
                %v2442 = vld [vmem:[%s2434 + $0x18] sm:$0xff]
                %2443 = vst [vmem:[%s2435 + $0x28] sm:$0xff] %v2442
              $region84: #{branch_0_fun.7} parent=78 // loop_footer
                %s2433 = sadd.s32 1, %s2429
              $region85: #{branch_0_fun.7} parent=78 // loop_footer_branch
                %2428 = sbr.rel target = $region81
              $region86: #{branch_0_fun.7} parent=78 // loop_exit
                _
            $region79: #{branch_0_fun.7} parent=74 // pred_fallthru
              _
            // Predicated region
            $region87: #{branch_0_fun.7} parent=74 // pred_check
              _
            $region88: #{branch_0_fun.7} parent=74 // pred_check_branch
              %2445 = sbr.rel target = $region90
            $region89: #{branch_0_fun.7} parent=74 // pred_region
              _
            $region90: #{branch_0_fun.7} parent=74 // pred_fallthru
              _
          $region75: #{branch_0_fun.7} parent=70 // pred_fallthru
            _
          %2446 = vnop
        $region71: #{branch_0_fun.7} parent=50 // pred_fallthru
          _
      $region51: #{branch_0_fun.7} parent=5 // pred_fallthru
        _
      %p2447 = scmp.le.s32.totalorder 2, %s12
      // Predicated region
      $region91: #{branch_0_fun.7} parent=5 // pred_check
        %p2448 = pneg %p2447
      $region92: #{branch_0_fun.7} parent=5 // pred_check_branch
        %2450 = sbr.rel (%p2448) target = $region94
      $region93: #{branch_0_fun.7} parent=5 // pred_region
        %s2451 = ssub.s32 %s12, 2
        // Predicated region
        $region95: #{branch_0_fun.7} parent=93 // pred_check
          %p2452 = pneg %p144
        $region96: #{branch_0_fun.7} parent=93 // pred_check_branch
          %2454 = sbr.rel (%p2452) target = $region98
        $region97: #{branch_0_fun.7} parent=93 // pred_region
          %s2455 = sand.u32 %s129, 1
          %s2456 = sand.u32 %s129, 1
          %s2457 = smul.addr %s2456, 32
          %s2458 = scalar_lea.vmem [#allocation6], %s2457
        $region98: #{branch_0_fun.7} parent=93 // pred_fallthru
          _
      $region94: #{branch_0_fun.7} parent=5 // pred_fallthru
        _
    $region6: #{branch_0_fun.7} parent=1 // loop_footer
      %s16 = sadd.s32 1, %s12
    $region7: #{branch_0_fun.7} parent=1 // loop_footer_branch
      %11 = sbr.rel target = $region3
    $region8: #{branch_0_fun.7} parent=1 // loop_exit
      _
    %2459 = vsyncpa [#allocation5], 1
    %s2460 = scalar_lea.sflag [#allocation5], 1
    %2461 = vsyncpa %s2460, 1

</llo_original>
